<compile_context>
chip_gen: v5e
topology: v5e:2x2
jax: 0.10.0
libtpu: 0.0.40
codegen_flags: <defaults>
</compile_context>

<pallas_src>
import numpy as np
import jax
import jax.numpy as jnp
from jax.experimental import pallas as pl
from jax.experimental.pallas import tpu as pltpu


# ----------------------------------------------------------------------------
# Board constants (standard Abalone hex board embedded in a 9x9 grid).
# ----------------------------------------------------------------------------
def _make_valid_board_mask():
    mask = np.zeros((9, 9), dtype=bool)
    for r in range(9):
        if r <= 4:
            mask[r, 0:5 + r] = True
        else:
            mask[r, r - 4:9] = True
    return mask


VALID_BOARD_MASK = _make_valid_board_mask()            # (9, 9), 61 True cells
NUM_VALID_CELLS = int(VALID_BOARD_MASK.sum())          # 61
VALID_IDX = np.nonzero(VALID_BOARD_MASK.flatten())[0]  # indices into 81
TECHNIAL_MOVE_AMOUNT = 140                             # synthetic move count

H = W = 9
BOARD_CELLS = H * W                                    # 81


def _round_up(x, m):
    return ((x + m - 1) // m) * m


# lane-padded (multiple-of-128) widths of every stage of the fused kernel
D_IN = _round_up(BOARD_CELLS * 2, 128)     # 256  (board, channels-last)
D1 = _round_up(BOARD_CELLS * 2, 128)       # 256  (conv1 out)
D2 = _round_up(BOARD_CELLS * 4, 128)       # 384  (conv2 out)
D3 = _round_up(BOARD_CELLS * 8, 128)       # 768  (conv3 out)
D4 = _round_up(BOARD_CELLS * 16, 128)      # 1408 (conv4 out / fc1 K dim)
EXTRA_PAD = 128                            # extra_tensor 3 -> 128 lanes
MOVE_PAD = 256                             # policy head 140 -> 256 lanes
VALUE_PAD = 128                            # value head 1 -> 128 lanes

_WEIGHT_ORDER = ("m1", "c1", "m2", "c2", "m3", "c3", "m4", "c4",
                 "w1", "b1", "w2a", "w2b", "b2", "w3", "b3",
                 "wp", "bp", "wv", "bv")


# ----------------------------------------------------------------------------
# Fused forward kernel: conv stack (as dense MXU matmuls) + FC trunk + heads.
# All matmuls are bf16 x bf16 -> f32 on the MXU; epilogue stays f32.
# ----------------------------------------------------------------------------
def abalone_fused_kernel(
        board_ref, extra_ref, lbias_ref,
        m1_ref, c1_ref, m2_ref, c2_ref, m3_ref, c3_ref, m4_ref, c4_ref,
        w1_ref, b1_ref, w2a_ref, w2b_ref, b2_ref, w3_ref, b3_ref,
        wp_ref, bp_ref, wv_ref, bv_ref,
        policy_ref, value_ref):

    def mm(a, w):
        return jnp.dot(a.astype(jnp.bfloat16), w,
                       preferred_element_type=jnp.float32)

    # --- conv stack: each 3x3 'same' conv is one exact, lane-padded matmul --
    x = board_ref[...]                                          # (TB, 256) f32
    x = jnp.maximum(mm(x, m1_ref[...]) + c1_ref[...], 0.0)      # (TB, 256)
    x = jnp.maximum(mm(x, m2_ref[...]) + c2_ref[...], 0.0)      # (TB, 384)
    x = jnp.maximum(mm(x, m3_ref[...]) + c3_ref[...], 0.0)      # (TB, 768)
    x = jnp.maximum(mm(x, m4_ref[...]) + c4_ref[...], 0.0)      # (TB, 1408)

    # --- FC trunk (valid-cell gather is folded into w1's zero rows) ---------
    h1 = jnp.maximum(mm(x, w1_ref[...]) + b1_ref[...], 0.0)     # (TB, 128)
    h2 = mm(h1, w2a_ref[...]) + mm(extra_ref[...], w2b_ref[...]) + b2_ref[...]
    h2 = jnp.maximum(h2, 0.0)                                   # (TB, 256)
    h3 = jnp.maximum(mm(h2, w3_ref[...]) + b3_ref[...], 0.0)    # (TB, 128)

    # --- policy head: additive-mask softmax over a lane-dense 256-wide slab -
    logits = mm(h3, wp_ref[...]) + bp_ref[...] + lbias_ref[...]  # (TB, 256)
    m = jnp.max(logits, axis=-1, keepdims=True)
    e = jnp.exp(logits - m)
    denom = jnp.sum(e, axis=-1, keepdims=True)
    policy_ref[...] = e / denom           # exact divide: rows sum to 1 (f32)

    # --- value head (lane-padded to 128 lanes; column 0 is the real output) -
    value_ref[...] = jnp.tanh(mm(h3, wv_ref[...]) + bv_ref[...])


# ----------------------------------------------------------------------------
# Wrapper: layout glue + single pallas_call over a batch grid.
# ----------------------------------------------------------------------------
def _batch_spec(tb, d):
    return pl.BlockSpec((tb, d), lambda i: (i, 0))


def _weight_spec(shape):
    # grid-invariant weight block (index_map always (0, 0))
    return pl.BlockSpec(shape, lambda i: (0, 0))


@jax.jit
def abalone_forward(kparams, board_tensor, extra_tensor, legal_moves_tensor):
    B = board_tensor.shape[0]

    # channels-last, cell-major flattening idx = (h*9 + w)*Cin + ci, lane-padded
    x = jnp.transpose(board_tensor.astype(jnp.float32), (0, 2, 3, 1))
    x = x.reshape(B, BOARD_CELLS * 2)
    x = jnp.pad(x, ((0, 0), (0, D_IN - BOARD_CELLS * 2)))

    extra_f = jnp.pad(extra_tensor.astype(jnp.float32),
                      ((0, 0), (0, EXTRA_PAD - extra_tensor.shape[1])))

    legal_f = jnp.pad(legal_moves_tensor.astype(jnp.float32),
                      ((0, 0), (0, MOVE_PAD - TECHNIAL_MOVE_AMOUNT)))
    # additive mask: 0 for legal, -1e30 for illegal (incl. the 140..255 pad lanes)
    lbias = (legal_f - 1.0) * 1e30

    # batch tiling: >= 8 rows per tile (full sublanes), and cap at ceil(B/2)
    # (and 128) so large batches get >= 2 "parallel" grid steps (v7x dual-TC).
    TB = min(128, max(8, _round_up((B + 1) // 2, 8)))
    Bp = _round_up(B, TB)
    if Bp != B:
        pad = Bp - B
        x = jnp.pad(x, ((0, pad), (0, 0)))
        extra_f = jnp.pad(extra_f, ((0, pad), (0, 0)))
        lbias = jnp.pad(lbias, ((0, pad), (0, 0)), constant_values=-1e30)
    grid = (Bp // TB,)

    weight_args = [kparams[k] for k in _WEIGHT_ORDER]
    in_specs = ([_batch_spec(TB, D_IN),
                 _batch_spec(TB, EXTRA_PAD),
                 _batch_spec(TB, MOVE_PAD)]
                + [_weight_spec(w.shape) for w in weight_args])
    out_specs = (_batch_spec(TB, MOVE_PAD), _batch_spec(TB, VALUE_PAD))
    out_shape = (jax.ShapeDtypeStruct((Bp, MOVE_PAD), jnp.float32),
                 jax.ShapeDtypeStruct((Bp, VALUE_PAD), jnp.float32))

    policy_pad, value_pad = pl.pallas_call(
        abalone_fused_kernel,
        out_shape=out_shape,
        grid=grid,
        in_specs=in_specs,
        out_specs=out_specs,
        compiler_params=pltpu.CompilerParams(
            dimension_semantics=("parallel",),
            vmem_limit_bytes=32 * 1024 * 1024),
    )(x, extra_f, lbias, *weight_args)

    return (policy_pad[:B, :TECHNIAL_MOVE_AMOUNT], value_pad[:B, :1])


# ----------------------------------------------------------------------------
# Parameter init (PyTorch-default-style uniform(-k, k), k = 1/sqrt(fan_in))
# plus precomputation of the kernel-ready (dense / lane-padded / bf16) weights.
# ----------------------------------------------------------------------------
def _dense_conv_matrix_padded(w, d_in, d_out):
    """Exact dense matrix of a 3x3 stride-1 pad-1 conv on the 9x9 grid,
    embedded top-left in a zero (d_in, d_out) matrix.
    Flattening on both sides is channels-last, cell-major: idx = (h*9+w)*C + c.
    w: (Cout, Cin, 3, 3) numpy."""
    Cout, Cin, _, _ = w.shape
    M = np.zeros((d_in, d_out), np.float32)
    for ho in range(H):
        for wo in range(W):
            co_off = (ho * W + wo) * Cout
            for kh in range(3):
                hi = ho + kh - 1
                if not (0 <= hi < H):
                    continue
                for kw in range(3):
                    wi = wo + kw - 1
                    if not (0 <= wi < W):
                        continue
                    ci_off = (hi * W + wi) * Cin
                    M[ci_off:ci_off + Cin, co_off:co_off + Cout] = w[:, :, kh, kw].T
    return M


def _uniform(rng, shape, fan_in):
    k = 1.0 / np.sqrt(fan_in)
    return rng.uniform(-k, k, size=shape).astype(np.float32)


def init_params(seed=0):
    rng = np.random.RandomState(seed)
    raw = {"convs": []}
    conv_dims = [(2, 2), (2, 4), (4, 8), (8, 16)]
    for cin, cout in conv_dims:
        fan = cin * 9
        w = _uniform(rng, (cout, cin, 3, 3), fan)
        b = _uniform(rng, (cout,), fan)
        raw["convs"].append((w, b))

    def linear(fin, fout):
        # stored already transposed: (in, out); bias as (1, out)
        return _uniform(rng, (fin, fout), fin), _uniform(rng, (1, fout), fin)

    raw["w1"], raw["b1"] = linear(NUM_VALID_CELLS * 16, 128)
    raw["w2"], raw["b2"] = linear(128 + 3, 256)
    raw["w3"], raw["b3"] = linear(256, 128)
    raw["wp"], raw["bp"] = linear(128, TECHNIAL_MOVE_AMOUNT)
    raw["wv"], raw["bv"] = linear(128, 1)

    # --- kernel-ready parameters: lane-padded, matmul weights in bf16 -------
    kp = {}
    d_ins = [D_IN, D1, D2, D3]
    d_outs = [D1, D2, D3, D4]
    for li, (w, b) in enumerate(raw["convs"]):
        cout = w.shape[0]
        kp[f"m{li + 1}"] = jnp.asarray(
            _dense_conv_matrix_padded(w, d_ins[li], d_outs[li]), jnp.bfloat16)
        c = np.zeros((1, d_outs[li]), np.float32)
        c[0, :BOARD_CELLS * cout] = np.tile(b, BOARD_CELLS)
        kp[f"c{li + 1}"] = jnp.asarray(c)

    # fold the valid-cell gather into fc1 and pad its K dim 1296 -> 1408:
    #   kernel conv output ordering = cell*16 + c (channels-last, cell-major)
    #   PyTorch fc1 input ordering  = c*61 + valid_rank(cell)
    w1_eff = np.zeros((BOARD_CELLS, 16, 128), np.float32)
    w1_eff[VALID_IDX] = raw["w1"].reshape(16, NUM_VALID_CELLS, 128).transpose(1, 0, 2)
    w1_pad = np.zeros((D4, 128), np.float32)
    w1_pad[:BOARD_CELLS * 16] = w1_eff.reshape(BOARD_CELLS * 16, 128)
    kp["w1"] = jnp.asarray(w1_pad, jnp.bfloat16)
    kp["b1"] = jnp.asarray(raw["b1"])

    kp["w2a"] = jnp.asarray(raw["w2"][:128], jnp.bfloat16)     # acts on fc1 out
    w2b = np.zeros((EXTRA_PAD, 256), np.float32)               # acts on extra
    w2b[:3] = raw["w2"][128:]
    kp["w2b"] = jnp.asarray(w2b, jnp.bfloat16)
    kp["b2"] = jnp.asarray(raw["b2"])
    kp["w3"] = jnp.asarray(raw["w3"], jnp.bfloat16)
    kp["b3"] = jnp.asarray(raw["b3"])

    wp = np.zeros((128, MOVE_PAD), np.float32)
    wp[:, :TECHNIAL_MOVE_AMOUNT] = raw["wp"]
    bp = np.zeros((1, MOVE_PAD), np.float32)
    bp[:, :TECHNIAL_MOVE_AMOUNT] = raw["bp"]
    kp["wp"], kp["bp"] = jnp.asarray(wp, jnp.bfloat16), jnp.asarray(bp)

    wv = np.zeros((128, VALUE_PAD), np.float32)
    wv[:, :1] = raw["wv"]
    bv = np.zeros((1, VALUE_PAD), np.float32)
    bv[:, :1] = raw["bv"]
    kp["wv"], kp["bv"] = jnp.asarray(wv, jnp.bfloat16), jnp.asarray(bv)

    raw_j = jax.tree_util.tree_map(jnp.asarray, raw)
    return kp, raw_j


# ----------------------------------------------------------------------------
# Pure-JAX f32 reference of the PyTorch forward (for validation only).
# ----------------------------------------------------------------------------
@jax.jit
def reference_forward(raw, board, extra, legal):
    x = board.astype(jnp.float32)
    for (w, b) in raw["convs"]:
        x = jax.lax.conv_general_dilated(
            x, w, window_strides=(1, 1), padding="SAME",
            dimension_numbers=("NCHW", "OIHW", "NCHW"))
        x = jnp.maximum(x + b[None, :, None, None], 0.0)
    B = x.shape[0]
    x = x.reshape(B, 16, BOARD_CELLS)[:, :, VALID_IDX].reshape(B, 16 * NUM_VALID_CELLS)
    h1 = jnp.maximum(x @ raw["w1"] + raw["b1"], 0.0)
    h2 = jnp.maximum(jnp.concatenate([h1, extra], axis=1) @ raw["w2"] + raw["b2"], 0.0)
    h3 = jnp.maximum(h2 @ raw["w3"] + raw["b3"], 0.0)
    logits = h3 @ raw["wp"] + raw["bp"]
    logits = jnp.where(legal, logits, jnp.finfo(jnp.float32).min)
    policy = jax.nn.softmax(logits, axis=-1)
    value = jnp.tanh(h3 @ raw["wv"] + raw["bv"])
    return policy, value


if __name__ == "__main__":
    key = jax.random.PRNGKey(0)
    kb, ke, kl = jax.random.split(key, 3)

    B = 2
    board = jax.random.normal(kb, (B, 2, 9, 9), jnp.float32)
    extra = jax.random.normal(ke, (B, 3), jnp.float32)
    legal = jax.random.bernoulli(kl, 0.6, (B, TECHNIAL_MOVE_AMOUNT))
    legal = legal.at[:, 0].set(True)   # guarantee at least one legal move per row

    kparams, raw = init_params(0)
    policy, value = abalone_forward(kparams, board, extra, legal)
    jax.block_until_ready((policy, value))

    assert policy.shape == (B, TECHNIAL_MOVE_AMOUNT) and value.shape == (B, 1)
    assert bool(jnp.all(jnp.isfinite(policy))) and bool(jnp.all(jnp.isfinite(value)))
    # exact-divide softmax: rows sum to 1; illegal entries exactly 0
    assert bool(jnp.allclose(jnp.sum(policy, axis=-1), 1.0, atol=1e-3))
    assert bool(jnp.all(jnp.where(legal, 0.0, policy) == 0.0))

    # cross-check the fused bf16-matmul kernel against a pure-f32 JAX reference
    ref_p, ref_v = reference_forward(raw, board, extra, legal)
    assert bool(jnp.allclose(policy, ref_p, atol=1e-2))   # bf16 matmul tolerance
    assert bool(jnp.allclose(value, ref_v, atol=2e-2))
    print("KERNEL_OK")
</pallas_src>

<mosaic_0001>
module attributes {stable_mosaic.version = 11 : i64} {
  func.func @abalone_fused_kernel(%arg0: i32, %arg1: memref<8x256xf32, #tpu.memory_space<vmem>>, %arg2: memref<8x128xf32, #tpu.memory_space<vmem>>, %arg3: memref<8x256xf32, #tpu.memory_space<vmem>>, %arg4: memref<256x256xbf16, #tpu.memory_space<vmem>>, %arg5: memref<1x256xf32, #tpu.memory_space<vmem>>, %arg6: memref<256x384xbf16, #tpu.memory_space<vmem>>, %arg7: memref<1x384xf32, #tpu.memory_space<vmem>>, %arg8: memref<384x768xbf16, #tpu.memory_space<vmem>>, %arg9: memref<1x768xf32, #tpu.memory_space<vmem>>, %arg10: memref<768x1408xbf16, #tpu.memory_space<vmem>>, %arg11: memref<1x1408xf32, #tpu.memory_space<vmem>>, %arg12: memref<1408x128xbf16, #tpu.memory_space<vmem>>, %arg13: memref<1x128xf32, #tpu.memory_space<vmem>>, %arg14: memref<128x256xbf16, #tpu.memory_space<vmem>>, %arg15: memref<128x256xbf16, #tpu.memory_space<vmem>>, %arg16: memref<1x256xf32, #tpu.memory_space<vmem>>, %arg17: memref<256x128xbf16, #tpu.memory_space<vmem>>, %arg18: memref<1x128xf32, #tpu.memory_space<vmem>>, %arg19: memref<128x256xbf16, #tpu.memory_space<vmem>>, %arg20: memref<1x256xf32, #tpu.memory_space<vmem>>, %arg21: memref<128x128xbf16, #tpu.memory_space<vmem>>, %arg22: memref<1x128xf32, #tpu.memory_space<vmem>>, %arg23: memref<8x256xf32, #tpu.memory_space<vmem>>, %arg24: memref<8x128xf32, #tpu.memory_space<vmem>>) attributes {dimension_semantics = [#tpu.dimension_semantics<parallel>], iteration_bounds = array<i64: 1>, scalar_prefetch = 0 : i64, scratch_operands = 0 : i64, tpu.core_type = #tpu.core_type<tc>, window_params = [{transform_indices = @transform_0, window_bounds = array<i64: 8, 256>}, {transform_indices = @transform_1, window_bounds = array<i64: 8, 128>}, {transform_indices = @transform_2, window_bounds = array<i64: 8, 256>}, {pipeline_mode = #tpu.pipeline_mode<synchronous>, transform_indices = @transform_3, window_bounds = array<i64: 256, 256>}, {pipeline_mode = #tpu.pipeline_mode<synchronous>, transform_indices = @transform_4, window_bounds = array<i64: 1, 256>}, {pipeline_mode = #tpu.pipeline_mode<synchronous>, transform_indices = @transform_5, window_bounds = array<i64: 256, 384>}, {pipeline_mode = #tpu.pipeline_mode<synchronous>, transform_indices = @transform_6, window_bounds = array<i64: 1, 384>}, {pipeline_mode = #tpu.pipeline_mode<synchronous>, transform_indices = @transform_7, window_bounds = array<i64: 384, 768>}, {pipeline_mode = #tpu.pipeline_mode<synchronous>, transform_indices = @transform_8, window_bounds = array<i64: 1, 768>}, {pipeline_mode = #tpu.pipeline_mode<synchronous>, transform_indices = @transform_9, window_bounds = array<i64: 768, 1408>}, {pipeline_mode = #tpu.pipeline_mode<synchronous>, transform_indices = @transform_10, window_bounds = array<i64: 1, 1408>}, {pipeline_mode = #tpu.pipeline_mode<synchronous>, transform_indices = @transform_11, window_bounds = array<i64: 1408, 128>}, {pipeline_mode = #tpu.pipeline_mode<synchronous>, transform_indices = @transform_12, window_bounds = array<i64: 1, 128>}, {pipeline_mode = #tpu.pipeline_mode<synchronous>, transform_indices = @transform_13, window_bounds = array<i64: 128, 256>}, {pipeline_mode = #tpu.pipeline_mode<synchronous>, transform_indices = @transform_14, window_bounds = array<i64: 128, 256>}, {pipeline_mode = #tpu.pipeline_mode<synchronous>, transform_indices = @transform_15, window_bounds = array<i64: 1, 256>}, {pipeline_mode = #tpu.pipeline_mode<synchronous>, transform_indices = @transform_16, window_bounds = array<i64: 256, 128>}, {pipeline_mode = #tpu.pipeline_mode<synchronous>, transform_indices = @transform_17, window_bounds = array<i64: 1, 128>}, {pipeline_mode = #tpu.pipeline_mode<synchronous>, transform_indices = @transform_18, window_bounds = array<i64: 128, 256>}, {pipeline_mode = #tpu.pipeline_mode<synchronous>, transform_indices = @transform_19, window_bounds = array<i64: 1, 256>}, {pipeline_mode = #tpu.pipeline_mode<synchronous>, transform_indices = @transform_20, window_bounds = array<i64: 128, 128>}, {pipeline_mode = #tpu.pipeline_mode<synchronous>, transform_indices = @transform_21, window_bounds = array<i64: 1, 128>}, {transform_indices = @transform_22, window_bounds = array<i64: 8, 256>}, {transform_indices = @transform_23, window_bounds = array<i64: 8, 128>}]} {
    %c0 = arith.constant 0 : index
    %c0_0 = arith.constant 0 : index
    %0 = vector.load %arg1[%c0, %c0_0] : memref<8x256xf32, #tpu.memory_space<vmem>>, vector<8x256xf32>
    %c0_1 = arith.constant 0 : index
    %c0_2 = arith.constant 0 : index
    %1 = vector.load %arg4[%c0_1, %c0_2] : memref<256x256xbf16, #tpu.memory_space<vmem>>, vector<256x256xbf16>
    %2 = arith.truncf %0 : vector<8x256xf32> to vector<8x256xbf16>
    %cst = arith.constant dense<0.000000e+00> : vector<8x256xf32>
    %3 = tpu.matmul %2, %1, %cst {dimension_numbers = #tpu.dot_dimension_numbers<[1], [0], [0], [1], [0, 0, 1, 1], [], []>} : vector<8x256xbf16>, vector<256x256xbf16>, vector<8x256xf32> -> vector<8x256xf32>
    %c0_3 = arith.constant 0 : index
    %c0_4 = arith.constant 0 : index
    %4 = vector.load %arg5[%c0_3, %c0_4] : memref<1x256xf32, #tpu.memory_space<vmem>>, vector<1x256xf32>
    %5 = vector.broadcast %4 : vector<1x256xf32> to vector<8x256xf32>
    %6 = arith.addf %3, %5 : vector<8x256xf32>
    %cst_5 = arith.constant 0.000000e+00 : f32
    %7 = vector.broadcast %cst_5 : f32 to vector<8x256xf32>
    %8 = arith.maximumf %6, %7 : vector<8x256xf32>
    %c0_6 = arith.constant 0 : index
    %c0_7 = arith.constant 0 : index
    %9 = vector.load %arg6[%c0_6, %c0_7] : memref<256x384xbf16, #tpu.memory_space<vmem>>, vector<256x384xbf16>
    %10 = arith.truncf %8 : vector<8x256xf32> to vector<8x256xbf16>
    %cst_8 = arith.constant dense<0.000000e+00> : vector<8x384xf32>
    %11 = tpu.matmul %10, %9, %cst_8 {dimension_numbers = #tpu.dot_dimension_numbers<[1], [0], [0], [1], [0, 0, 1, 1], [], []>} : vector<8x256xbf16>, vector<256x384xbf16>, vector<8x384xf32> -> vector<8x384xf32>
    %c0_9 = arith.constant 0 : index
    %c0_10 = arith.constant 0 : index
    %12 = vector.load %arg7[%c0_9, %c0_10] : memref<1x384xf32, #tpu.memory_space<vmem>>, vector<1x384xf32>
    %13 = vector.broadcast %12 : vector<1x384xf32> to vector<8x384xf32>
    %14 = arith.addf %11, %13 : vector<8x384xf32>
    %cst_11 = arith.constant 0.000000e+00 : f32
    %15 = vector.broadcast %cst_11 : f32 to vector<8x384xf32>
    %16 = arith.maximumf %14, %15 : vector<8x384xf32>
    %c0_12 = arith.constant 0 : index
    %c0_13 = arith.constant 0 : index
    %17 = vector.load %arg8[%c0_12, %c0_13] : memref<384x768xbf16, #tpu.memory_space<vmem>>, vector<384x768xbf16>
    %18 = arith.truncf %16 : vector<8x384xf32> to vector<8x384xbf16>
    %cst_14 = arith.constant dense<0.000000e+00> : vector<8x768xf32>
    %19 = tpu.matmul %18, %17, %cst_14 {dimension_numbers = #tpu.dot_dimension_numbers<[1], [0], [0], [1], [0, 0, 1, 1], [], []>} : vector<8x384xbf16>, vector<384x768xbf16>, vector<8x768xf32> -> vector<8x768xf32>
    %c0_15 = arith.constant 0 : index
    %c0_16 = arith.constant 0 : index
    %20 = vector.load %arg9[%c0_15, %c0_16] : memref<1x768xf32, #tpu.memory_space<vmem>>, vector<1x768xf32>
    %21 = vector.broadcast %20 : vector<1x768xf32> to vector<8x768xf32>
    %22 = arith.addf %19, %21 : vector<8x768xf32>
    %cst_17 = arith.constant 0.000000e+00 : f32
    %23 = vector.broadcast %cst_17 : f32 to vector<8x768xf32>
    %24 = arith.maximumf %22, %23 : vector<8x768xf32>
    %c0_18 = arith.constant 0 : index
    %c0_19 = arith.constant 0 : index
    %25 = vector.load %arg10[%c0_18, %c0_19] : memref<768x1408xbf16, #tpu.memory_space<vmem>>, vector<768x1408xbf16>
    %26 = arith.truncf %24 : vector<8x768xf32> to vector<8x768xbf16>
    %cst_20 = arith.constant dense<0.000000e+00> : vector<8x1408xf32>
    %27 = tpu.matmul %26, %25, %cst_20 {dimension_numbers = #tpu.dot_dimension_numbers<[1], [0], [0], [1], [0, 0, 1, 1], [], []>} : vector<8x768xbf16>, vector<768x1408xbf16>, vector<8x1408xf32> -> vector<8x1408xf32>
    %c0_21 = arith.constant 0 : index
    %c0_22 = arith.constant 0 : index
    %28 = vector.load %arg11[%c0_21, %c0_22] : memref<1x1408xf32, #tpu.memory_space<vmem>>, vector<1x1408xf32>
    %29 = vector.broadcast %28 : vector<1x1408xf32> to vector<8x1408xf32>
    %30 = arith.addf %27, %29 : vector<8x1408xf32>
    %cst_23 = arith.constant 0.000000e+00 : f32
    %31 = vector.broadcast %cst_23 : f32 to vector<8x1408xf32>
    %32 = arith.maximumf %30, %31 : vector<8x1408xf32>
    %c0_24 = arith.constant 0 : index
    %c0_25 = arith.constant 0 : index
    %33 = vector.load %arg12[%c0_24, %c0_25] : memref<1408x128xbf16, #tpu.memory_space<vmem>>, vector<1408x128xbf16>
    %34 = arith.truncf %32 : vector<8x1408xf32> to vector<8x1408xbf16>
    %cst_26 = arith.constant dense<0.000000e+00> : vector<8x128xf32>
    %35 = tpu.matmul %34, %33, %cst_26 {dimension_numbers = #tpu.dot_dimension_numbers<[1], [0], [0], [1], [0, 0, 1, 1], [], []>} : vector<8x1408xbf16>, vector<1408x128xbf16>, vector<8x128xf32> -> vector<8x128xf32>
    %c0_27 = arith.constant 0 : index
    %c0_28 = arith.constant 0 : index
    %36 = vector.load %arg13[%c0_27, %c0_28] : memref<1x128xf32, #tpu.memory_space<vmem>>, vector<1x128xf32>
    %37 = vector.broadcast %36 : vector<1x128xf32> to vector<8x128xf32>
    %38 = arith.addf %35, %37 : vector<8x128xf32>
    %cst_29 = arith.constant 0.000000e+00 : f32
    %39 = vector.broadcast %cst_29 : f32 to vector<8x128xf32>
    %40 = arith.maximumf %38, %39 : vector<8x128xf32>
    %c0_30 = arith.constant 0 : index
    %c0_31 = arith.constant 0 : index
    %41 = vector.load %arg14[%c0_30, %c0_31] : memref<128x256xbf16, #tpu.memory_space<vmem>>, vector<128x256xbf16>
    %42 = arith.truncf %40 : vector<8x128xf32> to vector<8x128xbf16>
    %cst_32 = arith.constant dense<0.000000e+00> : vector<8x256xf32>
    %43 = tpu.matmul %42, %41, %cst_32 {dimension_numbers = #tpu.dot_dimension_numbers<[1], [0], [0], [1], [0, 0, 1, 1], [], []>} : vector<8x128xbf16>, vector<128x256xbf16>, vector<8x256xf32> -> vector<8x256xf32>
    %c0_33 = arith.constant 0 : index
    %c0_34 = arith.constant 0 : index
    %44 = vector.load %arg2[%c0_33, %c0_34] : memref<8x128xf32, #tpu.memory_space<vmem>>, vector<8x128xf32>
    %c0_35 = arith.constant 0 : index
    %c0_36 = arith.constant 0 : index
    %45 = vector.load %arg15[%c0_35, %c0_36] : memref<128x256xbf16, #tpu.memory_space<vmem>>, vector<128x256xbf16>
    %46 = arith.truncf %44 : vector<8x128xf32> to vector<8x128xbf16>
    %cst_37 = arith.constant dense<0.000000e+00> : vector<8x256xf32>
    %47 = tpu.matmul %46, %45, %cst_37 {dimension_numbers = #tpu.dot_dimension_numbers<[1], [0], [0], [1], [0, 0, 1, 1], [], []>} : vector<8x128xbf16>, vector<128x256xbf16>, vector<8x256xf32> -> vector<8x256xf32>
    %48 = arith.addf %43, %47 : vector<8x256xf32>
    %c0_38 = arith.constant 0 : index
    %c0_39 = arith.constant 0 : index
    %49 = vector.load %arg16[%c0_38, %c0_39] : memref<1x256xf32, #tpu.memory_space<vmem>>, vector<1x256xf32>
    %50 = vector.broadcast %49 : vector<1x256xf32> to vector<8x256xf32>
    %51 = arith.addf %48, %50 : vector<8x256xf32>
    %cst_40 = arith.constant 0.000000e+00 : f32
    %52 = vector.broadcast %cst_40 : f32 to vector<8x256xf32>
    %53 = arith.maximumf %51, %52 : vector<8x256xf32>
    %c0_41 = arith.constant 0 : index
    %c0_42 = arith.constant 0 : index
    %54 = vector.load %arg17[%c0_41, %c0_42] : memref<256x128xbf16, #tpu.memory_space<vmem>>, vector<256x128xbf16>
    %55 = arith.truncf %53 : vector<8x256xf32> to vector<8x256xbf16>
    %cst_43 = arith.constant dense<0.000000e+00> : vector<8x128xf32>
    %56 = tpu.matmul %55, %54, %cst_43 {dimension_numbers = #tpu.dot_dimension_numbers<[1], [0], [0], [1], [0, 0, 1, 1], [], []>} : vector<8x256xbf16>, vector<256x128xbf16>, vector<8x128xf32> -> vector<8x128xf32>
    %c0_44 = arith.constant 0 : index
    %c0_45 = arith.constant 0 : index
    %57 = vector.load %arg18[%c0_44, %c0_45] : memref<1x128xf32, #tpu.memory_space<vmem>>, vector<1x128xf32>
    %58 = vector.broadcast %57 : vector<1x128xf32> to vector<8x128xf32>
    %59 = arith.addf %56, %58 : vector<8x128xf32>
    %cst_46 = arith.constant 0.000000e+00 : f32
    %60 = vector.broadcast %cst_46 : f32 to vector<8x128xf32>
    %61 = arith.maximumf %59, %60 : vector<8x128xf32>
    %c0_47 = arith.constant 0 : index
    %c0_48 = arith.constant 0 : index
    %62 = vector.load %arg19[%c0_47, %c0_48] : memref<128x256xbf16, #tpu.memory_space<vmem>>, vector<128x256xbf16>
    %63 = arith.truncf %61 : vector<8x128xf32> to vector<8x128xbf16>
    %cst_49 = arith.constant dense<0.000000e+00> : vector<8x256xf32>
    %64 = tpu.matmul %63, %62, %cst_49 {dimension_numbers = #tpu.dot_dimension_numbers<[1], [0], [0], [1], [0, 0, 1, 1], [], []>} : vector<8x128xbf16>, vector<128x256xbf16>, vector<8x256xf32> -> vector<8x256xf32>
    %c0_50 = arith.constant 0 : index
    %c0_51 = arith.constant 0 : index
    %65 = vector.load %arg20[%c0_50, %c0_51] : memref<1x256xf32, #tpu.memory_space<vmem>>, vector<1x256xf32>
    %66 = vector.broadcast %65 : vector<1x256xf32> to vector<8x256xf32>
    %67 = arith.addf %64, %66 : vector<8x256xf32>
    %c0_52 = arith.constant 0 : index
    %c0_53 = arith.constant 0 : index
    %68 = vector.load %arg3[%c0_52, %c0_53] : memref<8x256xf32, #tpu.memory_space<vmem>>, vector<8x256xf32>
    %69 = arith.addf %67, %68 : vector<8x256xf32>
    %cst_54 = arith.constant dense<0xFF800000> : vector<8xf32>
    %70 = vector.multi_reduction <maximumf>, %69, %cst_54 [1] : vector<8x256xf32> to vector<8xf32>
    %71 = vector.shape_cast %70 : vector<8xf32> to vector<8x1xf32>
    %72 = vector.broadcast %71 : vector<8x1xf32> to vector<8x256xf32>
    %73 = arith.subf %69, %72 : vector<8x256xf32>
    %74 = math.exp %73 : vector<8x256xf32>
    %cst_55 = arith.constant dense<0.000000e+00> : vector<8xf32>
    %75 = vector.multi_reduction <add>, %74, %cst_55 [1] : vector<8x256xf32> to vector<8xf32>
    %76 = vector.shape_cast %75 : vector<8xf32> to vector<8x1xf32>
    %77 = vector.broadcast %76 : vector<8x1xf32> to vector<8x256xf32>
    %78 = arith.divf %74, %77 : vector<8x256xf32>
    %c0_56 = arith.constant 0 : index
    %c0_57 = arith.constant 0 : index
    %79 = vector.load %arg23[%c0_56, %c0_57] : memref<8x256xf32, #tpu.memory_space<vmem>>, vector<8x256xf32>
    tpu.vector_store %arg23[%c0_56, %c0_57], %78 {strides = array<i32>} : memref<8x256xf32, #tpu.memory_space<vmem>>, vector<8x256xf32>,
    %c0_58 = arith.constant 0 : index
    %c0_59 = arith.constant 0 : index
    %80 = vector.load %arg21[%c0_58, %c0_59] : memref<128x128xbf16, #tpu.memory_space<vmem>>, vector<128x128xbf16>
    %81 = arith.truncf %61 : vector<8x128xf32> to vector<8x128xbf16>
    %cst_60 = arith.constant dense<0.000000e+00> : vector<8x128xf32>
    %82 = tpu.matmul %81, %80, %cst_60 {dimension_numbers = #tpu.dot_dimension_numbers<[1], [0], [0], [1], [0, 0, 1, 1], [], []>} : vector<8x128xbf16>, vector<128x128xbf16>, vector<8x128xf32> -> vector<8x128xf32>
    %c0_61 = arith.constant 0 : index
    %c0_62 = arith.constant 0 : index
    %83 = vector.load %arg22[%c0_61, %c0_62] : memref<1x128xf32, #tpu.memory_space<vmem>>, vector<1x128xf32>
    %84 = vector.broadcast %83 : vector<1x128xf32> to vector<8x128xf32>
    %85 = arith.addf %82, %84 : vector<8x128xf32>
    %86 = math.tanh %85 : vector<8x128xf32>
    %c0_63 = arith.constant 0 : index
    %c0_64 = arith.constant 0 : index
    %87 = vector.load %arg24[%c0_63, %c0_64] : memref<8x128xf32, #tpu.memory_space<vmem>>, vector<8x128xf32>
    tpu.vector_store %arg24[%c0_63, %c0_64], %86 {strides = array<i32>} : memref<8x128xf32, #tpu.memory_space<vmem>>, vector<8x128xf32>,
    return
  }
  func.func @transform_0(%arg0: i32) -> (i32, i32) {
    %c0_i32 = arith.constant 0 : i32
    %c0_i32_0 = arith.constant 0 : i32
    return %arg0, %c0_i32 : i32, i32
  }
  func.func @transform_1(%arg0: i32) -> (i32, i32) {
    %c0_i32 = arith.constant 0 : i32
    %c0_i32_0 = arith.constant 0 : i32
    return %arg0, %c0_i32 : i32, i32
  }
  func.func @transform_2(%arg0: i32) -> (i32, i32) {
    %c0_i32 = arith.constant 0 : i32
    %c0_i32_0 = arith.constant 0 : i32
    return %arg0, %c0_i32 : i32, i32
  }
  func.func @transform_3(%arg0: i32) -> (i32, i32) {
    %c0_i32 = arith.constant 0 : i32
    %c0_i32_0 = arith.constant 0 : i32
    %c0_i32_1 = arith.constant 0 : i32
    return %c0_i32, %c0_i32_0 : i32, i32
  }
  func.func @transform_4(%arg0: i32) -> (i32, i32) {
    %c0_i32 = arith.constant 0 : i32
    %c0_i32_0 = arith.constant 0 : i32
    %c0_i32_1 = arith.constant 0 : i32
    return %c0_i32, %c0_i32_0 : i32, i32
  }
  func.func @transform_5(%arg0: i32) -> (i32, i32) {
    %c0_i32 = arith.constant 0 : i32
    %c0_i32_0 = arith.constant 0 : i32
    %c0_i32_1 = arith.constant 0 : i32
    return %c0_i32, %c0_i32_0 : i32, i32
  }
  func.func @transform_6(%arg0: i32) -> (i32, i32) {
    %c0_i32 = arith.constant 0 : i32
    %c0_i32_0 = arith.constant 0 : i32
    %c0_i32_1 = arith.constant 0 : i32
    return %c0_i32, %c0_i32_0 : i32, i32
  }
  func.func @transform_7(%arg0: i32) -> (i32, i32) {
    %c0_i32 = arith.constant 0 : i32
    %c0_i32_0 = arith.constant 0 : i32
    %c0_i32_1 = arith.constant 0 : i32
    return %c0_i32, %c0_i32_0 : i32, i32
  }
  func.func @transform_8(%arg0: i32) -> (i32, i32) {
    %c0_i32 = arith.constant 0 : i32
    %c0_i32_0 = arith.constant 0 : i32
    %c0_i32_1 = arith.constant 0 : i32
    return %c0_i32, %c0_i32_0 : i32, i32
  }
  func.func @transform_9(%arg0: i32) -> (i32, i32) {
    %c0_i32 = arith.constant 0 : i32
    %c0_i32_0 = arith.constant 0 : i32
    %c0_i32_1 = arith.constant 0 : i32
    return %c0_i32, %c0_i32_0 : i32, i32
  }
  func.func @transform_10(%arg0: i32) -> (i32, i32) {
    %c0_i32 = arith.constant 0 : i32
    %c0_i32_0 = arith.constant 0 : i32
    %c0_i32_1 = arith.constant 0 : i32
    return %c0_i32, %c0_i32_0 : i32, i32
  }
  func.func @transform_11(%arg0: i32) -> (i32, i32) {
    %c0_i32 = arith.constant 0 : i32
    %c0_i32_0 = arith.constant 0 : i32
    %c0_i32_1 = arith.constant 0 : i32
    return %c0_i32, %c0_i32_0 : i32, i32
  }
  func.func @transform_12(%arg0: i32) -> (i32, i32) {
    %c0_i32 = arith.constant 0 : i32
    %c0_i32_0 = arith.constant 0 : i32
    %c0_i32_1 = arith.constant 0 : i32
    return %c0_i32, %c0_i32_0 : i32, i32
  }
  func.func @transform_13(%arg0: i32) -> (i32, i32) {
    %c0_i32 = arith.constant 0 : i32
    %c0_i32_0 = arith.constant 0 : i32
    %c0_i32_1 = arith.constant 0 : i32
    return %c0_i32, %c0_i32_0 : i32, i32
  }
  func.func @transform_14(%arg0: i32) -> (i32, i32) {
    %c0_i32 = arith.constant 0 : i32
    %c0_i32_0 = arith.constant 0 : i32
    %c0_i32_1 = arith.constant 0 : i32
    return %c0_i32, %c0_i32_0 : i32, i32
  }
  func.func @transform_15(%arg0: i32) -> (i32, i32) {
    %c0_i32 = arith.constant 0 : i32
    %c0_i32_0 = arith.constant 0 : i32
    %c0_i32_1 = arith.constant 0 : i32
    return %c0_i32, %c0_i32_0 : i32, i32
  }
  func.func @transform_16(%arg0: i32) -> (i32, i32) {
    %c0_i32 = arith.constant 0 : i32
    %c0_i32_0 = arith.constant 0 : i32
    %c0_i32_1 = arith.constant 0 : i32
    return %c0_i32, %c0_i32_0 : i32, i32
  }
  func.func @transform_17(%arg0: i32) -> (i32, i32) {
    %c0_i32 = arith.constant 0 : i32
    %c0_i32_0 = arith.constant 0 : i32
    %c0_i32_1 = arith.constant 0 : i32
    return %c0_i32, %c0_i32_0 : i32, i32
  }
  func.func @transform_18(%arg0: i32) -> (i32, i32) {
    %c0_i32 = arith.constant 0 : i32
    %c0_i32_0 = arith.constant 0 : i32
    %c0_i32_1 = arith.constant 0 : i32
    return %c0_i32, %c0_i32_0 : i32, i32
  }
  func.func @transform_19(%arg0: i32) -> (i32, i32) {
    %c0_i32 = arith.constant 0 : i32
    %c0_i32_0 = arith.constant 0 : i32
    %c0_i32_1 = arith.constant 0 : i32
    return %c0_i32, %c0_i32_0 : i32, i32
  }
  func.func @transform_20(%arg0: i32) -> (i32, i32) {
    %c0_i32 = arith.constant 0 : i32
    %c0_i32_0 = arith.constant 0 : i32
    %c0_i32_1 = arith.constant 0 : i32
    return %c0_i32, %c0_i32_0 : i32, i32
  }
  func.func @transform_21(%arg0: i32) -> (i32, i32) {
    %c0_i32 = arith.constant 0 : i32
    %c0_i32_0 = arith.constant 0 : i32
    %c0_i32_1 = arith.constant 0 : i32
    return %c0_i32, %c0_i32_0 : i32, i32
  }
  func.func @transform_22(%arg0: i32) -> (i32, i32) {
    %c0_i32 = arith.constant 0 : i32
    %c0_i32_0 = arith.constant 0 : i32
    return %arg0, %c0_i32 : i32, i32
  }
  func.func @transform_23(%arg0: i32) -> (i32, i32) {
    %c0_i32 = arith.constant 0 : i32
    %c0_i32_0 = arith.constant 0 : i32
    return %arg0, %c0_i32 : i32, i32
  }
}

</mosaic_0001>

<llo_original>
// kernel: abalone_forward.1
$region0: #{abalone_forward.1}
  #allocation0 [shape = 'u32[]', space=smem, size = 0x4, offset = 0x4, fixed_abs, tag = 'smem constant byte address 0x4 - core index']
  #allocation1 [shape = 'u32[72,128]{1,0:T(1,128)}', space=vmem, size = 0x9000, scoped, tag = 'internal scratch']
  %s0 = inlined_call_operand.vmem [shape: f32[8,256], index: 0, kind: input, shape index: {}]
  %s1 = inlined_call_operand.vmem [shape: f32[8,128], index: 1, kind: input, shape index: {}]
  %s2 = inlined_call_operand.vmem [shape: f32[8,256], index: 2, kind: input, shape index: {}]
  %s3 = inlined_call_operand.hbm [shape: bf16[256,256], index: 3, kind: input, shape index: {}]
  %s4 = inlined_call_operand.hbm [shape: f32[1,256], index: 4, kind: input, shape index: {}]
  %s5 = inlined_call_operand.hbm [shape: bf16[256,384], index: 5, kind: input, shape index: {}]
  %s6 = inlined_call_operand.hbm [shape: f32[1,384], index: 6, kind: input, shape index: {}]
  %s7 = inlined_call_operand.hbm [shape: bf16[384,768], index: 7, kind: input, shape index: {}]
  %s8 = inlined_call_operand.hbm [shape: f32[1,768], index: 8, kind: input, shape index: {}]
  %s9 = inlined_call_operand.hbm [shape: bf16[768,1408], index: 9, kind: input, shape index: {}]
  %s10 = inlined_call_operand.hbm [shape: f32[1,1408], index: 10, kind: input, shape index: {}]
  %s11 = inlined_call_operand.hbm [shape: bf16[1408,128], index: 11, kind: input, shape index: {}]
  %s12 = inlined_call_operand.hbm [shape: f32[1,128], index: 12, kind: input, shape index: {}]
  %s13 = inlined_call_operand.hbm [shape: bf16[128,256], index: 13, kind: input, shape index: {}]
  %s14 = inlined_call_operand.hbm [shape: bf16[128,256], index: 14, kind: input, shape index: {}]
  %s15 = inlined_call_operand.hbm [shape: f32[1,256], index: 15, kind: input, shape index: {}]
  %s16 = inlined_call_operand.hbm [shape: bf16[256,128], index: 16, kind: input, shape index: {}]
  %s17 = inlined_call_operand.hbm [shape: f32[1,128], index: 17, kind: input, shape index: {}]
  %s18 = inlined_call_operand.hbm [shape: bf16[128,256], index: 18, kind: input, shape index: {}]
  %s19 = inlined_call_operand.hbm [shape: f32[1,256], index: 19, kind: input, shape index: {}]
  %s20 = inlined_call_operand.hbm [shape: bf16[128,128], index: 20, kind: input, shape index: {}]
  %s21 = inlined_call_operand.hbm [shape: f32[1,128], index: 21, kind: input, shape index: {}]
  %s22 = inlined_call_operand.vmem [shape: f32[8,256], index: 22, kind: output, shape index: {0}]
  %s23 = inlined_call_operand.vmem [shape: f32[8,128], index: 23, kind: output, shape index: {1}]
  %24 = xla_tuple %s22, %s23
  %s25 = sld [smem:[#allocation0]]
  $region182: #{abalone_forward.1} parent=0
    _
  %s27 = ssub.s32 1, %s25
  %s28 = scalar_select 0, %s27, %s25
  $region1: #{abalone_forward.1} parent=0
    #allocation2 [shape = 'u8[131072]{0}', space=vmem, size = 0x20000, scoped, tag = 'input window, operand 3, single buffered']
    #allocation3 [shape = 's32[1]{0}', space=sflag, size = 0x4, scoped, tag = 'scoped memory for abalone_forward.1']
    #allocation4 [shape = 'u8[1024]{0}', space=vmem, size = 0x400, scoped, tag = 'input window, operand 4, single buffered']
    #allocation5 [shape = 's32[1]{0}', space=sflag, size = 0x4, scoped, tag = 'scoped memory for abalone_forward.1']
    #allocation6 [shape = 'u8[196608]{0}', space=vmem, size = 0x30000, scoped, tag = 'input window, operand 5, single buffered']
    #allocation7 [shape = 'u8[1536]{0}', space=vmem, size = 0x800, scoped, tag = 'input window, operand 6, single buffered']
    #allocation8 [shape = 's32[1]{0}', space=sflag, size = 0x4, scoped, tag = 'scoped memory for abalone_forward.1']
    #allocation9 [shape = 'u8[589824]{0}', space=vmem, size = 0x90000, scoped, tag = 'input window, operand 7, single buffered']
    #allocation10 [shape = 'u8[3072]{0}', space=vmem, size = 0xc00, scoped, tag = 'input window, operand 8, single buffered']
    #allocation11 [shape = 's32[1]{0}', space=sflag, size = 0x4, scoped, tag = 'scoped memory for abalone_forward.1']
    #allocation12 [shape = 'u8[2162688]{0}', space=vmem, size = 0x210000, scoped, tag = 'input window, operand 9, single buffered']
    #allocation13 [shape = 'u8[5632]{0}', space=vmem, size = 0x1800, scoped, tag = 'input window, operand 10, single buffered']
    #allocation14 [shape = 's32[1]{0}', space=sflag, size = 0x4, scoped, tag = 'scoped memory for abalone_forward.1']
    #allocation15 [shape = 'u8[360448]{0}', space=vmem, size = 0x58000, scoped, tag = 'input window, operand 11, single buffered']
    #allocation16 [shape = 'u8[512]{0}', space=vmem, size = 0x400, scoped, tag = 'input window, operand 12, single buffered']
    #allocation17 [shape = 's32[1]{0}', space=sflag, size = 0x4, scoped, tag = 'scoped memory for abalone_forward.1']
    #allocation18 [shape = 'u8[65536]{0}', space=vmem, size = 0x10000, scoped, tag = 'input window, operand 13, single buffered']
    #allocation19 [shape = 'u8[65536]{0}', space=vmem, size = 0x10000, scoped, tag = 'input window, operand 14, single buffered']
    #allocation20 [shape = 's32[1]{0}', space=sflag, size = 0x4, scoped, tag = 'scoped memory for abalone_forward.1']
    #allocation21 [shape = 'u8[1024]{0}', space=vmem, size = 0x400, scoped, tag = 'input window, operand 15, single buffered']
    #allocation22 [shape = 'u8[65536]{0}', space=vmem, size = 0x10000, scoped, tag = 'input window, operand 16, single buffered']
    #allocation23 [shape = 's32[1]{0}', space=sflag, size = 0x4, scoped, tag = 'scoped memory for abalone_forward.1']
    #allocation24 [shape = 'u8[512]{0}', space=vmem, size = 0x400, scoped, tag = 'input window, operand 17, single buffered']
    #allocation25 [shape = 'u8[65536]{0}', space=vmem, size = 0x10000, scoped, tag = 'input window, operand 18, single buffered']
    #allocation26 [shape = 's32[1]{0}', space=sflag, size = 0x4, scoped, tag = 'scoped memory for abalone_forward.1']
    #allocation27 [shape = 'u8[1024]{0}', space=vmem, size = 0x400, scoped, tag = 'input window, operand 19, single buffered']
    #allocation28 [shape = 'u8[32768]{0}', space=vmem, size = 0x8000, scoped, tag = 'input window, operand 20, single buffered']
    #allocation29 [shape = 's32[1]{0}', space=sflag, size = 0x4, scoped, tag = 'scoped memory for abalone_forward.1']
    #allocation30 [shape = 'u8[512]{0}', space=vmem, size = 0x400, scoped, tag = 'input window, operand 21, single buffered']
    %29 = vsyncpa [#allocation3], 0
    %30 = vsyncpa [#allocation5], 0
    %31 = vsyncpa [#allocation8], 0
    %32 = vsyncpa [#allocation11], 0
    %33 = vsyncpa [#allocation14], 0
    %34 = vsyncpa [#allocation17], 0
    %35 = vsyncpa [#allocation20], 0
    %36 = vsyncpa [#allocation23], 0
    %37 = vsyncpa [#allocation26], 0
    %38 = vsyncpa [#allocation29], 0
    // Predicated region
    $region2: #{abalone_forward.1} parent=1 // pred_check
      _
    $region3: #{abalone_forward.1} parent=1 // pred_check_branch
      %40 = sbr.rel (0) target = $region5
    $region4: #{abalone_forward.1} parent=1 // pred_region
      _
    $region5: #{abalone_forward.1} parent=1 // pred_fallthru
      _
    // Predicated region
    $region6: #{abalone_forward.1} parent=1 // pred_check
      _
    $region7: #{abalone_forward.1} parent=1 // pred_check_branch
      %42 = sbr.rel (0) target = $region9
    $region8: #{abalone_forward.1} parent=1 // pred_region
      _
    $region9: #{abalone_forward.1} parent=1 // pred_fallthru
      _
    // Predicated region
    $region10: #{abalone_forward.1} parent=1 // pred_check
      _
    $region11: #{abalone_forward.1} parent=1 // pred_check_branch
      %44 = sbr.rel (0) target = $region13
    $region12: #{abalone_forward.1} parent=1 // pred_region
      _
    $region13: #{abalone_forward.1} parent=1 // pred_fallthru
      _
    // Predicated region
    $region14: #{abalone_forward.1} parent=1 // pred_check
      _
    $region15: #{abalone_forward.1} parent=1 // pred_check_branch
      %46 = sbr.rel (0) target = $region17
    $region16: #{abalone_forward.1} parent=1 // pred_region
      %48 = vsyncadd [#allocation3], 0
      %s49 = sshll.u32 %s3, 4
      %s50 = int_to_ptr.hbm [resolvable:$true] %s49
      %s51 = sshll.u32 [#allocation2], 4
      %s52 = int_to_ptr.vmem [resolvable:$true] %s51
      %57 = dma.hbm_to_vmem [thread:$0]  %s50, 4096, %s52, [#allocation3], 128, 128, 8
    $region17: #{abalone_forward.1} parent=1 // pred_fallthru
      _
    // Predicated region
    $region18: #{abalone_forward.1} parent=1 // pred_check
      _
    $region19: #{abalone_forward.1} parent=1 // pred_check_branch
      %59 = sbr.rel (0) target = $region21
    $region20: #{abalone_forward.1} parent=1 // pred_region
      %61 = vsyncadd [#allocation5], 0
      %s63 = sshll.u32 %s4, 4
      %s64 = int_to_ptr.hbm [resolvable:$true] %s63
      %s65 = sshll.u32 [#allocation4], 4
      %s66 = int_to_ptr.vmem [resolvable:$true] %s65
      %68 = dma.hbm_to_vmem [thread:$0]  %s64, 32, %s66, [#allocation5]
    $region21: #{abalone_forward.1} parent=1 // pred_fallthru
      _
    // Predicated region
    $region22: #{abalone_forward.1} parent=1 // pred_check
      _
    $region23: #{abalone_forward.1} parent=1 // pred_check_branch
      %70 = sbr.rel (0) target = $region25
    $region24: #{abalone_forward.1} parent=1 // pred_region
      %72 = vsyncadd [#allocation5], 0
      %s73 = sshll.u32 %s5, 4
      %s74 = int_to_ptr.hbm [resolvable:$true] %s73
      %s75 = sshll.u32 [#allocation6], 4
      %s76 = int_to_ptr.vmem [resolvable:$true] %s75
      %81 = dma.hbm_to_vmem [thread:$0]  %s74, 6144, %s76, [#allocation5], 192, 192, 12
    $region25: #{abalone_forward.1} parent=1 // pred_fallthru
      _
    // Predicated region
    $region26: #{abalone_forward.1} parent=1 // pred_check
      _
    $region27: #{abalone_forward.1} parent=1 // pred_check_branch
      %83 = sbr.rel (0) target = $region29
    $region28: #{abalone_forward.1} parent=1 // pred_region
      %85 = vsyncadd [#allocation8], 0
      %s87 = sshll.u32 %s6, 4
      %s88 = int_to_ptr.hbm [resolvable:$true] %s87
      %s89 = sshll.u32 [#allocation7], 4
      %s90 = int_to_ptr.vmem [resolvable:$true] %s89
      %92 = dma.hbm_to_vmem [thread:$0]  %s88, 48, %s90, [#allocation8]
    $region29: #{abalone_forward.1} parent=1 // pred_fallthru
      _
    // Predicated region
    $region30: #{abalone_forward.1} parent=1 // pred_check
      _
    $region31: #{abalone_forward.1} parent=1 // pred_check_branch
      %94 = sbr.rel (0) target = $region33
    $region32: #{abalone_forward.1} parent=1 // pred_region
      %96 = vsyncadd [#allocation8], 0
      %s97 = sshll.u32 %s7, 4
      %s98 = int_to_ptr.hbm [resolvable:$true] %s97
      %s99 = sshll.u32 [#allocation9], 4
      %s100 = int_to_ptr.vmem [resolvable:$true] %s99
      %105 = dma.hbm_to_vmem [thread:$0]  %s98, 18432, %s100, [#allocation8], 384, 384, 24
    $region33: #{abalone_forward.1} parent=1 // pred_fallthru
      _
    // Predicated region
    $region34: #{abalone_forward.1} parent=1 // pred_check
      _
    $region35: #{abalone_forward.1} parent=1 // pred_check_branch
      %107 = sbr.rel (0) target = $region37
    $region36: #{abalone_forward.1} parent=1 // pred_region
      %109 = vsyncadd [#allocation11], 0
      %s111 = sshll.u32 %s8, 4
      %s112 = int_to_ptr.hbm [resolvable:$true] %s111
      %s113 = sshll.u32 [#allocation10], 4
      %s114 = int_to_ptr.vmem [resolvable:$true] %s113
      %116 = dma.hbm_to_vmem [thread:$0]  %s112, 96, %s114, [#allocation11]
    $region37: #{abalone_forward.1} parent=1 // pred_fallthru
      _
    // Predicated region
    $region38: #{abalone_forward.1} parent=1 // pred_check
      _
    $region39: #{abalone_forward.1} parent=1 // pred_check_branch
      %118 = sbr.rel (0) target = $region41
    $region40: #{abalone_forward.1} parent=1 // pred_region
      %120 = vsyncadd [#allocation11], 0
      %s121 = sshll.u32 %s9, 4
      %s122 = int_to_ptr.hbm [resolvable:$true] %s121
      %s123 = sshll.u32 [#allocation12], 4
      %s124 = int_to_ptr.vmem [resolvable:$true] %s123
      %129 = dma.hbm_to_vmem [thread:$0]  %s122, 67584, %s124, [#allocation11], 704, 704, 44
    $region41: #{abalone_forward.1} parent=1 // pred_fallthru
      _
    // Predicated region
    $region42: #{abalone_forward.1} parent=1 // pred_check
      _
    $region43: #{abalone_forward.1} parent=1 // pred_check_branch
      %131 = sbr.rel (0) target = $region45
    $region44: #{abalone_forward.1} parent=1 // pred_region
      %133 = vsyncadd [#allocation14], 0
      %s135 = sshll.u32 %s10, 4
      %s136 = int_to_ptr.hbm [resolvable:$true] %s135
      %s137 = sshll.u32 [#allocation13], 4
      %s138 = int_to_ptr.vmem [resolvable:$true] %s137
      %140 = dma.hbm_to_vmem [thread:$0]  %s136, 176, %s138, [#allocation14]
    $region45: #{abalone_forward.1} parent=1 // pred_fallthru
      _
    // Predicated region
    $region46: #{abalone_forward.1} parent=1 // pred_check
      _
    $region47: #{abalone_forward.1} parent=1 // pred_check_branch
      %142 = sbr.rel (0) target = $region49
    $region48: #{abalone_forward.1} parent=1 // pred_region
      %144 = vsyncadd [#allocation14], 0
      %s145 = sshll.u32 %s11, 4
      %s146 = int_to_ptr.hbm [resolvable:$true] %s145
      %s147 = sshll.u32 [#allocation15], 4
      %s148 = int_to_ptr.vmem [resolvable:$true] %s147
      %153 = dma.hbm_to_vmem [thread:$0]  %s146, 11264, %s148, [#allocation14], 64, 64, 4
    $region49: #{abalone_forward.1} parent=1 // pred_fallthru
      _
    // Predicated region
    $region50: #{abalone_forward.1} parent=1 // pred_check
      _
    $region51: #{abalone_forward.1} parent=1 // pred_check_branch
      %155 = sbr.rel (0) target = $region53
    $region52: #{abalone_forward.1} parent=1 // pred_region
      %157 = vsyncadd [#allocation17], 0
      %s159 = sshll.u32 %s12, 4
      %s160 = int_to_ptr.hbm [resolvable:$true] %s159
      %s161 = sshll.u32 [#allocation16], 4
      %s162 = int_to_ptr.vmem [resolvable:$true] %s161
      %164 = dma.hbm_to_vmem [thread:$0]  %s160, 16, %s162, [#allocation17]
    $region53: #{abalone_forward.1} parent=1 // pred_fallthru
      _
    // Predicated region
    $region54: #{abalone_forward.1} parent=1 // pred_check
      _
    $region55: #{abalone_forward.1} parent=1 // pred_check_branch
      %166 = sbr.rel (0) target = $region57
    $region56: #{abalone_forward.1} parent=1 // pred_region
      %168 = vsyncadd [#allocation17], 0
      %s169 = sshll.u32 %s13, 4
      %s170 = int_to_ptr.hbm [resolvable:$true] %s169
      %s171 = sshll.u32 [#allocation18], 4
      %s172 = int_to_ptr.vmem [resolvable:$true] %s171
      %177 = dma.hbm_to_vmem [thread:$0]  %s170, 2048, %s172, [#allocation17], 128, 128, 8
    $region57: #{abalone_forward.1} parent=1 // pred_fallthru
      _
    // Predicated region
    $region58: #{abalone_forward.1} parent=1 // pred_check
      _
    $region59: #{abalone_forward.1} parent=1 // pred_check_branch
      %179 = sbr.rel (0) target = $region61
    $region60: #{abalone_forward.1} parent=1 // pred_region
      %181 = vsyncadd [#allocation20], 0
      %s182 = sshll.u32 %s14, 4
      %s183 = int_to_ptr.hbm [resolvable:$true] %s182
      %s184 = sshll.u32 [#allocation19], 4
      %s185 = int_to_ptr.vmem [resolvable:$true] %s184
      %190 = dma.hbm_to_vmem [thread:$0]  %s183, 2048, %s185, [#allocation20], 128, 128, 8
    $region61: #{abalone_forward.1} parent=1 // pred_fallthru
      _
    // Predicated region
    $region62: #{abalone_forward.1} parent=1 // pred_check
      _
    $region63: #{abalone_forward.1} parent=1 // pred_check_branch
      %192 = sbr.rel (0) target = $region65
    $region64: #{abalone_forward.1} parent=1 // pred_region
      %194 = vsyncadd [#allocation20], 0
      %s196 = sshll.u32 %s15, 4
      %s197 = int_to_ptr.hbm [resolvable:$true] %s196
      %s198 = sshll.u32 [#allocation21], 4
      %s199 = int_to_ptr.vmem [resolvable:$true] %s198
      %201 = dma.hbm_to_vmem [thread:$0]  %s197, 32, %s199, [#allocation20]
    $region65: #{abalone_forward.1} parent=1 // pred_fallthru
      _
    // Predicated region
    $region66: #{abalone_forward.1} parent=1 // pred_check
      _
    $region67: #{abalone_forward.1} parent=1 // pred_check_branch
      %203 = sbr.rel (0) target = $region69
    $region68: #{abalone_forward.1} parent=1 // pred_region
      %205 = vsyncadd [#allocation23], 0
      %s206 = sshll.u32 %s16, 4
      %s207 = int_to_ptr.hbm [resolvable:$true] %s206
      %s208 = sshll.u32 [#allocation22], 4
      %s209 = int_to_ptr.vmem [resolvable:$true] %s208
      %214 = dma.hbm_to_vmem [thread:$0]  %s207, 2048, %s209, [#allocation23], 64, 64, 4
    $region69: #{abalone_forward.1} parent=1 // pred_fallthru
      _
    // Predicated region
    $region70: #{abalone_forward.1} parent=1 // pred_check
      _
    $region71: #{abalone_forward.1} parent=1 // pred_check_branch
      %216 = sbr.rel (0) target = $region73
    $region72: #{abalone_forward.1} parent=1 // pred_region
      %218 = vsyncadd [#allocation23], 0
      %s220 = sshll.u32 %s17, 4
      %s221 = int_to_ptr.hbm [resolvable:$true] %s220
      %s222 = sshll.u32 [#allocation24], 4
      %s223 = int_to_ptr.vmem [resolvable:$true] %s222
      %225 = dma.hbm_to_vmem [thread:$0]  %s221, 16, %s223, [#allocation23]
    $region73: #{abalone_forward.1} parent=1 // pred_fallthru
      _
    // Predicated region
    $region74: #{abalone_forward.1} parent=1 // pred_check
      _
    $region75: #{abalone_forward.1} parent=1 // pred_check_branch
      %227 = sbr.rel (0) target = $region77
    $region76: #{abalone_forward.1} parent=1 // pred_region
      %229 = vsyncadd [#allocation26], 0
      %s230 = sshll.u32 %s18, 4
      %s231 = int_to_ptr.hbm [resolvable:$true] %s230
      %s232 = sshll.u32 [#allocation25], 4
      %s233 = int_to_ptr.vmem [resolvable:$true] %s232
      %238 = dma.hbm_to_vmem [thread:$0]  %s231, 2048, %s233, [#allocation26], 128, 128, 8
    $region77: #{abalone_forward.1} parent=1 // pred_fallthru
      _
    // Predicated region
    $region78: #{abalone_forward.1} parent=1 // pred_check
      _
    $region79: #{abalone_forward.1} parent=1 // pred_check_branch
      %240 = sbr.rel (0) target = $region81
    $region80: #{abalone_forward.1} parent=1 // pred_region
      %242 = vsyncadd [#allocation26], 0
      %s244 = sshll.u32 %s19, 4
      %s245 = int_to_ptr.hbm [resolvable:$true] %s244
      %s246 = sshll.u32 [#allocation27], 4
      %s247 = int_to_ptr.vmem [resolvable:$true] %s246
      %249 = dma.hbm_to_vmem [thread:$0]  %s245, 32, %s247, [#allocation26]
    $region81: #{abalone_forward.1} parent=1 // pred_fallthru
      _
    // Predicated region
    $region82: #{abalone_forward.1} parent=1 // pred_check
      _
    $region83: #{abalone_forward.1} parent=1 // pred_check_branch
      %251 = sbr.rel (0) target = $region85
    $region84: #{abalone_forward.1} parent=1 // pred_region
      %253 = vsyncadd [#allocation29], 0
      %s254 = sshll.u32 %s20, 4
      %s255 = int_to_ptr.hbm [resolvable:$true] %s254
      %s256 = sshll.u32 [#allocation28], 4
      %s257 = int_to_ptr.vmem [resolvable:$true] %s256
      %262 = dma.hbm_to_vmem [thread:$0]  %s255, 1024, %s257, [#allocation29], 64, 64, 4
    $region85: #{abalone_forward.1} parent=1 // pred_fallthru
      _
    // Predicated region
    $region86: #{abalone_forward.1} parent=1 // pred_check
      _
    $region87: #{abalone_forward.1} parent=1 // pred_check_branch
      %264 = sbr.rel (0) target = $region89
    $region88: #{abalone_forward.1} parent=1 // pred_region
      %266 = vsyncadd [#allocation29], 0
      %s268 = sshll.u32 %s21, 4
      %s269 = int_to_ptr.hbm [resolvable:$true] %s268
      %s270 = sshll.u32 [#allocation30], 4
      %s271 = int_to_ptr.vmem [resolvable:$true] %s270
      %273 = dma.hbm_to_vmem [thread:$0]  %s269, 16, %s271, [#allocation29]
    $region89: #{abalone_forward.1} parent=1 // pred_fallthru
      _
    // Predicated region
    $region90: #{abalone_forward.1} parent=1 // pred_check
      _
    $region91: #{abalone_forward.1} parent=1 // pred_check_branch
      %275 = sbr.rel (0) target = $region93
    $region92: #{abalone_forward.1} parent=1 // pred_region
      %277 = dma.done [#allocation3], 4096
    $region93: #{abalone_forward.1} parent=1 // pred_fallthru
      _
    // Predicated region
    $region94: #{abalone_forward.1} parent=1 // pred_check
      _
    $region95: #{abalone_forward.1} parent=1 // pred_check_branch
      %279 = sbr.rel (0) target = $region97
    $region96: #{abalone_forward.1} parent=1 // pred_region
      %281 = dma.done [#allocation5], 32
    $region97: #{abalone_forward.1} parent=1 // pred_fallthru
      _
    // Predicated region
    $region98: #{abalone_forward.1} parent=1 // pred_check
      _
    $region99: #{abalone_forward.1} parent=1 // pred_check_branch
      %283 = sbr.rel (0) target = $region101
    $region100: #{abalone_forward.1} parent=1 // pred_region
      %285 = dma.done [#allocation5], 6144
    $region101: #{abalone_forward.1} parent=1 // pred_fallthru
      _
    // Predicated region
    $region102: #{abalone_forward.1} parent=1 // pred_check
      _
    $region103: #{abalone_forward.1} parent=1 // pred_check_branch
      %287 = sbr.rel (0) target = $region105
    $region104: #{abalone_forward.1} parent=1 // pred_region
      %289 = dma.done [#allocation8], 48
    $region105: #{abalone_forward.1} parent=1 // pred_fallthru
      _
    // Predicated region
    $region106: #{abalone_forward.1} parent=1 // pred_check
      _
    $region107: #{abalone_forward.1} parent=1 // pred_check_branch
      %291 = sbr.rel (0) target = $region109
    $region108: #{abalone_forward.1} parent=1 // pred_region
      %293 = dma.done [#allocation8], 18432
    $region109: #{abalone_forward.1} parent=1 // pred_fallthru
      _
    // Predicated region
    $region110: #{abalone_forward.1} parent=1 // pred_check
      _
    $region111: #{abalone_forward.1} parent=1 // pred_check_branch
      %295 = sbr.rel (0) target = $region113
    $region112: #{abalone_forward.1} parent=1 // pred_region
      %297 = dma.done [#allocation11], 96
    $region113: #{abalone_forward.1} parent=1 // pred_fallthru
      _
    // Predicated region
    $region114: #{abalone_forward.1} parent=1 // pred_check
      _
    $region115: #{abalone_forward.1} parent=1 // pred_check_branch
      %299 = sbr.rel (0) target = $region117
    $region116: #{abalone_forward.1} parent=1 // pred_region
      %301 = dma.done [#allocation11], 67584
    $region117: #{abalone_forward.1} parent=1 // pred_fallthru
      _
    // Predicated region
    $region118: #{abalone_forward.1} parent=1 // pred_check
      _
    $region119: #{abalone_forward.1} parent=1 // pred_check_branch
      %303 = sbr.rel (0) target = $region121
    $region120: #{abalone_forward.1} parent=1 // pred_region
      %305 = dma.done [#allocation14], 176
    $region121: #{abalone_forward.1} parent=1 // pred_fallthru
      _
    // Predicated region
    $region122: #{abalone_forward.1} parent=1 // pred_check
      _
    $region123: #{abalone_forward.1} parent=1 // pred_check_branch
      %307 = sbr.rel (0) target = $region125
    $region124: #{abalone_forward.1} parent=1 // pred_region
      %309 = dma.done [#allocation14], 11264
    $region125: #{abalone_forward.1} parent=1 // pred_fallthru
      _
    // Predicated region
    $region126: #{abalone_forward.1} parent=1 // pred_check
      _
    $region127: #{abalone_forward.1} parent=1 // pred_check_branch
      %311 = sbr.rel (0) target = $region129
    $region128: #{abalone_forward.1} parent=1 // pred_region
      %313 = dma.done [#allocation17], 16
    $region129: #{abalone_forward.1} parent=1 // pred_fallthru
      _
    // Predicated region
    $region130: #{abalone_forward.1} parent=1 // pred_check
      _
    $region131: #{abalone_forward.1} parent=1 // pred_check_branch
      %315 = sbr.rel (0) target = $region133
    $region132: #{abalone_forward.1} parent=1 // pred_region
      %317 = dma.done [#allocation17], 2048
    $region133: #{abalone_forward.1} parent=1 // pred_fallthru
      _
    // Predicated region
    $region134: #{abalone_forward.1} parent=1 // pred_check
      _
    $region135: #{abalone_forward.1} parent=1 // pred_check_branch
      %319 = sbr.rel (0) target = $region137
    $region136: #{abalone_forward.1} parent=1 // pred_region
      %321 = dma.done [#allocation20], 2048
    $region137: #{abalone_forward.1} parent=1 // pred_fallthru
      _
    // Predicated region
    $region138: #{abalone_forward.1} parent=1 // pred_check
      _
    $region139: #{abalone_forward.1} parent=1 // pred_check_branch
      %323 = sbr.rel (0) target = $region141
    $region140: #{abalone_forward.1} parent=1 // pred_region
      %325 = dma.done [#allocation20], 32
    $region141: #{abalone_forward.1} parent=1 // pred_fallthru
      _
    // Predicated region
    $region142: #{abalone_forward.1} parent=1 // pred_check
      _
    $region143: #{abalone_forward.1} parent=1 // pred_check_branch
      %327 = sbr.rel (0) target = $region145
    $region144: #{abalone_forward.1} parent=1 // pred_region
      %329 = dma.done [#allocation23], 2048
    $region145: #{abalone_forward.1} parent=1 // pred_fallthru
      _
    // Predicated region
    $region146: #{abalone_forward.1} parent=1 // pred_check
      _
    $region147: #{abalone_forward.1} parent=1 // pred_check_branch
      %331 = sbr.rel (0) target = $region149
    $region148: #{abalone_forward.1} parent=1 // pred_region
      %333 = dma.done [#allocation23], 16
    $region149: #{abalone_forward.1} parent=1 // pred_fallthru
      _
    // Predicated region
    $region150: #{abalone_forward.1} parent=1 // pred_check
      _
    $region151: #{abalone_forward.1} parent=1 // pred_check_branch
      %335 = sbr.rel (0) target = $region153
    $region152: #{abalone_forward.1} parent=1 // pred_region
      %337 = dma.done [#allocation26], 2048
    $region153: #{abalone_forward.1} parent=1 // pred_fallthru
      _
    // Predicated region
    $region154: #{abalone_forward.1} parent=1 // pred_check
      _
    $region155: #{abalone_forward.1} parent=1 // pred_check_branch
      %339 = sbr.rel (0) target = $region157
    $region156: #{abalone_forward.1} parent=1 // pred_region
      %341 = dma.done [#allocation26], 32
    $region157: #{abalone_forward.1} parent=1 // pred_fallthru
      _
    // Predicated region
    $region158: #{abalone_forward.1} parent=1 // pred_check
      _
    $region159: #{abalone_forward.1} parent=1 // pred_check_branch
      %343 = sbr.rel (0) target = $region161
    $region160: #{abalone_forward.1} parent=1 // pred_region
      %345 = dma.done [#allocation29], 1024
    $region161: #{abalone_forward.1} parent=1 // pred_fallthru
      _
    // Predicated region
    $region162: #{abalone_forward.1} parent=1 // pred_check
      _
    $region163: #{abalone_forward.1} parent=1 // pred_check_branch
      %347 = sbr.rel (0) target = $region165
    $region164: #{abalone_forward.1} parent=1 // pred_region
      %349 = dma.done [#allocation29], 16
    $region165: #{abalone_forward.1} parent=1 // pred_fallthru
      _
    %v350 = vld [vmem:[%s0] sm:$0xff]
    %v351 = vld [vmem:[%s0 + $0x8] sm:$0xff]
    %v352 = vld [vmem:[#allocation2] sm:$0xff]
    %v353 = vld [vmem:[#allocation2 + $0x8] sm:$0xff]
    %v354 = vld [vmem:[#allocation2 + $0x10] sm:$0xff]
    %v355 = vld [vmem:[#allocation2 + $0x18] sm:$0xff]
    %v356 = vld [vmem:[#allocation2 + $0x20] sm:$0xff]
    %v357 = vld [vmem:[#allocation2 + $0x28] sm:$0xff]
    %v358 = vld [vmem:[#allocation2 + $0x30] sm:$0xff]
    %v359 = vld [vmem:[#allocation2 + $0x38] sm:$0xff]
    %v360 = vld [vmem:[#allocation2 + $0x40] sm:$0xff]
    %v361 = vld [vmem:[#allocation2 + $0x48] sm:$0xff]
    %v362 = vld [vmem:[#allocation2 + $0x50] sm:$0xff]
    %v363 = vld [vmem:[#allocation2 + $0x58] sm:$0xff]
    %v364 = vld [vmem:[#allocation2 + $0x60] sm:$0xff]
    %v365 = vld [vmem:[#allocation2 + $0x68] sm:$0xff]
    %v366 = vld [vmem:[#allocation2 + $0x70] sm:$0xff]
    %v367 = vld [vmem:[#allocation2 + $0x78] sm:$0xff]
    %v368 = vld [vmem:[#allocation2 + $0x80] sm:$0xff]
    %v369 = vld [vmem:[#allocation2 + $0x88] sm:$0xff]
    %v370 = vld [vmem:[#allocation2 + $0x90] sm:$0xff]
    %v371 = vld [vmem:[#allocation2 + $0x98] sm:$0xff]
    %v372 = vld [vmem:[#allocation2 + $0xa0] sm:$0xff]
    %v373 = vld [vmem:[#allocation2 + $0xa8] sm:$0xff]
    %v374 = vld [vmem:[#allocation2 + $0xb0] sm:$0xff]
    %v375 = vld [vmem:[#allocation2 + $0xb8] sm:$0xff]
    %v376 = vld [vmem:[#allocation2 + $0xc0] sm:$0xff]
    %v377 = vld [vmem:[#allocation2 + $0xc8] sm:$0xff]
    %v378 = vld [vmem:[#allocation2 + $0xd0] sm:$0xff]
    %v379 = vld [vmem:[#allocation2 + $0xd8] sm:$0xff]
    %v380 = vld [vmem:[#allocation2 + $0xe0] sm:$0xff]
    %v381 = vld [vmem:[#allocation2 + $0xe8] sm:$0xff]
    %v382 = vld [vmem:[#allocation2 + $0xf0] sm:$0xff]
    %v383 = vld [vmem:[#allocation2 + $0xf8] sm:$0xff]
    %v384 = vpack.c.bf16 %v350, %v350
    %v385 = vpack.c.bf16 %v351, %v351
    %v386 = vld [vmem:[#allocation4] sm:$0x3]
    %v388 = vperm.slane %v386, 0
    %v389 = vperm.slane %v386, 1
    %v424 = vunpack.c.l.b16 %v352
    %v425 = vunpack.c.h.b16 %v352
    %v426 = vunpack.c.l.b16 %v353
    %v427 = vunpack.c.h.b16 %v353
    %v428 = vunpack.c.l.b16 %v354
    %v429 = vunpack.c.h.b16 %v354
    %v430 = vunpack.c.l.b16 %v355
    %v431 = vunpack.c.h.b16 %v355
    %v432 = vunpack.c.l.b16 %v356
    %v433 = vunpack.c.h.b16 %v356
    %v434 = vunpack.c.l.b16 %v357
    %v435 = vunpack.c.h.b16 %v357
    %v436 = vunpack.c.l.b16 %v358
    %v437 = vunpack.c.h.b16 %v358
    %v438 = vunpack.c.l.b16 %v359
    %v439 = vunpack.c.h.b16 %v359
    %v440 = vunpack.c.l.b16 %v360
    %v441 = vunpack.c.h.b16 %v360
    %v442 = vunpack.c.l.b16 %v361
    %v443 = vunpack.c.h.b16 %v361
    %v444 = vunpack.c.l.b16 %v362
    %v445 = vunpack.c.h.b16 %v362
    %v446 = vunpack.c.l.b16 %v363
    %v447 = vunpack.c.h.b16 %v363
    %v448 = vunpack.c.l.b16 %v364
    %v449 = vunpack.c.h.b16 %v364
    %v450 = vunpack.c.l.b16 %v365
    %v451 = vunpack.c.h.b16 %v365
    %v452 = vunpack.c.l.b16 %v366
    %v453 = vunpack.c.h.b16 %v366
    %v454 = vunpack.c.l.b16 %v367
    %v455 = vunpack.c.h.b16 %v367
    %v456 = vunpack.c.l.b16 %v368
    %v457 = vunpack.c.h.b16 %v368
    %v458 = vunpack.c.l.b16 %v369
    %v459 = vunpack.c.h.b16 %v369
    %v460 = vunpack.c.l.b16 %v370
    %v461 = vunpack.c.h.b16 %v370
    %v462 = vunpack.c.l.b16 %v371
    %v463 = vunpack.c.h.b16 %v371
    %v464 = vunpack.c.l.b16 %v372
    %v465 = vunpack.c.h.b16 %v372
    %v466 = vunpack.c.l.b16 %v373
    %v467 = vunpack.c.h.b16 %v373
    %v468 = vunpack.c.l.b16 %v374
    %v469 = vunpack.c.h.b16 %v374
    %v470 = vunpack.c.l.b16 %v375
    %v471 = vunpack.c.h.b16 %v375
    %v472 = vunpack.c.l.b16 %v376
    %v473 = vunpack.c.h.b16 %v376
    %v474 = vunpack.c.l.b16 %v377
    %v475 = vunpack.c.h.b16 %v377
    %v476 = vunpack.c.l.b16 %v378
    %v477 = vunpack.c.h.b16 %v378
    %v478 = vunpack.c.l.b16 %v379
    %v479 = vunpack.c.h.b16 %v379
    %v480 = vunpack.c.l.b16 %v380
    %v481 = vunpack.c.h.b16 %v380
    %v482 = vunpack.c.l.b16 %v381
    %v483 = vunpack.c.h.b16 %v381
    %v484 = vunpack.c.l.b16 %v382
    %v485 = vunpack.c.h.b16 %v382
    %v486 = vunpack.c.l.b16 %v383
    %v487 = vunpack.c.h.b16 %v383
    %v488 = vpack.c.b16 %v426, %v424
    %v489 = vpack.c.b16 %v427, %v425
    %v490 = vpack.c.b16 %v430, %v428
    %v491 = vpack.c.b16 %v431, %v429
    %v492 = vpack.c.b16 %v434, %v432
    %v493 = vpack.c.b16 %v435, %v433
    %v494 = vpack.c.b16 %v438, %v436
    %v495 = vpack.c.b16 %v439, %v437
    %v496 = vpack.c.b16 %v442, %v440
    %v497 = vpack.c.b16 %v443, %v441
    %v498 = vpack.c.b16 %v446, %v444
    %v499 = vpack.c.b16 %v447, %v445
    %v500 = vpack.c.b16 %v450, %v448
    %v501 = vpack.c.b16 %v451, %v449
    %v502 = vpack.c.b16 %v454, %v452
    %v503 = vpack.c.b16 %v455, %v453
    %v504 = vpack.c.b16 %v458, %v456
    %v505 = vpack.c.b16 %v459, %v457
    %v506 = vpack.c.b16 %v462, %v460
    %v507 = vpack.c.b16 %v463, %v461
    %v508 = vpack.c.b16 %v466, %v464
    %v509 = vpack.c.b16 %v467, %v465
    %v510 = vpack.c.b16 %v470, %v468
    %v511 = vpack.c.b16 %v471, %v469
    %v512 = vpack.c.b16 %v474, %v472
    %v513 = vpack.c.b16 %v475, %v473
    %v514 = vpack.c.b16 %v478, %v476
    %v515 = vpack.c.b16 %v479, %v477
    %v516 = vpack.c.b16 %v482, %v480
    %v517 = vpack.c.b16 %v483, %v481
    %v518 = vpack.c.b16 %v486, %v484
    %v519 = vpack.c.b16 %v487, %v485
    %552 = vmatpush.bf16.msra.mxu0 %v502
    %553 = vmatpush.bf16.msra.mxu0 %v500
    %554 = vmatpush.bf16.msra.mxu0 %v498
    %555 = vmatpush.bf16.msra.mxu0 %v496
    %556 = vmatpush.bf16.msra.mxu0 %v494
    %557 = vmatpush.bf16.msra.mxu0 %v492
    %558 = vmatpush.bf16.msra.mxu0 %v490
    %559 = vmatpush.bf16.msra.mxu0 %v488
    %560 = vmatmul.bf16.gmra.mxu0 %v384
    %v561 = vpop.f32.mrf.mxu0
    %v562 = vadd.f32 %v388, %v561
    %v563 = vpop.f32.mrf.mxu0
    %564 = vdwg.mxu0
    %565 = vmatpush.bf16.msra.mxu0 %v518
    %566 = vmatpush.bf16.msra.mxu0 %v516
    %567 = vmatpush.bf16.msra.mxu0 %v514
    %568 = vmatpush.bf16.msra.mxu0 %v512
    %569 = vmatpush.bf16.msra.mxu0 %v510
    %570 = vmatpush.bf16.msra.mxu0 %v508
    %571 = vmatpush.bf16.msra.mxu0 %v506
    %572 = vmatpush.bf16.msra.mxu0 %v504
    %573 = vmatmul.bf16.gmra.mxu0 %v385
    %v574 = vpop.f32.mrf.mxu0
    %v575 = vadd.f32 %v562, %v574
    %v576 = vpop.f32.mrf.mxu0
    %577 = vdwg.mxu0
    %578 = vmatpush.bf16.msra.mxu0 %v503
    %579 = vmatpush.bf16.msra.mxu0 %v501
    %580 = vmatpush.bf16.msra.mxu0 %v499
    %581 = vmatpush.bf16.msra.mxu0 %v497
    %582 = vmatpush.bf16.msra.mxu0 %v495
    %583 = vmatpush.bf16.msra.mxu0 %v493
    %584 = vmatpush.bf16.msra.mxu0 %v491
    %585 = vmatpush.bf16.msra.mxu0 %v489
    %586 = vmatmul.bf16.gmra.mxu0 %v384
    %v587 = vpop.f32.mrf.mxu0
    %v588 = vadd.f32 %v389, %v587
    %v589 = vpop.f32.mrf.mxu0
    %590 = vdwg.mxu0
    %591 = vmatpush.bf16.msra.mxu0 %v519
    %592 = vmatpush.bf16.msra.mxu0 %v517
    %593 = vmatpush.bf16.msra.mxu0 %v515
    %594 = vmatpush.bf16.msra.mxu0 %v513
    %595 = vmatpush.bf16.msra.mxu0 %v511
    %596 = vmatpush.bf16.msra.mxu0 %v509
    %597 = vmatpush.bf16.msra.mxu0 %v507
    %598 = vmatpush.bf16.msra.mxu0 %v505
    %599 = vmatmul.bf16.gmra.mxu0 %v385
    %v600 = vpop.f32.mrf.mxu0
    %v601 = vadd.f32 %v588, %v600
    %v602 = vpop.f32.mrf.mxu0
    %603 = vdwg.mxu0
    %v604 = vmax.f32 %v575, 0.0
    %v605 = vmax.f32 %v601, 0.0
    %v606 = vld [vmem:[#allocation6] sm:$0xff]
    %v607 = vld [vmem:[#allocation6 + $0x8] sm:$0xf]
    %v608 = vld [vmem:[#allocation6 + $0xc] sm:$0xff]
    %v609 = vld [vmem:[#allocation6 + $0x14] sm:$0xf]
    %v610 = vld [vmem:[#allocation6 + $0x18] sm:$0xff]
    %v611 = vld [vmem:[#allocation6 + $0x20] sm:$0xf]
    %v612 = vld [vmem:[#allocation6 + $0x24] sm:$0xff]
    %v613 = vld [vmem:[#allocation6 + $0x2c] sm:$0xf]
    %v614 = vld [vmem:[#allocation6 + $0x30] sm:$0xff]
    %v615 = vld [vmem:[#allocation6 + $0x38] sm:$0xf]
    %v616 = vld [vmem:[#allocation6 + $0x3c] sm:$0xff]
    %v617 = vld [vmem:[#allocation6 + $0x44] sm:$0xf]
    %v618 = vld [vmem:[#allocation6 + $0x48] sm:$0xff]
    %v619 = vld [vmem:[#allocation6 + $0x50] sm:$0xf]
    %v620 = vld [vmem:[#allocation6 + $0x54] sm:$0xff]
    %v621 = vld [vmem:[#allocation6 + $0x5c] sm:$0xf]
    %v622 = vld [vmem:[#allocation6 + $0x60] sm:$0xff]
    %v623 = vld [vmem:[#allocation6 + $0x68] sm:$0xf]
    %v624 = vld [vmem:[#allocation6 + $0x6c] sm:$0xff]
    %v625 = vld [vmem:[#allocation6 + $0x74] sm:$0xf]
    %v626 = vld [vmem:[#allocation6 + $0x78] sm:$0xff]
    %v627 = vld [vmem:[#allocation6 + $0x80] sm:$0xf]
    %v628 = vld [vmem:[#allocation6 + $0x84] sm:$0xff]
    %v629 = vld [vmem:[#allocation6 + $0x8c] sm:$0xf]
    %v630 = vld [vmem:[#allocation6 + $0x90] sm:$0xff]
    %v631 = vld [vmem:[#allocation6 + $0x98] sm:$0xf]
    %v632 = vld [vmem:[#allocation6 + $0x9c] sm:$0xff]
    %v633 = vld [vmem:[#allocation6 + $0xa4] sm:$0xf]
    %v634 = vld [vmem:[#allocation6 + $0xa8] sm:$0xff]
    %v635 = vld [vmem:[#allocation6 + $0xb0] sm:$0xf]
    %v636 = vld [vmem:[#allocation6 + $0xb4] sm:$0xff]
    %v637 = vld [vmem:[#allocation6 + $0xbc] sm:$0xf]
    %v638 = vld [vmem:[#allocation6 + $0xc0] sm:$0xff]
    %v639 = vld [vmem:[#allocation6 + $0xc8] sm:$0xf]
    %v640 = vld [vmem:[#allocation6 + $0xcc] sm:$0xff]
    %v641 = vld [vmem:[#allocation6 + $0xd4] sm:$0xf]
    %v642 = vld [vmem:[#allocation6 + $0xd8] sm:$0xff]
    %v643 = vld [vmem:[#allocation6 + $0xe0] sm:$0xf]
    %v644 = vld [vmem:[#allocation6 + $0xe4] sm:$0xff]
    %v645 = vld [vmem:[#allocation6 + $0xec] sm:$0xf]
    %v646 = vld [vmem:[#allocation6 + $0xf0] sm:$0xff]
    %v647 = vld [vmem:[#allocation6 + $0xf8] sm:$0xf]
    %v648 = vld [vmem:[#allocation6 + $0xfc] sm:$0xff]
    %v649 = vld [vmem:[#allocation6 + $0x104] sm:$0xf]
    %v650 = vld [vmem:[#allocation6 + $0x108] sm:$0xff]
    %v651 = vld [vmem:[#allocation6 + $0x110] sm:$0xf]
    %v652 = vld [vmem:[#allocation6 + $0x114] sm:$0xff]
    %v653 = vld [vmem:[#allocation6 + $0x11c] sm:$0xf]
    %v654 = vld [vmem:[#allocation6 + $0x120] sm:$0xff]
    %v655 = vld [vmem:[#allocation6 + $0x128] sm:$0xf]
    %v656 = vld [vmem:[#allocation6 + $0x12c] sm:$0xff]
    %v657 = vld [vmem:[#allocation6 + $0x134] sm:$0xf]
    %v658 = vld [vmem:[#allocation6 + $0x138] sm:$0xff]
    %v659 = vld [vmem:[#allocation6 + $0x140] sm:$0xf]
    %v660 = vld [vmem:[#allocation6 + $0x144] sm:$0xff]
    %v661 = vld [vmem:[#allocation6 + $0x14c] sm:$0xf]
    %v662 = vld [vmem:[#allocation6 + $0x150] sm:$0xff]
    %v663 = vld [vmem:[#allocation6 + $0x158] sm:$0xf]
    %v664 = vld [vmem:[#allocation6 + $0x15c] sm:$0xff]
    %v665 = vld [vmem:[#allocation6 + $0x164] sm:$0xf]
    %v666 = vld [vmem:[#allocation6 + $0x168] sm:$0xff]
    %v667 = vld [vmem:[#allocation6 + $0x170] sm:$0xf]
    %v668 = vld [vmem:[#allocation6 + $0x174] sm:$0xff]
    %v669 = vld [vmem:[#allocation6 + $0x17c] sm:$0xf]
    %v670 = vpack.c.bf16 %v604, %v604
    %v671 = vpack.c.bf16 %v605, %v605
    %v672 = vld [vmem:[#allocation7] sm:$0x7]
    %v674 = vperm.slane %v672, 0
    %v675 = vperm.slane %v672, 1
    %v676 = vperm.slane %v672, 2
    %v744 = vunpack.c.l.b16 %v606
    %v745 = vunpack.c.h.b16 %v606
    %v746 = vunpack.c.l.b16 %v607
    %v747 = vunpack.c.l.b16 %v608
    %v748 = vunpack.c.h.b16 %v608
    %v749 = vunpack.c.l.b16 %v609
    %v750 = vunpack.c.l.b16 %v610
    %v751 = vunpack.c.h.b16 %v610
    %v752 = vunpack.c.l.b16 %v611
    %v753 = vunpack.c.l.b16 %v612
    %v754 = vunpack.c.h.b16 %v612
    %v755 = vunpack.c.l.b16 %v613
    %v756 = vunpack.c.l.b16 %v614
    %v757 = vunpack.c.h.b16 %v614
    %v758 = vunpack.c.l.b16 %v615
    %v759 = vunpack.c.l.b16 %v616
    %v760 = vunpack.c.h.b16 %v616
    %v761 = vunpack.c.l.b16 %v617
    %v762 = vunpack.c.l.b16 %v618
    %v763 = vunpack.c.h.b16 %v618
    %v764 = vunpack.c.l.b16 %v619
    %v765 = vunpack.c.l.b16 %v620
    %v766 = vunpack.c.h.b16 %v620
    %v767 = vunpack.c.l.b16 %v621
    %v768 = vunpack.c.l.b16 %v622
    %v769 = vunpack.c.h.b16 %v622
    %v770 = vunpack.c.l.b16 %v623
    %v771 = vunpack.c.l.b16 %v624
    %v772 = vunpack.c.h.b16 %v624
    %v773 = vunpack.c.l.b16 %v625
    %v774 = vunpack.c.l.b16 %v626
    %v775 = vunpack.c.h.b16 %v626
    %v776 = vunpack.c.l.b16 %v627
    %v777 = vunpack.c.l.b16 %v628
    %v778 = vunpack.c.h.b16 %v628
    %v779 = vunpack.c.l.b16 %v629
    %v780 = vunpack.c.l.b16 %v630
    %v781 = vunpack.c.h.b16 %v630
    %v782 = vunpack.c.l.b16 %v631
    %v783 = vunpack.c.l.b16 %v632
    %v784 = vunpack.c.h.b16 %v632
    %v785 = vunpack.c.l.b16 %v633
    %v786 = vunpack.c.l.b16 %v634
    %v787 = vunpack.c.h.b16 %v634
    %v788 = vunpack.c.l.b16 %v635
    %v789 = vunpack.c.l.b16 %v636
    %v790 = vunpack.c.h.b16 %v636
    %v791 = vunpack.c.l.b16 %v637
    %v792 = vunpack.c.l.b16 %v638
    %v793 = vunpack.c.h.b16 %v638
    %v794 = vunpack.c.l.b16 %v639
    %v795 = vunpack.c.l.b16 %v640
    %v796 = vunpack.c.h.b16 %v640
    %v797 = vunpack.c.l.b16 %v641
    %v798 = vunpack.c.l.b16 %v642
    %v799 = vunpack.c.h.b16 %v642
    %v800 = vunpack.c.l.b16 %v643
    %v801 = vunpack.c.l.b16 %v644
    %v802 = vunpack.c.h.b16 %v644
    %v803 = vunpack.c.l.b16 %v645
    %v804 = vunpack.c.l.b16 %v646
    %v805 = vunpack.c.h.b16 %v646
    %v806 = vunpack.c.l.b16 %v647
    %v807 = vunpack.c.l.b16 %v648
    %v808 = vunpack.c.h.b16 %v648
    %v809 = vunpack.c.l.b16 %v649
    %v810 = vunpack.c.l.b16 %v650
    %v811 = vunpack.c.h.b16 %v650
    %v812 = vunpack.c.l.b16 %v651
    %v813 = vunpack.c.l.b16 %v652
    %v814 = vunpack.c.h.b16 %v652
    %v815 = vunpack.c.l.b16 %v653
    %v816 = vunpack.c.l.b16 %v654
    %v817 = vunpack.c.h.b16 %v654
    %v818 = vunpack.c.l.b16 %v655
    %v819 = vunpack.c.l.b16 %v656
    %v820 = vunpack.c.h.b16 %v656
    %v821 = vunpack.c.l.b16 %v657
    %v822 = vunpack.c.l.b16 %v658
    %v823 = vunpack.c.h.b16 %v658
    %v824 = vunpack.c.l.b16 %v659
    %v825 = vunpack.c.l.b16 %v660
    %v826 = vunpack.c.h.b16 %v660
    %v827 = vunpack.c.l.b16 %v661
    %v828 = vunpack.c.l.b16 %v662
    %v829 = vunpack.c.h.b16 %v662
    %v830 = vunpack.c.l.b16 %v663
    %v831 = vunpack.c.l.b16 %v664
    %v832 = vunpack.c.h.b16 %v664
    %v833 = vunpack.c.l.b16 %v665
    %v834 = vunpack.c.l.b16 %v666
    %v835 = vunpack.c.h.b16 %v666
    %v836 = vunpack.c.l.b16 %v667
    %v837 = vunpack.c.l.b16 %v668
    %v838 = vunpack.c.h.b16 %v668
    %v839 = vunpack.c.l.b16 %v669
    %v840 = vpack.c.b16 %v747, %v744
    %v841 = vpack.c.b16 %v748, %v745
    %v842 = vpack.c.b16 %v749, %v746
    %v843 = vpack.c.b16 %v753, %v750
    %v844 = vpack.c.b16 %v754, %v751
    %v845 = vpack.c.b16 %v755, %v752
    %v846 = vpack.c.b16 %v759, %v756
    %v847 = vpack.c.b16 %v760, %v757
    %v848 = vpack.c.b16 %v761, %v758
    %v849 = vpack.c.b16 %v765, %v762
    %v850 = vpack.c.b16 %v766, %v763
    %v851 = vpack.c.b16 %v767, %v764
    %v852 = vpack.c.b16 %v771, %v768
    %v853 = vpack.c.b16 %v772, %v769
    %v854 = vpack.c.b16 %v773, %v770
    %v855 = vpack.c.b16 %v777, %v774
    %v856 = vpack.c.b16 %v778, %v775
    %v857 = vpack.c.b16 %v779, %v776
    %v858 = vpack.c.b16 %v783, %v780
    %v859 = vpack.c.b16 %v784, %v781
    %v860 = vpack.c.b16 %v785, %v782
    %v861 = vpack.c.b16 %v789, %v786
    %v862 = vpack.c.b16 %v790, %v787
    %v863 = vpack.c.b16 %v791, %v788
    %v864 = vpack.c.b16 %v795, %v792
    %v865 = vpack.c.b16 %v796, %v793
    %v866 = vpack.c.b16 %v797, %v794
    %v867 = vpack.c.b16 %v801, %v798
    %v868 = vpack.c.b16 %v802, %v799
    %v869 = vpack.c.b16 %v803, %v800
    %v870 = vpack.c.b16 %v807, %v804
    %v871 = vpack.c.b16 %v808, %v805
    %v872 = vpack.c.b16 %v809, %v806
    %v873 = vpack.c.b16 %v813, %v810
    %v874 = vpack.c.b16 %v814, %v811
    %v875 = vpack.c.b16 %v815, %v812
    %v876 = vpack.c.b16 %v819, %v816
    %v877 = vpack.c.b16 %v820, %v817
    %v878 = vpack.c.b16 %v821, %v818
    %v879 = vpack.c.b16 %v825, %v822
    %v880 = vpack.c.b16 %v826, %v823
    %v881 = vpack.c.b16 %v827, %v824
    %v882 = vpack.c.b16 %v831, %v828
    %v883 = vpack.c.b16 %v832, %v829
    %v884 = vpack.c.b16 %v833, %v830
    %v885 = vpack.c.b16 %v837, %v834
    %v886 = vpack.c.b16 %v838, %v835
    %v887 = vpack.c.b16 %v839, %v836
    %936 = vmatpush.bf16.msra.mxu0 %v861
    %937 = vmatpush.bf16.msra.mxu0 %v858
    %938 = vmatpush.bf16.msra.mxu0 %v855
    %939 = vmatpush.bf16.msra.mxu0 %v852
    %940 = vmatpush.bf16.msra.mxu0 %v849
    %941 = vmatpush.bf16.msra.mxu0 %v846
    %942 = vmatpush.bf16.msra.mxu0 %v843
    %943 = vmatpush.bf16.msra.mxu0 %v840
    %944 = vmatmul.bf16.gmra.mxu0 %v670
    %v945 = vpop.f32.mrf.mxu0
    %v946 = vadd.f32 %v674, %v945
    %v947 = vpop.f32.mrf.mxu0
    %948 = vdwg.mxu0
    %949 = vmatpush.bf16.msra.mxu0 %v885
    %950 = vmatpush.bf16.msra.mxu0 %v882
    %951 = vmatpush.bf16.msra.mxu0 %v879
    %952 = vmatpush.bf16.msra.mxu0 %v876
    %953 = vmatpush.bf16.msra.mxu0 %v873
    %954 = vmatpush.bf16.msra.mxu0 %v870
    %955 = vmatpush.bf16.msra.mxu0 %v867
    %956 = vmatpush.bf16.msra.mxu0 %v864
    %957 = vmatmul.bf16.gmra.mxu0 %v671
    %v958 = vpop.f32.mrf.mxu0
    %v959 = vadd.f32 %v946, %v958
    %v960 = vpop.f32.mrf.mxu0
    %961 = vdwg.mxu0
    %962 = vmatpush.bf16.msra.mxu0 %v862
    %963 = vmatpush.bf16.msra.mxu0 %v859
    %964 = vmatpush.bf16.msra.mxu0 %v856
    %965 = vmatpush.bf16.msra.mxu0 %v853
    %966 = vmatpush.bf16.msra.mxu0 %v850
    %967 = vmatpush.bf16.msra.mxu0 %v847
    %968 = vmatpush.bf16.msra.mxu0 %v844
    %969 = vmatpush.bf16.msra.mxu0 %v841
    %970 = vmatmul.bf16.gmra.mxu0 %v670
    %v971 = vpop.f32.mrf.mxu0
    %v972 = vadd.f32 %v675, %v971
    %v973 = vpop.f32.mrf.mxu0
    %974 = vdwg.mxu0
    %975 = vmatpush.bf16.msra.mxu0 %v886
    %976 = vmatpush.bf16.msra.mxu0 %v883
    %977 = vmatpush.bf16.msra.mxu0 %v880
    %978 = vmatpush.bf16.msra.mxu0 %v877
    %979 = vmatpush.bf16.msra.mxu0 %v874
    %980 = vmatpush.bf16.msra.mxu0 %v871
    %981 = vmatpush.bf16.msra.mxu0 %v868
    %982 = vmatpush.bf16.msra.mxu0 %v865
    %983 = vmatmul.bf16.gmra.mxu0 %v671
    %v984 = vpop.f32.mrf.mxu0
    %v985 = vadd.f32 %v972, %v984
    %v986 = vpop.f32.mrf.mxu0
    %987 = vdwg.mxu0
    %988 = vmatpush.bf16.msra.mxu0 %v863
    %989 = vmatpush.bf16.msra.mxu0 %v860
    %990 = vmatpush.bf16.msra.mxu0 %v857
    %991 = vmatpush.bf16.msra.mxu0 %v854
    %992 = vmatpush.bf16.msra.mxu0 %v851
    %993 = vmatpush.bf16.msra.mxu0 %v848
    %994 = vmatpush.bf16.msra.mxu0 %v845
    %995 = vmatpush.bf16.msra.mxu0 %v842
    %996 = vmatmul.bf16.gmra.mxu0 %v670
    %v997 = vpop.f32.mrf.mxu0
    %v998 = vadd.f32 %v676, %v997
    %v999 = vpop.f32.mrf.mxu0
    %1000 = vdwg.mxu0
    %1001 = vmatpush.bf16.msra.mxu0 %v887
    %1002 = vmatpush.bf16.msra.mxu0 %v884
    %1003 = vmatpush.bf16.msra.mxu0 %v881
    %1004 = vmatpush.bf16.msra.mxu0 %v878
    %1005 = vmatpush.bf16.msra.mxu0 %v875
    %1006 = vmatpush.bf16.msra.mxu0 %v872
    %1007 = vmatpush.bf16.msra.mxu0 %v869
    %1008 = vmatpush.bf16.msra.mxu0 %v866
    %1009 = vmatmul.bf16.gmra.mxu0 %v671
    %v1010 = vpop.f32.mrf.mxu0
    %v1011 = vadd.f32 %v998, %v1010
    %v1012 = vpop.f32.mrf.mxu0
    %1013 = vdwg.mxu0
    %v1014 = vmax.f32 %v959, 0.0
    %v1015 = vmax.f32 %v985, 0.0
    %v1016 = vmax.f32 %v1011, 0.0
    %v1017 = vld [vmem:[#allocation9] sm:$0xff]
    %v1018 = vld [vmem:[#allocation9 + $0x8] sm:$0xff]
    %v1019 = vld [vmem:[#allocation9 + $0x10] sm:$0xff]
    %v1020 = vld [vmem:[#allocation9 + $0x18] sm:$0xff]
    %v1021 = vld [vmem:[#allocation9 + $0x20] sm:$0xff]
    %v1022 = vld [vmem:[#allocation9 + $0x28] sm:$0xff]
    %v1023 = vld [vmem:[#allocation9 + $0x30] sm:$0xff]
    %v1024 = vld [vmem:[#allocation9 + $0x38] sm:$0xff]
    %v1025 = vld [vmem:[#allocation9 + $0x40] sm:$0xff]
    %v1026 = vld [vmem:[#allocation9 + $0x48] sm:$0xff]
    %v1027 = vld [vmem:[#allocation9 + $0x50] sm:$0xff]
    %v1028 = vld [vmem:[#allocation9 + $0x58] sm:$0xff]
    %v1029 = vld [vmem:[#allocation9 + $0x60] sm:$0xff]
    %v1030 = vld [vmem:[#allocation9 + $0x68] sm:$0xff]
    %v1031 = vld [vmem:[#allocation9 + $0x70] sm:$0xff]
    %v1032 = vld [vmem:[#allocation9 + $0x78] sm:$0xff]
    %v1033 = vld [vmem:[#allocation9 + $0x80] sm:$0xff]
    %v1034 = vld [vmem:[#allocation9 + $0x88] sm:$0xff]
    %v1035 = vld [vmem:[#allocation9 + $0x90] sm:$0xff]
    %v1036 = vld [vmem:[#allocation9 + $0x98] sm:$0xff]
    %v1037 = vld [vmem:[#allocation9 + $0xa0] sm:$0xff]
    %v1038 = vld [vmem:[#allocation9 + $0xa8] sm:$0xff]
    %v1039 = vld [vmem:[#allocation9 + $0xb0] sm:$0xff]
    %v1040 = vld [vmem:[#allocation9 + $0xb8] sm:$0xff]
    %v1041 = vld [vmem:[#allocation9 + $0xc0] sm:$0xff]
    %v1042 = vld [vmem:[#allocation9 + $0xc8] sm:$0xff]
    %v1043 = vld [vmem:[#allocation9 + $0xd0] sm:$0xff]
    %v1044 = vld [vmem:[#allocation9 + $0xd8] sm:$0xff]
    %v1045 = vld [vmem:[#allocation9 + $0xe0] sm:$0xff]
    %v1046 = vld [vmem:[#allocation9 + $0xe8] sm:$0xff]
    %v1047 = vld [vmem:[#allocation9 + $0xf0] sm:$0xff]
    %v1048 = vld [vmem:[#allocation9 + $0xf8] sm:$0xff]
    %v1049 = vld [vmem:[#allocation9 + $0x100] sm:$0xff]
    %v1050 = vld [vmem:[#allocation9 + $0x108] sm:$0xff]
    %v1051 = vld [vmem:[#allocation9 + $0x110] sm:$0xff]
    %v1052 = vld [vmem:[#allocation9 + $0x118] sm:$0xff]
    %v1053 = vld [vmem:[#allocation9 + $0x120] sm:$0xff]
    %v1054 = vld [vmem:[#allocation9 + $0x128] sm:$0xff]
    %v1055 = vld [vmem:[#allocation9 + $0x130] sm:$0xff]
    %v1056 = vld [vmem:[#allocation9 + $0x138] sm:$0xff]
    %v1057 = vld [vmem:[#allocation9 + $0x140] sm:$0xff]
    %v1058 = vld [vmem:[#allocation9 + $0x148] sm:$0xff]
    %v1059 = vld [vmem:[#allocation9 + $0x150] sm:$0xff]
    %v1060 = vld [vmem:[#allocation9 + $0x158] sm:$0xff]
    %v1061 = vld [vmem:[#allocation9 + $0x160] sm:$0xff]
    %v1062 = vld [vmem:[#allocation9 + $0x168] sm:$0xff]
    %v1063 = vld [vmem:[#allocation9 + $0x170] sm:$0xff]
    %v1064 = vld [vmem:[#allocation9 + $0x178] sm:$0xff]
    %v1065 = vld [vmem:[#allocation9 + $0x180] sm:$0xff]
    %v1066 = vld [vmem:[#allocation9 + $0x188] sm:$0xff]
    %v1067 = vld [vmem:[#allocation9 + $0x190] sm:$0xff]
    %v1068 = vld [vmem:[#allocation9 + $0x198] sm:$0xff]
    %v1069 = vld [vmem:[#allocation9 + $0x1a0] sm:$0xff]
    %v1070 = vld [vmem:[#allocation9 + $0x1a8] sm:$0xff]
    %v1071 = vld [vmem:[#allocation9 + $0x1b0] sm:$0xff]
    %v1072 = vld [vmem:[#allocation9 + $0x1b8] sm:$0xff]
    %v1073 = vld [vmem:[#allocation9 + $0x1c0] sm:$0xff]
    %v1074 = vld [vmem:[#allocation9 + $0x1c8] sm:$0xff]
    %v1075 = vld [vmem:[#allocation9 + $0x1d0] sm:$0xff]
    %v1076 = vld [vmem:[#allocation9 + $0x1d8] sm:$0xff]
    %v1077 = vld [vmem:[#allocation9 + $0x1e0] sm:$0xff]
    %v1078 = vld [vmem:[#allocation9 + $0x1e8] sm:$0xff]
    %v1079 = vld [vmem:[#allocation9 + $0x1f0] sm:$0xff]
    %v1080 = vld [vmem:[#allocation9 + $0x1f8] sm:$0xff]
    %v1081 = vld [vmem:[#allocation9 + $0x200] sm:$0xff]
    %v1082 = vld [vmem:[#allocation9 + $0x208] sm:$0xff]
    %v1083 = vld [vmem:[#allocation9 + $0x210] sm:$0xff]
    %v1084 = vld [vmem:[#allocation9 + $0x218] sm:$0xff]
    %v1085 = vld [vmem:[#allocation9 + $0x220] sm:$0xff]
    %v1086 = vld [vmem:[#allocation9 + $0x228] sm:$0xff]
    %v1087 = vld [vmem:[#allocation9 + $0x230] sm:$0xff]
    %v1088 = vld [vmem:[#allocation9 + $0x238] sm:$0xff]
    %v1089 = vld [vmem:[#allocation9 + $0x240] sm:$0xff]
    %v1090 = vld [vmem:[#allocation9 + $0x248] sm:$0xff]
    %v1091 = vld [vmem:[#allocation9 + $0x250] sm:$0xff]
    %v1092 = vld [vmem:[#allocation9 + $0x258] sm:$0xff]
    %v1093 = vld [vmem:[#allocation9 + $0x260] sm:$0xff]
    %v1094 = vld [vmem:[#allocation9 + $0x268] sm:$0xff]
    %v1095 = vld [vmem:[#allocation9 + $0x270] sm:$0xff]
    %v1096 = vld [vmem:[#allocation9 + $0x278] sm:$0xff]
    %v1097 = vld [vmem:[#allocation9 + $0x280] sm:$0xff]
    %v1098 = vld [vmem:[#allocation9 + $0x288] sm:$0xff]
    %v1099 = vld [vmem:[#allocation9 + $0x290] sm:$0xff]
    %v1100 = vld [vmem:[#allocation9 + $0x298] sm:$0xff]
    %v1101 = vld [vmem:[#allocation9 + $0x2a0] sm:$0xff]
    %v1102 = vld [vmem:[#allocation9 + $0x2a8] sm:$0xff]
    %v1103 = vld [vmem:[#allocation9 + $0x2b0] sm:$0xff]
    %v1104 = vld [vmem:[#allocation9 + $0x2b8] sm:$0xff]
    %v1105 = vld [vmem:[#allocation9 + $0x2c0] sm:$0xff]
    %v1106 = vld [vmem:[#allocation9 + $0x2c8] sm:$0xff]
    %v1107 = vld [vmem:[#allocation9 + $0x2d0] sm:$0xff]
    %v1108 = vld [vmem:[#allocation9 + $0x2d8] sm:$0xff]
    %v1109 = vld [vmem:[#allocation9 + $0x2e0] sm:$0xff]
    %v1110 = vld [vmem:[#allocation9 + $0x2e8] sm:$0xff]
    %v1111 = vld [vmem:[#allocation9 + $0x2f0] sm:$0xff]
    %v1112 = vld [vmem:[#allocation9 + $0x2f8] sm:$0xff]
    %v1113 = vld [vmem:[#allocation9 + $0x300] sm:$0xff]
    %v1114 = vld [vmem:[#allocation9 + $0x308] sm:$0xff]
    %v1115 = vld [vmem:[#allocation9 + $0x310] sm:$0xff]
    %v1116 = vld [vmem:[#allocation9 + $0x318] sm:$0xff]
    %v1117 = vld [vmem:[#allocation9 + $0x320] sm:$0xff]
    %v1118 = vld [vmem:[#allocation9 + $0x328] sm:$0xff]
    %v1119 = vld [vmem:[#allocation9 + $0x330] sm:$0xff]
    %v1120 = vld [vmem:[#allocation9 + $0x338] sm:$0xff]
    %v1121 = vld [vmem:[#allocation9 + $0x340] sm:$0xff]
    %v1122 = vld [vmem:[#allocation9 + $0x348] sm:$0xff]
    %v1123 = vld [vmem:[#allocation9 + $0x350] sm:$0xff]
    %v1124 = vld [vmem:[#allocation9 + $0x358] sm:$0xff]
    %v1125 = vld [vmem:[#allocation9 + $0x360] sm:$0xff]
    %v1126 = vld [vmem:[#allocation9 + $0x368] sm:$0xff]
    %v1127 = vld [vmem:[#allocation9 + $0x370] sm:$0xff]
    %v1128 = vld [vmem:[#allocation9 + $0x378] sm:$0xff]
    %v1129 = vld [vmem:[#allocation9 + $0x380] sm:$0xff]
    %v1130 = vld [vmem:[#allocation9 + $0x388] sm:$0xff]
    %v1131 = vld [vmem:[#allocation9 + $0x390] sm:$0xff]
    %v1132 = vld [vmem:[#allocation9 + $0x398] sm:$0xff]
    %v1133 = vld [vmem:[#allocation9 + $0x3a0] sm:$0xff]
    %v1134 = vld [vmem:[#allocation9 + $0x3a8] sm:$0xff]
    %v1135 = vld [vmem:[#allocation9 + $0x3b0] sm:$0xff]
    %v1136 = vld [vmem:[#allocation9 + $0x3b8] sm:$0xff]
    %v1137 = vld [vmem:[#allocation9 + $0x3c0] sm:$0xff]
    %v1138 = vld [vmem:[#allocation9 + $0x3c8] sm:$0xff]
    %v1139 = vld [vmem:[#allocation9 + $0x3d0] sm:$0xff]
    %v1140 = vld [vmem:[#allocation9 + $0x3d8] sm:$0xff]
    %v1141 = vld [vmem:[#allocation9 + $0x3e0] sm:$0xff]
    %v1142 = vld [vmem:[#allocation9 + $0x3e8] sm:$0xff]
    %v1143 = vld [vmem:[#allocation9 + $0x3f0] sm:$0xff]
    %v1144 = vld [vmem:[#allocation9 + $0x3f8] sm:$0xff]
    %v1145 = vld [vmem:[#allocation9 + $0x400] sm:$0xff]
    %v1146 = vld [vmem:[#allocation9 + $0x408] sm:$0xff]
    %v1147 = vld [vmem:[#allocation9 + $0x410] sm:$0xff]
    %v1148 = vld [vmem:[#allocation9 + $0x418] sm:$0xff]
    %v1149 = vld [vmem:[#allocation9 + $0x420] sm:$0xff]
    %v1150 = vld [vmem:[#allocation9 + $0x428] sm:$0xff]
    %v1151 = vld [vmem:[#allocation9 + $0x430] sm:$0xff]
    %v1152 = vld [vmem:[#allocation9 + $0x438] sm:$0xff]
    %v1153 = vld [vmem:[#allocation9 + $0x440] sm:$0xff]
    %v1154 = vld [vmem:[#allocation9 + $0x448] sm:$0xff]
    %v1155 = vld [vmem:[#allocation9 + $0x450] sm:$0xff]
    %v1156 = vld [vmem:[#allocation9 + $0x458] sm:$0xff]
    %v1157 = vld [vmem:[#allocation9 + $0x460] sm:$0xff]
    %v1158 = vld [vmem:[#allocation9 + $0x468] sm:$0xff]
    %v1159 = vld [vmem:[#allocation9 + $0x470] sm:$0xff]
    %v1160 = vld [vmem:[#allocation9 + $0x478] sm:$0xff]
    %v1161 = vpack.c.bf16 %v1014, %v1014
    %v1162 = vpack.c.bf16 %v1015, %v1015
    %v1163 = vpack.c.bf16 %v1016, %v1016
    %v1164 = vld [vmem:[#allocation10] sm:$0x3f]
    %v1166 = vperm.slane %v1164, 0
    %v1167 = vperm.slane %v1164, 1
    %v1168 = vperm.slane %v1164, 2
    %v1169 = vperm.slane %v1164, 3
    %v1170 = vperm.slane %v1164, 4
    %v1171 = vperm.slane %v1164, 5
    %v1322 = vunpack.c.l.b16 %v1017
    %v1323 = vunpack.c.h.b16 %v1017
    %v1324 = vunpack.c.l.b16 %v1018
    %v1325 = vunpack.c.h.b16 %v1018
    %v1326 = vunpack.c.l.b16 %v1019
    %v1327 = vunpack.c.h.b16 %v1019
    %v1328 = vunpack.c.l.b16 %v1020
    %v1329 = vunpack.c.h.b16 %v1020
    %v1330 = vunpack.c.l.b16 %v1021
    %v1331 = vunpack.c.h.b16 %v1021
    %v1332 = vunpack.c.l.b16 %v1022
    %v1333 = vunpack.c.h.b16 %v1022
    %v1334 = vunpack.c.l.b16 %v1023
    %v1335 = vunpack.c.h.b16 %v1023
    %v1336 = vunpack.c.l.b16 %v1024
    %v1337 = vunpack.c.h.b16 %v1024
    %v1338 = vunpack.c.l.b16 %v1025
    %v1339 = vunpack.c.h.b16 %v1025
    %v1340 = vunpack.c.l.b16 %v1026
    %v1341 = vunpack.c.h.b16 %v1026
    %v1342 = vunpack.c.l.b16 %v1027
    %v1343 = vunpack.c.h.b16 %v1027
    %v1344 = vunpack.c.l.b16 %v1028
    %v1345 = vunpack.c.h.b16 %v1028
    %v1346 = vunpack.c.l.b16 %v1029
    %v1347 = vunpack.c.h.b16 %v1029
    %v1348 = vunpack.c.l.b16 %v1030
    %v1349 = vunpack.c.h.b16 %v1030
    %v1350 = vunpack.c.l.b16 %v1031
    %v1351 = vunpack.c.h.b16 %v1031
    %v1352 = vunpack.c.l.b16 %v1032
    %v1353 = vunpack.c.h.b16 %v1032
    %v1354 = vunpack.c.l.b16 %v1033
    %v1355 = vunpack.c.h.b16 %v1033
    %v1356 = vunpack.c.l.b16 %v1034
    %v1357 = vunpack.c.h.b16 %v1034
    %v1358 = vunpack.c.l.b16 %v1035
    %v1359 = vunpack.c.h.b16 %v1035
    %v1360 = vunpack.c.l.b16 %v1036
    %v1361 = vunpack.c.h.b16 %v1036
    %v1362 = vunpack.c.l.b16 %v1037
    %v1363 = vunpack.c.h.b16 %v1037
    %v1364 = vunpack.c.l.b16 %v1038
    %v1365 = vunpack.c.h.b16 %v1038
    %v1366 = vunpack.c.l.b16 %v1039
    %v1367 = vunpack.c.h.b16 %v1039
    %v1368 = vunpack.c.l.b16 %v1040
    %v1369 = vunpack.c.h.b16 %v1040
    %v1370 = vunpack.c.l.b16 %v1041
    %v1371 = vunpack.c.h.b16 %v1041
    %v1372 = vunpack.c.l.b16 %v1042
    %v1373 = vunpack.c.h.b16 %v1042
    %v1374 = vunpack.c.l.b16 %v1043
    %v1375 = vunpack.c.h.b16 %v1043
    %v1376 = vunpack.c.l.b16 %v1044
    %v1377 = vunpack.c.h.b16 %v1044
    %v1378 = vunpack.c.l.b16 %v1045
    %v1379 = vunpack.c.h.b16 %v1045
    %v1380 = vunpack.c.l.b16 %v1046
    %v1381 = vunpack.c.h.b16 %v1046
    %v1382 = vunpack.c.l.b16 %v1047
    %v1383 = vunpack.c.h.b16 %v1047
    %v1384 = vunpack.c.l.b16 %v1048
    %v1385 = vunpack.c.h.b16 %v1048
    %v1386 = vunpack.c.l.b16 %v1049
    %v1387 = vunpack.c.h.b16 %v1049
    %v1388 = vunpack.c.l.b16 %v1050
    %v1389 = vunpack.c.h.b16 %v1050
    %v1390 = vunpack.c.l.b16 %v1051
    %v1391 = vunpack.c.h.b16 %v1051
    %v1392 = vunpack.c.l.b16 %v1052
    %v1393 = vunpack.c.h.b16 %v1052
    %v1394 = vunpack.c.l.b16 %v1053
    %v1395 = vunpack.c.h.b16 %v1053
    %v1396 = vunpack.c.l.b16 %v1054
    %v1397 = vunpack.c.h.b16 %v1054
    %v1398 = vunpack.c.l.b16 %v1055
    %v1399 = vunpack.c.h.b16 %v1055
    %v1400 = vunpack.c.l.b16 %v1056
    %v1401 = vunpack.c.h.b16 %v1056
    %v1402 = vunpack.c.l.b16 %v1057
    %v1403 = vunpack.c.h.b16 %v1057
    %v1404 = vunpack.c.l.b16 %v1058
    %v1405 = vunpack.c.h.b16 %v1058
    %v1406 = vunpack.c.l.b16 %v1059
    %v1407 = vunpack.c.h.b16 %v1059
    %v1408 = vunpack.c.l.b16 %v1060
    %v1409 = vunpack.c.h.b16 %v1060
    %v1410 = vunpack.c.l.b16 %v1061
    %v1411 = vunpack.c.h.b16 %v1061
    %v1412 = vunpack.c.l.b16 %v1062
    %v1413 = vunpack.c.h.b16 %v1062
    %v1414 = vunpack.c.l.b16 %v1063
    %v1415 = vunpack.c.h.b16 %v1063
    %v1416 = vunpack.c.l.b16 %v1064
    %v1417 = vunpack.c.h.b16 %v1064
    %v1418 = vunpack.c.l.b16 %v1065
    %v1419 = vunpack.c.h.b16 %v1065
    %v1420 = vunpack.c.l.b16 %v1066
    %v1421 = vunpack.c.h.b16 %v1066
    %v1422 = vunpack.c.l.b16 %v1067
    %v1423 = vunpack.c.h.b16 %v1067
    %v1424 = vunpack.c.l.b16 %v1068
    %v1425 = vunpack.c.h.b16 %v1068
    %v1426 = vunpack.c.l.b16 %v1069
    %v1427 = vunpack.c.h.b16 %v1069
    %v1428 = vunpack.c.l.b16 %v1070
    %v1429 = vunpack.c.h.b16 %v1070
    %v1430 = vunpack.c.l.b16 %v1071
    %v1431 = vunpack.c.h.b16 %v1071
    %v1432 = vunpack.c.l.b16 %v1072
    %v1433 = vunpack.c.h.b16 %v1072
    %v1434 = vunpack.c.l.b16 %v1073
    %v1435 = vunpack.c.h.b16 %v1073
    %v1436 = vunpack.c.l.b16 %v1074
    %v1437 = vunpack.c.h.b16 %v1074
    %v1438 = vunpack.c.l.b16 %v1075
    %v1439 = vunpack.c.h.b16 %v1075
    %v1440 = vunpack.c.l.b16 %v1076
    %v1441 = vunpack.c.h.b16 %v1076
    %v1442 = vunpack.c.l.b16 %v1077
    %v1443 = vunpack.c.h.b16 %v1077
    %v1444 = vunpack.c.l.b16 %v1078
    %v1445 = vunpack.c.h.b16 %v1078
    %v1446 = vunpack.c.l.b16 %v1079
    %v1447 = vunpack.c.h.b16 %v1079
    %v1448 = vunpack.c.l.b16 %v1080
    %v1449 = vunpack.c.h.b16 %v1080
    %v1450 = vunpack.c.l.b16 %v1081
    %v1451 = vunpack.c.h.b16 %v1081
    %v1452 = vunpack.c.l.b16 %v1082
    %v1453 = vunpack.c.h.b16 %v1082
    %v1454 = vunpack.c.l.b16 %v1083
    %v1455 = vunpack.c.h.b16 %v1083
    %v1456 = vunpack.c.l.b16 %v1084
    %v1457 = vunpack.c.h.b16 %v1084
    %v1458 = vunpack.c.l.b16 %v1085
    %v1459 = vunpack.c.h.b16 %v1085
    %v1460 = vunpack.c.l.b16 %v1086
    %v1461 = vunpack.c.h.b16 %v1086
    %v1462 = vunpack.c.l.b16 %v1087
    %v1463 = vunpack.c.h.b16 %v1087
    %v1464 = vunpack.c.l.b16 %v1088
    %v1465 = vunpack.c.h.b16 %v1088
    %v1466 = vunpack.c.l.b16 %v1089
    %v1467 = vunpack.c.h.b16 %v1089
    %v1468 = vunpack.c.l.b16 %v1090
    %v1469 = vunpack.c.h.b16 %v1090
    %v1470 = vunpack.c.l.b16 %v1091
    %v1471 = vunpack.c.h.b16 %v1091
    %v1472 = vunpack.c.l.b16 %v1092
    %v1473 = vunpack.c.h.b16 %v1092
    %v1474 = vunpack.c.l.b16 %v1093
    %v1475 = vunpack.c.h.b16 %v1093
    %v1476 = vunpack.c.l.b16 %v1094
    %v1477 = vunpack.c.h.b16 %v1094
    %v1478 = vunpack.c.l.b16 %v1095
    %v1479 = vunpack.c.h.b16 %v1095
    %v1480 = vunpack.c.l.b16 %v1096
    %v1481 = vunpack.c.h.b16 %v1096
    %v1482 = vunpack.c.l.b16 %v1097
    %v1483 = vunpack.c.h.b16 %v1097
    %v1484 = vunpack.c.l.b16 %v1098
    %v1485 = vunpack.c.h.b16 %v1098
    %v1486 = vunpack.c.l.b16 %v1099
    %v1487 = vunpack.c.h.b16 %v1099
    %v1488 = vunpack.c.l.b16 %v1100
    %v1489 = vunpack.c.h.b16 %v1100
    %v1490 = vunpack.c.l.b16 %v1101
    %v1491 = vunpack.c.h.b16 %v1101
    %v1492 = vunpack.c.l.b16 %v1102
    %v1493 = vunpack.c.h.b16 %v1102
    %v1494 = vunpack.c.l.b16 %v1103
    %v1495 = vunpack.c.h.b16 %v1103
    %v1496 = vunpack.c.l.b16 %v1104
    %v1497 = vunpack.c.h.b16 %v1104
    %v1498 = vunpack.c.l.b16 %v1105
    %v1499 = vunpack.c.h.b16 %v1105
    %v1500 = vunpack.c.l.b16 %v1106
    %v1501 = vunpack.c.h.b16 %v1106
    %v1502 = vunpack.c.l.b16 %v1107
    %v1503 = vunpack.c.h.b16 %v1107
    %v1504 = vunpack.c.l.b16 %v1108
    %v1505 = vunpack.c.h.b16 %v1108
    %v1506 = vunpack.c.l.b16 %v1109
    %v1507 = vunpack.c.h.b16 %v1109
    %v1508 = vunpack.c.l.b16 %v1110
    %v1509 = vunpack.c.h.b16 %v1110
    %v1510 = vunpack.c.l.b16 %v1111
    %v1511 = vunpack.c.h.b16 %v1111
    %v1512 = vunpack.c.l.b16 %v1112
    %v1513 = vunpack.c.h.b16 %v1112
    %v1514 = vunpack.c.l.b16 %v1113
    %v1515 = vunpack.c.h.b16 %v1113
    %v1516 = vunpack.c.l.b16 %v1114
    %v1517 = vunpack.c.h.b16 %v1114
    %v1518 = vunpack.c.l.b16 %v1115
    %v1519 = vunpack.c.h.b16 %v1115
    %v1520 = vunpack.c.l.b16 %v1116
    %v1521 = vunpack.c.h.b16 %v1116
    %v1522 = vunpack.c.l.b16 %v1117
    %v1523 = vunpack.c.h.b16 %v1117
    %v1524 = vunpack.c.l.b16 %v1118
    %v1525 = vunpack.c.h.b16 %v1118
    %v1526 = vunpack.c.l.b16 %v1119
    %v1527 = vunpack.c.h.b16 %v1119
    %v1528 = vunpack.c.l.b16 %v1120
    %v1529 = vunpack.c.h.b16 %v1120
    %v1530 = vunpack.c.l.b16 %v1121
    %v1531 = vunpack.c.h.b16 %v1121
    %v1532 = vunpack.c.l.b16 %v1122
    %v1533 = vunpack.c.h.b16 %v1122
    %v1534 = vunpack.c.l.b16 %v1123
    %v1535 = vunpack.c.h.b16 %v1123
    %v1536 = vunpack.c.l.b16 %v1124
    %v1537 = vunpack.c.h.b16 %v1124
    %v1538 = vunpack.c.l.b16 %v1125
    %v1539 = vunpack.c.h.b16 %v1125
    %v1540 = vunpack.c.l.b16 %v1126
    %v1541 = vunpack.c.h.b16 %v1126
    %v1542 = vunpack.c.l.b16 %v1127
    %v1543 = vunpack.c.h.b16 %v1127
    %v1544 = vunpack.c.l.b16 %v1128
    %v1545 = vunpack.c.h.b16 %v1128
    %v1546 = vunpack.c.l.b16 %v1129
    %v1547 = vunpack.c.h.b16 %v1129
    %v1548 = vunpack.c.l.b16 %v1130
    %v1549 = vunpack.c.h.b16 %v1130
    %v1550 = vunpack.c.l.b16 %v1131
    %v1551 = vunpack.c.h.b16 %v1131
    %v1552 = vunpack.c.l.b16 %v1132
    %v1553 = vunpack.c.h.b16 %v1132
    %v1554 = vunpack.c.l.b16 %v1133
    %v1555 = vunpack.c.h.b16 %v1133
    %v1556 = vunpack.c.l.b16 %v1134
    %v1557 = vunpack.c.h.b16 %v1134
    %v1558 = vunpack.c.l.b16 %v1135
    %v1559 = vunpack.c.h.b16 %v1135
    %v1560 = vunpack.c.l.b16 %v1136
    %v1561 = vunpack.c.h.b16 %v1136
    %v1562 = vunpack.c.l.b16 %v1137
    %v1563 = vunpack.c.h.b16 %v1137
    %v1564 = vunpack.c.l.b16 %v1138
    %v1565 = vunpack.c.h.b16 %v1138
    %v1566 = vunpack.c.l.b16 %v1139
    %v1567 = vunpack.c.h.b16 %v1139
    %v1568 = vunpack.c.l.b16 %v1140
    %v1569 = vunpack.c.h.b16 %v1140
    %v1570 = vunpack.c.l.b16 %v1141
    %v1571 = vunpack.c.h.b16 %v1141
    %v1572 = vunpack.c.l.b16 %v1142
    %v1573 = vunpack.c.h.b16 %v1142
    %v1574 = vunpack.c.l.b16 %v1143
    %v1575 = vunpack.c.h.b16 %v1143
    %v1576 = vunpack.c.l.b16 %v1144
    %v1577 = vunpack.c.h.b16 %v1144
    %v1578 = vunpack.c.l.b16 %v1145
    %v1579 = vunpack.c.h.b16 %v1145
    %v1580 = vunpack.c.l.b16 %v1146
    %v1581 = vunpack.c.h.b16 %v1146
    %v1582 = vunpack.c.l.b16 %v1147
    %v1583 = vunpack.c.h.b16 %v1147
    %v1584 = vunpack.c.l.b16 %v1148
    %v1585 = vunpack.c.h.b16 %v1148
    %v1586 = vunpack.c.l.b16 %v1149
    %v1587 = vunpack.c.h.b16 %v1149
    %v1588 = vunpack.c.l.b16 %v1150
    %v1589 = vunpack.c.h.b16 %v1150
    %v1590 = vunpack.c.l.b16 %v1151
    %v1591 = vunpack.c.h.b16 %v1151
    %v1592 = vunpack.c.l.b16 %v1152
    %v1593 = vunpack.c.h.b16 %v1152
    %v1594 = vunpack.c.l.b16 %v1153
    %v1595 = vunpack.c.h.b16 %v1153
    %v1596 = vunpack.c.l.b16 %v1154
    %v1597 = vunpack.c.h.b16 %v1154
    %v1598 = vunpack.c.l.b16 %v1155
    %v1599 = vunpack.c.h.b16 %v1155
    %v1600 = vunpack.c.l.b16 %v1156
    %v1601 = vunpack.c.h.b16 %v1156
    %v1602 = vunpack.c.l.b16 %v1157
    %v1603 = vunpack.c.h.b16 %v1157
    %v1604 = vunpack.c.l.b16 %v1158
    %v1605 = vunpack.c.h.b16 %v1158
    %v1606 = vunpack.c.l.b16 %v1159
    %v1607 = vunpack.c.h.b16 %v1159
    %v1608 = vunpack.c.l.b16 %v1160
    %v1609 = vunpack.c.h.b16 %v1160
    %v1610 = vpack.c.b16 %v1328, %v1322
    %v1611 = vpack.c.b16 %v1329, %v1323
    %v1612 = vpack.c.b16 %v1330, %v1324
    %v1613 = vpack.c.b16 %v1331, %v1325
    %v1614 = vpack.c.b16 %v1332, %v1326
    %v1615 = vpack.c.b16 %v1333, %v1327
    %v1616 = vpack.c.b16 %v1340, %v1334
    %v1617 = vpack.c.b16 %v1341, %v1335
    %v1618 = vpack.c.b16 %v1342, %v1336
    %v1619 = vpack.c.b16 %v1343, %v1337
    %v1620 = vpack.c.b16 %v1344, %v1338
    %v1621 = vpack.c.b16 %v1345, %v1339
    %v1622 = vpack.c.b16 %v1352, %v1346
    %v1623 = vpack.c.b16 %v1353, %v1347
    %v1624 = vpack.c.b16 %v1354, %v1348
    %v1625 = vpack.c.b16 %v1355, %v1349
    %v1626 = vpack.c.b16 %v1356, %v1350
    %v1627 = vpack.c.b16 %v1357, %v1351
    %v1628 = vpack.c.b16 %v1364, %v1358
    %v1629 = vpack.c.b16 %v1365, %v1359
    %v1630 = vpack.c.b16 %v1366, %v1360
    %v1631 = vpack.c.b16 %v1367, %v1361
    %v1632 = vpack.c.b16 %v1368, %v1362
    %v1633 = vpack.c.b16 %v1369, %v1363
    %v1634 = vpack.c.b16 %v1376, %v1370
    %v1635 = vpack.c.b16 %v1377, %v1371
    %v1636 = vpack.c.b16 %v1378, %v1372
    %v1637 = vpack.c.b16 %v1379, %v1373
    %v1638 = vpack.c.b16 %v1380, %v1374
    %v1639 = vpack.c.b16 %v1381, %v1375
    %v1640 = vpack.c.b16 %v1388, %v1382
    %v1641 = vpack.c.b16 %v1389, %v1383
    %v1642 = vpack.c.b16 %v1390, %v1384
    %v1643 = vpack.c.b16 %v1391, %v1385
    %v1644 = vpack.c.b16 %v1392, %v1386
    %v1645 = vpack.c.b16 %v1393, %v1387
    %v1646 = vpack.c.b16 %v1400, %v1394
    %v1647 = vpack.c.b16 %v1401, %v1395
    %v1648 = vpack.c.b16 %v1402, %v1396
    %v1649 = vpack.c.b16 %v1403, %v1397
    %v1650 = vpack.c.b16 %v1404, %v1398
    %v1651 = vpack.c.b16 %v1405, %v1399
    %v1652 = vpack.c.b16 %v1412, %v1406
    %v1653 = vpack.c.b16 %v1413, %v1407
    %v1654 = vpack.c.b16 %v1414, %v1408
    %v1655 = vpack.c.b16 %v1415, %v1409
    %v1656 = vpack.c.b16 %v1416, %v1410
    %v1657 = vpack.c.b16 %v1417, %v1411
    %v1658 = vpack.c.b16 %v1424, %v1418
    %v1659 = vpack.c.b16 %v1425, %v1419
    %v1660 = vpack.c.b16 %v1426, %v1420
    %v1661 = vpack.c.b16 %v1427, %v1421
    %v1662 = vpack.c.b16 %v1428, %v1422
    %v1663 = vpack.c.b16 %v1429, %v1423
    %v1664 = vpack.c.b16 %v1436, %v1430
    %v1665 = vpack.c.b16 %v1437, %v1431
    %v1666 = vpack.c.b16 %v1438, %v1432
    %v1667 = vpack.c.b16 %v1439, %v1433
    %v1668 = vpack.c.b16 %v1440, %v1434
    %v1669 = vpack.c.b16 %v1441, %v1435
    %v1670 = vpack.c.b16 %v1448, %v1442
    %v1671 = vpack.c.b16 %v1449, %v1443
    %v1672 = vpack.c.b16 %v1450, %v1444
    %v1673 = vpack.c.b16 %v1451, %v1445
    %v1674 = vpack.c.b16 %v1452, %v1446
    %v1675 = vpack.c.b16 %v1453, %v1447
    %v1676 = vpack.c.b16 %v1460, %v1454
    %v1677 = vpack.c.b16 %v1461, %v1455
    %v1678 = vpack.c.b16 %v1462, %v1456
    %v1679 = vpack.c.b16 %v1463, %v1457
    %v1680 = vpack.c.b16 %v1464, %v1458
    %v1681 = vpack.c.b16 %v1465, %v1459
    %v1682 = vpack.c.b16 %v1472, %v1466
    %v1683 = vpack.c.b16 %v1473, %v1467
    %v1684 = vpack.c.b16 %v1474, %v1468
    %v1685 = vpack.c.b16 %v1475, %v1469
    %v1686 = vpack.c.b16 %v1476, %v1470
    %v1687 = vpack.c.b16 %v1477, %v1471
    %v1688 = vpack.c.b16 %v1484, %v1478
    %v1689 = vpack.c.b16 %v1485, %v1479
    %v1690 = vpack.c.b16 %v1486, %v1480
    %v1691 = vpack.c.b16 %v1487, %v1481
    %v1692 = vpack.c.b16 %v1488, %v1482
    %v1693 = vpack.c.b16 %v1489, %v1483
    %v1694 = vpack.c.b16 %v1496, %v1490
    %v1695 = vpack.c.b16 %v1497, %v1491
    %v1696 = vpack.c.b16 %v1498, %v1492
    %v1697 = vpack.c.b16 %v1499, %v1493
    %v1698 = vpack.c.b16 %v1500, %v1494
    %v1699 = vpack.c.b16 %v1501, %v1495
    %v1700 = vpack.c.b16 %v1508, %v1502
    %v1701 = vpack.c.b16 %v1509, %v1503
    %v1702 = vpack.c.b16 %v1510, %v1504
    %v1703 = vpack.c.b16 %v1511, %v1505
    %v1704 = vpack.c.b16 %v1512, %v1506
    %v1705 = vpack.c.b16 %v1513, %v1507
    %v1706 = vpack.c.b16 %v1520, %v1514
    %v1707 = vpack.c.b16 %v1521, %v1515
    %v1708 = vpack.c.b16 %v1522, %v1516
    %v1709 = vpack.c.b16 %v1523, %v1517
    %v1710 = vpack.c.b16 %v1524, %v1518
    %v1711 = vpack.c.b16 %v1525, %v1519
    %v1712 = vpack.c.b16 %v1532, %v1526
    %v1713 = vpack.c.b16 %v1533, %v1527
    %v1714 = vpack.c.b16 %v1534, %v1528
    %v1715 = vpack.c.b16 %v1535, %v1529
    %v1716 = vpack.c.b16 %v1536, %v1530
    %v1717 = vpack.c.b16 %v1537, %v1531
    %v1718 = vpack.c.b16 %v1544, %v1538
    %v1719 = vpack.c.b16 %v1545, %v1539
    %v1720 = vpack.c.b16 %v1546, %v1540
    %v1721 = vpack.c.b16 %v1547, %v1541
    %v1722 = vpack.c.b16 %v1548, %v1542
    %v1723 = vpack.c.b16 %v1549, %v1543
    %v1724 = vpack.c.b16 %v1556, %v1550
    %v1725 = vpack.c.b16 %v1557, %v1551
    %v1726 = vpack.c.b16 %v1558, %v1552
    %v1727 = vpack.c.b16 %v1559, %v1553
    %v1728 = vpack.c.b16 %v1560, %v1554
    %v1729 = vpack.c.b16 %v1561, %v1555
    %v1730 = vpack.c.b16 %v1568, %v1562
    %v1731 = vpack.c.b16 %v1569, %v1563
    %v1732 = vpack.c.b16 %v1570, %v1564
    %v1733 = vpack.c.b16 %v1571, %v1565
    %v1734 = vpack.c.b16 %v1572, %v1566
    %v1735 = vpack.c.b16 %v1573, %v1567
    %v1736 = vpack.c.b16 %v1580, %v1574
    %v1737 = vpack.c.b16 %v1581, %v1575
    %v1738 = vpack.c.b16 %v1582, %v1576
    %v1739 = vpack.c.b16 %v1583, %v1577
    %v1740 = vpack.c.b16 %v1584, %v1578
    %v1741 = vpack.c.b16 %v1585, %v1579
    %v1742 = vpack.c.b16 %v1592, %v1586
    %v1743 = vpack.c.b16 %v1593, %v1587
    %v1744 = vpack.c.b16 %v1594, %v1588
    %v1745 = vpack.c.b16 %v1595, %v1589
    %v1746 = vpack.c.b16 %v1596, %v1590
    %v1747 = vpack.c.b16 %v1597, %v1591
    %v1748 = vpack.c.b16 %v1604, %v1598
    %v1749 = vpack.c.b16 %v1605, %v1599
    %v1750 = vpack.c.b16 %v1606, %v1600
    %v1751 = vpack.c.b16 %v1607, %v1601
    %v1752 = vpack.c.b16 %v1608, %v1602
    %v1753 = vpack.c.b16 %v1609, %v1603
    %1898 = vmatpush.bf16.msra.mxu0 %v1652
    %1899 = vmatpush.bf16.msra.mxu0 %v1646
    %1900 = vmatpush.bf16.msra.mxu0 %v1640
    %1901 = vmatpush.bf16.msra.mxu0 %v1634
    %1902 = vmatpush.bf16.msra.mxu0 %v1628
    %1903 = vmatpush.bf16.msra.mxu0 %v1622
    %1904 = vmatpush.bf16.msra.mxu0 %v1616
    %1905 = vmatpush.bf16.msra.mxu0 %v1610
    %1906 = vmatmul.bf16.gmra.mxu0 %v1161
    %v1907 = vpop.f32.mrf.mxu0
    %v1908 = vadd.f32 %v1166, %v1907
    %v1909 = vpop.f32.mrf.mxu0
    %1910 = vdwg.mxu0
    %1911 = vmatpush.bf16.msra.mxu0 %v1700
    %1912 = vmatpush.bf16.msra.mxu0 %v1694
    %1913 = vmatpush.bf16.msra.mxu0 %v1688
    %1914 = vmatpush.bf16.msra.mxu0 %v1682
    %1915 = vmatpush.bf16.msra.mxu0 %v1676
    %1916 = vmatpush.bf16.msra.mxu0 %v1670
    %1917 = vmatpush.bf16.msra.mxu0 %v1664
    %1918 = vmatpush.bf16.msra.mxu0 %v1658
    %1919 = vmatmul.bf16.gmra.mxu0 %v1162
    %v1920 = vpop.f32.mrf.mxu0
    %v1921 = vadd.f32 %v1908, %v1920
    %v1922 = vpop.f32.mrf.mxu0
    %1923 = vdwg.mxu0
    %1924 = vmatpush.bf16.msra.mxu0 %v1748
    %1925 = vmatpush.bf16.msra.mxu0 %v1742
    %1926 = vmatpush.bf16.msra.mxu0 %v1736
    %1927 = vmatpush.bf16.msra.mxu0 %v1730
    %1928 = vmatpush.bf16.msra.mxu0 %v1724
    %1929 = vmatpush.bf16.msra.mxu0 %v1718
    %1930 = vmatpush.bf16.msra.mxu0 %v1712
    %1931 = vmatpush.bf16.msra.mxu0 %v1706
    %1932 = vmatmul.bf16.gmra.mxu0 %v1163
    %v1933 = vpop.f32.mrf.mxu0
    %v1934 = vadd.f32 %v1921, %v1933
    %v1935 = vpop.f32.mrf.mxu0
    %1936 = vdwg.mxu0
    %1937 = vmatpush.bf16.msra.mxu0 %v1653
    %1938 = vmatpush.bf16.msra.mxu0 %v1647
    %1939 = vmatpush.bf16.msra.mxu0 %v1641
    %1940 = vmatpush.bf16.msra.mxu0 %v1635
    %1941 = vmatpush.bf16.msra.mxu0 %v1629
    %1942 = vmatpush.bf16.msra.mxu0 %v1623
    %1943 = vmatpush.bf16.msra.mxu0 %v1617
    %1944 = vmatpush.bf16.msra.mxu0 %v1611
    %1945 = vmatmul.bf16.gmra.mxu0 %v1161
    %v1946 = vpop.f32.mrf.mxu0
    %v1947 = vadd.f32 %v1167, %v1946
    %v1948 = vpop.f32.mrf.mxu0
    %1949 = vdwg.mxu0
    %1950 = vmatpush.bf16.msra.mxu0 %v1701
    %1951 = vmatpush.bf16.msra.mxu0 %v1695
    %1952 = vmatpush.bf16.msra.mxu0 %v1689
    %1953 = vmatpush.bf16.msra.mxu0 %v1683
    %1954 = vmatpush.bf16.msra.mxu0 %v1677
    %1955 = vmatpush.bf16.msra.mxu0 %v1671
    %1956 = vmatpush.bf16.msra.mxu0 %v1665
    %1957 = vmatpush.bf16.msra.mxu0 %v1659
    %1958 = vmatmul.bf16.gmra.mxu0 %v1162
    %v1959 = vpop.f32.mrf.mxu0
    %v1960 = vadd.f32 %v1947, %v1959
    %v1961 = vpop.f32.mrf.mxu0
    %1962 = vdwg.mxu0
    %1963 = vmatpush.bf16.msra.mxu0 %v1749
    %1964 = vmatpush.bf16.msra.mxu0 %v1743
    %1965 = vmatpush.bf16.msra.mxu0 %v1737
    %1966 = vmatpush.bf16.msra.mxu0 %v1731
    %1967 = vmatpush.bf16.msra.mxu0 %v1725
    %1968 = vmatpush.bf16.msra.mxu0 %v1719
    %1969 = vmatpush.bf16.msra.mxu0 %v1713
    %1970 = vmatpush.bf16.msra.mxu0 %v1707
    %1971 = vmatmul.bf16.gmra.mxu0 %v1163
    %v1972 = vpop.f32.mrf.mxu0
    %v1973 = vadd.f32 %v1960, %v1972
    %v1974 = vpop.f32.mrf.mxu0
    %1975 = vdwg.mxu0
    %1976 = vmatpush.bf16.msra.mxu0 %v1654
    %1977 = vmatpush.bf16.msra.mxu0 %v1648
    %1978 = vmatpush.bf16.msra.mxu0 %v1642
    %1979 = vmatpush.bf16.msra.mxu0 %v1636
    %1980 = vmatpush.bf16.msra.mxu0 %v1630
    %1981 = vmatpush.bf16.msra.mxu0 %v1624
    %1982 = vmatpush.bf16.msra.mxu0 %v1618
    %1983 = vmatpush.bf16.msra.mxu0 %v1612
    %1984 = vmatmul.bf16.gmra.mxu0 %v1161
    %v1985 = vpop.f32.mrf.mxu0
    %v1986 = vadd.f32 %v1168, %v1985
    %v1987 = vpop.f32.mrf.mxu0
    %1988 = vdwg.mxu0
    %1989 = vmatpush.bf16.msra.mxu0 %v1702
    %1990 = vmatpush.bf16.msra.mxu0 %v1696
    %1991 = vmatpush.bf16.msra.mxu0 %v1690
    %1992 = vmatpush.bf16.msra.mxu0 %v1684
    %1993 = vmatpush.bf16.msra.mxu0 %v1678
    %1994 = vmatpush.bf16.msra.mxu0 %v1672
    %1995 = vmatpush.bf16.msra.mxu0 %v1666
    %1996 = vmatpush.bf16.msra.mxu0 %v1660
    %1997 = vmatmul.bf16.gmra.mxu0 %v1162
    %v1998 = vpop.f32.mrf.mxu0
    %v1999 = vadd.f32 %v1986, %v1998
    %v2000 = vpop.f32.mrf.mxu0
    %2001 = vdwg.mxu0
    %2002 = vmatpush.bf16.msra.mxu0 %v1750
    %2003 = vmatpush.bf16.msra.mxu0 %v1744
    %2004 = vmatpush.bf16.msra.mxu0 %v1738
    %2005 = vmatpush.bf16.msra.mxu0 %v1732
    %2006 = vmatpush.bf16.msra.mxu0 %v1726
    %2007 = vmatpush.bf16.msra.mxu0 %v1720
    %2008 = vmatpush.bf16.msra.mxu0 %v1714
    %2009 = vmatpush.bf16.msra.mxu0 %v1708
    %2010 = vmatmul.bf16.gmra.mxu0 %v1163
    %v2011 = vpop.f32.mrf.mxu0
    %v2012 = vadd.f32 %v1999, %v2011
    %v2013 = vpop.f32.mrf.mxu0
    %2014 = vdwg.mxu0
    %2015 = vmatpush.bf16.msra.mxu0 %v1655
    %2016 = vmatpush.bf16.msra.mxu0 %v1649
    %2017 = vmatpush.bf16.msra.mxu0 %v1643
    %2018 = vmatpush.bf16.msra.mxu0 %v1637
    %2019 = vmatpush.bf16.msra.mxu0 %v1631
    %2020 = vmatpush.bf16.msra.mxu0 %v1625
    %2021 = vmatpush.bf16.msra.mxu0 %v1619
    %2022 = vmatpush.bf16.msra.mxu0 %v1613
    %2023 = vmatmul.bf16.gmra.mxu0 %v1161
    %v2024 = vpop.f32.mrf.mxu0
    %v2025 = vadd.f32 %v1169, %v2024
    %v2026 = vpop.f32.mrf.mxu0
    %2027 = vdwg.mxu0
    %2028 = vmatpush.bf16.msra.mxu0 %v1703
    %2029 = vmatpush.bf16.msra.mxu0 %v1697
    %2030 = vmatpush.bf16.msra.mxu0 %v1691
    %2031 = vmatpush.bf16.msra.mxu0 %v1685
    %2032 = vmatpush.bf16.msra.mxu0 %v1679
    %2033 = vmatpush.bf16.msra.mxu0 %v1673
    %2034 = vmatpush.bf16.msra.mxu0 %v1667
    %2035 = vmatpush.bf16.msra.mxu0 %v1661
    %2036 = vmatmul.bf16.gmra.mxu0 %v1162
    %v2037 = vpop.f32.mrf.mxu0
    %v2038 = vadd.f32 %v2025, %v2037
    %v2039 = vpop.f32.mrf.mxu0
    %2040 = vdwg.mxu0
    %2041 = vmatpush.bf16.msra.mxu0 %v1751
    %2042 = vmatpush.bf16.msra.mxu0 %v1745
    %2043 = vmatpush.bf16.msra.mxu0 %v1739
    %2044 = vmatpush.bf16.msra.mxu0 %v1733
    %2045 = vmatpush.bf16.msra.mxu0 %v1727
    %2046 = vmatpush.bf16.msra.mxu0 %v1721
    %2047 = vmatpush.bf16.msra.mxu0 %v1715
    %2048 = vmatpush.bf16.msra.mxu0 %v1709
    %2049 = vmatmul.bf16.gmra.mxu0 %v1163
    %v2050 = vpop.f32.mrf.mxu0
    %v2051 = vadd.f32 %v2038, %v2050
    %v2052 = vpop.f32.mrf.mxu0
    %2053 = vdwg.mxu0
    %2054 = vmatpush.bf16.msra.mxu0 %v1656
    %2055 = vmatpush.bf16.msra.mxu0 %v1650
    %2056 = vmatpush.bf16.msra.mxu0 %v1644
    %2057 = vmatpush.bf16.msra.mxu0 %v1638
    %2058 = vmatpush.bf16.msra.mxu0 %v1632
    %2059 = vmatpush.bf16.msra.mxu0 %v1626
    %2060 = vmatpush.bf16.msra.mxu0 %v1620
    %2061 = vmatpush.bf16.msra.mxu0 %v1614
    %2062 = vmatmul.bf16.gmra.mxu0 %v1161
    %v2063 = vpop.f32.mrf.mxu0
    %v2064 = vadd.f32 %v1170, %v2063
    %v2065 = vpop.f32.mrf.mxu0
    %2066 = vdwg.mxu0
    %2067 = vmatpush.bf16.msra.mxu0 %v1704
    %2068 = vmatpush.bf16.msra.mxu0 %v1698
    %2069 = vmatpush.bf16.msra.mxu0 %v1692
    %2070 = vmatpush.bf16.msra.mxu0 %v1686
    %2071 = vmatpush.bf16.msra.mxu0 %v1680
    %2072 = vmatpush.bf16.msra.mxu0 %v1674
    %2073 = vmatpush.bf16.msra.mxu0 %v1668
    %2074 = vmatpush.bf16.msra.mxu0 %v1662
    %2075 = vmatmul.bf16.gmra.mxu0 %v1162
    %v2076 = vpop.f32.mrf.mxu0
    %v2077 = vadd.f32 %v2064, %v2076
    %v2078 = vpop.f32.mrf.mxu0
    %2079 = vdwg.mxu0
    %2080 = vmatpush.bf16.msra.mxu0 %v1752
    %2081 = vmatpush.bf16.msra.mxu0 %v1746
    %2082 = vmatpush.bf16.msra.mxu0 %v1740
    %2083 = vmatpush.bf16.msra.mxu0 %v1734
    %2084 = vmatpush.bf16.msra.mxu0 %v1728
    %2085 = vmatpush.bf16.msra.mxu0 %v1722
    %2086 = vmatpush.bf16.msra.mxu0 %v1716
    %2087 = vmatpush.bf16.msra.mxu0 %v1710
    %2088 = vmatmul.bf16.gmra.mxu0 %v1163
    %v2089 = vpop.f32.mrf.mxu0
    %v2090 = vadd.f32 %v2077, %v2089
    %v2091 = vpop.f32.mrf.mxu0
    %2092 = vdwg.mxu0
    %2093 = vmatpush.bf16.msra.mxu0 %v1657
    %2094 = vmatpush.bf16.msra.mxu0 %v1651
    %2095 = vmatpush.bf16.msra.mxu0 %v1645
    %2096 = vmatpush.bf16.msra.mxu0 %v1639
    %2097 = vmatpush.bf16.msra.mxu0 %v1633
    %2098 = vmatpush.bf16.msra.mxu0 %v1627
    %2099 = vmatpush.bf16.msra.mxu0 %v1621
    %2100 = vmatpush.bf16.msra.mxu0 %v1615
    %2101 = vmatmul.bf16.gmra.mxu0 %v1161
    %v2102 = vpop.f32.mrf.mxu0
    %v2103 = vadd.f32 %v1171, %v2102
    %v2104 = vpop.f32.mrf.mxu0
    %2105 = vdwg.mxu0
    %2106 = vmatpush.bf16.msra.mxu0 %v1705
    %2107 = vmatpush.bf16.msra.mxu0 %v1699
    %2108 = vmatpush.bf16.msra.mxu0 %v1693
    %2109 = vmatpush.bf16.msra.mxu0 %v1687
    %2110 = vmatpush.bf16.msra.mxu0 %v1681
    %2111 = vmatpush.bf16.msra.mxu0 %v1675
    %2112 = vmatpush.bf16.msra.mxu0 %v1669
    %2113 = vmatpush.bf16.msra.mxu0 %v1663
    %2114 = vmatmul.bf16.gmra.mxu0 %v1162
    %v2115 = vpop.f32.mrf.mxu0
    %v2116 = vadd.f32 %v2103, %v2115
    %v2117 = vpop.f32.mrf.mxu0
    %2118 = vdwg.mxu0
    %2119 = vmatpush.bf16.msra.mxu0 %v1753
    %2120 = vmatpush.bf16.msra.mxu0 %v1747
    %2121 = vmatpush.bf16.msra.mxu0 %v1741
    %2122 = vmatpush.bf16.msra.mxu0 %v1735
    %2123 = vmatpush.bf16.msra.mxu0 %v1729
    %2124 = vmatpush.bf16.msra.mxu0 %v1723
    %2125 = vmatpush.bf16.msra.mxu0 %v1717
    %2126 = vmatpush.bf16.msra.mxu0 %v1711
    %2127 = vmatmul.bf16.gmra.mxu0 %v1163
    %v2128 = vpop.f32.mrf.mxu0
    %v2129 = vadd.f32 %v2116, %v2128
    %v2130 = vpop.f32.mrf.mxu0
    %2131 = vdwg.mxu0
    %v2132 = vmax.f32 %v1934, 0.0
    %v2133 = vmax.f32 %v1973, 0.0
    %v2134 = vmax.f32 %v2012, 0.0
    %v2135 = vmax.f32 %v2051, 0.0
    %v2136 = vmax.f32 %v2090, 0.0
    %v2137 = vmax.f32 %v2129, 0.0
    %v2138 = vld [vmem:[#allocation12] sm:$0xff]
    %v2139 = vld [vmem:[#allocation12 + $0x8] sm:$0xff]
    %v2140 = vld [vmem:[#allocation12 + $0x10] sm:$0xff]
    %v2141 = vld [vmem:[#allocation12 + $0x18] sm:$0xff]
    %v2142 = vld [vmem:[#allocation12 + $0x20] sm:$0xff]
    %v2143 = vld [vmem:[#allocation12 + $0x28] sm:$0xf]
    %v2144 = vld [vmem:[#allocation12 + $0x2c] sm:$0xff]
    %v2145 = vld [vmem:[#allocation12 + $0x34] sm:$0xff]
    %v2146 = vld [vmem:[#allocation12 + $0x3c] sm:$0xff]
    %v2147 = vld [vmem:[#allocation12 + $0x44] sm:$0xff]
    %v2148 = vld [vmem:[#allocation12 + $0x4c] sm:$0xff]
    %v2149 = vld [vmem:[#allocation12 + $0x54] sm:$0xf]
    %v2150 = vld [vmem:[#allocation12 + $0x58] sm:$0xff]
    %v2151 = vld [vmem:[#allocation12 + $0x60] sm:$0xff]
    %v2152 = vld [vmem:[#allocation12 + $0x68] sm:$0xff]
    %v2153 = vld [vmem:[#allocation12 + $0x70] sm:$0xff]
    %v2154 = vld [vmem:[#allocation12 + $0x78] sm:$0xff]
    %v2155 = vld [vmem:[#allocation12 + $0x80] sm:$0xf]
    %v2156 = vld [vmem:[#allocation12 + $0x84] sm:$0xff]
    %v2157 = vld [vmem:[#allocation12 + $0x8c] sm:$0xff]
    %v2158 = vld [vmem:[#allocation12 + $0x94] sm:$0xff]
    %v2159 = vld [vmem:[#allocation12 + $0x9c] sm:$0xff]
    %v2160 = vld [vmem:[#allocation12 + $0xa4] sm:$0xff]
    %v2161 = vld [vmem:[#allocation12 + $0xac] sm:$0xf]
    %v2162 = vld [vmem:[#allocation12 + $0xb0] sm:$0xff]
    %v2163 = vld [vmem:[#allocation12 + $0xb8] sm:$0xff]
    %v2164 = vld [vmem:[#allocation12 + $0xc0] sm:$0xff]
    %v2165 = vld [vmem:[#allocation12 + $0xc8] sm:$0xff]
    %v2166 = vld [vmem:[#allocation12 + $0xd0] sm:$0xff]
    %v2167 = vld [vmem:[#allocation12 + $0xd8] sm:$0xf]
    %v2168 = vld [vmem:[#allocation12 + $0xdc] sm:$0xff]
    %v2169 = vld [vmem:[#allocation12 + $0xe4] sm:$0xff]
    %v2170 = vld [vmem:[#allocation12 + $0xec] sm:$0xff]
    %v2171 = vld [vmem:[#allocation12 + $0xf4] sm:$0xff]
    %v2172 = vld [vmem:[#allocation12 + $0xfc] sm:$0xff]
    %v2173 = vld [vmem:[#allocation12 + $0x104] sm:$0xf]
    %v2174 = vld [vmem:[#allocation12 + $0x108] sm:$0xff]
    %v2175 = vld [vmem:[#allocation12 + $0x110] sm:$0xff]
    %v2176 = vld [vmem:[#allocation12 + $0x118] sm:$0xff]
    %v2177 = vld [vmem:[#allocation12 + $0x120] sm:$0xff]
    %v2178 = vld [vmem:[#allocation12 + $0x128] sm:$0xff]
    %v2179 = vld [vmem:[#allocation12 + $0x130] sm:$0xf]
    %v2180 = vld [vmem:[#allocation12 + $0x134] sm:$0xff]
    %v2181 = vld [vmem:[#allocation12 + $0x13c] sm:$0xff]
    %v2182 = vld [vmem:[#allocation12 + $0x144] sm:$0xff]
    %v2183 = vld [vmem:[#allocation12 + $0x14c] sm:$0xff]
    %v2184 = vld [vmem:[#allocation12 + $0x154] sm:$0xff]
    %v2185 = vld [vmem:[#allocation12 + $0x15c] sm:$0xf]
    %v2186 = vld [vmem:[#allocation12 + $0x160] sm:$0xff]
    %v2187 = vld [vmem:[#allocation12 + $0x168] sm:$0xff]
    %v2188 = vld [vmem:[#allocation12 + $0x170] sm:$0xff]
    %v2189 = vld [vmem:[#allocation12 + $0x178] sm:$0xff]
    %v2190 = vld [vmem:[#allocation12 + $0x180] sm:$0xff]
    %v2191 = vld [vmem:[#allocation12 + $0x188] sm:$0xf]
    %v2192 = vld [vmem:[#allocation12 + $0x18c] sm:$0xff]
    %v2193 = vld [vmem:[#allocation12 + $0x194] sm:$0xff]
    %v2194 = vld [vmem:[#allocation12 + $0x19c] sm:$0xff]
    %v2195 = vld [vmem:[#allocation12 + $0x1a4] sm:$0xff]
    %v2196 = vld [vmem:[#allocation12 + $0x1ac] sm:$0xff]
    %v2197 = vld [vmem:[#allocation12 + $0x1b4] sm:$0xf]
    %v2198 = vld [vmem:[#allocation12 + $0x1b8] sm:$0xff]
    %v2199 = vld [vmem:[#allocation12 + $0x1c0] sm:$0xff]
    %v2200 = vld [vmem:[#allocation12 + $0x1c8] sm:$0xff]
    %v2201 = vld [vmem:[#allocation12 + $0x1d0] sm:$0xff]
    %v2202 = vld [vmem:[#allocation12 + $0x1d8] sm:$0xff]
    %v2203 = vld [vmem:[#allocation12 + $0x1e0] sm:$0xf]
    %v2204 = vld [vmem:[#allocation12 + $0x1e4] sm:$0xff]
    %v2205 = vld [vmem:[#allocation12 + $0x1ec] sm:$0xff]
    %v2206 = vld [vmem:[#allocation12 + $0x1f4] sm:$0xff]
    %v2207 = vld [vmem:[#allocation12 + $0x1fc] sm:$0xff]
    %v2208 = vld [vmem:[#allocation12 + $0x204] sm:$0xff]
    %v2209 = vld [vmem:[#allocation12 + $0x20c] sm:$0xf]
    %v2210 = vld [vmem:[#allocation12 + $0x210] sm:$0xff]
    %v2211 = vld [vmem:[#allocation12 + $0x218] sm:$0xff]
    %v2212 = vld [vmem:[#allocation12 + $0x220] sm:$0xff]
    %v2213 = vld [vmem:[#allocation12 + $0x228] sm:$0xff]
    %v2214 = vld [vmem:[#allocation12 + $0x230] sm:$0xff]
    %v2215 = vld [vmem:[#allocation12 + $0x238] sm:$0xf]
    %v2216 = vld [vmem:[#allocation12 + $0x23c] sm:$0xff]
    %v2217 = vld [vmem:[#allocation12 + $0x244] sm:$0xff]
    %v2218 = vld [vmem:[#allocation12 + $0x24c] sm:$0xff]
    %v2219 = vld [vmem:[#allocation12 + $0x254] sm:$0xff]
    %v2220 = vld [vmem:[#allocation12 + $0x25c] sm:$0xff]
    %v2221 = vld [vmem:[#allocation12 + $0x264] sm:$0xf]
    %v2222 = vld [vmem:[#allocation12 + $0x268] sm:$0xff]
    %v2223 = vld [vmem:[#allocation12 + $0x270] sm:$0xff]
    %v2224 = vld [vmem:[#allocation12 + $0x278] sm:$0xff]
    %v2225 = vld [vmem:[#allocation12 + $0x280] sm:$0xff]
    %v2226 = vld [vmem:[#allocation12 + $0x288] sm:$0xff]
    %v2227 = vld [vmem:[#allocation12 + $0x290] sm:$0xf]
    %v2228 = vld [vmem:[#allocation12 + $0x294] sm:$0xff]
    %v2229 = vld [vmem:[#allocation12 + $0x29c] sm:$0xff]
    %v2230 = vld [vmem:[#allocation12 + $0x2a4] sm:$0xff]
    %v2231 = vld [vmem:[#allocation12 + $0x2ac] sm:$0xff]
    %v2232 = vld [vmem:[#allocation12 + $0x2b4] sm:$0xff]
    %v2233 = vld [vmem:[#allocation12 + $0x2bc] sm:$0xf]
    %v2234 = vld [vmem:[#allocation12 + $0x2c0] sm:$0xff]
    %v2235 = vld [vmem:[#allocation12 + $0x2c8] sm:$0xff]
    %v2236 = vld [vmem:[#allocation12 + $0x2d0] sm:$0xff]
    %v2237 = vld [vmem:[#allocation12 + $0x2d8] sm:$0xff]
    %v2238 = vld [vmem:[#allocation12 + $0x2e0] sm:$0xff]
    %v2239 = vld [vmem:[#allocation12 + $0x2e8] sm:$0xf]
    %v2240 = vld [vmem:[#allocation12 + $0x2ec] sm:$0xff]
    %v2241 = vld [vmem:[#allocation12 + $0x2f4] sm:$0xff]
    %v2242 = vld [vmem:[#allocation12 + $0x2fc] sm:$0xff]
    %v2243 = vld [vmem:[#allocation12 + $0x304] sm:$0xff]
    %v2244 = vld [vmem:[#allocation12 + $0x30c] sm:$0xff]
    %v2245 = vld [vmem:[#allocation12 + $0x314] sm:$0xf]
    %v2246 = vld [vmem:[#allocation12 + $0x318] sm:$0xff]
    %v2247 = vld [vmem:[#allocation12 + $0x320] sm:$0xff]
    %v2248 = vld [vmem:[#allocation12 + $0x328] sm:$0xff]
    %v2249 = vld [vmem:[#allocation12 + $0x330] sm:$0xff]
    %v2250 = vld [vmem:[#allocation12 + $0x338] sm:$0xff]
    %v2251 = vld [vmem:[#allocation12 + $0x340] sm:$0xf]
    %v2252 = vld [vmem:[#allocation12 + $0x344] sm:$0xff]
    %v2253 = vld [vmem:[#allocation12 + $0x34c] sm:$0xff]
    %v2254 = vld [vmem:[#allocation12 + $0x354] sm:$0xff]
    %v2255 = vld [vmem:[#allocation12 + $0x35c] sm:$0xff]
    %v2256 = vld [vmem:[#allocation12 + $0x364] sm:$0xff]
    %v2257 = vld [vmem:[#allocation12 + $0x36c] sm:$0xf]
    %v2258 = vld [vmem:[#allocation12 + $0x370] sm:$0xff]
    %v2259 = vld [vmem:[#allocation12 + $0x378] sm:$0xff]
    %v2260 = vld [vmem:[#allocation12 + $0x380] sm:$0xff]
    %v2261 = vld [vmem:[#allocation12 + $0x388] sm:$0xff]
    %v2262 = vld [vmem:[#allocation12 + $0x390] sm:$0xff]
    %v2263 = vld [vmem:[#allocation12 + $0x398] sm:$0xf]
    %v2264 = vld [vmem:[#allocation12 + $0x39c] sm:$0xff]
    %v2265 = vld [vmem:[#allocation12 + $0x3a4] sm:$0xff]
    %v2266 = vld [vmem:[#allocation12 + $0x3ac] sm:$0xff]
    %v2267 = vld [vmem:[#allocation12 + $0x3b4] sm:$0xff]
    %v2268 = vld [vmem:[#allocation12 + $0x3bc] sm:$0xff]
    %v2269 = vld [vmem:[#allocation12 + $0x3c4] sm:$0xf]
    %v2270 = vld [vmem:[#allocation12 + $0x3c8] sm:$0xff]
    %v2271 = vld [vmem:[#allocation12 + $0x3d0] sm:$0xff]
    %v2272 = vld [vmem:[#allocation12 + $0x3d8] sm:$0xff]
    %v2273 = vld [vmem:[#allocation12 + $0x3e0] sm:$0xff]
    %v2274 = vld [vmem:[#allocation12 + $0x3e8] sm:$0xff]
    %v2275 = vld [vmem:[#allocation12 + $0x3f0] sm:$0xf]
    %v2276 = vld [vmem:[#allocation12 + $0x3f4] sm:$0xff]
    %v2277 = vld [vmem:[#allocation12 + $0x3fc] sm:$0xff]
    %v2278 = vld [vmem:[#allocation12 + $0x404] sm:$0xff]
    %v2279 = vld [vmem:[#allocation12 + $0x40c] sm:$0xff]
    %v2280 = vld [vmem:[#allocation12 + $0x414] sm:$0xff]
    %v2281 = vld [vmem:[#allocation12 + $0x41c] sm:$0xf]
    %v2282 = vld [vmem:[#allocation12 + $0x420] sm:$0xff]
    %v2283 = vld [vmem:[#allocation12 + $0x428] sm:$0xff]
    %v2284 = vld [vmem:[#allocation12 + $0x430] sm:$0xff]
    %v2285 = vld [vmem:[#allocation12 + $0x438] sm:$0xff]
    %v2286 = vld [vmem:[#allocation12 + $0x440] sm:$0xff]
    %v2287 = vld [vmem:[#allocation12 + $0x448] sm:$0xf]
    %v2288 = vld [vmem:[#allocation12 + $0x44c] sm:$0xff]
    %v2289 = vld [vmem:[#allocation12 + $0x454] sm:$0xff]
    %v2290 = vld [vmem:[#allocation12 + $0x45c] sm:$0xff]
    %v2291 = vld [vmem:[#allocation12 + $0x464] sm:$0xff]
    %v2292 = vld [vmem:[#allocation12 + $0x46c] sm:$0xff]
    %v2293 = vld [vmem:[#allocation12 + $0x474] sm:$0xf]
    %v2294 = vld [vmem:[#allocation12 + $0x478] sm:$0xff]
    %v2295 = vld [vmem:[#allocation12 + $0x480] sm:$0xff]
    %v2296 = vld [vmem:[#allocation12 + $0x488] sm:$0xff]
    %v2297 = vld [vmem:[#allocation12 + $0x490] sm:$0xff]
    %v2298 = vld [vmem:[#allocation12 + $0x498] sm:$0xff]
    %v2299 = vld [vmem:[#allocation12 + $0x4a0] sm:$0xf]
    %v2300 = vld [vmem:[#allocation12 + $0x4a4] sm:$0xff]
    %v2301 = vld [vmem:[#allocation12 + $0x4ac] sm:$0xff]
    %v2302 = vld [vmem:[#allocation12 + $0x4b4] sm:$0xff]
    %v2303 = vld [vmem:[#allocation12 + $0x4bc] sm:$0xff]
    %v2304 = vld [vmem:[#allocation12 + $0x4c4] sm:$0xff]
    %v2305 = vld [vmem:[#allocation12 + $0x4cc] sm:$0xf]
    %v2306 = vld [vmem:[#allocation12 + $0x4d0] sm:$0xff]
    %v2307 = vld [vmem:[#allocation12 + $0x4d8] sm:$0xff]
    %v2308 = vld [vmem:[#allocation12 + $0x4e0] sm:$0xff]
    %v2309 = vld [vmem:[#allocation12 + $0x4e8] sm:$0xff]
    %v2310 = vld [vmem:[#allocation12 + $0x4f0] sm:$0xff]
    %v2311 = vld [vmem:[#allocation12 + $0x4f8] sm:$0xf]
    %v2312 = vld [vmem:[#allocation12 + $0x4fc] sm:$0xff]
    %v2313 = vld [vmem:[#allocation12 + $0x504] sm:$0xff]
    %v2314 = vld [vmem:[#allocation12 + $0x50c] sm:$0xff]
    %v2315 = vld [vmem:[#allocation12 + $0x514] sm:$0xff]
    %v2316 = vld [vmem:[#allocation12 + $0x51c] sm:$0xff]
    %v2317 = vld [vmem:[#allocation12 + $0x524] sm:$0xf]
    %v2318 = vld [vmem:[#allocation12 + $0x528] sm:$0xff]
    %v2319 = vld [vmem:[#allocation12 + $0x530] sm:$0xff]
    %v2320 = vld [vmem:[#allocation12 + $0x538] sm:$0xff]
    %v2321 = vld [vmem:[#allocation12 + $0x540] sm:$0xff]
    %v2322 = vld [vmem:[#allocation12 + $0x548] sm:$0xff]
    %v2323 = vld [vmem:[#allocation12 + $0x550] sm:$0xf]
    %v2324 = vld [vmem:[#allocation12 + $0x554] sm:$0xff]
    %v2325 = vld [vmem:[#allocation12 + $0x55c] sm:$0xff]
    %v2326 = vld [vmem:[#allocation12 + $0x564] sm:$0xff]
    %v2327 = vld [vmem:[#allocation12 + $0x56c] sm:$0xff]
    %v2328 = vld [vmem:[#allocation12 + $0x574] sm:$0xff]
    %v2329 = vld [vmem:[#allocation12 + $0x57c] sm:$0xf]
    %v2330 = vld [vmem:[#allocation12 + $0x580] sm:$0xff]
    %v2331 = vld [vmem:[#allocation12 + $0x588] sm:$0xff]
    %v2332 = vld [vmem:[#allocation12 + $0x590] sm:$0xff]
    %v2333 = vld [vmem:[#allocation12 + $0x598] sm:$0xff]
    %v2334 = vld [vmem:[#allocation12 + $0x5a0] sm:$0xff]
    %v2335 = vld [vmem:[#allocation12 + $0x5a8] sm:$0xf]
    %v2336 = vld [vmem:[#allocation12 + $0x5ac] sm:$0xff]
    %v2337 = vld [vmem:[#allocation12 + $0x5b4] sm:$0xff]
    %v2338 = vld [vmem:[#allocation12 + $0x5bc] sm:$0xff]
    %v2339 = vld [vmem:[#allocation12 + $0x5c4] sm:$0xff]
    %v2340 = vld [vmem:[#allocation12 + $0x5cc] sm:$0xff]
    %v2341 = vld [vmem:[#allocation12 + $0x5d4] sm:$0xf]
    %v2342 = vld [vmem:[#allocation12 + $0x5d8] sm:$0xff]
    %v2343 = vld [vmem:[#allocation12 + $0x5e0] sm:$0xff]
    %v2344 = vld [vmem:[#allocation12 + $0x5e8] sm:$0xff]
    %v2345 = vld [vmem:[#allocation12 + $0x5f0] sm:$0xff]
    %v2346 = vld [vmem:[#allocation12 + $0x5f8] sm:$0xff]
    %v2347 = vld [vmem:[#allocation12 + $0x600] sm:$0xf]
    %v2348 = vld [vmem:[#allocation12 + $0x604] sm:$0xff]
    %v2349 = vld [vmem:[#allocation12 + $0x60c] sm:$0xff]
    %v2350 = vld [vmem:[#allocation12 + $0x614] sm:$0xff]
    %v2351 = vld [vmem:[#allocation12 + $0x61c] sm:$0xff]
    %v2352 = vld [vmem:[#allocation12 + $0x624] sm:$0xff]
    %v2353 = vld [vmem:[#allocation12 + $0x62c] sm:$0xf]
    %v2354 = vld [vmem:[#allocation12 + $0x630] sm:$0xff]
    %v2355 = vld [vmem:[#allocation12 + $0x638] sm:$0xff]
    %v2356 = vld [vmem:[#allocation12 + $0x640] sm:$0xff]
    %v2357 = vld [vmem:[#allocation12 + $0x648] sm:$0xff]
    %v2358 = vld [vmem:[#allocation12 + $0x650] sm:$0xff]
    %v2359 = vld [vmem:[#allocation12 + $0x658] sm:$0xf]
    %v2360 = vld [vmem:[#allocation12 + $0x65c] sm:$0xff]
    %v2361 = vld [vmem:[#allocation12 + $0x664] sm:$0xff]
    %v2362 = vld [vmem:[#allocation12 + $0x66c] sm:$0xff]
    %v2363 = vld [vmem:[#allocation12 + $0x674] sm:$0xff]
    %v2364 = vld [vmem:[#allocation12 + $0x67c] sm:$0xff]
    %v2365 = vld [vmem:[#allocation12 + $0x684] sm:$0xf]
    %v2366 = vld [vmem:[#allocation12 + $0x688] sm:$0xff]
    %v2367 = vld [vmem:[#allocation12 + $0x690] sm:$0xff]
    %v2368 = vld [vmem:[#allocation12 + $0x698] sm:$0xff]
    %v2369 = vld [vmem:[#allocation12 + $0x6a0] sm:$0xff]
    %v2370 = vld [vmem:[#allocation12 + $0x6a8] sm:$0xff]
    %v2371 = vld [vmem:[#allocation12 + $0x6b0] sm:$0xf]
    %v2372 = vld [vmem:[#allocation12 + $0x6b4] sm:$0xff]
    %v2373 = vld [vmem:[#allocation12 + $0x6bc] sm:$0xff]
    %v2374 = vld [vmem:[#allocation12 + $0x6c4] sm:$0xff]
    %v2375 = vld [vmem:[#allocation12 + $0x6cc] sm:$0xff]
    %v2376 = vld [vmem:[#allocation12 + $0x6d4] sm:$0xff]
    %v2377 = vld [vmem:[#allocation12 + $0x6dc] sm:$0xf]
    %v2378 = vld [vmem:[#allocation12 + $0x6e0] sm:$0xff]
    %v2379 = vld [vmem:[#allocation12 + $0x6e8] sm:$0xff]
    %v2380 = vld [vmem:[#allocation12 + $0x6f0] sm:$0xff]
    %v2381 = vld [vmem:[#allocation12 + $0x6f8] sm:$0xff]
    %v2382 = vld [vmem:[#allocation12 + $0x700] sm:$0xff]
    %v2383 = vld [vmem:[#allocation12 + $0x708] sm:$0xf]
    %v2384 = vld [vmem:[#allocation12 + $0x70c] sm:$0xff]
    %v2385 = vld [vmem:[#allocation12 + $0x714] sm:$0xff]
    %v2386 = vld [vmem:[#allocation12 + $0x71c] sm:$0xff]
    %v2387 = vld [vmem:[#allocation12 + $0x724] sm:$0xff]
    %v2388 = vld [vmem:[#allocation12 + $0x72c] sm:$0xff]
    %v2389 = vld [vmem:[#allocation12 + $0x734] sm:$0xf]
    %v2390 = vld [vmem:[#allocation12 + $0x738] sm:$0xff]
    %v2391 = vld [vmem:[#allocation12 + $0x740] sm:$0xff]
    %v2392 = vld [vmem:[#allocation12 + $0x748] sm:$0xff]
    %v2393 = vld [vmem:[#allocation12 + $0x750] sm:$0xff]
    %v2394 = vld [vmem:[#allocation12 + $0x758] sm:$0xff]
    %v2395 = vld [vmem:[#allocation12 + $0x760] sm:$0xf]
    %v2396 = vld [vmem:[#allocation12 + $0x764] sm:$0xff]
    %v2397 = vld [vmem:[#allocation12 + $0x76c] sm:$0xff]
    %v2398 = vld [vmem:[#allocation12 + $0x774] sm:$0xff]
    %v2399 = vld [vmem:[#allocation12 + $0x77c] sm:$0xff]
    %v2400 = vld [vmem:[#allocation12 + $0x784] sm:$0xff]
    %v2401 = vld [vmem:[#allocation12 + $0x78c] sm:$0xf]
    %v2402 = vld [vmem:[#allocation12 + $0x790] sm:$0xff]
    %v2403 = vld [vmem:[#allocation12 + $0x798] sm:$0xff]
    %v2404 = vld [vmem:[#allocation12 + $0x7a0] sm:$0xff]
    %v2405 = vld [vmem:[#allocation12 + $0x7a8] sm:$0xff]
    %v2406 = vld [vmem:[#allocation12 + $0x7b0] sm:$0xff]
    %v2407 = vld [vmem:[#allocation12 + $0x7b8] sm:$0xf]
    %v2408 = vld [vmem:[#allocation12 + $0x7bc] sm:$0xff]
    %v2409 = vld [vmem:[#allocation12 + $0x7c4] sm:$0xff]
    %v2410 = vld [vmem:[#allocation12 + $0x7cc] sm:$0xff]
    %v2411 = vld [vmem:[#allocation12 + $0x7d4] sm:$0xff]
    %v2412 = vld [vmem:[#allocation12 + $0x7dc] sm:$0xff]
    %v2413 = vld [vmem:[#allocation12 + $0x7e4] sm:$0xf]
    %v2414 = vld [vmem:[#allocation12 + $0x7e8] sm:$0xff]
    %v2415 = vld [vmem:[#allocation12 + $0x7f0] sm:$0xff]
    %v2416 = vld [vmem:[#allocation12 + $0x7f8] sm:$0xff]
    %v2417 = vld [vmem:[#allocation12 + $0x800] sm:$0xff]
    %v2418 = vld [vmem:[#allocation12 + $0x808] sm:$0xff]
    %v2419 = vld [vmem:[#allocation12 + $0x810] sm:$0xf]
    %v2420 = vld [vmem:[#allocation12 + $0x814] sm:$0xff]
    %v2421 = vld [vmem:[#allocation12 + $0x81c] sm:$0xff]
    %v2422 = vld [vmem:[#allocation12 + $0x824] sm:$0xff]
    %v2423 = vld [vmem:[#allocation12 + $0x82c] sm:$0xff]
    %v2424 = vld [vmem:[#allocation12 + $0x834] sm:$0xff]
    %v2425 = vld [vmem:[#allocation12 + $0x83c] sm:$0xf]
    %v2426 = vld [vmem:[#allocation12 + $0x840] sm:$0xff]
    %v2427 = vld [vmem:[#allocation12 + $0x848] sm:$0xff]
    %v2428 = vld [vmem:[#allocation12 + $0x850] sm:$0xff]
    %v2429 = vld [vmem:[#allocation12 + $0x858] sm:$0xff]
    %v2430 = vld [vmem:[#allocation12 + $0x860] sm:$0xff]
    %v2431 = vld [vmem:[#allocation12 + $0x868] sm:$0xf]
    %v2432 = vld [vmem:[#allocation12 + $0x86c] sm:$0xff]
    %v2433 = vld [vmem:[#allocation12 + $0x874] sm:$0xff]
    %v2434 = vld [vmem:[#allocation12 + $0x87c] sm:$0xff]
    %v2435 = vld [vmem:[#allocation12 + $0x884] sm:$0xff]
    %v2436 = vld [vmem:[#allocation12 + $0x88c] sm:$0xff]
    %v2437 = vld [vmem:[#allocation12 + $0x894] sm:$0xf]
    %v2438 = vld [vmem:[#allocation12 + $0x898] sm:$0xff]
    %v2439 = vld [vmem:[#allocation12 + $0x8a0] sm:$0xff]
    %v2440 = vld [vmem:[#allocation12 + $0x8a8] sm:$0xff]
    %v2441 = vld [vmem:[#allocation12 + $0x8b0] sm:$0xff]
    %v2442 = vld [vmem:[#allocation12 + $0x8b8] sm:$0xff]
    %v2443 = vld [vmem:[#allocation12 + $0x8c0] sm:$0xf]
    %v2444 = vld [vmem:[#allocation12 + $0x8c4] sm:$0xff]
    %v2445 = vld [vmem:[#allocation12 + $0x8cc] sm:$0xff]
    %v2446 = vld [vmem:[#allocation12 + $0x8d4] sm:$0xff]
    %v2447 = vld [vmem:[#allocation12 + $0x8dc] sm:$0xff]
    %v2448 = vld [vmem:[#allocation12 + $0x8e4] sm:$0xff]
    %v2449 = vld [vmem:[#allocation12 + $0x8ec] sm:$0xf]
    %v2450 = vld [vmem:[#allocation12 + $0x8f0] sm:$0xff]
    %v2451 = vld [vmem:[#allocation12 + $0x8f8] sm:$0xff]
    %v2452 = vld [vmem:[#allocation12 + $0x900] sm:$0xff]
    %v2453 = vld [vmem:[#allocation12 + $0x908] sm:$0xff]
    %v2454 = vld [vmem:[#allocation12 + $0x910] sm:$0xff]
    %v2455 = vld [vmem:[#allocation12 + $0x918] sm:$0xf]
    %v2456 = vld [vmem:[#allocation12 + $0x91c] sm:$0xff]
    %v2457 = vld [vmem:[#allocation12 + $0x924] sm:$0xff]
    %v2458 = vld [vmem:[#allocation12 + $0x92c] sm:$0xff]
    %v2459 = vld [vmem:[#allocation12 + $0x934] sm:$0xff]
    %v2460 = vld [vmem:[#allocation12 + $0x93c] sm:$0xff]
    %v2461 = vld [vmem:[#allocation12 + $0x944] sm:$0xf]
    %v2462 = vld [vmem:[#allocation12 + $0x948] sm:$0xff]
    %v2463 = vld [vmem:[#allocation12 + $0x950] sm:$0xff]
    %v2464 = vld [vmem:[#allocation12 + $0x958] sm:$0xff]
    %v2465 = vld [vmem:[#allocation12 + $0x960] sm:$0xff]
    %v2466 = vld [vmem:[#allocation12 + $0x968] sm:$0xff]
    %v2467 = vld [vmem:[#allocation12 + $0x970] sm:$0xf]
    %v2468 = vld [vmem:[#allocation12 + $0x974] sm:$0xff]
    %v2469 = vld [vmem:[#allocation12 + $0x97c] sm:$0xff]
    %v2470 = vld [vmem:[#allocation12 + $0x984] sm:$0xff]
    %v2471 = vld [vmem:[#allocation12 + $0x98c] sm:$0xff]
    %v2472 = vld [vmem:[#allocation12 + $0x994] sm:$0xff]
    %v2473 = vld [vmem:[#allocation12 + $0x99c] sm:$0xf]
    %v2474 = vld [vmem:[#allocation12 + $0x9a0] sm:$0xff]
    %v2475 = vld [vmem:[#allocation12 + $0x9a8] sm:$0xff]
    %v2476 = vld [vmem:[#allocation12 + $0x9b0] sm:$0xff]
    %v2477 = vld [vmem:[#allocation12 + $0x9b8] sm:$0xff]
    %v2478 = vld [vmem:[#allocation12 + $0x9c0] sm:$0xff]
    %v2479 = vld [vmem:[#allocation12 + $0x9c8] sm:$0xf]
    %v2480 = vld [vmem:[#allocation12 + $0x9cc] sm:$0xff]
    %v2481 = vld [vmem:[#allocation12 + $0x9d4] sm:$0xff]
    %v2482 = vld [vmem:[#allocation12 + $0x9dc] sm:$0xff]
    %v2483 = vld [vmem:[#allocation12 + $0x9e4] sm:$0xff]
    %v2484 = vld [vmem:[#allocation12 + $0x9ec] sm:$0xff]
    %v2485 = vld [vmem:[#allocation12 + $0x9f4] sm:$0xf]
    %v2486 = vld [vmem:[#allocation12 + $0x9f8] sm:$0xff]
    %v2487 = vld [vmem:[#allocation12 + $0xa00] sm:$0xff]
    %v2488 = vld [vmem:[#allocation12 + $0xa08] sm:$0xff]
    %v2489 = vld [vmem:[#allocation12 + $0xa10] sm:$0xff]
    %v2490 = vld [vmem:[#allocation12 + $0xa18] sm:$0xff]
    %v2491 = vld [vmem:[#allocation12 + $0xa20] sm:$0xf]
    %v2492 = vld [vmem:[#allocation12 + $0xa24] sm:$0xff]
    %v2493 = vld [vmem:[#allocation12 + $0xa2c] sm:$0xff]
    %v2494 = vld [vmem:[#allocation12 + $0xa34] sm:$0xff]
    %v2495 = vld [vmem:[#allocation12 + $0xa3c] sm:$0xff]
    %v2496 = vld [vmem:[#allocation12 + $0xa44] sm:$0xff]
    %v2497 = vld [vmem:[#allocation12 + $0xa4c] sm:$0xf]
    %v2498 = vld [vmem:[#allocation12 + $0xa50] sm:$0xff]
    %v2499 = vld [vmem:[#allocation12 + $0xa58] sm:$0xff]
    %v2500 = vld [vmem:[#allocation12 + $0xa60] sm:$0xff]
    %v2501 = vld [vmem:[#allocation12 + $0xa68] sm:$0xff]
    %v2502 = vld [vmem:[#allocation12 + $0xa70] sm:$0xff]
    %v2503 = vld [vmem:[#allocation12 + $0xa78] sm:$0xf]
    %v2504 = vld [vmem:[#allocation12 + $0xa7c] sm:$0xff]
    %v2505 = vld [vmem:[#allocation12 + $0xa84] sm:$0xff]
    %v2506 = vld [vmem:[#allocation12 + $0xa8c] sm:$0xff]
    %v2507 = vld [vmem:[#allocation12 + $0xa94] sm:$0xff]
    %v2508 = vld [vmem:[#allocation12 + $0xa9c] sm:$0xff]
    %v2509 = vld [vmem:[#allocation12 + $0xaa4] sm:$0xf]
    %v2510 = vld [vmem:[#allocation12 + $0xaa8] sm:$0xff]
    %v2511 = vld [vmem:[#allocation12 + $0xab0] sm:$0xff]
    %v2512 = vld [vmem:[#allocation12 + $0xab8] sm:$0xff]
    %v2513 = vld [vmem:[#allocation12 + $0xac0] sm:$0xff]
    %v2514 = vld [vmem:[#allocation12 + $0xac8] sm:$0xff]
    %v2515 = vld [vmem:[#allocation12 + $0xad0] sm:$0xf]
    %v2516 = vld [vmem:[#allocation12 + $0xad4] sm:$0xff]
    %v2517 = vld [vmem:[#allocation12 + $0xadc] sm:$0xff]
    %v2518 = vld [vmem:[#allocation12 + $0xae4] sm:$0xff]
    %v2519 = vld [vmem:[#allocation12 + $0xaec] sm:$0xff]
    %v2520 = vld [vmem:[#allocation12 + $0xaf4] sm:$0xff]
    %v2521 = vld [vmem:[#allocation12 + $0xafc] sm:$0xf]
    %v2522 = vld [vmem:[#allocation12 + $0xb00] sm:$0xff]
    %v2523 = vld [vmem:[#allocation12 + $0xb08] sm:$0xff]
    %v2524 = vld [vmem:[#allocation12 + $0xb10] sm:$0xff]
    %v2525 = vld [vmem:[#allocation12 + $0xb18] sm:$0xff]
    %v2526 = vld [vmem:[#allocation12 + $0xb20] sm:$0xff]
    %v2527 = vld [vmem:[#allocation12 + $0xb28] sm:$0xf]
    %v2528 = vld [vmem:[#allocation12 + $0xb2c] sm:$0xff]
    %v2529 = vld [vmem:[#allocation12 + $0xb34] sm:$0xff]
    %v2530 = vld [vmem:[#allocation12 + $0xb3c] sm:$0xff]
    %v2531 = vld [vmem:[#allocation12 + $0xb44] sm:$0xff]
    %v2532 = vld [vmem:[#allocation12 + $0xb4c] sm:$0xff]
    %v2533 = vld [vmem:[#allocation12 + $0xb54] sm:$0xf]
    %v2534 = vld [vmem:[#allocation12 + $0xb58] sm:$0xff]
    %v2535 = vld [vmem:[#allocation12 + $0xb60] sm:$0xff]
    %v2536 = vld [vmem:[#allocation12 + $0xb68] sm:$0xff]
    %v2537 = vld [vmem:[#allocation12 + $0xb70] sm:$0xff]
    %v2538 = vld [vmem:[#allocation12 + $0xb78] sm:$0xff]
    %v2539 = vld [vmem:[#allocation12 + $0xb80] sm:$0xf]
    %v2540 = vld [vmem:[#allocation12 + $0xb84] sm:$0xff]
    %v2541 = vld [vmem:[#allocation12 + $0xb8c] sm:$0xff]
    %v2542 = vld [vmem:[#allocation12 + $0xb94] sm:$0xff]
    %v2543 = vld [vmem:[#allocation12 + $0xb9c] sm:$0xff]
    %v2544 = vld [vmem:[#allocation12 + $0xba4] sm:$0xff]
    %v2545 = vld [vmem:[#allocation12 + $0xbac] sm:$0xf]
    %v2546 = vld [vmem:[#allocation12 + $0xbb0] sm:$0xff]
    %v2547 = vld [vmem:[#allocation12 + $0xbb8] sm:$0xff]
    %v2548 = vld [vmem:[#allocation12 + $0xbc0] sm:$0xff]
    %v2549 = vld [vmem:[#allocation12 + $0xbc8] sm:$0xff]
    %v2550 = vld [vmem:[#allocation12 + $0xbd0] sm:$0xff]
    %v2551 = vld [vmem:[#allocation12 + $0xbd8] sm:$0xf]
    %v2552 = vld [vmem:[#allocation12 + $0xbdc] sm:$0xff]
    %v2553 = vld [vmem:[#allocation12 + $0xbe4] sm:$0xff]
    %v2554 = vld [vmem:[#allocation12 + $0xbec] sm:$0xff]
    %v2555 = vld [vmem:[#allocation12 + $0xbf4] sm:$0xff]
    %v2556 = vld [vmem:[#allocation12 + $0xbfc] sm:$0xff]
    %v2557 = vld [vmem:[#allocation12 + $0xc04] sm:$0xf]
    %v2558 = vld [vmem:[#allocation12 + $0xc08] sm:$0xff]
    %v2559 = vld [vmem:[#allocation12 + $0xc10] sm:$0xff]
    %v2560 = vld [vmem:[#allocation12 + $0xc18] sm:$0xff]
    %v2561 = vld [vmem:[#allocation12 + $0xc20] sm:$0xff]
    %v2562 = vld [vmem:[#allocation12 + $0xc28] sm:$0xff]
    %v2563 = vld [vmem:[#allocation12 + $0xc30] sm:$0xf]
    %v2564 = vld [vmem:[#allocation12 + $0xc34] sm:$0xff]
    %v2565 = vld [vmem:[#allocation12 + $0xc3c] sm:$0xff]
    %v2566 = vld [vmem:[#allocation12 + $0xc44] sm:$0xff]
    %v2567 = vld [vmem:[#allocation12 + $0xc4c] sm:$0xff]
    %v2568 = vld [vmem:[#allocation12 + $0xc54] sm:$0xff]
    %v2569 = vld [vmem:[#allocation12 + $0xc5c] sm:$0xf]
    %v2570 = vld [vmem:[#allocation12 + $0xc60] sm:$0xff]
    %v2571 = vld [vmem:[#allocation12 + $0xc68] sm:$0xff]
    %v2572 = vld [vmem:[#allocation12 + $0xc70] sm:$0xff]
    %v2573 = vld [vmem:[#allocation12 + $0xc78] sm:$0xff]
    %v2574 = vld [vmem:[#allocation12 + $0xc80] sm:$0xff]
    %v2575 = vld [vmem:[#allocation12 + $0xc88] sm:$0xf]
    %v2576 = vld [vmem:[#allocation12 + $0xc8c] sm:$0xff]
    %v2577 = vld [vmem:[#allocation12 + $0xc94] sm:$0xff]
    %v2578 = vld [vmem:[#allocation12 + $0xc9c] sm:$0xff]
    %v2579 = vld [vmem:[#allocation12 + $0xca4] sm:$0xff]
    %v2580 = vld [vmem:[#allocation12 + $0xcac] sm:$0xff]
    %v2581 = vld [vmem:[#allocation12 + $0xcb4] sm:$0xf]
    %v2582 = vld [vmem:[#allocation12 + $0xcb8] sm:$0xff]
    %v2583 = vld [vmem:[#allocation12 + $0xcc0] sm:$0xff]
    %v2584 = vld [vmem:[#allocation12 + $0xcc8] sm:$0xff]
    %v2585 = vld [vmem:[#allocation12 + $0xcd0] sm:$0xff]
    %v2586 = vld [vmem:[#allocation12 + $0xcd8] sm:$0xff]
    %v2587 = vld [vmem:[#allocation12 + $0xce0] sm:$0xf]
    %v2588 = vld [vmem:[#allocation12 + $0xce4] sm:$0xff]
    %v2589 = vld [vmem:[#allocation12 + $0xcec] sm:$0xff]
    %v2590 = vld [vmem:[#allocation12 + $0xcf4] sm:$0xff]
    %v2591 = vld [vmem:[#allocation12 + $0xcfc] sm:$0xff]
    %v2592 = vld [vmem:[#allocation12 + $0xd04] sm:$0xff]
    %v2593 = vld [vmem:[#allocation12 + $0xd0c] sm:$0xf]
    %v2594 = vld [vmem:[#allocation12 + $0xd10] sm:$0xff]
    %v2595 = vld [vmem:[#allocation12 + $0xd18] sm:$0xff]
    %v2596 = vld [vmem:[#allocation12 + $0xd20] sm:$0xff]
    %v2597 = vld [vmem:[#allocation12 + $0xd28] sm:$0xff]
    %v2598 = vld [vmem:[#allocation12 + $0xd30] sm:$0xff]
    %v2599 = vld [vmem:[#allocation12 + $0xd38] sm:$0xf]
    %v2600 = vld [vmem:[#allocation12 + $0xd3c] sm:$0xff]
    %v2601 = vld [vmem:[#allocation12 + $0xd44] sm:$0xff]
    %v2602 = vld [vmem:[#allocation12 + $0xd4c] sm:$0xff]
    %v2603 = vld [vmem:[#allocation12 + $0xd54] sm:$0xff]
    %v2604 = vld [vmem:[#allocation12 + $0xd5c] sm:$0xff]
    %v2605 = vld [vmem:[#allocation12 + $0xd64] sm:$0xf]
    %v2606 = vld [vmem:[#allocation12 + $0xd68] sm:$0xff]
    %v2607 = vld [vmem:[#allocation12 + $0xd70] sm:$0xff]
    %v2608 = vld [vmem:[#allocation12 + $0xd78] sm:$0xff]
    %v2609 = vld [vmem:[#allocation12 + $0xd80] sm:$0xff]
    %v2610 = vld [vmem:[#allocation12 + $0xd88] sm:$0xff]
    %v2611 = vld [vmem:[#allocation12 + $0xd90] sm:$0xf]
    %v2612 = vld [vmem:[#allocation12 + $0xd94] sm:$0xff]
    %v2613 = vld [vmem:[#allocation12 + $0xd9c] sm:$0xff]
    %v2614 = vld [vmem:[#allocation12 + $0xda4] sm:$0xff]
    %v2615 = vld [vmem:[#allocation12 + $0xdac] sm:$0xff]
    %v2616 = vld [vmem:[#allocation12 + $0xdb4] sm:$0xff]
    %v2617 = vld [vmem:[#allocation12 + $0xdbc] sm:$0xf]
    %v2618 = vld [vmem:[#allocation12 + $0xdc0] sm:$0xff]
    %v2619 = vld [vmem:[#allocation12 + $0xdc8] sm:$0xff]
    %v2620 = vld [vmem:[#allocation12 + $0xdd0] sm:$0xff]
    %v2621 = vld [vmem:[#allocation12 + $0xdd8] sm:$0xff]
    %v2622 = vld [vmem:[#allocation12 + $0xde0] sm:$0xff]
    %v2623 = vld [vmem:[#allocation12 + $0xde8] sm:$0xf]
    %v2624 = vld [vmem:[#allocation12 + $0xdec] sm:$0xff]
    %v2625 = vld [vmem:[#allocation12 + $0xdf4] sm:$0xff]
    %v2626 = vld [vmem:[#allocation12 + $0xdfc] sm:$0xff]
    %v2627 = vld [vmem:[#allocation12 + $0xe04] sm:$0xff]
    %v2628 = vld [vmem:[#allocation12 + $0xe0c] sm:$0xff]
    %v2629 = vld [vmem:[#allocation12 + $0xe14] sm:$0xf]
    %v2630 = vld [vmem:[#allocation12 + $0xe18] sm:$0xff]
    %v2631 = vld [vmem:[#allocation12 + $0xe20] sm:$0xff]
    %v2632 = vld [vmem:[#allocation12 + $0xe28] sm:$0xff]
    %v2633 = vld [vmem:[#allocation12 + $0xe30] sm:$0xff]
    %v2634 = vld [vmem:[#allocation12 + $0xe38] sm:$0xff]
    %v2635 = vld [vmem:[#allocation12 + $0xe40] sm:$0xf]
    %v2636 = vld [vmem:[#allocation12 + $0xe44] sm:$0xff]
    %v2637 = vld [vmem:[#allocation12 + $0xe4c] sm:$0xff]
    %v2638 = vld [vmem:[#allocation12 + $0xe54] sm:$0xff]
    %v2639 = vld [vmem:[#allocation12 + $0xe5c] sm:$0xff]
    %v2640 = vld [vmem:[#allocation12 + $0xe64] sm:$0xff]
    %v2641 = vld [vmem:[#allocation12 + $0xe6c] sm:$0xf]
    %v2642 = vld [vmem:[#allocation12 + $0xe70] sm:$0xff]
    %v2643 = vld [vmem:[#allocation12 + $0xe78] sm:$0xff]
    %v2644 = vld [vmem:[#allocation12 + $0xe80] sm:$0xff]
    %v2645 = vld [vmem:[#allocation12 + $0xe88] sm:$0xff]
    %v2646 = vld [vmem:[#allocation12 + $0xe90] sm:$0xff]
    %v2647 = vld [vmem:[#allocation12 + $0xe98] sm:$0xf]
    %v2648 = vld [vmem:[#allocation12 + $0xe9c] sm:$0xff]
    %v2649 = vld [vmem:[#allocation12 + $0xea4] sm:$0xff]
    %v2650 = vld [vmem:[#allocation12 + $0xeac] sm:$0xff]
    %v2651 = vld [vmem:[#allocation12 + $0xeb4] sm:$0xff]
    %v2652 = vld [vmem:[#allocation12 + $0xebc] sm:$0xff]
    %v2653 = vld [vmem:[#allocation12 + $0xec4] sm:$0xf]
    %v2654 = vld [vmem:[#allocation12 + $0xec8] sm:$0xff]
    %v2655 = vld [vmem:[#allocation12 + $0xed0] sm:$0xff]
    %v2656 = vld [vmem:[#allocation12 + $0xed8] sm:$0xff]
    %v2657 = vld [vmem:[#allocation12 + $0xee0] sm:$0xff]
    %v2658 = vld [vmem:[#allocation12 + $0xee8] sm:$0xff]
    %v2659 = vld [vmem:[#allocation12 + $0xef0] sm:$0xf]
    %v2660 = vld [vmem:[#allocation12 + $0xef4] sm:$0xff]
    %v2661 = vld [vmem:[#allocation12 + $0xefc] sm:$0xff]
    %v2662 = vld [vmem:[#allocation12 + $0xf04] sm:$0xff]
    %v2663 = vld [vmem:[#allocation12 + $0xf0c] sm:$0xff]
    %v2664 = vld [vmem:[#allocation12 + $0xf14] sm:$0xff]
    %v2665 = vld [vmem:[#allocation12 + $0xf1c] sm:$0xf]
    %v2666 = vld [vmem:[#allocation12 + $0xf20] sm:$0xff]
    %v2667 = vld [vmem:[#allocation12 + $0xf28] sm:$0xff]
    %v2668 = vld [vmem:[#allocation12 + $0xf30] sm:$0xff]
    %v2669 = vld [vmem:[#allocation12 + $0xf38] sm:$0xff]
    %v2670 = vld [vmem:[#allocation12 + $0xf40] sm:$0xff]
    %v2671 = vld [vmem:[#allocation12 + $0xf48] sm:$0xf]
    %v2672 = vld [vmem:[#allocation12 + $0xf4c] sm:$0xff]
    %v2673 = vld [vmem:[#allocation12 + $0xf54] sm:$0xff]
    %v2674 = vld [vmem:[#allocation12 + $0xf5c] sm:$0xff]
    %v2675 = vld [vmem:[#allocation12 + $0xf64] sm:$0xff]
    %v2676 = vld [vmem:[#allocation12 + $0xf6c] sm:$0xff]
    %v2677 = vld [vmem:[#allocation12 + $0xf74] sm:$0xf]
    %v2678 = vld [vmem:[#allocation12 + $0xf78] sm:$0xff]
    %v2679 = vld [vmem:[#allocation12 + $0xf80] sm:$0xff]
    %v2680 = vld [vmem:[#allocation12 + $0xf88] sm:$0xff]
    %v2681 = vld [vmem:[#allocation12 + $0xf90] sm:$0xff]
    %v2682 = vld [vmem:[#allocation12 + $0xf98] sm:$0xff]
    %v2683 = vld [vmem:[#allocation12 + $0xfa0] sm:$0xf]
    %v2684 = vld [vmem:[#allocation12 + $0xfa4] sm:$0xff]
    %v2685 = vld [vmem:[#allocation12 + $0xfac] sm:$0xff]
    %v2686 = vld [vmem:[#allocation12 + $0xfb4] sm:$0xff]
    %v2687 = vld [vmem:[#allocation12 + $0xfbc] sm:$0xff]
    %v2688 = vld [vmem:[#allocation12 + $0xfc4] sm:$0xff]
    %v2689 = vld [vmem:[#allocation12 + $0xfcc] sm:$0xf]
    %v2690 = vld [vmem:[#allocation12 + $0xfd0] sm:$0xff]
    %v2691 = vld [vmem:[#allocation12 + $0xfd8] sm:$0xff]
    %v2692 = vld [vmem:[#allocation12 + $0xfe0] sm:$0xff]
    %v2693 = vld [vmem:[#allocation12 + $0xfe8] sm:$0xff]
    %v2694 = vld [vmem:[#allocation12 + $0xff0] sm:$0xff]
    %v2695 = vld [vmem:[#allocation12 + $0xff8] sm:$0xf]
    %v2696 = vld [vmem:[#allocation12 + $0xffc] sm:$0xff]
    %v2697 = vld [vmem:[#allocation12 + $0x1004] sm:$0xff]
    %v2698 = vld [vmem:[#allocation12 + $0x100c] sm:$0xff]
    %v2699 = vld [vmem:[#allocation12 + $0x1014] sm:$0xff]
    %v2700 = vld [vmem:[#allocation12 + $0x101c] sm:$0xff]
    %v2701 = vld [vmem:[#allocation12 + $0x1024] sm:$0xf]
    %v2702 = vld [vmem:[#allocation12 + $0x1028] sm:$0xff]
    %v2703 = vld [vmem:[#allocation12 + $0x1030] sm:$0xff]
    %v2704 = vld [vmem:[#allocation12 + $0x1038] sm:$0xff]
    %v2705 = vld [vmem:[#allocation12 + $0x1040] sm:$0xff]
    %v2706 = vld [vmem:[#allocation12 + $0x1048] sm:$0xff]
    %v2707 = vld [vmem:[#allocation12 + $0x1050] sm:$0xf]
    %v2708 = vld [vmem:[#allocation12 + $0x1054] sm:$0xff]
    %v2709 = vld [vmem:[#allocation12 + $0x105c] sm:$0xff]
    %v2710 = vld [vmem:[#allocation12 + $0x1064] sm:$0xff]
    %v2711 = vld [vmem:[#allocation12 + $0x106c] sm:$0xff]
    %v2712 = vld [vmem:[#allocation12 + $0x1074] sm:$0xff]
    %v2713 = vld [vmem:[#allocation12 + $0x107c] sm:$0xf]
    %v2714 = vpack.c.bf16 %v2132, %v2132
    %v2715 = vpack.c.bf16 %v2133, %v2133
    %v2716 = vpack.c.bf16 %v2134, %v2134
    %v2717 = vpack.c.bf16 %v2135, %v2135
    %v2718 = vpack.c.bf16 %v2136, %v2136
    %v2719 = vpack.c.bf16 %v2137, %v2137
    %v2720 = vld [vmem:[#allocation13] sm:$0xff]
    %v2721 = vld [vmem:[#allocation13 + $0x8] sm:$0x7]
    %v2724 = vperm.slane %v2720, 0
    %v2725 = vperm.slane %v2720, 1
    %v2726 = vperm.slane %v2720, 2
    %v2727 = vperm.slane %v2720, 3
    %v2728 = vperm.slane %v2720, 4
    %v2729 = vperm.slane %v2720, 5
    %v2730 = vperm.slane %v2720, 6
    %v2731 = vperm.slane %v2720, 7
    %v2732 = vperm.slane %v2721, 0
    %v2733 = vperm.slane %v2721, 1
    %v2734 = vperm.slane %v2721, 2
    %v3322 = vunpack.c.l.b16 %v2138
    %v3323 = vunpack.c.h.b16 %v2138
    %v3324 = vunpack.c.l.b16 %v2139
    %v3325 = vunpack.c.h.b16 %v2139
    %v3326 = vunpack.c.l.b16 %v2140
    %v3327 = vunpack.c.h.b16 %v2140
    %v3328 = vunpack.c.l.b16 %v2141
    %v3329 = vunpack.c.h.b16 %v2141
    %v3330 = vunpack.c.l.b16 %v2142
    %v3331 = vunpack.c.h.b16 %v2142
    %v3332 = vunpack.c.l.b16 %v2143
    %v3333 = vunpack.c.l.b16 %v2144
    %v3334 = vunpack.c.h.b16 %v2144
    %v3335 = vunpack.c.l.b16 %v2145
    %v3336 = vunpack.c.h.b16 %v2145
    %v3337 = vunpack.c.l.b16 %v2146
    %v3338 = vunpack.c.h.b16 %v2146
    %v3339 = vunpack.c.l.b16 %v2147
    %v3340 = vunpack.c.h.b16 %v2147
    %v3341 = vunpack.c.l.b16 %v2148
    %v3342 = vunpack.c.h.b16 %v2148
    %v3343 = vunpack.c.l.b16 %v2149
    %v3344 = vunpack.c.l.b16 %v2150
    %v3345 = vunpack.c.h.b16 %v2150
    %v3346 = vunpack.c.l.b16 %v2151
    %v3347 = vunpack.c.h.b16 %v2151
    %v3348 = vunpack.c.l.b16 %v2152
    %v3349 = vunpack.c.h.b16 %v2152
    %v3350 = vunpack.c.l.b16 %v2153
    %v3351 = vunpack.c.h.b16 %v2153
    %v3352 = vunpack.c.l.b16 %v2154
    %v3353 = vunpack.c.h.b16 %v2154
    %v3354 = vunpack.c.l.b16 %v2155
    %v3355 = vunpack.c.l.b16 %v2156
    %v3356 = vunpack.c.h.b16 %v2156
    %v3357 = vunpack.c.l.b16 %v2157
    %v3358 = vunpack.c.h.b16 %v2157
    %v3359 = vunpack.c.l.b16 %v2158
    %v3360 = vunpack.c.h.b16 %v2158
    %v3361 = vunpack.c.l.b16 %v2159
    %v3362 = vunpack.c.h.b16 %v2159
    %v3363 = vunpack.c.l.b16 %v2160
    %v3364 = vunpack.c.h.b16 %v2160
    %v3365 = vunpack.c.l.b16 %v2161
    %v3366 = vunpack.c.l.b16 %v2162
    %v3367 = vunpack.c.h.b16 %v2162
    %v3368 = vunpack.c.l.b16 %v2163
    %v3369 = vunpack.c.h.b16 %v2163
    %v3370 = vunpack.c.l.b16 %v2164
    %v3371 = vunpack.c.h.b16 %v2164
    %v3372 = vunpack.c.l.b16 %v2165
    %v3373 = vunpack.c.h.b16 %v2165
    %v3374 = vunpack.c.l.b16 %v2166
    %v3375 = vunpack.c.h.b16 %v2166
    %v3376 = vunpack.c.l.b16 %v2167
    %v3377 = vunpack.c.l.b16 %v2168
    %v3378 = vunpack.c.h.b16 %v2168
    %v3379 = vunpack.c.l.b16 %v2169
    %v3380 = vunpack.c.h.b16 %v2169
    %v3381 = vunpack.c.l.b16 %v2170
    %v3382 = vunpack.c.h.b16 %v2170
    %v3383 = vunpack.c.l.b16 %v2171
    %v3384 = vunpack.c.h.b16 %v2171
    %v3385 = vunpack.c.l.b16 %v2172
    %v3386 = vunpack.c.h.b16 %v2172
    %v3387 = vunpack.c.l.b16 %v2173
    %v3388 = vunpack.c.l.b16 %v2174
    %v3389 = vunpack.c.h.b16 %v2174
    %v3390 = vunpack.c.l.b16 %v2175
    %v3391 = vunpack.c.h.b16 %v2175
    %v3392 = vunpack.c.l.b16 %v2176
    %v3393 = vunpack.c.h.b16 %v2176
    %v3394 = vunpack.c.l.b16 %v2177
    %v3395 = vunpack.c.h.b16 %v2177
    %v3396 = vunpack.c.l.b16 %v2178
    %v3397 = vunpack.c.h.b16 %v2178
    %v3398 = vunpack.c.l.b16 %v2179
    %v3399 = vunpack.c.l.b16 %v2180
    %v3400 = vunpack.c.h.b16 %v2180
    %v3401 = vunpack.c.l.b16 %v2181
    %v3402 = vunpack.c.h.b16 %v2181
    %v3403 = vunpack.c.l.b16 %v2182
    %v3404 = vunpack.c.h.b16 %v2182
    %v3405 = vunpack.c.l.b16 %v2183
    %v3406 = vunpack.c.h.b16 %v2183
    %v3407 = vunpack.c.l.b16 %v2184
    %v3408 = vunpack.c.h.b16 %v2184
    %v3409 = vunpack.c.l.b16 %v2185
    %v3410 = vunpack.c.l.b16 %v2186
    %v3411 = vunpack.c.h.b16 %v2186
    %v3412 = vunpack.c.l.b16 %v2187
    %v3413 = vunpack.c.h.b16 %v2187
    %v3414 = vunpack.c.l.b16 %v2188
    %v3415 = vunpack.c.h.b16 %v2188
    %v3416 = vunpack.c.l.b16 %v2189
    %v3417 = vunpack.c.h.b16 %v2189
    %v3418 = vunpack.c.l.b16 %v2190
    %v3419 = vunpack.c.h.b16 %v2190
    %v3420 = vunpack.c.l.b16 %v2191
    %v3421 = vunpack.c.l.b16 %v2192
    %v3422 = vunpack.c.h.b16 %v2192
    %v3423 = vunpack.c.l.b16 %v2193
    %v3424 = vunpack.c.h.b16 %v2193
    %v3425 = vunpack.c.l.b16 %v2194
    %v3426 = vunpack.c.h.b16 %v2194
    %v3427 = vunpack.c.l.b16 %v2195
    %v3428 = vunpack.c.h.b16 %v2195
    %v3429 = vunpack.c.l.b16 %v2196
    %v3430 = vunpack.c.h.b16 %v2196
    %v3431 = vunpack.c.l.b16 %v2197
    %v3432 = vunpack.c.l.b16 %v2198
    %v3433 = vunpack.c.h.b16 %v2198
    %v3434 = vunpack.c.l.b16 %v2199
    %v3435 = vunpack.c.h.b16 %v2199
    %v3436 = vunpack.c.l.b16 %v2200
    %v3437 = vunpack.c.h.b16 %v2200
    %v3438 = vunpack.c.l.b16 %v2201
    %v3439 = vunpack.c.h.b16 %v2201
    %v3440 = vunpack.c.l.b16 %v2202
    %v3441 = vunpack.c.h.b16 %v2202
    %v3442 = vunpack.c.l.b16 %v2203
    %v3443 = vunpack.c.l.b16 %v2204
    %v3444 = vunpack.c.h.b16 %v2204
    %v3445 = vunpack.c.l.b16 %v2205
    %v3446 = vunpack.c.h.b16 %v2205
    %v3447 = vunpack.c.l.b16 %v2206
    %v3448 = vunpack.c.h.b16 %v2206
    %v3449 = vunpack.c.l.b16 %v2207
    %v3450 = vunpack.c.h.b16 %v2207
    %v3451 = vunpack.c.l.b16 %v2208
    %v3452 = vunpack.c.h.b16 %v2208
    %v3453 = vunpack.c.l.b16 %v2209
    %v3454 = vunpack.c.l.b16 %v2210
    %v3455 = vunpack.c.h.b16 %v2210
    %v3456 = vunpack.c.l.b16 %v2211
    %v3457 = vunpack.c.h.b16 %v2211
    %v3458 = vunpack.c.l.b16 %v2212
    %v3459 = vunpack.c.h.b16 %v2212
    %v3460 = vunpack.c.l.b16 %v2213
    %v3461 = vunpack.c.h.b16 %v2213
    %v3462 = vunpack.c.l.b16 %v2214
    %v3463 = vunpack.c.h.b16 %v2214
    %v3464 = vunpack.c.l.b16 %v2215
    %v3465 = vunpack.c.l.b16 %v2216
    %v3466 = vunpack.c.h.b16 %v2216
    %v3467 = vunpack.c.l.b16 %v2217
    %v3468 = vunpack.c.h.b16 %v2217
    %v3469 = vunpack.c.l.b16 %v2218
    %v3470 = vunpack.c.h.b16 %v2218
    %v3471 = vunpack.c.l.b16 %v2219
    %v3472 = vunpack.c.h.b16 %v2219
    %v3473 = vunpack.c.l.b16 %v2220
    %v3474 = vunpack.c.h.b16 %v2220
    %v3475 = vunpack.c.l.b16 %v2221
    %v3476 = vunpack.c.l.b16 %v2222
    %v3477 = vunpack.c.h.b16 %v2222
    %v3478 = vunpack.c.l.b16 %v2223
    %v3479 = vunpack.c.h.b16 %v2223
    %v3480 = vunpack.c.l.b16 %v2224
    %v3481 = vunpack.c.h.b16 %v2224
    %v3482 = vunpack.c.l.b16 %v2225
    %v3483 = vunpack.c.h.b16 %v2225
    %v3484 = vunpack.c.l.b16 %v2226
    %v3485 = vunpack.c.h.b16 %v2226
    %v3486 = vunpack.c.l.b16 %v2227
    %v3487 = vunpack.c.l.b16 %v2228
    %v3488 = vunpack.c.h.b16 %v2228
    %v3489 = vunpack.c.l.b16 %v2229
    %v3490 = vunpack.c.h.b16 %v2229
    %v3491 = vunpack.c.l.b16 %v2230
    %v3492 = vunpack.c.h.b16 %v2230
    %v3493 = vunpack.c.l.b16 %v2231
    %v3494 = vunpack.c.h.b16 %v2231
    %v3495 = vunpack.c.l.b16 %v2232
    %v3496 = vunpack.c.h.b16 %v2232
    %v3497 = vunpack.c.l.b16 %v2233
    %v3498 = vunpack.c.l.b16 %v2234
    %v3499 = vunpack.c.h.b16 %v2234
    %v3500 = vunpack.c.l.b16 %v2235
    %v3501 = vunpack.c.h.b16 %v2235
    %v3502 = vunpack.c.l.b16 %v2236
    %v3503 = vunpack.c.h.b16 %v2236
    %v3504 = vunpack.c.l.b16 %v2237
    %v3505 = vunpack.c.h.b16 %v2237
    %v3506 = vunpack.c.l.b16 %v2238
    %v3507 = vunpack.c.h.b16 %v2238
    %v3508 = vunpack.c.l.b16 %v2239
    %v3509 = vunpack.c.l.b16 %v2240
    %v3510 = vunpack.c.h.b16 %v2240
    %v3511 = vunpack.c.l.b16 %v2241
    %v3512 = vunpack.c.h.b16 %v2241
    %v3513 = vunpack.c.l.b16 %v2242
    %v3514 = vunpack.c.h.b16 %v2242
    %v3515 = vunpack.c.l.b16 %v2243
    %v3516 = vunpack.c.h.b16 %v2243
    %v3517 = vunpack.c.l.b16 %v2244
    %v3518 = vunpack.c.h.b16 %v2244
    %v3519 = vunpack.c.l.b16 %v2245
    %v3520 = vunpack.c.l.b16 %v2246
    %v3521 = vunpack.c.h.b16 %v2246
    %v3522 = vunpack.c.l.b16 %v2247
    %v3523 = vunpack.c.h.b16 %v2247
    %v3524 = vunpack.c.l.b16 %v2248
    %v3525 = vunpack.c.h.b16 %v2248
    %v3526 = vunpack.c.l.b16 %v2249
    %v3527 = vunpack.c.h.b16 %v2249
    %v3528 = vunpack.c.l.b16 %v2250
    %v3529 = vunpack.c.h.b16 %v2250
    %v3530 = vunpack.c.l.b16 %v2251
    %v3531 = vunpack.c.l.b16 %v2252
    %v3532 = vunpack.c.h.b16 %v2252
    %v3533 = vunpack.c.l.b16 %v2253
    %v3534 = vunpack.c.h.b16 %v2253
    %v3535 = vunpack.c.l.b16 %v2254
    %v3536 = vunpack.c.h.b16 %v2254
    %v3537 = vunpack.c.l.b16 %v2255
    %v3538 = vunpack.c.h.b16 %v2255
    %v3539 = vunpack.c.l.b16 %v2256
    %v3540 = vunpack.c.h.b16 %v2256
    %v3541 = vunpack.c.l.b16 %v2257
    %v3542 = vunpack.c.l.b16 %v2258
    %v3543 = vunpack.c.h.b16 %v2258
    %v3544 = vunpack.c.l.b16 %v2259
    %v3545 = vunpack.c.h.b16 %v2259
    %v3546 = vunpack.c.l.b16 %v2260
    %v3547 = vunpack.c.h.b16 %v2260
    %v3548 = vunpack.c.l.b16 %v2261
    %v3549 = vunpack.c.h.b16 %v2261
    %v3550 = vunpack.c.l.b16 %v2262
    %v3551 = vunpack.c.h.b16 %v2262
    %v3552 = vunpack.c.l.b16 %v2263
    %v3553 = vunpack.c.l.b16 %v2264
    %v3554 = vunpack.c.h.b16 %v2264
    %v3555 = vunpack.c.l.b16 %v2265
    %v3556 = vunpack.c.h.b16 %v2265
    %v3557 = vunpack.c.l.b16 %v2266
    %v3558 = vunpack.c.h.b16 %v2266
    %v3559 = vunpack.c.l.b16 %v2267
    %v3560 = vunpack.c.h.b16 %v2267
    %v3561 = vunpack.c.l.b16 %v2268
    %v3562 = vunpack.c.h.b16 %v2268
    %v3563 = vunpack.c.l.b16 %v2269
    %v3564 = vunpack.c.l.b16 %v2270
    %v3565 = vunpack.c.h.b16 %v2270
    %v3566 = vunpack.c.l.b16 %v2271
    %v3567 = vunpack.c.h.b16 %v2271
    %v3568 = vunpack.c.l.b16 %v2272
    %v3569 = vunpack.c.h.b16 %v2272
    %v3570 = vunpack.c.l.b16 %v2273
    %v3571 = vunpack.c.h.b16 %v2273
    %v3572 = vunpack.c.l.b16 %v2274
    %v3573 = vunpack.c.h.b16 %v2274
    %v3574 = vunpack.c.l.b16 %v2275
    %v3575 = vunpack.c.l.b16 %v2276
    %v3576 = vunpack.c.h.b16 %v2276
    %v3577 = vunpack.c.l.b16 %v2277
    %v3578 = vunpack.c.h.b16 %v2277
    %v3579 = vunpack.c.l.b16 %v2278
    %v3580 = vunpack.c.h.b16 %v2278
    %v3581 = vunpack.c.l.b16 %v2279
    %v3582 = vunpack.c.h.b16 %v2279
    %v3583 = vunpack.c.l.b16 %v2280
    %v3584 = vunpack.c.h.b16 %v2280
    %v3585 = vunpack.c.l.b16 %v2281
    %v3586 = vunpack.c.l.b16 %v2282
    %v3587 = vunpack.c.h.b16 %v2282
    %v3588 = vunpack.c.l.b16 %v2283
    %v3589 = vunpack.c.h.b16 %v2283
    %v3590 = vunpack.c.l.b16 %v2284
    %v3591 = vunpack.c.h.b16 %v2284
    %v3592 = vunpack.c.l.b16 %v2285
    %v3593 = vunpack.c.h.b16 %v2285
    %v3594 = vunpack.c.l.b16 %v2286
    %v3595 = vunpack.c.h.b16 %v2286
    %v3596 = vunpack.c.l.b16 %v2287
    %v3597 = vunpack.c.l.b16 %v2288
    %v3598 = vunpack.c.h.b16 %v2288
    %v3599 = vunpack.c.l.b16 %v2289
    %v3600 = vunpack.c.h.b16 %v2289
    %v3601 = vunpack.c.l.b16 %v2290
    %v3602 = vunpack.c.h.b16 %v2290
    %v3603 = vunpack.c.l.b16 %v2291
    %v3604 = vunpack.c.h.b16 %v2291
    %v3605 = vunpack.c.l.b16 %v2292
    %v3606 = vunpack.c.h.b16 %v2292
    %v3607 = vunpack.c.l.b16 %v2293
    %v3608 = vunpack.c.l.b16 %v2294
    %v3609 = vunpack.c.h.b16 %v2294
    %v3610 = vunpack.c.l.b16 %v2295
    %v3611 = vunpack.c.h.b16 %v2295
    %v3612 = vunpack.c.l.b16 %v2296
    %v3613 = vunpack.c.h.b16 %v2296
    %v3614 = vunpack.c.l.b16 %v2297
    %v3615 = vunpack.c.h.b16 %v2297
    %v3616 = vunpack.c.l.b16 %v2298
    %v3617 = vunpack.c.h.b16 %v2298
    %v3618 = vunpack.c.l.b16 %v2299
    %v3619 = vunpack.c.l.b16 %v2300
    %v3620 = vunpack.c.h.b16 %v2300
    %v3621 = vunpack.c.l.b16 %v2301
    %v3622 = vunpack.c.h.b16 %v2301
    %v3623 = vunpack.c.l.b16 %v2302
    %v3624 = vunpack.c.h.b16 %v2302
    %v3625 = vunpack.c.l.b16 %v2303
    %v3626 = vunpack.c.h.b16 %v2303
    %v3627 = vunpack.c.l.b16 %v2304
    %v3628 = vunpack.c.h.b16 %v2304
    %v3629 = vunpack.c.l.b16 %v2305
    %v3630 = vunpack.c.l.b16 %v2306
    %v3631 = vunpack.c.h.b16 %v2306
    %v3632 = vunpack.c.l.b16 %v2307
    %v3633 = vunpack.c.h.b16 %v2307
    %v3634 = vunpack.c.l.b16 %v2308
    %v3635 = vunpack.c.h.b16 %v2308
    %v3636 = vunpack.c.l.b16 %v2309
    %v3637 = vunpack.c.h.b16 %v2309
    %v3638 = vunpack.c.l.b16 %v2310
    %v3639 = vunpack.c.h.b16 %v2310
    %v3640 = vunpack.c.l.b16 %v2311
    %v3641 = vunpack.c.l.b16 %v2312
    %v3642 = vunpack.c.h.b16 %v2312
    %v3643 = vunpack.c.l.b16 %v2313
    %v3644 = vunpack.c.h.b16 %v2313
    %v3645 = vunpack.c.l.b16 %v2314
    %v3646 = vunpack.c.h.b16 %v2314
    %v3647 = vunpack.c.l.b16 %v2315
    %v3648 = vunpack.c.h.b16 %v2315
    %v3649 = vunpack.c.l.b16 %v2316
    %v3650 = vunpack.c.h.b16 %v2316
    %v3651 = vunpack.c.l.b16 %v2317
    %v3652 = vunpack.c.l.b16 %v2318
    %v3653 = vunpack.c.h.b16 %v2318
    %v3654 = vunpack.c.l.b16 %v2319
    %v3655 = vunpack.c.h.b16 %v2319
    %v3656 = vunpack.c.l.b16 %v2320
    %v3657 = vunpack.c.h.b16 %v2320
    %v3658 = vunpack.c.l.b16 %v2321
    %v3659 = vunpack.c.h.b16 %v2321
    %v3660 = vunpack.c.l.b16 %v2322
    %v3661 = vunpack.c.h.b16 %v2322
    %v3662 = vunpack.c.l.b16 %v2323
    %v3663 = vunpack.c.l.b16 %v2324
    %v3664 = vunpack.c.h.b16 %v2324
    %v3665 = vunpack.c.l.b16 %v2325
    %v3666 = vunpack.c.h.b16 %v2325
    %v3667 = vunpack.c.l.b16 %v2326
    %v3668 = vunpack.c.h.b16 %v2326
    %v3669 = vunpack.c.l.b16 %v2327
    %v3670 = vunpack.c.h.b16 %v2327
    %v3671 = vunpack.c.l.b16 %v2328
    %v3672 = vunpack.c.h.b16 %v2328
    %v3673 = vunpack.c.l.b16 %v2329
    %v3674 = vunpack.c.l.b16 %v2330
    %v3675 = vunpack.c.h.b16 %v2330
    %v3676 = vunpack.c.l.b16 %v2331
    %v3677 = vunpack.c.h.b16 %v2331
    %v3678 = vunpack.c.l.b16 %v2332
    %v3679 = vunpack.c.h.b16 %v2332
    %v3680 = vunpack.c.l.b16 %v2333
    %v3681 = vunpack.c.h.b16 %v2333
    %v3682 = vunpack.c.l.b16 %v2334
    %v3683 = vunpack.c.h.b16 %v2334
    %v3684 = vunpack.c.l.b16 %v2335
    %v3685 = vunpack.c.l.b16 %v2336
    %v3686 = vunpack.c.h.b16 %v2336
    %v3687 = vunpack.c.l.b16 %v2337
    %v3688 = vunpack.c.h.b16 %v2337
    %v3689 = vunpack.c.l.b16 %v2338
    %v3690 = vunpack.c.h.b16 %v2338
    %v3691 = vunpack.c.l.b16 %v2339
    %v3692 = vunpack.c.h.b16 %v2339
    %v3693 = vunpack.c.l.b16 %v2340
    %v3694 = vunpack.c.h.b16 %v2340
    %v3695 = vunpack.c.l.b16 %v2341
    %v3696 = vunpack.c.l.b16 %v2342
    %v3697 = vunpack.c.h.b16 %v2342
    %v3698 = vunpack.c.l.b16 %v2343
    %v3699 = vunpack.c.h.b16 %v2343
    %v3700 = vunpack.c.l.b16 %v2344
    %v3701 = vunpack.c.h.b16 %v2344
    %v3702 = vunpack.c.l.b16 %v2345
    %v3703 = vunpack.c.h.b16 %v2345
    %v3704 = vunpack.c.l.b16 %v2346
    %v3705 = vunpack.c.h.b16 %v2346
    %v3706 = vunpack.c.l.b16 %v2347
    %v3707 = vunpack.c.l.b16 %v2348
    %v3708 = vunpack.c.h.b16 %v2348
    %v3709 = vunpack.c.l.b16 %v2349
    %v3710 = vunpack.c.h.b16 %v2349
    %v3711 = vunpack.c.l.b16 %v2350
    %v3712 = vunpack.c.h.b16 %v2350
    %v3713 = vunpack.c.l.b16 %v2351
    %v3714 = vunpack.c.h.b16 %v2351
    %v3715 = vunpack.c.l.b16 %v2352
    %v3716 = vunpack.c.h.b16 %v2352
    %v3717 = vunpack.c.l.b16 %v2353
    %v3718 = vunpack.c.l.b16 %v2354
    %v3719 = vunpack.c.h.b16 %v2354
    %v3720 = vunpack.c.l.b16 %v2355
    %v3721 = vunpack.c.h.b16 %v2355
    %v3722 = vunpack.c.l.b16 %v2356
    %v3723 = vunpack.c.h.b16 %v2356
    %v3724 = vunpack.c.l.b16 %v2357
    %v3725 = vunpack.c.h.b16 %v2357
    %v3726 = vunpack.c.l.b16 %v2358
    %v3727 = vunpack.c.h.b16 %v2358
    %v3728 = vunpack.c.l.b16 %v2359
    %v3729 = vunpack.c.l.b16 %v2360
    %v3730 = vunpack.c.h.b16 %v2360
    %v3731 = vunpack.c.l.b16 %v2361
    %v3732 = vunpack.c.h.b16 %v2361
    %v3733 = vunpack.c.l.b16 %v2362
    %v3734 = vunpack.c.h.b16 %v2362
    %v3735 = vunpack.c.l.b16 %v2363
    %v3736 = vunpack.c.h.b16 %v2363
    %v3737 = vunpack.c.l.b16 %v2364
    %v3738 = vunpack.c.h.b16 %v2364
    %v3739 = vunpack.c.l.b16 %v2365
    %v3740 = vunpack.c.l.b16 %v2366
    %v3741 = vunpack.c.h.b16 %v2366
    %v3742 = vunpack.c.l.b16 %v2367
    %v3743 = vunpack.c.h.b16 %v2367
    %v3744 = vunpack.c.l.b16 %v2368
    %v3745 = vunpack.c.h.b16 %v2368
    %v3746 = vunpack.c.l.b16 %v2369
    %v3747 = vunpack.c.h.b16 %v2369
    %v3748 = vunpack.c.l.b16 %v2370
    %v3749 = vunpack.c.h.b16 %v2370
    %v3750 = vunpack.c.l.b16 %v2371
    %v3751 = vunpack.c.l.b16 %v2372
    %v3752 = vunpack.c.h.b16 %v2372
    %v3753 = vunpack.c.l.b16 %v2373
    %v3754 = vunpack.c.h.b16 %v2373
    %v3755 = vunpack.c.l.b16 %v2374
    %v3756 = vunpack.c.h.b16 %v2374
    %v3757 = vunpack.c.l.b16 %v2375
    %v3758 = vunpack.c.h.b16 %v2375
    %v3759 = vunpack.c.l.b16 %v2376
    %v3760 = vunpack.c.h.b16 %v2376
    %v3761 = vunpack.c.l.b16 %v2377
    %v3762 = vunpack.c.l.b16 %v2378
    %v3763 = vunpack.c.h.b16 %v2378
    %v3764 = vunpack.c.l.b16 %v2379
    %v3765 = vunpack.c.h.b16 %v2379
    %v3766 = vunpack.c.l.b16 %v2380
    %v3767 = vunpack.c.h.b16 %v2380
    %v3768 = vunpack.c.l.b16 %v2381
    %v3769 = vunpack.c.h.b16 %v2381
    %v3770 = vunpack.c.l.b16 %v2382
    %v3771 = vunpack.c.h.b16 %v2382
    %v3772 = vunpack.c.l.b16 %v2383
    %v3773 = vunpack.c.l.b16 %v2384
    %v3774 = vunpack.c.h.b16 %v2384
    %v3775 = vunpack.c.l.b16 %v2385
    %v3776 = vunpack.c.h.b16 %v2385
    %v3777 = vunpack.c.l.b16 %v2386
    %v3778 = vunpack.c.h.b16 %v2386
    %v3779 = vunpack.c.l.b16 %v2387
    %v3780 = vunpack.c.h.b16 %v2387
    %v3781 = vunpack.c.l.b16 %v2388
    %v3782 = vunpack.c.h.b16 %v2388
    %v3783 = vunpack.c.l.b16 %v2389
    %v3784 = vunpack.c.l.b16 %v2390
    %v3785 = vunpack.c.h.b16 %v2390
    %v3786 = vunpack.c.l.b16 %v2391
    %v3787 = vunpack.c.h.b16 %v2391
    %v3788 = vunpack.c.l.b16 %v2392
    %v3789 = vunpack.c.h.b16 %v2392
    %v3790 = vunpack.c.l.b16 %v2393
    %v3791 = vunpack.c.h.b16 %v2393
    %v3792 = vunpack.c.l.b16 %v2394
    %v3793 = vunpack.c.h.b16 %v2394
    %v3794 = vunpack.c.l.b16 %v2395
    %v3795 = vunpack.c.l.b16 %v2396
    %v3796 = vunpack.c.h.b16 %v2396
    %v3797 = vunpack.c.l.b16 %v2397
    %v3798 = vunpack.c.h.b16 %v2397
    %v3799 = vunpack.c.l.b16 %v2398
    %v3800 = vunpack.c.h.b16 %v2398
    %v3801 = vunpack.c.l.b16 %v2399
    %v3802 = vunpack.c.h.b16 %v2399
    %v3803 = vunpack.c.l.b16 %v2400
    %v3804 = vunpack.c.h.b16 %v2400
    %v3805 = vunpack.c.l.b16 %v2401
    %v3806 = vunpack.c.l.b16 %v2402
    %v3807 = vunpack.c.h.b16 %v2402
    %v3808 = vunpack.c.l.b16 %v2403
    %v3809 = vunpack.c.h.b16 %v2403
    %v3810 = vunpack.c.l.b16 %v2404
    %v3811 = vunpack.c.h.b16 %v2404
    %v3812 = vunpack.c.l.b16 %v2405
    %v3813 = vunpack.c.h.b16 %v2405
    %v3814 = vunpack.c.l.b16 %v2406
    %v3815 = vunpack.c.h.b16 %v2406
    %v3816 = vunpack.c.l.b16 %v2407
    %v3817 = vunpack.c.l.b16 %v2408
    %v3818 = vunpack.c.h.b16 %v2408
    %v3819 = vunpack.c.l.b16 %v2409
    %v3820 = vunpack.c.h.b16 %v2409
    %v3821 = vunpack.c.l.b16 %v2410
    %v3822 = vunpack.c.h.b16 %v2410
    %v3823 = vunpack.c.l.b16 %v2411
    %v3824 = vunpack.c.h.b16 %v2411
    %v3825 = vunpack.c.l.b16 %v2412
    %v3826 = vunpack.c.h.b16 %v2412
    %v3827 = vunpack.c.l.b16 %v2413
    %v3828 = vunpack.c.l.b16 %v2414
    %v3829 = vunpack.c.h.b16 %v2414
    %v3830 = vunpack.c.l.b16 %v2415
    %v3831 = vunpack.c.h.b16 %v2415
    %v3832 = vunpack.c.l.b16 %v2416
    %v3833 = vunpack.c.h.b16 %v2416
    %v3834 = vunpack.c.l.b16 %v2417
    %v3835 = vunpack.c.h.b16 %v2417
    %v3836 = vunpack.c.l.b16 %v2418
    %v3837 = vunpack.c.h.b16 %v2418
    %v3838 = vunpack.c.l.b16 %v2419
    %v3839 = vunpack.c.l.b16 %v2420
    %v3840 = vunpack.c.h.b16 %v2420
    %v3841 = vunpack.c.l.b16 %v2421
    %v3842 = vunpack.c.h.b16 %v2421
    %v3843 = vunpack.c.l.b16 %v2422
    %v3844 = vunpack.c.h.b16 %v2422
    %v3845 = vunpack.c.l.b16 %v2423
    %v3846 = vunpack.c.h.b16 %v2423
    %v3847 = vunpack.c.l.b16 %v2424
    %v3848 = vunpack.c.h.b16 %v2424
    %v3849 = vunpack.c.l.b16 %v2425
    %v3850 = vunpack.c.l.b16 %v2426
    %v3851 = vunpack.c.h.b16 %v2426
    %v3852 = vunpack.c.l.b16 %v2427
    %v3853 = vunpack.c.h.b16 %v2427
    %v3854 = vunpack.c.l.b16 %v2428
    %v3855 = vunpack.c.h.b16 %v2428
    %v3856 = vunpack.c.l.b16 %v2429
    %v3857 = vunpack.c.h.b16 %v2429
    %v3858 = vunpack.c.l.b16 %v2430
    %v3859 = vunpack.c.h.b16 %v2430
    %v3860 = vunpack.c.l.b16 %v2431
    %v3861 = vunpack.c.l.b16 %v2432
    %v3862 = vunpack.c.h.b16 %v2432
    %v3863 = vunpack.c.l.b16 %v2433
    %v3864 = vunpack.c.h.b16 %v2433
    %v3865 = vunpack.c.l.b16 %v2434
    %v3866 = vunpack.c.h.b16 %v2434
    %v3867 = vunpack.c.l.b16 %v2435
    %v3868 = vunpack.c.h.b16 %v2435
    %v3869 = vunpack.c.l.b16 %v2436
    %v3870 = vunpack.c.h.b16 %v2436
    %v3871 = vunpack.c.l.b16 %v2437
    %v3872 = vunpack.c.l.b16 %v2438
    %v3873 = vunpack.c.h.b16 %v2438
    %v3874 = vunpack.c.l.b16 %v2439
    %v3875 = vunpack.c.h.b16 %v2439
    %v3876 = vunpack.c.l.b16 %v2440
    %v3877 = vunpack.c.h.b16 %v2440
    %v3878 = vunpack.c.l.b16 %v2441
    %v3879 = vunpack.c.h.b16 %v2441
    %v3880 = vunpack.c.l.b16 %v2442
    %v3881 = vunpack.c.h.b16 %v2442
    %v3882 = vunpack.c.l.b16 %v2443
    %v3883 = vunpack.c.l.b16 %v2444
    %v3884 = vunpack.c.h.b16 %v2444
    %v3885 = vunpack.c.l.b16 %v2445
    %v3886 = vunpack.c.h.b16 %v2445
    %v3887 = vunpack.c.l.b16 %v2446
    %v3888 = vunpack.c.h.b16 %v2446
    %v3889 = vunpack.c.l.b16 %v2447
    %v3890 = vunpack.c.h.b16 %v2447
    %v3891 = vunpack.c.l.b16 %v2448
    %v3892 = vunpack.c.h.b16 %v2448
    %v3893 = vunpack.c.l.b16 %v2449
    %v3894 = vunpack.c.l.b16 %v2450
    %v3895 = vunpack.c.h.b16 %v2450
    %v3896 = vunpack.c.l.b16 %v2451
    %v3897 = vunpack.c.h.b16 %v2451
    %v3898 = vunpack.c.l.b16 %v2452
    %v3899 = vunpack.c.h.b16 %v2452
    %v3900 = vunpack.c.l.b16 %v2453
    %v3901 = vunpack.c.h.b16 %v2453
    %v3902 = vunpack.c.l.b16 %v2454
    %v3903 = vunpack.c.h.b16 %v2454
    %v3904 = vunpack.c.l.b16 %v2455
    %v3905 = vunpack.c.l.b16 %v2456
    %v3906 = vunpack.c.h.b16 %v2456
    %v3907 = vunpack.c.l.b16 %v2457
    %v3908 = vunpack.c.h.b16 %v2457
    %v3909 = vunpack.c.l.b16 %v2458
    %v3910 = vunpack.c.h.b16 %v2458
    %v3911 = vunpack.c.l.b16 %v2459
    %v3912 = vunpack.c.h.b16 %v2459
    %v3913 = vunpack.c.l.b16 %v2460
    %v3914 = vunpack.c.h.b16 %v2460
    %v3915 = vunpack.c.l.b16 %v2461
    %v3916 = vunpack.c.l.b16 %v2462
    %v3917 = vunpack.c.h.b16 %v2462
    %v3918 = vunpack.c.l.b16 %v2463
    %v3919 = vunpack.c.h.b16 %v2463
    %v3920 = vunpack.c.l.b16 %v2464
    %v3921 = vunpack.c.h.b16 %v2464
    %v3922 = vunpack.c.l.b16 %v2465
    %v3923 = vunpack.c.h.b16 %v2465
    %v3924 = vunpack.c.l.b16 %v2466
    %v3925 = vunpack.c.h.b16 %v2466
    %v3926 = vunpack.c.l.b16 %v2467
    %v3927 = vunpack.c.l.b16 %v2468
    %v3928 = vunpack.c.h.b16 %v2468
    %v3929 = vunpack.c.l.b16 %v2469
    %v3930 = vunpack.c.h.b16 %v2469
    %v3931 = vunpack.c.l.b16 %v2470
    %v3932 = vunpack.c.h.b16 %v2470
    %v3933 = vunpack.c.l.b16 %v2471
    %v3934 = vunpack.c.h.b16 %v2471
    %v3935 = vunpack.c.l.b16 %v2472
    %v3936 = vunpack.c.h.b16 %v2472
    %v3937 = vunpack.c.l.b16 %v2473
    %v3938 = vunpack.c.l.b16 %v2474
    %v3939 = vunpack.c.h.b16 %v2474
    %v3940 = vunpack.c.l.b16 %v2475
    %v3941 = vunpack.c.h.b16 %v2475
    %v3942 = vunpack.c.l.b16 %v2476
    %v3943 = vunpack.c.h.b16 %v2476
    %v3944 = vunpack.c.l.b16 %v2477
    %v3945 = vunpack.c.h.b16 %v2477
    %v3946 = vunpack.c.l.b16 %v2478
    %v3947 = vunpack.c.h.b16 %v2478
    %v3948 = vunpack.c.l.b16 %v2479
    %v3949 = vunpack.c.l.b16 %v2480
    %v3950 = vunpack.c.h.b16 %v2480
    %v3951 = vunpack.c.l.b16 %v2481
    %v3952 = vunpack.c.h.b16 %v2481
    %v3953 = vunpack.c.l.b16 %v2482
    %v3954 = vunpack.c.h.b16 %v2482
    %v3955 = vunpack.c.l.b16 %v2483
    %v3956 = vunpack.c.h.b16 %v2483
    %v3957 = vunpack.c.l.b16 %v2484
    %v3958 = vunpack.c.h.b16 %v2484
    %v3959 = vunpack.c.l.b16 %v2485
    %v3960 = vunpack.c.l.b16 %v2486
    %v3961 = vunpack.c.h.b16 %v2486
    %v3962 = vunpack.c.l.b16 %v2487
    %v3963 = vunpack.c.h.b16 %v2487
    %v3964 = vunpack.c.l.b16 %v2488
    %v3965 = vunpack.c.h.b16 %v2488
    %v3966 = vunpack.c.l.b16 %v2489
    %v3967 = vunpack.c.h.b16 %v2489
    %v3968 = vunpack.c.l.b16 %v2490
    %v3969 = vunpack.c.h.b16 %v2490
    %v3970 = vunpack.c.l.b16 %v2491
    %v3971 = vunpack.c.l.b16 %v2492
    %v3972 = vunpack.c.h.b16 %v2492
    %v3973 = vunpack.c.l.b16 %v2493
    %v3974 = vunpack.c.h.b16 %v2493
    %v3975 = vunpack.c.l.b16 %v2494
    %v3976 = vunpack.c.h.b16 %v2494
    %v3977 = vunpack.c.l.b16 %v2495
    %v3978 = vunpack.c.h.b16 %v2495
    %v3979 = vunpack.c.l.b16 %v2496
    %v3980 = vunpack.c.h.b16 %v2496
    %v3981 = vunpack.c.l.b16 %v2497
    %v3982 = vunpack.c.l.b16 %v2498
    %v3983 = vunpack.c.h.b16 %v2498
    %v3984 = vunpack.c.l.b16 %v2499
    %v3985 = vunpack.c.h.b16 %v2499
    %v3986 = vunpack.c.l.b16 %v2500
    %v3987 = vunpack.c.h.b16 %v2500
    %v3988 = vunpack.c.l.b16 %v2501
    %v3989 = vunpack.c.h.b16 %v2501
    %v3990 = vunpack.c.l.b16 %v2502
    %v3991 = vunpack.c.h.b16 %v2502
    %v3992 = vunpack.c.l.b16 %v2503
    %v3993 = vunpack.c.l.b16 %v2504
    %v3994 = vunpack.c.h.b16 %v2504
    %v3995 = vunpack.c.l.b16 %v2505
    %v3996 = vunpack.c.h.b16 %v2505
    %v3997 = vunpack.c.l.b16 %v2506
    %v3998 = vunpack.c.h.b16 %v2506
    %v3999 = vunpack.c.l.b16 %v2507
    %v4000 = vunpack.c.h.b16 %v2507
    %v4001 = vunpack.c.l.b16 %v2508
    %v4002 = vunpack.c.h.b16 %v2508
    %v4003 = vunpack.c.l.b16 %v2509
    %v4004 = vunpack.c.l.b16 %v2510
    %v4005 = vunpack.c.h.b16 %v2510
    %v4006 = vunpack.c.l.b16 %v2511
    %v4007 = vunpack.c.h.b16 %v2511
    %v4008 = vunpack.c.l.b16 %v2512
    %v4009 = vunpack.c.h.b16 %v2512
    %v4010 = vunpack.c.l.b16 %v2513
    %v4011 = vunpack.c.h.b16 %v2513
    %v4012 = vunpack.c.l.b16 %v2514
    %v4013 = vunpack.c.h.b16 %v2514
    %v4014 = vunpack.c.l.b16 %v2515
    %v4015 = vunpack.c.l.b16 %v2516
    %v4016 = vunpack.c.h.b16 %v2516
    %v4017 = vunpack.c.l.b16 %v2517
    %v4018 = vunpack.c.h.b16 %v2517
    %v4019 = vunpack.c.l.b16 %v2518
    %v4020 = vunpack.c.h.b16 %v2518
    %v4021 = vunpack.c.l.b16 %v2519
    %v4022 = vunpack.c.h.b16 %v2519
    %v4023 = vunpack.c.l.b16 %v2520
    %v4024 = vunpack.c.h.b16 %v2520
    %v4025 = vunpack.c.l.b16 %v2521
    %v4026 = vunpack.c.l.b16 %v2522
    %v4027 = vunpack.c.h.b16 %v2522
    %v4028 = vunpack.c.l.b16 %v2523
    %v4029 = vunpack.c.h.b16 %v2523
    %v4030 = vunpack.c.l.b16 %v2524
    %v4031 = vunpack.c.h.b16 %v2524
    %v4032 = vunpack.c.l.b16 %v2525
    %v4033 = vunpack.c.h.b16 %v2525
    %v4034 = vunpack.c.l.b16 %v2526
    %v4035 = vunpack.c.h.b16 %v2526
    %v4036 = vunpack.c.l.b16 %v2527
    %v4037 = vunpack.c.l.b16 %v2528
    %v4038 = vunpack.c.h.b16 %v2528
    %v4039 = vunpack.c.l.b16 %v2529
    %v4040 = vunpack.c.h.b16 %v2529
    %v4041 = vunpack.c.l.b16 %v2530
    %v4042 = vunpack.c.h.b16 %v2530
    %v4043 = vunpack.c.l.b16 %v2531
    %v4044 = vunpack.c.h.b16 %v2531
    %v4045 = vunpack.c.l.b16 %v2532
    %v4046 = vunpack.c.h.b16 %v2532
    %v4047 = vunpack.c.l.b16 %v2533
    %v4048 = vunpack.c.l.b16 %v2534
    %v4049 = vunpack.c.h.b16 %v2534
    %v4050 = vunpack.c.l.b16 %v2535
    %v4051 = vunpack.c.h.b16 %v2535
    %v4052 = vunpack.c.l.b16 %v2536
    %v4053 = vunpack.c.h.b16 %v2536
    %v4054 = vunpack.c.l.b16 %v2537
    %v4055 = vunpack.c.h.b16 %v2537
    %v4056 = vunpack.c.l.b16 %v2538
    %v4057 = vunpack.c.h.b16 %v2538
    %v4058 = vunpack.c.l.b16 %v2539
    %v4059 = vunpack.c.l.b16 %v2540
    %v4060 = vunpack.c.h.b16 %v2540
    %v4061 = vunpack.c.l.b16 %v2541
    %v4062 = vunpack.c.h.b16 %v2541
    %v4063 = vunpack.c.l.b16 %v2542
    %v4064 = vunpack.c.h.b16 %v2542
    %v4065 = vunpack.c.l.b16 %v2543
    %v4066 = vunpack.c.h.b16 %v2543
    %v4067 = vunpack.c.l.b16 %v2544
    %v4068 = vunpack.c.h.b16 %v2544
    %v4069 = vunpack.c.l.b16 %v2545
    %v4070 = vunpack.c.l.b16 %v2546
    %v4071 = vunpack.c.h.b16 %v2546
    %v4072 = vunpack.c.l.b16 %v2547
    %v4073 = vunpack.c.h.b16 %v2547
    %v4074 = vunpack.c.l.b16 %v2548
    %v4075 = vunpack.c.h.b16 %v2548
    %v4076 = vunpack.c.l.b16 %v2549
    %v4077 = vunpack.c.h.b16 %v2549
    %v4078 = vunpack.c.l.b16 %v2550
    %v4079 = vunpack.c.h.b16 %v2550
    %v4080 = vunpack.c.l.b16 %v2551
    %v4081 = vunpack.c.l.b16 %v2552
    %v4082 = vunpack.c.h.b16 %v2552
    %v4083 = vunpack.c.l.b16 %v2553
    %v4084 = vunpack.c.h.b16 %v2553
    %v4085 = vunpack.c.l.b16 %v2554
    %v4086 = vunpack.c.h.b16 %v2554
    %v4087 = vunpack.c.l.b16 %v2555
    %v4088 = vunpack.c.h.b16 %v2555
    %v4089 = vunpack.c.l.b16 %v2556
    %v4090 = vunpack.c.h.b16 %v2556
    %v4091 = vunpack.c.l.b16 %v2557
    %v4092 = vunpack.c.l.b16 %v2558
    %v4093 = vunpack.c.h.b16 %v2558
    %v4094 = vunpack.c.l.b16 %v2559
    %v4095 = vunpack.c.h.b16 %v2559
    %v4096 = vunpack.c.l.b16 %v2560
    %v4097 = vunpack.c.h.b16 %v2560
    %v4098 = vunpack.c.l.b16 %v2561
    %v4099 = vunpack.c.h.b16 %v2561
    %v4100 = vunpack.c.l.b16 %v2562
    %v4101 = vunpack.c.h.b16 %v2562
    %v4102 = vunpack.c.l.b16 %v2563
    %v4103 = vunpack.c.l.b16 %v2564
    %v4104 = vunpack.c.h.b16 %v2564
    %v4105 = vunpack.c.l.b16 %v2565
    %v4106 = vunpack.c.h.b16 %v2565
    %v4107 = vunpack.c.l.b16 %v2566
    %v4108 = vunpack.c.h.b16 %v2566
    %v4109 = vunpack.c.l.b16 %v2567
    %v4110 = vunpack.c.h.b16 %v2567
    %v4111 = vunpack.c.l.b16 %v2568
    %v4112 = vunpack.c.h.b16 %v2568
    %v4113 = vunpack.c.l.b16 %v2569
    %v4114 = vunpack.c.l.b16 %v2570
    %v4115 = vunpack.c.h.b16 %v2570
    %v4116 = vunpack.c.l.b16 %v2571
    %v4117 = vunpack.c.h.b16 %v2571
    %v4118 = vunpack.c.l.b16 %v2572
    %v4119 = vunpack.c.h.b16 %v2572
    %v4120 = vunpack.c.l.b16 %v2573
    %v4121 = vunpack.c.h.b16 %v2573
    %v4122 = vunpack.c.l.b16 %v2574
    %v4123 = vunpack.c.h.b16 %v2574
    %v4124 = vunpack.c.l.b16 %v2575
    %v4125 = vunpack.c.l.b16 %v2576
    %v4126 = vunpack.c.h.b16 %v2576
    %v4127 = vunpack.c.l.b16 %v2577
    %v4128 = vunpack.c.h.b16 %v2577
    %v4129 = vunpack.c.l.b16 %v2578
    %v4130 = vunpack.c.h.b16 %v2578
    %v4131 = vunpack.c.l.b16 %v2579
    %v4132 = vunpack.c.h.b16 %v2579
    %v4133 = vunpack.c.l.b16 %v2580
    %v4134 = vunpack.c.h.b16 %v2580
    %v4135 = vunpack.c.l.b16 %v2581
    %v4136 = vunpack.c.l.b16 %v2582
    %v4137 = vunpack.c.h.b16 %v2582
    %v4138 = vunpack.c.l.b16 %v2583
    %v4139 = vunpack.c.h.b16 %v2583
    %v4140 = vunpack.c.l.b16 %v2584
    %v4141 = vunpack.c.h.b16 %v2584
    %v4142 = vunpack.c.l.b16 %v2585
    %v4143 = vunpack.c.h.b16 %v2585
    %v4144 = vunpack.c.l.b16 %v2586
    %v4145 = vunpack.c.h.b16 %v2586
    %v4146 = vunpack.c.l.b16 %v2587
    %v4147 = vunpack.c.l.b16 %v2588
    %v4148 = vunpack.c.h.b16 %v2588
    %v4149 = vunpack.c.l.b16 %v2589
    %v4150 = vunpack.c.h.b16 %v2589
    %v4151 = vunpack.c.l.b16 %v2590
    %v4152 = vunpack.c.h.b16 %v2590
    %v4153 = vunpack.c.l.b16 %v2591
    %v4154 = vunpack.c.h.b16 %v2591
    %v4155 = vunpack.c.l.b16 %v2592
    %v4156 = vunpack.c.h.b16 %v2592
    %v4157 = vunpack.c.l.b16 %v2593
    %v4158 = vunpack.c.l.b16 %v2594
    %v4159 = vunpack.c.h.b16 %v2594
    %v4160 = vunpack.c.l.b16 %v2595
    %v4161 = vunpack.c.h.b16 %v2595
    %v4162 = vunpack.c.l.b16 %v2596
    %v4163 = vunpack.c.h.b16 %v2596
    %v4164 = vunpack.c.l.b16 %v2597
    %v4165 = vunpack.c.h.b16 %v2597
    %v4166 = vunpack.c.l.b16 %v2598
    %v4167 = vunpack.c.h.b16 %v2598
    %v4168 = vunpack.c.l.b16 %v2599
    %v4169 = vunpack.c.l.b16 %v2600
    %v4170 = vunpack.c.h.b16 %v2600
    %v4171 = vunpack.c.l.b16 %v2601
    %v4172 = vunpack.c.h.b16 %v2601
    %v4173 = vunpack.c.l.b16 %v2602
    %v4174 = vunpack.c.h.b16 %v2602
    %v4175 = vunpack.c.l.b16 %v2603
    %v4176 = vunpack.c.h.b16 %v2603
    %v4177 = vunpack.c.l.b16 %v2604
    %v4178 = vunpack.c.h.b16 %v2604
    %v4179 = vunpack.c.l.b16 %v2605
    %v4180 = vunpack.c.l.b16 %v2606
    %v4181 = vunpack.c.h.b16 %v2606
    %v4182 = vunpack.c.l.b16 %v2607
    %v4183 = vunpack.c.h.b16 %v2607
    %v4184 = vunpack.c.l.b16 %v2608
    %v4185 = vunpack.c.h.b16 %v2608
    %v4186 = vunpack.c.l.b16 %v2609
    %v4187 = vunpack.c.h.b16 %v2609
    %v4188 = vunpack.c.l.b16 %v2610
    %v4189 = vunpack.c.h.b16 %v2610
    %v4190 = vunpack.c.l.b16 %v2611
    %v4191 = vunpack.c.l.b16 %v2612
    %v4192 = vunpack.c.h.b16 %v2612
    %v4193 = vunpack.c.l.b16 %v2613
    %v4194 = vunpack.c.h.b16 %v2613
    %v4195 = vunpack.c.l.b16 %v2614
    %v4196 = vunpack.c.h.b16 %v2614
    %v4197 = vunpack.c.l.b16 %v2615
    %v4198 = vunpack.c.h.b16 %v2615
    %v4199 = vunpack.c.l.b16 %v2616
    %v4200 = vunpack.c.h.b16 %v2616
    %v4201 = vunpack.c.l.b16 %v2617
    %v4202 = vunpack.c.l.b16 %v2618
    %v4203 = vunpack.c.h.b16 %v2618
    %v4204 = vunpack.c.l.b16 %v2619
    %v4205 = vunpack.c.h.b16 %v2619
    %v4206 = vunpack.c.l.b16 %v2620
    %v4207 = vunpack.c.h.b16 %v2620
    %v4208 = vunpack.c.l.b16 %v2621
    %v4209 = vunpack.c.h.b16 %v2621
    %v4210 = vunpack.c.l.b16 %v2622
    %v4211 = vunpack.c.h.b16 %v2622
    %v4212 = vunpack.c.l.b16 %v2623
    %v4213 = vunpack.c.l.b16 %v2624
    %v4214 = vunpack.c.h.b16 %v2624
    %v4215 = vunpack.c.l.b16 %v2625
    %v4216 = vunpack.c.h.b16 %v2625
    %v4217 = vunpack.c.l.b16 %v2626
    %v4218 = vunpack.c.h.b16 %v2626
    %v4219 = vunpack.c.l.b16 %v2627
    %v4220 = vunpack.c.h.b16 %v2627
    %v4221 = vunpack.c.l.b16 %v2628
    %v4222 = vunpack.c.h.b16 %v2628
    %v4223 = vunpack.c.l.b16 %v2629
    %v4224 = vunpack.c.l.b16 %v2630
    %v4225 = vunpack.c.h.b16 %v2630
    %v4226 = vunpack.c.l.b16 %v2631
    %v4227 = vunpack.c.h.b16 %v2631
    %v4228 = vunpack.c.l.b16 %v2632
    %v4229 = vunpack.c.h.b16 %v2632
    %v4230 = vunpack.c.l.b16 %v2633
    %v4231 = vunpack.c.h.b16 %v2633
    %v4232 = vunpack.c.l.b16 %v2634
    %v4233 = vunpack.c.h.b16 %v2634
    %v4234 = vunpack.c.l.b16 %v2635
    %v4235 = vunpack.c.l.b16 %v2636
    %v4236 = vunpack.c.h.b16 %v2636
    %v4237 = vunpack.c.l.b16 %v2637
    %v4238 = vunpack.c.h.b16 %v2637
    %v4239 = vunpack.c.l.b16 %v2638
    %v4240 = vunpack.c.h.b16 %v2638
    %v4241 = vunpack.c.l.b16 %v2639
    %v4242 = vunpack.c.h.b16 %v2639
    %v4243 = vunpack.c.l.b16 %v2640
    %v4244 = vunpack.c.h.b16 %v2640
    %v4245 = vunpack.c.l.b16 %v2641
    %v4246 = vunpack.c.l.b16 %v2642
    %v4247 = vunpack.c.h.b16 %v2642
    %v4248 = vunpack.c.l.b16 %v2643
    %v4249 = vunpack.c.h.b16 %v2643
    %v4250 = vunpack.c.l.b16 %v2644
    %v4251 = vunpack.c.h.b16 %v2644
    %v4252 = vunpack.c.l.b16 %v2645
    %v4253 = vunpack.c.h.b16 %v2645
    %v4254 = vunpack.c.l.b16 %v2646
    %v4255 = vunpack.c.h.b16 %v2646
    %v4256 = vunpack.c.l.b16 %v2647
    %v4257 = vunpack.c.l.b16 %v2648
    %v4258 = vunpack.c.h.b16 %v2648
    %v4259 = vunpack.c.l.b16 %v2649
    %v4260 = vunpack.c.h.b16 %v2649
    %v4261 = vunpack.c.l.b16 %v2650
    %v4262 = vunpack.c.h.b16 %v2650
    %v4263 = vunpack.c.l.b16 %v2651
    %v4264 = vunpack.c.h.b16 %v2651
    %v4265 = vunpack.c.l.b16 %v2652
    %v4266 = vunpack.c.h.b16 %v2652
    %v4267 = vunpack.c.l.b16 %v2653
    %v4268 = vunpack.c.l.b16 %v2654
    %v4269 = vunpack.c.h.b16 %v2654
    %v4270 = vunpack.c.l.b16 %v2655
    %v4271 = vunpack.c.h.b16 %v2655
    %v4272 = vunpack.c.l.b16 %v2656
    %v4273 = vunpack.c.h.b16 %v2656
    %v4274 = vunpack.c.l.b16 %v2657
    %v4275 = vunpack.c.h.b16 %v2657
    %v4276 = vunpack.c.l.b16 %v2658
    %v4277 = vunpack.c.h.b16 %v2658
    %v4278 = vunpack.c.l.b16 %v2659
    %v4279 = vunpack.c.l.b16 %v2660
    %v4280 = vunpack.c.h.b16 %v2660
    %v4281 = vunpack.c.l.b16 %v2661
    %v4282 = vunpack.c.h.b16 %v2661
    %v4283 = vunpack.c.l.b16 %v2662
    %v4284 = vunpack.c.h.b16 %v2662
    %v4285 = vunpack.c.l.b16 %v2663
    %v4286 = vunpack.c.h.b16 %v2663
    %v4287 = vunpack.c.l.b16 %v2664
    %v4288 = vunpack.c.h.b16 %v2664
    %v4289 = vunpack.c.l.b16 %v2665
    %v4290 = vunpack.c.l.b16 %v2666
    %v4291 = vunpack.c.h.b16 %v2666
    %v4292 = vunpack.c.l.b16 %v2667
    %v4293 = vunpack.c.h.b16 %v2667
    %v4294 = vunpack.c.l.b16 %v2668
    %v4295 = vunpack.c.h.b16 %v2668
    %v4296 = vunpack.c.l.b16 %v2669
    %v4297 = vunpack.c.h.b16 %v2669
    %v4298 = vunpack.c.l.b16 %v2670
    %v4299 = vunpack.c.h.b16 %v2670
    %v4300 = vunpack.c.l.b16 %v2671
    %v4301 = vunpack.c.l.b16 %v2672
    %v4302 = vunpack.c.h.b16 %v2672
    %v4303 = vunpack.c.l.b16 %v2673
    %v4304 = vunpack.c.h.b16 %v2673
    %v4305 = vunpack.c.l.b16 %v2674
    %v4306 = vunpack.c.h.b16 %v2674
    %v4307 = vunpack.c.l.b16 %v2675
    %v4308 = vunpack.c.h.b16 %v2675
    %v4309 = vunpack.c.l.b16 %v2676
    %v4310 = vunpack.c.h.b16 %v2676
    %v4311 = vunpack.c.l.b16 %v2677
    %v4312 = vunpack.c.l.b16 %v2678
    %v4313 = vunpack.c.h.b16 %v2678
    %v4314 = vunpack.c.l.b16 %v2679
    %v4315 = vunpack.c.h.b16 %v2679
    %v4316 = vunpack.c.l.b16 %v2680
    %v4317 = vunpack.c.h.b16 %v2680
    %v4318 = vunpack.c.l.b16 %v2681
    %v4319 = vunpack.c.h.b16 %v2681
    %v4320 = vunpack.c.l.b16 %v2682
    %v4321 = vunpack.c.h.b16 %v2682
    %v4322 = vunpack.c.l.b16 %v2683
    %v4323 = vunpack.c.l.b16 %v2684
    %v4324 = vunpack.c.h.b16 %v2684
    %v4325 = vunpack.c.l.b16 %v2685
    %v4326 = vunpack.c.h.b16 %v2685
    %v4327 = vunpack.c.l.b16 %v2686
    %v4328 = vunpack.c.h.b16 %v2686
    %v4329 = vunpack.c.l.b16 %v2687
    %v4330 = vunpack.c.h.b16 %v2687
    %v4331 = vunpack.c.l.b16 %v2688
    %v4332 = vunpack.c.h.b16 %v2688
    %v4333 = vunpack.c.l.b16 %v2689
    %v4334 = vunpack.c.l.b16 %v2690
    %v4335 = vunpack.c.h.b16 %v2690
    %v4336 = vunpack.c.l.b16 %v2691
    %v4337 = vunpack.c.h.b16 %v2691
    %v4338 = vunpack.c.l.b16 %v2692
    %v4339 = vunpack.c.h.b16 %v2692
    %v4340 = vunpack.c.l.b16 %v2693
    %v4341 = vunpack.c.h.b16 %v2693
    %v4342 = vunpack.c.l.b16 %v2694
    %v4343 = vunpack.c.h.b16 %v2694
    %v4344 = vunpack.c.l.b16 %v2695
    %v4345 = vunpack.c.l.b16 %v2696
    %v4346 = vunpack.c.h.b16 %v2696
    %v4347 = vunpack.c.l.b16 %v2697
    %v4348 = vunpack.c.h.b16 %v2697
    %v4349 = vunpack.c.l.b16 %v2698
    %v4350 = vunpack.c.h.b16 %v2698
    %v4351 = vunpack.c.l.b16 %v2699
    %v4352 = vunpack.c.h.b16 %v2699
    %v4353 = vunpack.c.l.b16 %v2700
    %v4354 = vunpack.c.h.b16 %v2700
    %v4355 = vunpack.c.l.b16 %v2701
    %v4356 = vunpack.c.l.b16 %v2702
    %v4357 = vunpack.c.h.b16 %v2702
    %v4358 = vunpack.c.l.b16 %v2703
    %v4359 = vunpack.c.h.b16 %v2703
    %v4360 = vunpack.c.l.b16 %v2704
    %v4361 = vunpack.c.h.b16 %v2704
    %v4362 = vunpack.c.l.b16 %v2705
    %v4363 = vunpack.c.h.b16 %v2705
    %v4364 = vunpack.c.l.b16 %v2706
    %v4365 = vunpack.c.h.b16 %v2706
    %v4366 = vunpack.c.l.b16 %v2707
    %v4367 = vunpack.c.l.b16 %v2708
    %v4368 = vunpack.c.h.b16 %v2708
    %v4369 = vunpack.c.l.b16 %v2709
    %v4370 = vunpack.c.h.b16 %v2709
    %v4371 = vunpack.c.l.b16 %v2710
    %v4372 = vunpack.c.h.b16 %v2710
    %v4373 = vunpack.c.l.b16 %v2711
    %v4374 = vunpack.c.h.b16 %v2711
    %v4375 = vunpack.c.l.b16 %v2712
    %v4376 = vunpack.c.h.b16 %v2712
    %v4377 = vunpack.c.l.b16 %v2713
    %v4378 = vpack.c.b16 %v3333, %v3322
    %v4379 = vpack.c.b16 %v3334, %v3323
    %v4380 = vpack.c.b16 %v3335, %v3324
    %v4381 = vpack.c.b16 %v3336, %v3325
    %v4382 = vpack.c.b16 %v3337, %v3326
    %v4383 = vpack.c.b16 %v3338, %v3327
    %v4384 = vpack.c.b16 %v3339, %v3328
    %v4385 = vpack.c.b16 %v3340, %v3329
    %v4386 = vpack.c.b16 %v3341, %v3330
    %v4387 = vpack.c.b16 %v3342, %v3331
    %v4388 = vpack.c.b16 %v3343, %v3332
    %v4389 = vpack.c.b16 %v3355, %v3344
    %v4390 = vpack.c.b16 %v3356, %v3345
    %v4391 = vpack.c.b16 %v3357, %v3346
    %v4392 = vpack.c.b16 %v3358, %v3347
    %v4393 = vpack.c.b16 %v3359, %v3348
    %v4394 = vpack.c.b16 %v3360, %v3349
    %v4395 = vpack.c.b16 %v3361, %v3350
    %v4396 = vpack.c.b16 %v3362, %v3351
    %v4397 = vpack.c.b16 %v3363, %v3352
    %v4398 = vpack.c.b16 %v3364, %v3353
    %v4399 = vpack.c.b16 %v3365, %v3354
    %v4400 = vpack.c.b16 %v3377, %v3366
    %v4401 = vpack.c.b16 %v3378, %v3367
    %v4402 = vpack.c.b16 %v3379, %v3368
    %v4403 = vpack.c.b16 %v3380, %v3369
    %v4404 = vpack.c.b16 %v3381, %v3370
    %v4405 = vpack.c.b16 %v3382, %v3371
    %v4406 = vpack.c.b16 %v3383, %v3372
    %v4407 = vpack.c.b16 %v3384, %v3373
    %v4408 = vpack.c.b16 %v3385, %v3374
    %v4409 = vpack.c.b16 %v3386, %v3375
    %v4410 = vpack.c.b16 %v3387, %v3376
    %v4411 = vpack.c.b16 %v3399, %v3388
    %v4412 = vpack.c.b16 %v3400, %v3389
    %v4413 = vpack.c.b16 %v3401, %v3390
    %v4414 = vpack.c.b16 %v3402, %v3391
    %v4415 = vpack.c.b16 %v3403, %v3392
    %v4416 = vpack.c.b16 %v3404, %v3393
    %v4417 = vpack.c.b16 %v3405, %v3394
    %v4418 = vpack.c.b16 %v3406, %v3395
    %v4419 = vpack.c.b16 %v3407, %v3396
    %v4420 = vpack.c.b16 %v3408, %v3397
    %v4421 = vpack.c.b16 %v3409, %v3398
    %v4422 = vpack.c.b16 %v3421, %v3410
    %v4423 = vpack.c.b16 %v3422, %v3411
    %v4424 = vpack.c.b16 %v3423, %v3412
    %v4425 = vpack.c.b16 %v3424, %v3413
    %v4426 = vpack.c.b16 %v3425, %v3414
    %v4427 = vpack.c.b16 %v3426, %v3415
    %v4428 = vpack.c.b16 %v3427, %v3416
    %v4429 = vpack.c.b16 %v3428, %v3417
    %v4430 = vpack.c.b16 %v3429, %v3418
    %v4431 = vpack.c.b16 %v3430, %v3419
    %v4432 = vpack.c.b16 %v3431, %v3420
    %v4433 = vpack.c.b16 %v3443, %v3432
    %v4434 = vpack.c.b16 %v3444, %v3433
    %v4435 = vpack.c.b16 %v3445, %v3434
    %v4436 = vpack.c.b16 %v3446, %v3435
    %v4437 = vpack.c.b16 %v3447, %v3436
    %v4438 = vpack.c.b16 %v3448, %v3437
    %v4439 = vpack.c.b16 %v3449, %v3438
    %v4440 = vpack.c.b16 %v3450, %v3439
    %v4441 = vpack.c.b16 %v3451, %v3440
    %v4442 = vpack.c.b16 %v3452, %v3441
    %v4443 = vpack.c.b16 %v3453, %v3442
    %v4444 = vpack.c.b16 %v3465, %v3454
    %v4445 = vpack.c.b16 %v3466, %v3455
    %v4446 = vpack.c.b16 %v3467, %v3456
    %v4447 = vpack.c.b16 %v3468, %v3457
    %v4448 = vpack.c.b16 %v3469, %v3458
    %v4449 = vpack.c.b16 %v3470, %v3459
    %v4450 = vpack.c.b16 %v3471, %v3460
    %v4451 = vpack.c.b16 %v3472, %v3461
    %v4452 = vpack.c.b16 %v3473, %v3462
    %v4453 = vpack.c.b16 %v3474, %v3463
    %v4454 = vpack.c.b16 %v3475, %v3464
    %v4455 = vpack.c.b16 %v3487, %v3476
    %v4456 = vpack.c.b16 %v3488, %v3477
    %v4457 = vpack.c.b16 %v3489, %v3478
    %v4458 = vpack.c.b16 %v3490, %v3479
    %v4459 = vpack.c.b16 %v3491, %v3480
    %v4460 = vpack.c.b16 %v3492, %v3481
    %v4461 = vpack.c.b16 %v3493, %v3482
    %v4462 = vpack.c.b16 %v3494, %v3483
    %v4463 = vpack.c.b16 %v3495, %v3484
    %v4464 = vpack.c.b16 %v3496, %v3485
    %v4465 = vpack.c.b16 %v3497, %v3486
    %v4466 = vpack.c.b16 %v3509, %v3498
    %v4467 = vpack.c.b16 %v3510, %v3499
    %v4468 = vpack.c.b16 %v3511, %v3500
    %v4469 = vpack.c.b16 %v3512, %v3501
    %v4470 = vpack.c.b16 %v3513, %v3502
    %v4471 = vpack.c.b16 %v3514, %v3503
    %v4472 = vpack.c.b16 %v3515, %v3504
    %v4473 = vpack.c.b16 %v3516, %v3505
    %v4474 = vpack.c.b16 %v3517, %v3506
    %v4475 = vpack.c.b16 %v3518, %v3507
    %v4476 = vpack.c.b16 %v3519, %v3508
    %v4477 = vpack.c.b16 %v3531, %v3520
    %v4478 = vpack.c.b16 %v3532, %v3521
    %v4479 = vpack.c.b16 %v3533, %v3522
    %v4480 = vpack.c.b16 %v3534, %v3523
    %v4481 = vpack.c.b16 %v3535, %v3524
    %v4482 = vpack.c.b16 %v3536, %v3525
    %v4483 = vpack.c.b16 %v3537, %v3526
    %v4484 = vpack.c.b16 %v3538, %v3527
    %v4485 = vpack.c.b16 %v3539, %v3528
    %v4486 = vpack.c.b16 %v3540, %v3529
    %v4487 = vpack.c.b16 %v3541, %v3530
    %v4488 = vpack.c.b16 %v3553, %v3542
    %v4489 = vpack.c.b16 %v3554, %v3543
    %v4490 = vpack.c.b16 %v3555, %v3544
    %v4491 = vpack.c.b16 %v3556, %v3545
    %v4492 = vpack.c.b16 %v3557, %v3546
    %v4493 = vpack.c.b16 %v3558, %v3547
    %v4494 = vpack.c.b16 %v3559, %v3548
    %v4495 = vpack.c.b16 %v3560, %v3549
    %v4496 = vpack.c.b16 %v3561, %v3550
    %v4497 = vpack.c.b16 %v3562, %v3551
    %v4498 = vpack.c.b16 %v3563, %v3552
    %v4499 = vpack.c.b16 %v3575, %v3564
    %v4500 = vpack.c.b16 %v3576, %v3565
    %v4501 = vpack.c.b16 %v3577, %v3566
    %v4502 = vpack.c.b16 %v3578, %v3567
    %v4503 = vpack.c.b16 %v3579, %v3568
    %v4504 = vpack.c.b16 %v3580, %v3569
    %v4505 = vpack.c.b16 %v3581, %v3570
    %v4506 = vpack.c.b16 %v3582, %v3571
    %v4507 = vpack.c.b16 %v3583, %v3572
    %v4508 = vpack.c.b16 %v3584, %v3573
    %v4509 = vpack.c.b16 %v3585, %v3574
    %v4510 = vpack.c.b16 %v3597, %v3586
    %v4511 = vpack.c.b16 %v3598, %v3587
    %v4512 = vpack.c.b16 %v3599, %v3588
    %v4513 = vpack.c.b16 %v3600, %v3589
    %v4514 = vpack.c.b16 %v3601, %v3590
    %v4515 = vpack.c.b16 %v3602, %v3591
    %v4516 = vpack.c.b16 %v3603, %v3592
    %v4517 = vpack.c.b16 %v3604, %v3593
    %v4518 = vpack.c.b16 %v3605, %v3594
    %v4519 = vpack.c.b16 %v3606, %v3595
    %v4520 = vpack.c.b16 %v3607, %v3596
    %v4521 = vpack.c.b16 %v3619, %v3608
    %v4522 = vpack.c.b16 %v3620, %v3609
    %v4523 = vpack.c.b16 %v3621, %v3610
    %v4524 = vpack.c.b16 %v3622, %v3611
    %v4525 = vpack.c.b16 %v3623, %v3612
    %v4526 = vpack.c.b16 %v3624, %v3613
    %v4527 = vpack.c.b16 %v3625, %v3614
    %v4528 = vpack.c.b16 %v3626, %v3615
    %v4529 = vpack.c.b16 %v3627, %v3616
    %v4530 = vpack.c.b16 %v3628, %v3617
    %v4531 = vpack.c.b16 %v3629, %v3618
    %v4532 = vpack.c.b16 %v3641, %v3630
    %v4533 = vpack.c.b16 %v3642, %v3631
    %v4534 = vpack.c.b16 %v3643, %v3632
    %v4535 = vpack.c.b16 %v3644, %v3633
    %v4536 = vpack.c.b16 %v3645, %v3634
    %v4537 = vpack.c.b16 %v3646, %v3635
    %v4538 = vpack.c.b16 %v3647, %v3636
    %v4539 = vpack.c.b16 %v3648, %v3637
    %v4540 = vpack.c.b16 %v3649, %v3638
    %v4541 = vpack.c.b16 %v3650, %v3639
    %v4542 = vpack.c.b16 %v3651, %v3640
    %v4543 = vpack.c.b16 %v3663, %v3652
    %v4544 = vpack.c.b16 %v3664, %v3653
    %v4545 = vpack.c.b16 %v3665, %v3654
    %v4546 = vpack.c.b16 %v3666, %v3655
    %v4547 = vpack.c.b16 %v3667, %v3656
    %v4548 = vpack.c.b16 %v3668, %v3657
    %v4549 = vpack.c.b16 %v3669, %v3658
    %v4550 = vpack.c.b16 %v3670, %v3659
    %v4551 = vpack.c.b16 %v3671, %v3660
    %v4552 = vpack.c.b16 %v3672, %v3661
    %v4553 = vpack.c.b16 %v3673, %v3662
    %v4554 = vpack.c.b16 %v3685, %v3674
    %v4555 = vpack.c.b16 %v3686, %v3675
    %v4556 = vpack.c.b16 %v3687, %v3676
    %v4557 = vpack.c.b16 %v3688, %v3677
    %v4558 = vpack.c.b16 %v3689, %v3678
    %v4559 = vpack.c.b16 %v3690, %v3679
    %v4560 = vpack.c.b16 %v3691, %v3680
    %v4561 = vpack.c.b16 %v3692, %v3681
    %v4562 = vpack.c.b16 %v3693, %v3682
    %v4563 = vpack.c.b16 %v3694, %v3683
    %v4564 = vpack.c.b16 %v3695, %v3684
    %v4565 = vpack.c.b16 %v3707, %v3696
    %v4566 = vpack.c.b16 %v3708, %v3697
    %v4567 = vpack.c.b16 %v3709, %v3698
    %v4568 = vpack.c.b16 %v3710, %v3699
    %v4569 = vpack.c.b16 %v3711, %v3700
    %v4570 = vpack.c.b16 %v3712, %v3701
    %v4571 = vpack.c.b16 %v3713, %v3702
    %v4572 = vpack.c.b16 %v3714, %v3703
    %v4573 = vpack.c.b16 %v3715, %v3704
    %v4574 = vpack.c.b16 %v3716, %v3705
    %v4575 = vpack.c.b16 %v3717, %v3706
    %v4576 = vpack.c.b16 %v3729, %v3718
    %v4577 = vpack.c.b16 %v3730, %v3719
    %v4578 = vpack.c.b16 %v3731, %v3720
    %v4579 = vpack.c.b16 %v3732, %v3721
    %v4580 = vpack.c.b16 %v3733, %v3722
    %v4581 = vpack.c.b16 %v3734, %v3723
    %v4582 = vpack.c.b16 %v3735, %v3724
    %v4583 = vpack.c.b16 %v3736, %v3725
    %v4584 = vpack.c.b16 %v3737, %v3726
    %v4585 = vpack.c.b16 %v3738, %v3727
    %v4586 = vpack.c.b16 %v3739, %v3728
    %v4587 = vpack.c.b16 %v3751, %v3740
    %v4588 = vpack.c.b16 %v3752, %v3741
    %v4589 = vpack.c.b16 %v3753, %v3742
    %v4590 = vpack.c.b16 %v3754, %v3743
    %v4591 = vpack.c.b16 %v3755, %v3744
    %v4592 = vpack.c.b16 %v3756, %v3745
    %v4593 = vpack.c.b16 %v3757, %v3746
    %v4594 = vpack.c.b16 %v3758, %v3747
    %v4595 = vpack.c.b16 %v3759, %v3748
    %v4596 = vpack.c.b16 %v3760, %v3749
    %v4597 = vpack.c.b16 %v3761, %v3750
    %v4598 = vpack.c.b16 %v3773, %v3762
    %v4599 = vpack.c.b16 %v3774, %v3763
    %v4600 = vpack.c.b16 %v3775, %v3764
    %v4601 = vpack.c.b16 %v3776, %v3765
    %v4602 = vpack.c.b16 %v3777, %v3766
    %v4603 = vpack.c.b16 %v3778, %v3767
    %v4604 = vpack.c.b16 %v3779, %v3768
    %v4605 = vpack.c.b16 %v3780, %v3769
    %v4606 = vpack.c.b16 %v3781, %v3770
    %v4607 = vpack.c.b16 %v3782, %v3771
    %v4608 = vpack.c.b16 %v3783, %v3772
    %v4609 = vpack.c.b16 %v3795, %v3784
    %v4610 = vpack.c.b16 %v3796, %v3785
    %v4611 = vpack.c.b16 %v3797, %v3786
    %v4612 = vpack.c.b16 %v3798, %v3787
    %v4613 = vpack.c.b16 %v3799, %v3788
    %v4614 = vpack.c.b16 %v3800, %v3789
    %v4615 = vpack.c.b16 %v3801, %v3790
    %v4616 = vpack.c.b16 %v3802, %v3791
    %v4617 = vpack.c.b16 %v3803, %v3792
    %v4618 = vpack.c.b16 %v3804, %v3793
    %v4619 = vpack.c.b16 %v3805, %v3794
    %v4620 = vpack.c.b16 %v3817, %v3806
    %v4621 = vpack.c.b16 %v3818, %v3807
    %v4622 = vpack.c.b16 %v3819, %v3808
    %v4623 = vpack.c.b16 %v3820, %v3809
    %v4624 = vpack.c.b16 %v3821, %v3810
    %v4625 = vpack.c.b16 %v3822, %v3811
    %v4626 = vpack.c.b16 %v3823, %v3812
    %v4627 = vpack.c.b16 %v3824, %v3813
    %v4628 = vpack.c.b16 %v3825, %v3814
    %v4629 = vpack.c.b16 %v3826, %v3815
    %v4630 = vpack.c.b16 %v3827, %v3816
    %v4631 = vpack.c.b16 %v3839, %v3828
    %v4632 = vpack.c.b16 %v3840, %v3829
    %v4633 = vpack.c.b16 %v3841, %v3830
    %v4634 = vpack.c.b16 %v3842, %v3831
    %v4635 = vpack.c.b16 %v3843, %v3832
    %v4636 = vpack.c.b16 %v3844, %v3833
    %v4637 = vpack.c.b16 %v3845, %v3834
    %v4638 = vpack.c.b16 %v3846, %v3835
    %v4639 = vpack.c.b16 %v3847, %v3836
    %v4640 = vpack.c.b16 %v3848, %v3837
    %v4641 = vpack.c.b16 %v3849, %v3838
    %v4642 = vpack.c.b16 %v3861, %v3850
    %v4643 = vpack.c.b16 %v3862, %v3851
    %v4644 = vpack.c.b16 %v3863, %v3852
    %v4645 = vpack.c.b16 %v3864, %v3853
    %v4646 = vpack.c.b16 %v3865, %v3854
    %v4647 = vpack.c.b16 %v3866, %v3855
    %v4648 = vpack.c.b16 %v3867, %v3856
    %v4649 = vpack.c.b16 %v3868, %v3857
    %v4650 = vpack.c.b16 %v3869, %v3858
    %v4651 = vpack.c.b16 %v3870, %v3859
    %v4652 = vpack.c.b16 %v3871, %v3860
    %v4653 = vpack.c.b16 %v3883, %v3872
    %v4654 = vpack.c.b16 %v3884, %v3873
    %v4655 = vpack.c.b16 %v3885, %v3874
    %v4656 = vpack.c.b16 %v3886, %v3875
    %v4657 = vpack.c.b16 %v3887, %v3876
    %v4658 = vpack.c.b16 %v3888, %v3877
    %v4659 = vpack.c.b16 %v3889, %v3878
    %v4660 = vpack.c.b16 %v3890, %v3879
    %v4661 = vpack.c.b16 %v3891, %v3880
    %v4662 = vpack.c.b16 %v3892, %v3881
    %v4663 = vpack.c.b16 %v3893, %v3882
    %v4664 = vpack.c.b16 %v3905, %v3894
    %v4665 = vpack.c.b16 %v3906, %v3895
    %v4666 = vpack.c.b16 %v3907, %v3896
    %v4667 = vpack.c.b16 %v3908, %v3897
    %v4668 = vpack.c.b16 %v3909, %v3898
    %v4669 = vpack.c.b16 %v3910, %v3899
    %v4670 = vpack.c.b16 %v3911, %v3900
    %v4671 = vpack.c.b16 %v3912, %v3901
    %v4672 = vpack.c.b16 %v3913, %v3902
    %v4673 = vpack.c.b16 %v3914, %v3903
    %v4674 = vpack.c.b16 %v3915, %v3904
    %v4675 = vpack.c.b16 %v3927, %v3916
    %v4676 = vpack.c.b16 %v3928, %v3917
    %v4677 = vpack.c.b16 %v3929, %v3918
    %v4678 = vpack.c.b16 %v3930, %v3919
    %v4679 = vpack.c.b16 %v3931, %v3920
    %v4680 = vpack.c.b16 %v3932, %v3921
    %v4681 = vpack.c.b16 %v3933, %v3922
    %v4682 = vpack.c.b16 %v3934, %v3923
    %v4683 = vpack.c.b16 %v3935, %v3924
    %v4684 = vpack.c.b16 %v3936, %v3925
    %v4685 = vpack.c.b16 %v3937, %v3926
    %v4686 = vpack.c.b16 %v3949, %v3938
    %v4687 = vpack.c.b16 %v3950, %v3939
    %v4688 = vpack.c.b16 %v3951, %v3940
    %v4689 = vpack.c.b16 %v3952, %v3941
    %v4690 = vpack.c.b16 %v3953, %v3942
    %v4691 = vpack.c.b16 %v3954, %v3943
    %v4692 = vpack.c.b16 %v3955, %v3944
    %v4693 = vpack.c.b16 %v3956, %v3945
    %v4694 = vpack.c.b16 %v3957, %v3946
    %v4695 = vpack.c.b16 %v3958, %v3947
    %v4696 = vpack.c.b16 %v3959, %v3948
    %v4697 = vpack.c.b16 %v3971, %v3960
    %v4698 = vpack.c.b16 %v3972, %v3961
    %v4699 = vpack.c.b16 %v3973, %v3962
    %v4700 = vpack.c.b16 %v3974, %v3963
    %v4701 = vpack.c.b16 %v3975, %v3964
    %v4702 = vpack.c.b16 %v3976, %v3965
    %v4703 = vpack.c.b16 %v3977, %v3966
    %v4704 = vpack.c.b16 %v3978, %v3967
    %v4705 = vpack.c.b16 %v3979, %v3968
    %v4706 = vpack.c.b16 %v3980, %v3969
    %v4707 = vpack.c.b16 %v3981, %v3970
    %v4708 = vpack.c.b16 %v3993, %v3982
    %v4709 = vpack.c.b16 %v3994, %v3983
    %v4710 = vpack.c.b16 %v3995, %v3984
    %v4711 = vpack.c.b16 %v3996, %v3985
    %v4712 = vpack.c.b16 %v3997, %v3986
    %v4713 = vpack.c.b16 %v3998, %v3987
    %v4714 = vpack.c.b16 %v3999, %v3988
    %v4715 = vpack.c.b16 %v4000, %v3989
    %v4716 = vpack.c.b16 %v4001, %v3990
    %v4717 = vpack.c.b16 %v4002, %v3991
    %v4718 = vpack.c.b16 %v4003, %v3992
    %v4719 = vpack.c.b16 %v4015, %v4004
    %v4720 = vpack.c.b16 %v4016, %v4005
    %v4721 = vpack.c.b16 %v4017, %v4006
    %v4722 = vpack.c.b16 %v4018, %v4007
    %v4723 = vpack.c.b16 %v4019, %v4008
    %v4724 = vpack.c.b16 %v4020, %v4009
    %v4725 = vpack.c.b16 %v4021, %v4010
    %v4726 = vpack.c.b16 %v4022, %v4011
    %v4727 = vpack.c.b16 %v4023, %v4012
    %v4728 = vpack.c.b16 %v4024, %v4013
    %v4729 = vpack.c.b16 %v4025, %v4014
    %v4730 = vpack.c.b16 %v4037, %v4026
    %v4731 = vpack.c.b16 %v4038, %v4027
    %v4732 = vpack.c.b16 %v4039, %v4028
    %v4733 = vpack.c.b16 %v4040, %v4029
    %v4734 = vpack.c.b16 %v4041, %v4030
    %v4735 = vpack.c.b16 %v4042, %v4031
    %v4736 = vpack.c.b16 %v4043, %v4032
    %v4737 = vpack.c.b16 %v4044, %v4033
    %v4738 = vpack.c.b16 %v4045, %v4034
    %v4739 = vpack.c.b16 %v4046, %v4035
    %v4740 = vpack.c.b16 %v4047, %v4036
    %v4741 = vpack.c.b16 %v4059, %v4048
    %v4742 = vpack.c.b16 %v4060, %v4049
    %v4743 = vpack.c.b16 %v4061, %v4050
    %v4744 = vpack.c.b16 %v4062, %v4051
    %v4745 = vpack.c.b16 %v4063, %v4052
    %v4746 = vpack.c.b16 %v4064, %v4053
    %v4747 = vpack.c.b16 %v4065, %v4054
    %v4748 = vpack.c.b16 %v4066, %v4055
    %v4749 = vpack.c.b16 %v4067, %v4056
    %v4750 = vpack.c.b16 %v4068, %v4057
    %v4751 = vpack.c.b16 %v4069, %v4058
    %v4752 = vpack.c.b16 %v4081, %v4070
    %v4753 = vpack.c.b16 %v4082, %v4071
    %v4754 = vpack.c.b16 %v4083, %v4072
    %v4755 = vpack.c.b16 %v4084, %v4073
    %v4756 = vpack.c.b16 %v4085, %v4074
    %v4757 = vpack.c.b16 %v4086, %v4075
    %v4758 = vpack.c.b16 %v4087, %v4076
    %v4759 = vpack.c.b16 %v4088, %v4077
    %v4760 = vpack.c.b16 %v4089, %v4078
    %v4761 = vpack.c.b16 %v4090, %v4079
    %v4762 = vpack.c.b16 %v4091, %v4080
    %v4763 = vpack.c.b16 %v4103, %v4092
    %v4764 = vpack.c.b16 %v4104, %v4093
    %v4765 = vpack.c.b16 %v4105, %v4094
    %v4766 = vpack.c.b16 %v4106, %v4095
    %v4767 = vpack.c.b16 %v4107, %v4096
    %v4768 = vpack.c.b16 %v4108, %v4097
    %v4769 = vpack.c.b16 %v4109, %v4098
    %v4770 = vpack.c.b16 %v4110, %v4099
    %v4771 = vpack.c.b16 %v4111, %v4100
    %v4772 = vpack.c.b16 %v4112, %v4101
    %v4773 = vpack.c.b16 %v4113, %v4102
    %v4774 = vpack.c.b16 %v4125, %v4114
    %v4775 = vpack.c.b16 %v4126, %v4115
    %v4776 = vpack.c.b16 %v4127, %v4116
    %v4777 = vpack.c.b16 %v4128, %v4117
    %v4778 = vpack.c.b16 %v4129, %v4118
    %v4779 = vpack.c.b16 %v4130, %v4119
    %v4780 = vpack.c.b16 %v4131, %v4120
    %v4781 = vpack.c.b16 %v4132, %v4121
    %v4782 = vpack.c.b16 %v4133, %v4122
    %v4783 = vpack.c.b16 %v4134, %v4123
    %v4784 = vpack.c.b16 %v4135, %v4124
    %v4785 = vpack.c.b16 %v4147, %v4136
    %v4786 = vpack.c.b16 %v4148, %v4137
    %v4787 = vpack.c.b16 %v4149, %v4138
    %v4788 = vpack.c.b16 %v4150, %v4139
    %v4789 = vpack.c.b16 %v4151, %v4140
    %v4790 = vpack.c.b16 %v4152, %v4141
    %v4791 = vpack.c.b16 %v4153, %v4142
    %v4792 = vpack.c.b16 %v4154, %v4143
    %v4793 = vpack.c.b16 %v4155, %v4144
    %v4794 = vpack.c.b16 %v4156, %v4145
    %v4795 = vpack.c.b16 %v4157, %v4146
    %v4796 = vpack.c.b16 %v4169, %v4158
    %v4797 = vpack.c.b16 %v4170, %v4159
    %v4798 = vpack.c.b16 %v4171, %v4160
    %v4799 = vpack.c.b16 %v4172, %v4161
    %v4800 = vpack.c.b16 %v4173, %v4162
    %v4801 = vpack.c.b16 %v4174, %v4163
    %v4802 = vpack.c.b16 %v4175, %v4164
    %v4803 = vpack.c.b16 %v4176, %v4165
    %v4804 = vpack.c.b16 %v4177, %v4166
    %v4805 = vpack.c.b16 %v4178, %v4167
    %v4806 = vpack.c.b16 %v4179, %v4168
    %v4807 = vpack.c.b16 %v4191, %v4180
    %v4808 = vpack.c.b16 %v4192, %v4181
    %v4809 = vpack.c.b16 %v4193, %v4182
    %v4810 = vpack.c.b16 %v4194, %v4183
    %v4811 = vpack.c.b16 %v4195, %v4184
    %v4812 = vpack.c.b16 %v4196, %v4185
    %v4813 = vpack.c.b16 %v4197, %v4186
    %v4814 = vpack.c.b16 %v4198, %v4187
    %v4815 = vpack.c.b16 %v4199, %v4188
    %v4816 = vpack.c.b16 %v4200, %v4189
    %v4817 = vpack.c.b16 %v4201, %v4190
    %v4818 = vpack.c.b16 %v4213, %v4202
    %v4819 = vpack.c.b16 %v4214, %v4203
    %v4820 = vpack.c.b16 %v4215, %v4204
    %v4821 = vpack.c.b16 %v4216, %v4205
    %v4822 = vpack.c.b16 %v4217, %v4206
    %v4823 = vpack.c.b16 %v4218, %v4207
    %v4824 = vpack.c.b16 %v4219, %v4208
    %v4825 = vpack.c.b16 %v4220, %v4209
    %v4826 = vpack.c.b16 %v4221, %v4210
    %v4827 = vpack.c.b16 %v4222, %v4211
    %v4828 = vpack.c.b16 %v4223, %v4212
    %v4829 = vpack.c.b16 %v4235, %v4224
    %v4830 = vpack.c.b16 %v4236, %v4225
    %v4831 = vpack.c.b16 %v4237, %v4226
    %v4832 = vpack.c.b16 %v4238, %v4227
    %v4833 = vpack.c.b16 %v4239, %v4228
    %v4834 = vpack.c.b16 %v4240, %v4229
    %v4835 = vpack.c.b16 %v4241, %v4230
    %v4836 = vpack.c.b16 %v4242, %v4231
    %v4837 = vpack.c.b16 %v4243, %v4232
    %v4838 = vpack.c.b16 %v4244, %v4233
    %v4839 = vpack.c.b16 %v4245, %v4234
    %v4840 = vpack.c.b16 %v4257, %v4246
    %v4841 = vpack.c.b16 %v4258, %v4247
    %v4842 = vpack.c.b16 %v4259, %v4248
    %v4843 = vpack.c.b16 %v4260, %v4249
    %v4844 = vpack.c.b16 %v4261, %v4250
    %v4845 = vpack.c.b16 %v4262, %v4251
    %v4846 = vpack.c.b16 %v4263, %v4252
    %v4847 = vpack.c.b16 %v4264, %v4253
    %v4848 = vpack.c.b16 %v4265, %v4254
    %v4849 = vpack.c.b16 %v4266, %v4255
    %v4850 = vpack.c.b16 %v4267, %v4256
    %v4851 = vpack.c.b16 %v4279, %v4268
    %v4852 = vpack.c.b16 %v4280, %v4269
    %v4853 = vpack.c.b16 %v4281, %v4270
    %v4854 = vpack.c.b16 %v4282, %v4271
    %v4855 = vpack.c.b16 %v4283, %v4272
    %v4856 = vpack.c.b16 %v4284, %v4273
    %v4857 = vpack.c.b16 %v4285, %v4274
    %v4858 = vpack.c.b16 %v4286, %v4275
    %v4859 = vpack.c.b16 %v4287, %v4276
    %v4860 = vpack.c.b16 %v4288, %v4277
    %v4861 = vpack.c.b16 %v4289, %v4278
    %v4862 = vpack.c.b16 %v4301, %v4290
    %v4863 = vpack.c.b16 %v4302, %v4291
    %v4864 = vpack.c.b16 %v4303, %v4292
    %v4865 = vpack.c.b16 %v4304, %v4293
    %v4866 = vpack.c.b16 %v4305, %v4294
    %v4867 = vpack.c.b16 %v4306, %v4295
    %v4868 = vpack.c.b16 %v4307, %v4296
    %v4869 = vpack.c.b16 %v4308, %v4297
    %v4870 = vpack.c.b16 %v4309, %v4298
    %v4871 = vpack.c.b16 %v4310, %v4299
    %v4872 = vpack.c.b16 %v4311, %v4300
    %v4873 = vpack.c.b16 %v4323, %v4312
    %v4874 = vpack.c.b16 %v4324, %v4313
    %v4875 = vpack.c.b16 %v4325, %v4314
    %v4876 = vpack.c.b16 %v4326, %v4315
    %v4877 = vpack.c.b16 %v4327, %v4316
    %v4878 = vpack.c.b16 %v4328, %v4317
    %v4879 = vpack.c.b16 %v4329, %v4318
    %v4880 = vpack.c.b16 %v4330, %v4319
    %v4881 = vpack.c.b16 %v4331, %v4320
    %v4882 = vpack.c.b16 %v4332, %v4321
    %v4883 = vpack.c.b16 %v4333, %v4322
    %v4884 = vpack.c.b16 %v4345, %v4334
    %v4885 = vpack.c.b16 %v4346, %v4335
    %v4886 = vpack.c.b16 %v4347, %v4336
    %v4887 = vpack.c.b16 %v4348, %v4337
    %v4888 = vpack.c.b16 %v4349, %v4338
    %v4889 = vpack.c.b16 %v4350, %v4339
    %v4890 = vpack.c.b16 %v4351, %v4340
    %v4891 = vpack.c.b16 %v4352, %v4341
    %v4892 = vpack.c.b16 %v4353, %v4342
    %v4893 = vpack.c.b16 %v4354, %v4343
    %v4894 = vpack.c.b16 %v4355, %v4344
    %v4895 = vpack.c.b16 %v4367, %v4356
    %v4896 = vpack.c.b16 %v4368, %v4357
    %v4897 = vpack.c.b16 %v4369, %v4358
    %v4898 = vpack.c.b16 %v4370, %v4359
    %v4899 = vpack.c.b16 %v4371, %v4360
    %v4900 = vpack.c.b16 %v4372, %v4361
    %v4901 = vpack.c.b16 %v4373, %v4362
    %v4902 = vpack.c.b16 %v4374, %v4363
    %v4903 = vpack.c.b16 %v4375, %v4364
    %v4904 = vpack.c.b16 %v4376, %v4365
    %v4905 = vpack.c.b16 %v4377, %v4366
    %5434 = vmatpush.bf16.msra.mxu0 %v4455
    %5435 = vmatpush.bf16.msra.mxu0 %v4444
    %5436 = vmatpush.bf16.msra.mxu0 %v4433
    %5437 = vmatpush.bf16.msra.mxu0 %v4422
    %5438 = vmatpush.bf16.msra.mxu0 %v4411
    %5439 = vmatpush.bf16.msra.mxu0 %v4400
    %5440 = vmatpush.bf16.msra.mxu0 %v4389
    %5441 = vmatpush.bf16.msra.mxu0 %v4378
    %5442 = vmatmul.bf16.gmra.mxu0 %v2714
    %v5443 = vpop.f32.mrf.mxu0
    %v5444 = vadd.f32 %v2724, %v5443
    %v5445 = vpop.f32.mrf.mxu0
    %5446 = vdwg.mxu0
    %5447 = vmatpush.bf16.msra.mxu0 %v4543
    %5448 = vmatpush.bf16.msra.mxu0 %v4532
    %5449 = vmatpush.bf16.msra.mxu0 %v4521
    %5450 = vmatpush.bf16.msra.mxu0 %v4510
    %5451 = vmatpush.bf16.msra.mxu0 %v4499
    %5452 = vmatpush.bf16.msra.mxu0 %v4488
    %5453 = vmatpush.bf16.msra.mxu0 %v4477
    %5454 = vmatpush.bf16.msra.mxu0 %v4466
    %5455 = vmatmul.bf16.gmra.mxu0 %v2715
    %v5456 = vpop.f32.mrf.mxu0
    %v5457 = vadd.f32 %v5444, %v5456
    %v5458 = vpop.f32.mrf.mxu0
    %5459 = vdwg.mxu0
    %5460 = vmatpush.bf16.msra.mxu0 %v4631
    %5461 = vmatpush.bf16.msra.mxu0 %v4620
    %5462 = vmatpush.bf16.msra.mxu0 %v4609
    %5463 = vmatpush.bf16.msra.mxu0 %v4598
    %5464 = vmatpush.bf16.msra.mxu0 %v4587
    %5465 = vmatpush.bf16.msra.mxu0 %v4576
    %5466 = vmatpush.bf16.msra.mxu0 %v4565
    %5467 = vmatpush.bf16.msra.mxu0 %v4554
    %5468 = vmatmul.bf16.gmra.mxu0 %v2716
    %v5469 = vpop.f32.mrf.mxu0
    %v5470 = vadd.f32 %v5457, %v5469
    %v5471 = vpop.f32.mrf.mxu0
    %5472 = vdwg.mxu0
    %5473 = vmatpush.bf16.msra.mxu0 %v4719
    %5474 = vmatpush.bf16.msra.mxu0 %v4708
    %5475 = vmatpush.bf16.msra.mxu0 %v4697
    %5476 = vmatpush.bf16.msra.mxu0 %v4686
    %5477 = vmatpush.bf16.msra.mxu0 %v4675
    %5478 = vmatpush.bf16.msra.mxu0 %v4664
    %5479 = vmatpush.bf16.msra.mxu0 %v4653
    %5480 = vmatpush.bf16.msra.mxu0 %v4642
    %5481 = vmatmul.bf16.gmra.mxu0 %v2717
    %v5482 = vpop.f32.mrf.mxu0
    %v5483 = vadd.f32 %v5470, %v5482
    %v5484 = vpop.f32.mrf.mxu0
    %5485 = vdwg.mxu0
    %5486 = vmatpush.bf16.msra.mxu0 %v4807
    %5487 = vmatpush.bf16.msra.mxu0 %v4796
    %5488 = vmatpush.bf16.msra.mxu0 %v4785
    %5489 = vmatpush.bf16.msra.mxu0 %v4774
    %5490 = vmatpush.bf16.msra.mxu0 %v4763
    %5491 = vmatpush.bf16.msra.mxu0 %v4752
    %5492 = vmatpush.bf16.msra.mxu0 %v4741
    %5493 = vmatpush.bf16.msra.mxu0 %v4730
    %5494 = vmatmul.bf16.gmra.mxu0 %v2718
    %v5495 = vpop.f32.mrf.mxu0
    %v5496 = vadd.f32 %v5483, %v5495
    %v5497 = vpop.f32.mrf.mxu0
    %5498 = vdwg.mxu0
    %5499 = vmatpush.bf16.msra.mxu0 %v4895
    %5500 = vmatpush.bf16.msra.mxu0 %v4884
    %5501 = vmatpush.bf16.msra.mxu0 %v4873
    %5502 = vmatpush.bf16.msra.mxu0 %v4862
    %5503 = vmatpush.bf16.msra.mxu0 %v4851
    %5504 = vmatpush.bf16.msra.mxu0 %v4840
    %5505 = vmatpush.bf16.msra.mxu0 %v4829
    %5506 = vmatpush.bf16.msra.mxu0 %v4818
    %5507 = vmatmul.bf16.gmra.mxu0 %v2719
    %v5508 = vpop.f32.mrf.mxu0
    %v5509 = vadd.f32 %v5496, %v5508
    %v5510 = vpop.f32.mrf.mxu0
    %5511 = vdwg.mxu0
    %5512 = vmatpush.bf16.msra.mxu0 %v4456
    %5513 = vmatpush.bf16.msra.mxu0 %v4445
    %5514 = vmatpush.bf16.msra.mxu0 %v4434
    %5515 = vmatpush.bf16.msra.mxu0 %v4423
    %5516 = vmatpush.bf16.msra.mxu0 %v4412
    %5517 = vmatpush.bf16.msra.mxu0 %v4401
    %5518 = vmatpush.bf16.msra.mxu0 %v4390
    %5519 = vmatpush.bf16.msra.mxu0 %v4379
    %5520 = vmatmul.bf16.gmra.mxu0 %v2714
    %v5521 = vpop.f32.mrf.mxu0
    %v5522 = vadd.f32 %v2725, %v5521
    %v5523 = vpop.f32.mrf.mxu0
    %5524 = vdwg.mxu0
    %5525 = vmatpush.bf16.msra.mxu0 %v4544
    %5526 = vmatpush.bf16.msra.mxu0 %v4533
    %5527 = vmatpush.bf16.msra.mxu0 %v4522
    %5528 = vmatpush.bf16.msra.mxu0 %v4511
    %5529 = vmatpush.bf16.msra.mxu0 %v4500
    %5530 = vmatpush.bf16.msra.mxu0 %v4489
    %5531 = vmatpush.bf16.msra.mxu0 %v4478
    %5532 = vmatpush.bf16.msra.mxu0 %v4467
    %5533 = vmatmul.bf16.gmra.mxu0 %v2715
    %v5534 = vpop.f32.mrf.mxu0
    %v5535 = vadd.f32 %v5522, %v5534
    %v5536 = vpop.f32.mrf.mxu0
    %5537 = vdwg.mxu0
    %5538 = vmatpush.bf16.msra.mxu0 %v4632
    %5539 = vmatpush.bf16.msra.mxu0 %v4621
    %5540 = vmatpush.bf16.msra.mxu0 %v4610
    %5541 = vmatpush.bf16.msra.mxu0 %v4599
    %5542 = vmatpush.bf16.msra.mxu0 %v4588
    %5543 = vmatpush.bf16.msra.mxu0 %v4577
    %5544 = vmatpush.bf16.msra.mxu0 %v4566
    %5545 = vmatpush.bf16.msra.mxu0 %v4555
    %5546 = vmatmul.bf16.gmra.mxu0 %v2716
    %v5547 = vpop.f32.mrf.mxu0
    %v5548 = vadd.f32 %v5535, %v5547
    %v5549 = vpop.f32.mrf.mxu0
    %5550 = vdwg.mxu0
    %5551 = vmatpush.bf16.msra.mxu0 %v4720
    %5552 = vmatpush.bf16.msra.mxu0 %v4709
    %5553 = vmatpush.bf16.msra.mxu0 %v4698
    %5554 = vmatpush.bf16.msra.mxu0 %v4687
    %5555 = vmatpush.bf16.msra.mxu0 %v4676
    %5556 = vmatpush.bf16.msra.mxu0 %v4665
    %5557 = vmatpush.bf16.msra.mxu0 %v4654
    %5558 = vmatpush.bf16.msra.mxu0 %v4643
    %5559 = vmatmul.bf16.gmra.mxu0 %v2717
    %v5560 = vpop.f32.mrf.mxu0
    %v5561 = vadd.f32 %v5548, %v5560
    %v5562 = vpop.f32.mrf.mxu0
    %5563 = vdwg.mxu0
    %5564 = vmatpush.bf16.msra.mxu0 %v4808
    %5565 = vmatpush.bf16.msra.mxu0 %v4797
    %5566 = vmatpush.bf16.msra.mxu0 %v4786
    %5567 = vmatpush.bf16.msra.mxu0 %v4775
    %5568 = vmatpush.bf16.msra.mxu0 %v4764
    %5569 = vmatpush.bf16.msra.mxu0 %v4753
    %5570 = vmatpush.bf16.msra.mxu0 %v4742
    %5571 = vmatpush.bf16.msra.mxu0 %v4731
    %5572 = vmatmul.bf16.gmra.mxu0 %v2718
    %v5573 = vpop.f32.mrf.mxu0
    %v5574 = vadd.f32 %v5561, %v5573
    %v5575 = vpop.f32.mrf.mxu0
    %5576 = vdwg.mxu0
    %5577 = vmatpush.bf16.msra.mxu0 %v4896
    %5578 = vmatpush.bf16.msra.mxu0 %v4885
    %5579 = vmatpush.bf16.msra.mxu0 %v4874
    %5580 = vmatpush.bf16.msra.mxu0 %v4863
    %5581 = vmatpush.bf16.msra.mxu0 %v4852
    %5582 = vmatpush.bf16.msra.mxu0 %v4841
    %5583 = vmatpush.bf16.msra.mxu0 %v4830
    %5584 = vmatpush.bf16.msra.mxu0 %v4819
    %5585 = vmatmul.bf16.gmra.mxu0 %v2719
    %v5586 = vpop.f32.mrf.mxu0
    %v5587 = vadd.f32 %v5574, %v5586
    %v5588 = vpop.f32.mrf.mxu0
    %5589 = vdwg.mxu0
    %5590 = vmatpush.bf16.msra.mxu0 %v4457
    %5591 = vmatpush.bf16.msra.mxu0 %v4446
    %5592 = vmatpush.bf16.msra.mxu0 %v4435
    %5593 = vmatpush.bf16.msra.mxu0 %v4424
    %5594 = vmatpush.bf16.msra.mxu0 %v4413
    %5595 = vmatpush.bf16.msra.mxu0 %v4402
    %5596 = vmatpush.bf16.msra.mxu0 %v4391
    %5597 = vmatpush.bf16.msra.mxu0 %v4380
    %5598 = vmatmul.bf16.gmra.mxu0 %v2714
    %v5599 = vpop.f32.mrf.mxu0
    %v5600 = vadd.f32 %v2726, %v5599
    %v5601 = vpop.f32.mrf.mxu0
    %5602 = vdwg.mxu0
    %5603 = vmatpush.bf16.msra.mxu0 %v4545
    %5604 = vmatpush.bf16.msra.mxu0 %v4534
    %5605 = vmatpush.bf16.msra.mxu0 %v4523
    %5606 = vmatpush.bf16.msra.mxu0 %v4512
    %5607 = vmatpush.bf16.msra.mxu0 %v4501
    %5608 = vmatpush.bf16.msra.mxu0 %v4490
    %5609 = vmatpush.bf16.msra.mxu0 %v4479
    %5610 = vmatpush.bf16.msra.mxu0 %v4468
    %5611 = vmatmul.bf16.gmra.mxu0 %v2715
    %v5612 = vpop.f32.mrf.mxu0
    %v5613 = vadd.f32 %v5600, %v5612
    %v5614 = vpop.f32.mrf.mxu0
    %5615 = vdwg.mxu0
    %5616 = vmatpush.bf16.msra.mxu0 %v4633
    %5617 = vmatpush.bf16.msra.mxu0 %v4622
    %5618 = vmatpush.bf16.msra.mxu0 %v4611
    %5619 = vmatpush.bf16.msra.mxu0 %v4600
    %5620 = vmatpush.bf16.msra.mxu0 %v4589
    %5621 = vmatpush.bf16.msra.mxu0 %v4578
    %5622 = vmatpush.bf16.msra.mxu0 %v4567
    %5623 = vmatpush.bf16.msra.mxu0 %v4556
    %5624 = vmatmul.bf16.gmra.mxu0 %v2716
    %v5625 = vpop.f32.mrf.mxu0
    %v5626 = vadd.f32 %v5613, %v5625
    %v5627 = vpop.f32.mrf.mxu0
    %5628 = vdwg.mxu0
    %5629 = vmatpush.bf16.msra.mxu0 %v4721
    %5630 = vmatpush.bf16.msra.mxu0 %v4710
    %5631 = vmatpush.bf16.msra.mxu0 %v4699
    %5632 = vmatpush.bf16.msra.mxu0 %v4688
    %5633 = vmatpush.bf16.msra.mxu0 %v4677
    %5634 = vmatpush.bf16.msra.mxu0 %v4666
    %5635 = vmatpush.bf16.msra.mxu0 %v4655
    %5636 = vmatpush.bf16.msra.mxu0 %v4644
    %5637 = vmatmul.bf16.gmra.mxu0 %v2717
    %v5638 = vpop.f32.mrf.mxu0
    %v5639 = vadd.f32 %v5626, %v5638
    %v5640 = vpop.f32.mrf.mxu0
    %5641 = vdwg.mxu0
    %5642 = vmatpush.bf16.msra.mxu0 %v4809
    %5643 = vmatpush.bf16.msra.mxu0 %v4798
    %5644 = vmatpush.bf16.msra.mxu0 %v4787
    %5645 = vmatpush.bf16.msra.mxu0 %v4776
    %5646 = vmatpush.bf16.msra.mxu0 %v4765
    %5647 = vmatpush.bf16.msra.mxu0 %v4754
    %5648 = vmatpush.bf16.msra.mxu0 %v4743
    %5649 = vmatpush.bf16.msra.mxu0 %v4732
    %5650 = vmatmul.bf16.gmra.mxu0 %v2718
    %v5651 = vpop.f32.mrf.mxu0
    %v5652 = vadd.f32 %v5639, %v5651
    %v5653 = vpop.f32.mrf.mxu0
    %5654 = vdwg.mxu0
    %5655 = vmatpush.bf16.msra.mxu0 %v4897
    %5656 = vmatpush.bf16.msra.mxu0 %v4886
    %5657 = vmatpush.bf16.msra.mxu0 %v4875
    %5658 = vmatpush.bf16.msra.mxu0 %v4864
    %5659 = vmatpush.bf16.msra.mxu0 %v4853
    %5660 = vmatpush.bf16.msra.mxu0 %v4842
    %5661 = vmatpush.bf16.msra.mxu0 %v4831
    %5662 = vmatpush.bf16.msra.mxu0 %v4820
    %5663 = vmatmul.bf16.gmra.mxu0 %v2719
    %v5664 = vpop.f32.mrf.mxu0
    %v5665 = vadd.f32 %v5652, %v5664
    %v5666 = vpop.f32.mrf.mxu0
    %5667 = vdwg.mxu0
    %5668 = vmatpush.bf16.msra.mxu0 %v4458
    %5669 = vmatpush.bf16.msra.mxu0 %v4447
    %5670 = vmatpush.bf16.msra.mxu0 %v4436
    %5671 = vmatpush.bf16.msra.mxu0 %v4425
    %5672 = vmatpush.bf16.msra.mxu0 %v4414
    %5673 = vmatpush.bf16.msra.mxu0 %v4403
    %5674 = vmatpush.bf16.msra.mxu0 %v4392
    %5675 = vmatpush.bf16.msra.mxu0 %v4381
    %5676 = vmatmul.bf16.gmra.mxu0 %v2714
    %v5677 = vpop.f32.mrf.mxu0
    %v5678 = vadd.f32 %v2727, %v5677
    %v5679 = vpop.f32.mrf.mxu0
    %5680 = vdwg.mxu0
    %5681 = vmatpush.bf16.msra.mxu0 %v4546
    %5682 = vmatpush.bf16.msra.mxu0 %v4535
    %5683 = vmatpush.bf16.msra.mxu0 %v4524
    %5684 = vmatpush.bf16.msra.mxu0 %v4513
    %5685 = vmatpush.bf16.msra.mxu0 %v4502
    %5686 = vmatpush.bf16.msra.mxu0 %v4491
    %5687 = vmatpush.bf16.msra.mxu0 %v4480
    %5688 = vmatpush.bf16.msra.mxu0 %v4469
    %5689 = vmatmul.bf16.gmra.mxu0 %v2715
    %v5690 = vpop.f32.mrf.mxu0
    %v5691 = vadd.f32 %v5678, %v5690
    %v5692 = vpop.f32.mrf.mxu0
    %5693 = vdwg.mxu0
    %5694 = vmatpush.bf16.msra.mxu0 %v4634
    %5695 = vmatpush.bf16.msra.mxu0 %v4623
    %5696 = vmatpush.bf16.msra.mxu0 %v4612
    %5697 = vmatpush.bf16.msra.mxu0 %v4601
    %5698 = vmatpush.bf16.msra.mxu0 %v4590
    %5699 = vmatpush.bf16.msra.mxu0 %v4579
    %5700 = vmatpush.bf16.msra.mxu0 %v4568
    %5701 = vmatpush.bf16.msra.mxu0 %v4557
    %5702 = vmatmul.bf16.gmra.mxu0 %v2716
    %v5703 = vpop.f32.mrf.mxu0
    %v5704 = vadd.f32 %v5691, %v5703
    %v5705 = vpop.f32.mrf.mxu0
    %5706 = vdwg.mxu0
    %5707 = vmatpush.bf16.msra.mxu0 %v4722
    %5708 = vmatpush.bf16.msra.mxu0 %v4711
    %5709 = vmatpush.bf16.msra.mxu0 %v4700
    %5710 = vmatpush.bf16.msra.mxu0 %v4689
    %5711 = vmatpush.bf16.msra.mxu0 %v4678
    %5712 = vmatpush.bf16.msra.mxu0 %v4667
    %5713 = vmatpush.bf16.msra.mxu0 %v4656
    %5714 = vmatpush.bf16.msra.mxu0 %v4645
    %5715 = vmatmul.bf16.gmra.mxu0 %v2717
    %v5716 = vpop.f32.mrf.mxu0
    %v5717 = vadd.f32 %v5704, %v5716
    %v5718 = vpop.f32.mrf.mxu0
    %5719 = vdwg.mxu0
    %5720 = vmatpush.bf16.msra.mxu0 %v4810
    %5721 = vmatpush.bf16.msra.mxu0 %v4799
    %5722 = vmatpush.bf16.msra.mxu0 %v4788
    %5723 = vmatpush.bf16.msra.mxu0 %v4777
    %5724 = vmatpush.bf16.msra.mxu0 %v4766
    %5725 = vmatpush.bf16.msra.mxu0 %v4755
    %5726 = vmatpush.bf16.msra.mxu0 %v4744
    %5727 = vmatpush.bf16.msra.mxu0 %v4733
    %5728 = vmatmul.bf16.gmra.mxu0 %v2718
    %v5729 = vpop.f32.mrf.mxu0
    %v5730 = vadd.f32 %v5717, %v5729
    %v5731 = vpop.f32.mrf.mxu0
    %5732 = vdwg.mxu0
    %5733 = vmatpush.bf16.msra.mxu0 %v4898
    %5734 = vmatpush.bf16.msra.mxu0 %v4887
    %5735 = vmatpush.bf16.msra.mxu0 %v4876
    %5736 = vmatpush.bf16.msra.mxu0 %v4865
    %5737 = vmatpush.bf16.msra.mxu0 %v4854
    %5738 = vmatpush.bf16.msra.mxu0 %v4843
    %5739 = vmatpush.bf16.msra.mxu0 %v4832
    %5740 = vmatpush.bf16.msra.mxu0 %v4821
    %5741 = vmatmul.bf16.gmra.mxu0 %v2719
    %v5742 = vpop.f32.mrf.mxu0
    %v5743 = vadd.f32 %v5730, %v5742
    %v5744 = vpop.f32.mrf.mxu0
    %5745 = vdwg.mxu0
    %5746 = vmatpush.bf16.msra.mxu0 %v4459
    %5747 = vmatpush.bf16.msra.mxu0 %v4448
    %5748 = vmatpush.bf16.msra.mxu0 %v4437
    %5749 = vmatpush.bf16.msra.mxu0 %v4426
    %5750 = vmatpush.bf16.msra.mxu0 %v4415
    %5751 = vmatpush.bf16.msra.mxu0 %v4404
    %5752 = vmatpush.bf16.msra.mxu0 %v4393
    %5753 = vmatpush.bf16.msra.mxu0 %v4382
    %5754 = vmatmul.bf16.gmra.mxu0 %v2714
    %v5755 = vpop.f32.mrf.mxu0
    %v5756 = vadd.f32 %v2728, %v5755
    %v5757 = vpop.f32.mrf.mxu0
    %5758 = vdwg.mxu0
    %5759 = vmatpush.bf16.msra.mxu0 %v4547
    %5760 = vmatpush.bf16.msra.mxu0 %v4536
    %5761 = vmatpush.bf16.msra.mxu0 %v4525
    %5762 = vmatpush.bf16.msra.mxu0 %v4514
    %5763 = vmatpush.bf16.msra.mxu0 %v4503
    %5764 = vmatpush.bf16.msra.mxu0 %v4492
    %5765 = vmatpush.bf16.msra.mxu0 %v4481
    %5766 = vmatpush.bf16.msra.mxu0 %v4470
    %5767 = vmatmul.bf16.gmra.mxu0 %v2715
    %v5768 = vpop.f32.mrf.mxu0
    %v5769 = vadd.f32 %v5756, %v5768
    %v5770 = vpop.f32.mrf.mxu0
    %5771 = vdwg.mxu0
    %5772 = vmatpush.bf16.msra.mxu0 %v4635
    %5773 = vmatpush.bf16.msra.mxu0 %v4624
    %5774 = vmatpush.bf16.msra.mxu0 %v4613
    %5775 = vmatpush.bf16.msra.mxu0 %v4602
    %5776 = vmatpush.bf16.msra.mxu0 %v4591
    %5777 = vmatpush.bf16.msra.mxu0 %v4580
    %5778 = vmatpush.bf16.msra.mxu0 %v4569
    %5779 = vmatpush.bf16.msra.mxu0 %v4558
    %5780 = vmatmul.bf16.gmra.mxu0 %v2716
    %v5781 = vpop.f32.mrf.mxu0
    %v5782 = vadd.f32 %v5769, %v5781
    %v5783 = vpop.f32.mrf.mxu0
    %5784 = vdwg.mxu0
    %5785 = vmatpush.bf16.msra.mxu0 %v4723
    %5786 = vmatpush.bf16.msra.mxu0 %v4712
    %5787 = vmatpush.bf16.msra.mxu0 %v4701
    %5788 = vmatpush.bf16.msra.mxu0 %v4690
    %5789 = vmatpush.bf16.msra.mxu0 %v4679
    %5790 = vmatpush.bf16.msra.mxu0 %v4668
    %5791 = vmatpush.bf16.msra.mxu0 %v4657
    %5792 = vmatpush.bf16.msra.mxu0 %v4646
    %5793 = vmatmul.bf16.gmra.mxu0 %v2717
    %v5794 = vpop.f32.mrf.mxu0
    %v5795 = vadd.f32 %v5782, %v5794
    %v5796 = vpop.f32.mrf.mxu0
    %5797 = vdwg.mxu0
    %5798 = vmatpush.bf16.msra.mxu0 %v4811
    %5799 = vmatpush.bf16.msra.mxu0 %v4800
    %5800 = vmatpush.bf16.msra.mxu0 %v4789
    %5801 = vmatpush.bf16.msra.mxu0 %v4778
    %5802 = vmatpush.bf16.msra.mxu0 %v4767
    %5803 = vmatpush.bf16.msra.mxu0 %v4756
    %5804 = vmatpush.bf16.msra.mxu0 %v4745
    %5805 = vmatpush.bf16.msra.mxu0 %v4734
    %5806 = vmatmul.bf16.gmra.mxu0 %v2718
    %v5807 = vpop.f32.mrf.mxu0
    %v5808 = vadd.f32 %v5795, %v5807
    %v5809 = vpop.f32.mrf.mxu0
    %5810 = vdwg.mxu0
    %5811 = vmatpush.bf16.msra.mxu0 %v4899
    %5812 = vmatpush.bf16.msra.mxu0 %v4888
    %5813 = vmatpush.bf16.msra.mxu0 %v4877
    %5814 = vmatpush.bf16.msra.mxu0 %v4866
    %5815 = vmatpush.bf16.msra.mxu0 %v4855
    %5816 = vmatpush.bf16.msra.mxu0 %v4844
    %5817 = vmatpush.bf16.msra.mxu0 %v4833
    %5818 = vmatpush.bf16.msra.mxu0 %v4822
    %5819 = vmatmul.bf16.gmra.mxu0 %v2719
    %v5820 = vpop.f32.mrf.mxu0
    %v5821 = vadd.f32 %v5808, %v5820
    %v5822 = vpop.f32.mrf.mxu0
    %5823 = vdwg.mxu0
    %5824 = vmatpush.bf16.msra.mxu0 %v4460
    %5825 = vmatpush.bf16.msra.mxu0 %v4449
    %5826 = vmatpush.bf16.msra.mxu0 %v4438
    %5827 = vmatpush.bf16.msra.mxu0 %v4427
    %5828 = vmatpush.bf16.msra.mxu0 %v4416
    %5829 = vmatpush.bf16.msra.mxu0 %v4405
    %5830 = vmatpush.bf16.msra.mxu0 %v4394
    %5831 = vmatpush.bf16.msra.mxu0 %v4383
    %5832 = vmatmul.bf16.gmra.mxu0 %v2714
    %v5833 = vpop.f32.mrf.mxu0
    %v5834 = vadd.f32 %v2729, %v5833
    %v5835 = vpop.f32.mrf.mxu0
    %5836 = vdwg.mxu0
    %5837 = vmatpush.bf16.msra.mxu0 %v4548
    %5838 = vmatpush.bf16.msra.mxu0 %v4537
    %5839 = vmatpush.bf16.msra.mxu0 %v4526
    %5840 = vmatpush.bf16.msra.mxu0 %v4515
    %5841 = vmatpush.bf16.msra.mxu0 %v4504
    %5842 = vmatpush.bf16.msra.mxu0 %v4493
    %5843 = vmatpush.bf16.msra.mxu0 %v4482
    %5844 = vmatpush.bf16.msra.mxu0 %v4471
    %5845 = vmatmul.bf16.gmra.mxu0 %v2715
    %v5846 = vpop.f32.mrf.mxu0
    %v5847 = vadd.f32 %v5834, %v5846
    %v5848 = vpop.f32.mrf.mxu0
    %5849 = vdwg.mxu0
    %5850 = vmatpush.bf16.msra.mxu0 %v4636
    %5851 = vmatpush.bf16.msra.mxu0 %v4625
    %5852 = vmatpush.bf16.msra.mxu0 %v4614
    %5853 = vmatpush.bf16.msra.mxu0 %v4603
    %5854 = vmatpush.bf16.msra.mxu0 %v4592
    %5855 = vmatpush.bf16.msra.mxu0 %v4581
    %5856 = vmatpush.bf16.msra.mxu0 %v4570
    %5857 = vmatpush.bf16.msra.mxu0 %v4559
    %5858 = vmatmul.bf16.gmra.mxu0 %v2716
    %v5859 = vpop.f32.mrf.mxu0
    %v5860 = vadd.f32 %v5847, %v5859
    %v5861 = vpop.f32.mrf.mxu0
    %5862 = vdwg.mxu0
    %5863 = vmatpush.bf16.msra.mxu0 %v4724
    %5864 = vmatpush.bf16.msra.mxu0 %v4713
    %5865 = vmatpush.bf16.msra.mxu0 %v4702
    %5866 = vmatpush.bf16.msra.mxu0 %v4691
    %5867 = vmatpush.bf16.msra.mxu0 %v4680
    %5868 = vmatpush.bf16.msra.mxu0 %v4669
    %5869 = vmatpush.bf16.msra.mxu0 %v4658
    %5870 = vmatpush.bf16.msra.mxu0 %v4647
    %5871 = vmatmul.bf16.gmra.mxu0 %v2717
    %v5872 = vpop.f32.mrf.mxu0
    %v5873 = vadd.f32 %v5860, %v5872
    %v5874 = vpop.f32.mrf.mxu0
    %5875 = vdwg.mxu0
    %5876 = vmatpush.bf16.msra.mxu0 %v4812
    %5877 = vmatpush.bf16.msra.mxu0 %v4801
    %5878 = vmatpush.bf16.msra.mxu0 %v4790
    %5879 = vmatpush.bf16.msra.mxu0 %v4779
    %5880 = vmatpush.bf16.msra.mxu0 %v4768
    %5881 = vmatpush.bf16.msra.mxu0 %v4757
    %5882 = vmatpush.bf16.msra.mxu0 %v4746
    %5883 = vmatpush.bf16.msra.mxu0 %v4735
    %5884 = vmatmul.bf16.gmra.mxu0 %v2718
    %v5885 = vpop.f32.mrf.mxu0
    %v5886 = vadd.f32 %v5873, %v5885
    %v5887 = vpop.f32.mrf.mxu0
    %5888 = vdwg.mxu0
    %5889 = vmatpush.bf16.msra.mxu0 %v4900
    %5890 = vmatpush.bf16.msra.mxu0 %v4889
    %5891 = vmatpush.bf16.msra.mxu0 %v4878
    %5892 = vmatpush.bf16.msra.mxu0 %v4867
    %5893 = vmatpush.bf16.msra.mxu0 %v4856
    %5894 = vmatpush.bf16.msra.mxu0 %v4845
    %5895 = vmatpush.bf16.msra.mxu0 %v4834
    %5896 = vmatpush.bf16.msra.mxu0 %v4823
    %5897 = vmatmul.bf16.gmra.mxu0 %v2719
    %v5898 = vpop.f32.mrf.mxu0
    %v5899 = vadd.f32 %v5886, %v5898
    %v5900 = vpop.f32.mrf.mxu0
    %5901 = vdwg.mxu0
    %5902 = vmatpush.bf16.msra.mxu0 %v4461
    %5903 = vmatpush.bf16.msra.mxu0 %v4450
    %5904 = vmatpush.bf16.msra.mxu0 %v4439
    %5905 = vmatpush.bf16.msra.mxu0 %v4428
    %5906 = vmatpush.bf16.msra.mxu0 %v4417
    %5907 = vmatpush.bf16.msra.mxu0 %v4406
    %5908 = vmatpush.bf16.msra.mxu0 %v4395
    %5909 = vmatpush.bf16.msra.mxu0 %v4384
    %5910 = vmatmul.bf16.gmra.mxu0 %v2714
    %v5911 = vpop.f32.mrf.mxu0
    %v5912 = vadd.f32 %v2730, %v5911
    %v5913 = vpop.f32.mrf.mxu0
    %5914 = vdwg.mxu0
    %5915 = vmatpush.bf16.msra.mxu0 %v4549
    %5916 = vmatpush.bf16.msra.mxu0 %v4538
    %5917 = vmatpush.bf16.msra.mxu0 %v4527
    %5918 = vmatpush.bf16.msra.mxu0 %v4516
    %5919 = vmatpush.bf16.msra.mxu0 %v4505
    %5920 = vmatpush.bf16.msra.mxu0 %v4494
    %5921 = vmatpush.bf16.msra.mxu0 %v4483
    %5922 = vmatpush.bf16.msra.mxu0 %v4472
    %5923 = vmatmul.bf16.gmra.mxu0 %v2715
    %v5924 = vpop.f32.mrf.mxu0
    %v5925 = vadd.f32 %v5912, %v5924
    %v5926 = vpop.f32.mrf.mxu0
    %5927 = vdwg.mxu0
    %5928 = vmatpush.bf16.msra.mxu0 %v4637
    %5929 = vmatpush.bf16.msra.mxu0 %v4626
    %5930 = vmatpush.bf16.msra.mxu0 %v4615
    %5931 = vmatpush.bf16.msra.mxu0 %v4604
    %5932 = vmatpush.bf16.msra.mxu0 %v4593
    %5933 = vmatpush.bf16.msra.mxu0 %v4582
    %5934 = vmatpush.bf16.msra.mxu0 %v4571
    %5935 = vmatpush.bf16.msra.mxu0 %v4560
    %5936 = vmatmul.bf16.gmra.mxu0 %v2716
    %v5937 = vpop.f32.mrf.mxu0
    %v5938 = vadd.f32 %v5925, %v5937
    %v5939 = vpop.f32.mrf.mxu0
    %5940 = vdwg.mxu0
    %5941 = vmatpush.bf16.msra.mxu0 %v4725
    %5942 = vmatpush.bf16.msra.mxu0 %v4714
    %5943 = vmatpush.bf16.msra.mxu0 %v4703
    %5944 = vmatpush.bf16.msra.mxu0 %v4692
    %5945 = vmatpush.bf16.msra.mxu0 %v4681
    %5946 = vmatpush.bf16.msra.mxu0 %v4670
    %5947 = vmatpush.bf16.msra.mxu0 %v4659
    %5948 = vmatpush.bf16.msra.mxu0 %v4648
    %5949 = vmatmul.bf16.gmra.mxu0 %v2717
    %v5950 = vpop.f32.mrf.mxu0
    %v5951 = vadd.f32 %v5938, %v5950
    %v5952 = vpop.f32.mrf.mxu0
    %5953 = vdwg.mxu0
    %5954 = vmatpush.bf16.msra.mxu0 %v4813
    %5955 = vmatpush.bf16.msra.mxu0 %v4802
    %5956 = vmatpush.bf16.msra.mxu0 %v4791
    %5957 = vmatpush.bf16.msra.mxu0 %v4780
    %5958 = vmatpush.bf16.msra.mxu0 %v4769
    %5959 = vmatpush.bf16.msra.mxu0 %v4758
    %5960 = vmatpush.bf16.msra.mxu0 %v4747
    %5961 = vmatpush.bf16.msra.mxu0 %v4736
    %5962 = vmatmul.bf16.gmra.mxu0 %v2718
    %v5963 = vpop.f32.mrf.mxu0
    %v5964 = vadd.f32 %v5951, %v5963
    %v5965 = vpop.f32.mrf.mxu0
    %5966 = vdwg.mxu0
    %5967 = vmatpush.bf16.msra.mxu0 %v4901
    %5968 = vmatpush.bf16.msra.mxu0 %v4890
    %5969 = vmatpush.bf16.msra.mxu0 %v4879
    %5970 = vmatpush.bf16.msra.mxu0 %v4868
    %5971 = vmatpush.bf16.msra.mxu0 %v4857
    %5972 = vmatpush.bf16.msra.mxu0 %v4846
    %5973 = vmatpush.bf16.msra.mxu0 %v4835
    %5974 = vmatpush.bf16.msra.mxu0 %v4824
    %5975 = vmatmul.bf16.gmra.mxu0 %v2719
    %v5976 = vpop.f32.mrf.mxu0
    %v5977 = vadd.f32 %v5964, %v5976
    %v5978 = vpop.f32.mrf.mxu0
    %5979 = vdwg.mxu0
    %5980 = vmatpush.bf16.msra.mxu0 %v4462
    %5981 = vmatpush.bf16.msra.mxu0 %v4451
    %5982 = vmatpush.bf16.msra.mxu0 %v4440
    %5983 = vmatpush.bf16.msra.mxu0 %v4429
    %5984 = vmatpush.bf16.msra.mxu0 %v4418
    %5985 = vmatpush.bf16.msra.mxu0 %v4407
    %5986 = vmatpush.bf16.msra.mxu0 %v4396
    %5987 = vmatpush.bf16.msra.mxu0 %v4385
    %5988 = vmatmul.bf16.gmra.mxu0 %v2714
    %v5989 = vpop.f32.mrf.mxu0
    %v5990 = vadd.f32 %v2731, %v5989
    %v5991 = vpop.f32.mrf.mxu0
    %5992 = vdwg.mxu0
    %5993 = vmatpush.bf16.msra.mxu0 %v4550
    %5994 = vmatpush.bf16.msra.mxu0 %v4539
    %5995 = vmatpush.bf16.msra.mxu0 %v4528
    %5996 = vmatpush.bf16.msra.mxu0 %v4517
    %5997 = vmatpush.bf16.msra.mxu0 %v4506
    %5998 = vmatpush.bf16.msra.mxu0 %v4495
    %5999 = vmatpush.bf16.msra.mxu0 %v4484
    %6000 = vmatpush.bf16.msra.mxu0 %v4473
    %6001 = vmatmul.bf16.gmra.mxu0 %v2715
    %v6002 = vpop.f32.mrf.mxu0
    %v6003 = vadd.f32 %v5990, %v6002
    %v6004 = vpop.f32.mrf.mxu0
    %6005 = vdwg.mxu0
    %6006 = vmatpush.bf16.msra.mxu0 %v4638
    %6007 = vmatpush.bf16.msra.mxu0 %v4627
    %6008 = vmatpush.bf16.msra.mxu0 %v4616
    %6009 = vmatpush.bf16.msra.mxu0 %v4605
    %6010 = vmatpush.bf16.msra.mxu0 %v4594
    %6011 = vmatpush.bf16.msra.mxu0 %v4583
    %6012 = vmatpush.bf16.msra.mxu0 %v4572
    %6013 = vmatpush.bf16.msra.mxu0 %v4561
    %6014 = vmatmul.bf16.gmra.mxu0 %v2716
    %v6015 = vpop.f32.mrf.mxu0
    %v6016 = vadd.f32 %v6003, %v6015
    %v6017 = vpop.f32.mrf.mxu0
    %6018 = vdwg.mxu0
    %6019 = vmatpush.bf16.msra.mxu0 %v4726
    %6020 = vmatpush.bf16.msra.mxu0 %v4715
    %6021 = vmatpush.bf16.msra.mxu0 %v4704
    %6022 = vmatpush.bf16.msra.mxu0 %v4693
    %6023 = vmatpush.bf16.msra.mxu0 %v4682
    %6024 = vmatpush.bf16.msra.mxu0 %v4671
    %6025 = vmatpush.bf16.msra.mxu0 %v4660
    %6026 = vmatpush.bf16.msra.mxu0 %v4649
    %6027 = vmatmul.bf16.gmra.mxu0 %v2717
    %v6028 = vpop.f32.mrf.mxu0
    %v6029 = vadd.f32 %v6016, %v6028
    %v6030 = vpop.f32.mrf.mxu0
    %6031 = vdwg.mxu0
    %6032 = vmatpush.bf16.msra.mxu0 %v4814
    %6033 = vmatpush.bf16.msra.mxu0 %v4803
    %6034 = vmatpush.bf16.msra.mxu0 %v4792
    %6035 = vmatpush.bf16.msra.mxu0 %v4781
    %6036 = vmatpush.bf16.msra.mxu0 %v4770
    %6037 = vmatpush.bf16.msra.mxu0 %v4759
    %6038 = vmatpush.bf16.msra.mxu0 %v4748
    %6039 = vmatpush.bf16.msra.mxu0 %v4737
    %6040 = vmatmul.bf16.gmra.mxu0 %v2718
    %v6041 = vpop.f32.mrf.mxu0
    %v6042 = vadd.f32 %v6029, %v6041
    %v6043 = vpop.f32.mrf.mxu0
    %6044 = vdwg.mxu0
    %6045 = vmatpush.bf16.msra.mxu0 %v4902
    %6046 = vmatpush.bf16.msra.mxu0 %v4891
    %6047 = vmatpush.bf16.msra.mxu0 %v4880
    %6048 = vmatpush.bf16.msra.mxu0 %v4869
    %6049 = vmatpush.bf16.msra.mxu0 %v4858
    %6050 = vmatpush.bf16.msra.mxu0 %v4847
    %6051 = vmatpush.bf16.msra.mxu0 %v4836
    %6052 = vmatpush.bf16.msra.mxu0 %v4825
    %6053 = vmatmul.bf16.gmra.mxu0 %v2719
    %v6054 = vpop.f32.mrf.mxu0
    %v6055 = vadd.f32 %v6042, %v6054
    %v6056 = vpop.f32.mrf.mxu0
    %6057 = vdwg.mxu0
    %6058 = vmatpush.bf16.msra.mxu0 %v4463
    %6059 = vmatpush.bf16.msra.mxu0 %v4452
    %6060 = vmatpush.bf16.msra.mxu0 %v4441
    %6061 = vmatpush.bf16.msra.mxu0 %v4430
    %6062 = vmatpush.bf16.msra.mxu0 %v4419
    %6063 = vmatpush.bf16.msra.mxu0 %v4408
    %6064 = vmatpush.bf16.msra.mxu0 %v4397
    %6065 = vmatpush.bf16.msra.mxu0 %v4386
    %6066 = vmatmul.bf16.gmra.mxu0 %v2714
    %v6067 = vpop.f32.mrf.mxu0
    %v6068 = vadd.f32 %v2732, %v6067
    %v6069 = vpop.f32.mrf.mxu0
    %6070 = vdwg.mxu0
    %6071 = vmatpush.bf16.msra.mxu0 %v4551
    %6072 = vmatpush.bf16.msra.mxu0 %v4540
    %6073 = vmatpush.bf16.msra.mxu0 %v4529
    %6074 = vmatpush.bf16.msra.mxu0 %v4518
    %6075 = vmatpush.bf16.msra.mxu0 %v4507
    %6076 = vmatpush.bf16.msra.mxu0 %v4496
    %6077 = vmatpush.bf16.msra.mxu0 %v4485
    %6078 = vmatpush.bf16.msra.mxu0 %v4474
    %6079 = vmatmul.bf16.gmra.mxu0 %v2715
    %v6080 = vpop.f32.mrf.mxu0
    %v6081 = vadd.f32 %v6068, %v6080
    %v6082 = vpop.f32.mrf.mxu0
    %6083 = vdwg.mxu0
    %6084 = vmatpush.bf16.msra.mxu0 %v4639
    %6085 = vmatpush.bf16.msra.mxu0 %v4628
    %6086 = vmatpush.bf16.msra.mxu0 %v4617
    %6087 = vmatpush.bf16.msra.mxu0 %v4606
    %6088 = vmatpush.bf16.msra.mxu0 %v4595
    %6089 = vmatpush.bf16.msra.mxu0 %v4584
    %6090 = vmatpush.bf16.msra.mxu0 %v4573
    %6091 = vmatpush.bf16.msra.mxu0 %v4562
    %6092 = vmatmul.bf16.gmra.mxu0 %v2716
    %v6093 = vpop.f32.mrf.mxu0
    %v6094 = vadd.f32 %v6081, %v6093
    %v6095 = vpop.f32.mrf.mxu0
    %6096 = vdwg.mxu0
    %6097 = vmatpush.bf16.msra.mxu0 %v4727
    %6098 = vmatpush.bf16.msra.mxu0 %v4716
    %6099 = vmatpush.bf16.msra.mxu0 %v4705
    %6100 = vmatpush.bf16.msra.mxu0 %v4694
    %6101 = vmatpush.bf16.msra.mxu0 %v4683
    %6102 = vmatpush.bf16.msra.mxu0 %v4672
    %6103 = vmatpush.bf16.msra.mxu0 %v4661
    %6104 = vmatpush.bf16.msra.mxu0 %v4650
    %6105 = vmatmul.bf16.gmra.mxu0 %v2717
    %v6106 = vpop.f32.mrf.mxu0
    %v6107 = vadd.f32 %v6094, %v6106
    %v6108 = vpop.f32.mrf.mxu0
    %6109 = vdwg.mxu0
    %6110 = vmatpush.bf16.msra.mxu0 %v4815
    %6111 = vmatpush.bf16.msra.mxu0 %v4804
    %6112 = vmatpush.bf16.msra.mxu0 %v4793
    %6113 = vmatpush.bf16.msra.mxu0 %v4782
    %6114 = vmatpush.bf16.msra.mxu0 %v4771
    %6115 = vmatpush.bf16.msra.mxu0 %v4760
    %6116 = vmatpush.bf16.msra.mxu0 %v4749
    %6117 = vmatpush.bf16.msra.mxu0 %v4738
    %6118 = vmatmul.bf16.gmra.mxu0 %v2718
    %v6119 = vpop.f32.mrf.mxu0
    %v6120 = vadd.f32 %v6107, %v6119
    %v6121 = vpop.f32.mrf.mxu0
    %6122 = vdwg.mxu0
    %6123 = vmatpush.bf16.msra.mxu0 %v4903
    %6124 = vmatpush.bf16.msra.mxu0 %v4892
    %6125 = vmatpush.bf16.msra.mxu0 %v4881
    %6126 = vmatpush.bf16.msra.mxu0 %v4870
    %6127 = vmatpush.bf16.msra.mxu0 %v4859
    %6128 = vmatpush.bf16.msra.mxu0 %v4848
    %6129 = vmatpush.bf16.msra.mxu0 %v4837
    %6130 = vmatpush.bf16.msra.mxu0 %v4826
    %6131 = vmatmul.bf16.gmra.mxu0 %v2719
    %v6132 = vpop.f32.mrf.mxu0
    %v6133 = vadd.f32 %v6120, %v6132
    %v6134 = vpop.f32.mrf.mxu0
    %6135 = vdwg.mxu0
    %6136 = vmatpush.bf16.msra.mxu0 %v4464
    %6137 = vmatpush.bf16.msra.mxu0 %v4453
    %6138 = vmatpush.bf16.msra.mxu0 %v4442
    %6139 = vmatpush.bf16.msra.mxu0 %v4431
    %6140 = vmatpush.bf16.msra.mxu0 %v4420
    %6141 = vmatpush.bf16.msra.mxu0 %v4409
    %6142 = vmatpush.bf16.msra.mxu0 %v4398
    %6143 = vmatpush.bf16.msra.mxu0 %v4387
    %6144 = vmatmul.bf16.gmra.mxu0 %v2714
    %v6145 = vpop.f32.mrf.mxu0
    %v6146 = vadd.f32 %v2733, %v6145
    %v6147 = vpop.f32.mrf.mxu0
    %6148 = vdwg.mxu0
    %6149 = vmatpush.bf16.msra.mxu0 %v4552
    %6150 = vmatpush.bf16.msra.mxu0 %v4541
    %6151 = vmatpush.bf16.msra.mxu0 %v4530
    %6152 = vmatpush.bf16.msra.mxu0 %v4519
    %6153 = vmatpush.bf16.msra.mxu0 %v4508
    %6154 = vmatpush.bf16.msra.mxu0 %v4497
    %6155 = vmatpush.bf16.msra.mxu0 %v4486
    %6156 = vmatpush.bf16.msra.mxu0 %v4475
    %6157 = vmatmul.bf16.gmra.mxu0 %v2715
    %v6158 = vpop.f32.mrf.mxu0
    %v6159 = vadd.f32 %v6146, %v6158
    %v6160 = vpop.f32.mrf.mxu0
    %6161 = vdwg.mxu0
    %6162 = vmatpush.bf16.msra.mxu0 %v4640
    %6163 = vmatpush.bf16.msra.mxu0 %v4629
    %6164 = vmatpush.bf16.msra.mxu0 %v4618
    %6165 = vmatpush.bf16.msra.mxu0 %v4607
    %6166 = vmatpush.bf16.msra.mxu0 %v4596
    %6167 = vmatpush.bf16.msra.mxu0 %v4585
    %6168 = vmatpush.bf16.msra.mxu0 %v4574
    %6169 = vmatpush.bf16.msra.mxu0 %v4563
    %6170 = vmatmul.bf16.gmra.mxu0 %v2716
    %v6171 = vpop.f32.mrf.mxu0
    %v6172 = vadd.f32 %v6159, %v6171
    %v6173 = vpop.f32.mrf.mxu0
    %6174 = vdwg.mxu0
    %6175 = vmatpush.bf16.msra.mxu0 %v4728
    %6176 = vmatpush.bf16.msra.mxu0 %v4717
    %6177 = vmatpush.bf16.msra.mxu0 %v4706
    %6178 = vmatpush.bf16.msra.mxu0 %v4695
    %6179 = vmatpush.bf16.msra.mxu0 %v4684
    %6180 = vmatpush.bf16.msra.mxu0 %v4673
    %6181 = vmatpush.bf16.msra.mxu0 %v4662
    %6182 = vmatpush.bf16.msra.mxu0 %v4651
    %6183 = vmatmul.bf16.gmra.mxu0 %v2717
    %v6184 = vpop.f32.mrf.mxu0
    %v6185 = vadd.f32 %v6172, %v6184
    %v6186 = vpop.f32.mrf.mxu0
    %6187 = vdwg.mxu0
    %6188 = vmatpush.bf16.msra.mxu0 %v4816
    %6189 = vmatpush.bf16.msra.mxu0 %v4805
    %6190 = vmatpush.bf16.msra.mxu0 %v4794
    %6191 = vmatpush.bf16.msra.mxu0 %v4783
    %6192 = vmatpush.bf16.msra.mxu0 %v4772
    %6193 = vmatpush.bf16.msra.mxu0 %v4761
    %6194 = vmatpush.bf16.msra.mxu0 %v4750
    %6195 = vmatpush.bf16.msra.mxu0 %v4739
    %6196 = vmatmul.bf16.gmra.mxu0 %v2718
    %v6197 = vpop.f32.mrf.mxu0
    %v6198 = vadd.f32 %v6185, %v6197
    %v6199 = vpop.f32.mrf.mxu0
    %6200 = vdwg.mxu0
    %6201 = vmatpush.bf16.msra.mxu0 %v4904
    %6202 = vmatpush.bf16.msra.mxu0 %v4893
    %6203 = vmatpush.bf16.msra.mxu0 %v4882
    %6204 = vmatpush.bf16.msra.mxu0 %v4871
    %6205 = vmatpush.bf16.msra.mxu0 %v4860
    %6206 = vmatpush.bf16.msra.mxu0 %v4849
    %6207 = vmatpush.bf16.msra.mxu0 %v4838
    %6208 = vmatpush.bf16.msra.mxu0 %v4827
    %6209 = vmatmul.bf16.gmra.mxu0 %v2719
    %v6210 = vpop.f32.mrf.mxu0
    %v6211 = vadd.f32 %v6198, %v6210
    %v6212 = vpop.f32.mrf.mxu0
    %6213 = vdwg.mxu0
    %6214 = vmatpush.bf16.msra.mxu0 %v4465
    %6215 = vmatpush.bf16.msra.mxu0 %v4454
    %6216 = vmatpush.bf16.msra.mxu0 %v4443
    %6217 = vmatpush.bf16.msra.mxu0 %v4432
    %6218 = vmatpush.bf16.msra.mxu0 %v4421
    %6219 = vmatpush.bf16.msra.mxu0 %v4410
    %6220 = vmatpush.bf16.msra.mxu0 %v4399
    %6221 = vmatpush.bf16.msra.mxu0 %v4388
    %6222 = vmatmul.bf16.gmra.mxu0 %v2714
    %v6223 = vpop.f32.mrf.mxu0
    %v6224 = vadd.f32 %v2734, %v6223
    %v6225 = vpop.f32.mrf.mxu0
    %6226 = vdwg.mxu0
    %6227 = vmatpush.bf16.msra.mxu0 %v4553
    %6228 = vmatpush.bf16.msra.mxu0 %v4542
    %6229 = vmatpush.bf16.msra.mxu0 %v4531
    %6230 = vmatpush.bf16.msra.mxu0 %v4520
    %6231 = vmatpush.bf16.msra.mxu0 %v4509
    %6232 = vmatpush.bf16.msra.mxu0 %v4498
    %6233 = vmatpush.bf16.msra.mxu0 %v4487
    %6234 = vmatpush.bf16.msra.mxu0 %v4476
    %6235 = vmatmul.bf16.gmra.mxu0 %v2715
    %v6236 = vpop.f32.mrf.mxu0
    %v6237 = vadd.f32 %v6224, %v6236
    %v6238 = vpop.f32.mrf.mxu0
    %6239 = vdwg.mxu0
    %6240 = vmatpush.bf16.msra.mxu0 %v4641
    %6241 = vmatpush.bf16.msra.mxu0 %v4630
    %6242 = vmatpush.bf16.msra.mxu0 %v4619
    %6243 = vmatpush.bf16.msra.mxu0 %v4608
    %6244 = vmatpush.bf16.msra.mxu0 %v4597
    %6245 = vmatpush.bf16.msra.mxu0 %v4586
    %6246 = vmatpush.bf16.msra.mxu0 %v4575
    %6247 = vmatpush.bf16.msra.mxu0 %v4564
    %6248 = vmatmul.bf16.gmra.mxu0 %v2716
    %v6249 = vpop.f32.mrf.mxu0
    %v6250 = vadd.f32 %v6237, %v6249
    %v6251 = vpop.f32.mrf.mxu0
    %6252 = vdwg.mxu0
    %6253 = vmatpush.bf16.msra.mxu0 %v4729
    %6254 = vmatpush.bf16.msra.mxu0 %v4718
    %6255 = vmatpush.bf16.msra.mxu0 %v4707
    %6256 = vmatpush.bf16.msra.mxu0 %v4696
    %6257 = vmatpush.bf16.msra.mxu0 %v4685
    %6258 = vmatpush.bf16.msra.mxu0 %v4674
    %6259 = vmatpush.bf16.msra.mxu0 %v4663
    %6260 = vmatpush.bf16.msra.mxu0 %v4652
    %6261 = vmatmul.bf16.gmra.mxu0 %v2717
    %v6262 = vpop.f32.mrf.mxu0
    %v6263 = vadd.f32 %v6250, %v6262
    %v6264 = vpop.f32.mrf.mxu0
    %6265 = vdwg.mxu0
    %6266 = vmatpush.bf16.msra.mxu0 %v4817
    %6267 = vmatpush.bf16.msra.mxu0 %v4806
    %6268 = vmatpush.bf16.msra.mxu0 %v4795
    %6269 = vmatpush.bf16.msra.mxu0 %v4784
    %6270 = vmatpush.bf16.msra.mxu0 %v4773
    %6271 = vmatpush.bf16.msra.mxu0 %v4762
    %6272 = vmatpush.bf16.msra.mxu0 %v4751
    %6273 = vmatpush.bf16.msra.mxu0 %v4740
    %6274 = vmatmul.bf16.gmra.mxu0 %v2718
    %v6275 = vpop.f32.mrf.mxu0
    %v6276 = vadd.f32 %v6263, %v6275
    %v6277 = vpop.f32.mrf.mxu0
    %6278 = vdwg.mxu0
    %6279 = vmatpush.bf16.msra.mxu0 %v4905
    %6280 = vmatpush.bf16.msra.mxu0 %v4894
    %6281 = vmatpush.bf16.msra.mxu0 %v4883
    %6282 = vmatpush.bf16.msra.mxu0 %v4872
    %6283 = vmatpush.bf16.msra.mxu0 %v4861
    %6284 = vmatpush.bf16.msra.mxu0 %v4850
    %6285 = vmatpush.bf16.msra.mxu0 %v4839
    %6286 = vmatpush.bf16.msra.mxu0 %v4828
    %6287 = vmatmul.bf16.gmra.mxu0 %v2719
    %v6288 = vpop.f32.mrf.mxu0
    %v6289 = vadd.f32 %v6276, %v6288
    %v6290 = vpop.f32.mrf.mxu0
    %6291 = vdwg.mxu0
    %v6292 = vmax.f32 %v5509, 0.0
    %v6293 = vmax.f32 %v5587, 0.0
    %v6294 = vmax.f32 %v5665, 0.0
    %v6295 = vmax.f32 %v5743, 0.0
    %v6296 = vmax.f32 %v5821, 0.0
    %v6297 = vmax.f32 %v5899, 0.0
    %v6298 = vmax.f32 %v5977, 0.0
    %v6299 = vmax.f32 %v6055, 0.0
    %v6300 = vmax.f32 %v6133, 0.0
    %v6301 = vmax.f32 %v6211, 0.0
    %v6302 = vmax.f32 %v6289, 0.0
    %v6303 = vld [vmem:[#allocation15] sm:$0xf]
    %v6304 = vld [vmem:[#allocation15 + $0x4] sm:$0xf]
    %v6305 = vld [vmem:[#allocation15 + $0x8] sm:$0xf]
    %v6306 = vld [vmem:[#allocation15 + $0xc] sm:$0xf]
    %v6307 = vld [vmem:[#allocation15 + $0x10] sm:$0xf]
    %v6308 = vld [vmem:[#allocation15 + $0x14] sm:$0xf]
    %v6309 = vld [vmem:[#allocation15 + $0x18] sm:$0xf]
    %v6310 = vld [vmem:[#allocation15 + $0x1c] sm:$0xf]
    %v6311 = vld [vmem:[#allocation15 + $0x20] sm:$0xf]
    %v6312 = vld [vmem:[#allocation15 + $0x24] sm:$0xf]
    %v6313 = vld [vmem:[#allocation15 + $0x28] sm:$0xf]
    %v6314 = vld [vmem:[#allocation15 + $0x2c] sm:$0xf]
    %v6315 = vld [vmem:[#allocation15 + $0x30] sm:$0xf]
    %v6316 = vld [vmem:[#allocation15 + $0x34] sm:$0xf]
    %v6317 = vld [vmem:[#allocation15 + $0x38] sm:$0xf]
    %v6318 = vld [vmem:[#allocation15 + $0x3c] sm:$0xf]
    %v6319 = vld [vmem:[#allocation15 + $0x40] sm:$0xf]
    %v6320 = vld [vmem:[#allocation15 + $0x44] sm:$0xf]
    %v6321 = vld [vmem:[#allocation15 + $0x48] sm:$0xf]
    %v6322 = vld [vmem:[#allocation15 + $0x4c] sm:$0xf]
    %v6323 = vld [vmem:[#allocation15 + $0x50] sm:$0xf]
    %v6324 = vld [vmem:[#allocation15 + $0x54] sm:$0xf]
    %v6325 = vld [vmem:[#allocation15 + $0x58] sm:$0xf]
    %v6326 = vld [vmem:[#allocation15 + $0x5c] sm:$0xf]
    %v6327 = vld [vmem:[#allocation15 + $0x60] sm:$0xf]
    %v6328 = vld [vmem:[#allocation15 + $0x64] sm:$0xf]
    %v6329 = vld [vmem:[#allocation15 + $0x68] sm:$0xf]
    %v6330 = vld [vmem:[#allocation15 + $0x6c] sm:$0xf]
    %v6331 = vld [vmem:[#allocation15 + $0x70] sm:$0xf]
    %v6332 = vld [vmem:[#allocation15 + $0x74] sm:$0xf]
    %v6333 = vld [vmem:[#allocation15 + $0x78] sm:$0xf]
    %v6334 = vld [vmem:[#allocation15 + $0x7c] sm:$0xf]
    %v6335 = vld [vmem:[#allocation15 + $0x80] sm:$0xf]
    %v6336 = vld [vmem:[#allocation15 + $0x84] sm:$0xf]
    %v6337 = vld [vmem:[#allocation15 + $0x88] sm:$0xf]
    %v6338 = vld [vmem:[#allocation15 + $0x8c] sm:$0xf]
    %v6339 = vld [vmem:[#allocation15 + $0x90] sm:$0xf]
    %v6340 = vld [vmem:[#allocation15 + $0x94] sm:$0xf]
    %v6341 = vld [vmem:[#allocation15 + $0x98] sm:$0xf]
    %v6342 = vld [vmem:[#allocation15 + $0x9c] sm:$0xf]
    %v6343 = vld [vmem:[#allocation15 + $0xa0] sm:$0xf]
    %v6344 = vld [vmem:[#allocation15 + $0xa4] sm:$0xf]
    %v6345 = vld [vmem:[#allocation15 + $0xa8] sm:$0xf]
    %v6346 = vld [vmem:[#allocation15 + $0xac] sm:$0xf]
    %v6347 = vld [vmem:[#allocation15 + $0xb0] sm:$0xf]
    %v6348 = vld [vmem:[#allocation15 + $0xb4] sm:$0xf]
    %v6349 = vld [vmem:[#allocation15 + $0xb8] sm:$0xf]
    %v6350 = vld [vmem:[#allocation15 + $0xbc] sm:$0xf]
    %v6351 = vld [vmem:[#allocation15 + $0xc0] sm:$0xf]
    %v6352 = vld [vmem:[#allocation15 + $0xc4] sm:$0xf]
    %v6353 = vld [vmem:[#allocation15 + $0xc8] sm:$0xf]
    %v6354 = vld [vmem:[#allocation15 + $0xcc] sm:$0xf]
    %v6355 = vld [vmem:[#allocation15 + $0xd0] sm:$0xf]
    %v6356 = vld [vmem:[#allocation15 + $0xd4] sm:$0xf]
    %v6357 = vld [vmem:[#allocation15 + $0xd8] sm:$0xf]
    %v6358 = vld [vmem:[#allocation15 + $0xdc] sm:$0xf]
    %v6359 = vld [vmem:[#allocation15 + $0xe0] sm:$0xf]
    %v6360 = vld [vmem:[#allocation15 + $0xe4] sm:$0xf]
    %v6361 = vld [vmem:[#allocation15 + $0xe8] sm:$0xf]
    %v6362 = vld [vmem:[#allocation15 + $0xec] sm:$0xf]
    %v6363 = vld [vmem:[#allocation15 + $0xf0] sm:$0xf]
    %v6364 = vld [vmem:[#allocation15 + $0xf4] sm:$0xf]
    %v6365 = vld [vmem:[#allocation15 + $0xf8] sm:$0xf]
    %v6366 = vld [vmem:[#allocation15 + $0xfc] sm:$0xf]
    %v6367 = vld [vmem:[#allocation15 + $0x100] sm:$0xf]
    %v6368 = vld [vmem:[#allocation15 + $0x104] sm:$0xf]
    %v6369 = vld [vmem:[#allocation15 + $0x108] sm:$0xf]
    %v6370 = vld [vmem:[#allocation15 + $0x10c] sm:$0xf]
    %v6371 = vld [vmem:[#allocation15 + $0x110] sm:$0xf]
    %v6372 = vld [vmem:[#allocation15 + $0x114] sm:$0xf]
    %v6373 = vld [vmem:[#allocation15 + $0x118] sm:$0xf]
    %v6374 = vld [vmem:[#allocation15 + $0x11c] sm:$0xf]
    %v6375 = vld [vmem:[#allocation15 + $0x120] sm:$0xf]
    %v6376 = vld [vmem:[#allocation15 + $0x124] sm:$0xf]
    %v6377 = vld [vmem:[#allocation15 + $0x128] sm:$0xf]
    %v6378 = vld [vmem:[#allocation15 + $0x12c] sm:$0xf]
    %v6379 = vld [vmem:[#allocation15 + $0x130] sm:$0xf]
    %v6380 = vld [vmem:[#allocation15 + $0x134] sm:$0xf]
    %v6381 = vld [vmem:[#allocation15 + $0x138] sm:$0xf]
    %v6382 = vld [vmem:[#allocation15 + $0x13c] sm:$0xf]
    %v6383 = vld [vmem:[#allocation15 + $0x140] sm:$0xf]
    %v6384 = vld [vmem:[#allocation15 + $0x144] sm:$0xf]
    %v6385 = vld [vmem:[#allocation15 + $0x148] sm:$0xf]
    %v6386 = vld [vmem:[#allocation15 + $0x14c] sm:$0xf]
    %v6387 = vld [vmem:[#allocation15 + $0x150] sm:$0xf]
    %v6388 = vld [vmem:[#allocation15 + $0x154] sm:$0xf]
    %v6389 = vld [vmem:[#allocation15 + $0x158] sm:$0xf]
    %v6390 = vld [vmem:[#allocation15 + $0x15c] sm:$0xf]
    %v6391 = vld [vmem:[#allocation15 + $0x160] sm:$0xf]
    %v6392 = vld [vmem:[#allocation15 + $0x164] sm:$0xf]
    %v6393 = vld [vmem:[#allocation15 + $0x168] sm:$0xf]
    %v6394 = vld [vmem:[#allocation15 + $0x16c] sm:$0xf]
    %v6395 = vld [vmem:[#allocation15 + $0x170] sm:$0xf]
    %v6396 = vld [vmem:[#allocation15 + $0x174] sm:$0xf]
    %v6397 = vld [vmem:[#allocation15 + $0x178] sm:$0xf]
    %v6398 = vld [vmem:[#allocation15 + $0x17c] sm:$0xf]
    %v6399 = vld [vmem:[#allocation15 + $0x180] sm:$0xf]
    %v6400 = vld [vmem:[#allocation15 + $0x184] sm:$0xf]
    %v6401 = vld [vmem:[#allocation15 + $0x188] sm:$0xf]
    %v6402 = vld [vmem:[#allocation15 + $0x18c] sm:$0xf]
    %v6403 = vld [vmem:[#allocation15 + $0x190] sm:$0xf]
    %v6404 = vld [vmem:[#allocation15 + $0x194] sm:$0xf]
    %v6405 = vld [vmem:[#allocation15 + $0x198] sm:$0xf]
    %v6406 = vld [vmem:[#allocation15 + $0x19c] sm:$0xf]
    %v6407 = vld [vmem:[#allocation15 + $0x1a0] sm:$0xf]
    %v6408 = vld [vmem:[#allocation15 + $0x1a4] sm:$0xf]
    %v6409 = vld [vmem:[#allocation15 + $0x1a8] sm:$0xf]
    %v6410 = vld [vmem:[#allocation15 + $0x1ac] sm:$0xf]
    %v6411 = vld [vmem:[#allocation15 + $0x1b0] sm:$0xf]
    %v6412 = vld [vmem:[#allocation15 + $0x1b4] sm:$0xf]
    %v6413 = vld [vmem:[#allocation15 + $0x1b8] sm:$0xf]
    %v6414 = vld [vmem:[#allocation15 + $0x1bc] sm:$0xf]
    %v6415 = vld [vmem:[#allocation15 + $0x1c0] sm:$0xf]
    %v6416 = vld [vmem:[#allocation15 + $0x1c4] sm:$0xf]
    %v6417 = vld [vmem:[#allocation15 + $0x1c8] sm:$0xf]
    %v6418 = vld [vmem:[#allocation15 + $0x1cc] sm:$0xf]
    %v6419 = vld [vmem:[#allocation15 + $0x1d0] sm:$0xf]
    %v6420 = vld [vmem:[#allocation15 + $0x1d4] sm:$0xf]
    %v6421 = vld [vmem:[#allocation15 + $0x1d8] sm:$0xf]
    %v6422 = vld [vmem:[#allocation15 + $0x1dc] sm:$0xf]
    %v6423 = vld [vmem:[#allocation15 + $0x1e0] sm:$0xf]
    %v6424 = vld [vmem:[#allocation15 + $0x1e4] sm:$0xf]
    %v6425 = vld [vmem:[#allocation15 + $0x1e8] sm:$0xf]
    %v6426 = vld [vmem:[#allocation15 + $0x1ec] sm:$0xf]
    %v6427 = vld [vmem:[#allocation15 + $0x1f0] sm:$0xf]
    %v6428 = vld [vmem:[#allocation15 + $0x1f4] sm:$0xf]
    %v6429 = vld [vmem:[#allocation15 + $0x1f8] sm:$0xf]
    %v6430 = vld [vmem:[#allocation15 + $0x1fc] sm:$0xf]
    %v6431 = vld [vmem:[#allocation15 + $0x200] sm:$0xf]
    %v6432 = vld [vmem:[#allocation15 + $0x204] sm:$0xf]
    %v6433 = vld [vmem:[#allocation15 + $0x208] sm:$0xf]
    %v6434 = vld [vmem:[#allocation15 + $0x20c] sm:$0xf]
    %v6435 = vld [vmem:[#allocation15 + $0x210] sm:$0xf]
    %v6436 = vld [vmem:[#allocation15 + $0x214] sm:$0xf]
    %v6437 = vld [vmem:[#allocation15 + $0x218] sm:$0xf]
    %v6438 = vld [vmem:[#allocation15 + $0x21c] sm:$0xf]
    %v6439 = vld [vmem:[#allocation15 + $0x220] sm:$0xf]
    %v6440 = vld [vmem:[#allocation15 + $0x224] sm:$0xf]
    %v6441 = vld [vmem:[#allocation15 + $0x228] sm:$0xf]
    %v6442 = vld [vmem:[#allocation15 + $0x22c] sm:$0xf]
    %v6443 = vld [vmem:[#allocation15 + $0x230] sm:$0xf]
    %v6444 = vld [vmem:[#allocation15 + $0x234] sm:$0xf]
    %v6445 = vld [vmem:[#allocation15 + $0x238] sm:$0xf]
    %v6446 = vld [vmem:[#allocation15 + $0x23c] sm:$0xf]
    %v6447 = vld [vmem:[#allocation15 + $0x240] sm:$0xf]
    %v6448 = vld [vmem:[#allocation15 + $0x244] sm:$0xf]
    %v6449 = vld [vmem:[#allocation15 + $0x248] sm:$0xf]
    %v6450 = vld [vmem:[#allocation15 + $0x24c] sm:$0xf]
    %v6451 = vld [vmem:[#allocation15 + $0x250] sm:$0xf]
    %v6452 = vld [vmem:[#allocation15 + $0x254] sm:$0xf]
    %v6453 = vld [vmem:[#allocation15 + $0x258] sm:$0xf]
    %v6454 = vld [vmem:[#allocation15 + $0x25c] sm:$0xf]
    %v6455 = vld [vmem:[#allocation15 + $0x260] sm:$0xf]
    %v6456 = vld [vmem:[#allocation15 + $0x264] sm:$0xf]
    %v6457 = vld [vmem:[#allocation15 + $0x268] sm:$0xf]
    %v6458 = vld [vmem:[#allocation15 + $0x26c] sm:$0xf]
    %v6459 = vld [vmem:[#allocation15 + $0x270] sm:$0xf]
    %v6460 = vld [vmem:[#allocation15 + $0x274] sm:$0xf]
    %v6461 = vld [vmem:[#allocation15 + $0x278] sm:$0xf]
    %v6462 = vld [vmem:[#allocation15 + $0x27c] sm:$0xf]
    %v6463 = vld [vmem:[#allocation15 + $0x280] sm:$0xf]
    %v6464 = vld [vmem:[#allocation15 + $0x284] sm:$0xf]
    %v6465 = vld [vmem:[#allocation15 + $0x288] sm:$0xf]
    %v6466 = vld [vmem:[#allocation15 + $0x28c] sm:$0xf]
    %v6467 = vld [vmem:[#allocation15 + $0x290] sm:$0xf]
    %v6468 = vld [vmem:[#allocation15 + $0x294] sm:$0xf]
    %v6469 = vld [vmem:[#allocation15 + $0x298] sm:$0xf]
    %v6470 = vld [vmem:[#allocation15 + $0x29c] sm:$0xf]
    %v6471 = vld [vmem:[#allocation15 + $0x2a0] sm:$0xf]
    %v6472 = vld [vmem:[#allocation15 + $0x2a4] sm:$0xf]
    %v6473 = vld [vmem:[#allocation15 + $0x2a8] sm:$0xf]
    %v6474 = vld [vmem:[#allocation15 + $0x2ac] sm:$0xf]
    %v6475 = vld [vmem:[#allocation15 + $0x2b0] sm:$0xf]
    %v6476 = vld [vmem:[#allocation15 + $0x2b4] sm:$0xf]
    %v6477 = vld [vmem:[#allocation15 + $0x2b8] sm:$0xf]
    %v6478 = vld [vmem:[#allocation15 + $0x2bc] sm:$0xf]
    %v6479 = vpack.c.bf16 %v6292, %v6292
    %v6480 = vpack.c.bf16 %v6293, %v6293
    %v6481 = vpack.c.bf16 %v6294, %v6294
    %v6482 = vpack.c.bf16 %v6295, %v6295
    %v6483 = vpack.c.bf16 %v6296, %v6296
    %v6484 = vpack.c.bf16 %v6297, %v6297
    %v6485 = vpack.c.bf16 %v6298, %v6298
    %v6486 = vpack.c.bf16 %v6299, %v6299
    %v6487 = vpack.c.bf16 %v6300, %v6300
    %v6488 = vpack.c.bf16 %v6301, %v6301
    %v6489 = vpack.c.bf16 %v6302, %v6302
    %v6490 = vld [vmem:[#allocation16] sm:$0x1]
    %v6492 = vperm.slane %v6490, 0
    %v6670 = vunpack.c.l.b16 %v6303
    %v6671 = vunpack.c.l.b16 %v6304
    %v6672 = vunpack.c.l.b16 %v6305
    %v6673 = vunpack.c.l.b16 %v6306
    %v6674 = vunpack.c.l.b16 %v6307
    %v6675 = vunpack.c.l.b16 %v6308
    %v6676 = vunpack.c.l.b16 %v6309
    %v6677 = vunpack.c.l.b16 %v6310
    %v6678 = vunpack.c.l.b16 %v6311
    %v6679 = vunpack.c.l.b16 %v6312
    %v6680 = vunpack.c.l.b16 %v6313
    %v6681 = vunpack.c.l.b16 %v6314
    %v6682 = vunpack.c.l.b16 %v6315
    %v6683 = vunpack.c.l.b16 %v6316
    %v6684 = vunpack.c.l.b16 %v6317
    %v6685 = vunpack.c.l.b16 %v6318
    %v6686 = vunpack.c.l.b16 %v6319
    %v6687 = vunpack.c.l.b16 %v6320
    %v6688 = vunpack.c.l.b16 %v6321
    %v6689 = vunpack.c.l.b16 %v6322
    %v6690 = vunpack.c.l.b16 %v6323
    %v6691 = vunpack.c.l.b16 %v6324
    %v6692 = vunpack.c.l.b16 %v6325
    %v6693 = vunpack.c.l.b16 %v6326
    %v6694 = vunpack.c.l.b16 %v6327
    %v6695 = vunpack.c.l.b16 %v6328
    %v6696 = vunpack.c.l.b16 %v6329
    %v6697 = vunpack.c.l.b16 %v6330
    %v6698 = vunpack.c.l.b16 %v6331
    %v6699 = vunpack.c.l.b16 %v6332
    %v6700 = vunpack.c.l.b16 %v6333
    %v6701 = vunpack.c.l.b16 %v6334
    %v6702 = vunpack.c.l.b16 %v6335
    %v6703 = vunpack.c.l.b16 %v6336
    %v6704 = vunpack.c.l.b16 %v6337
    %v6705 = vunpack.c.l.b16 %v6338
    %v6706 = vunpack.c.l.b16 %v6339
    %v6707 = vunpack.c.l.b16 %v6340
    %v6708 = vunpack.c.l.b16 %v6341
    %v6709 = vunpack.c.l.b16 %v6342
    %v6710 = vunpack.c.l.b16 %v6343
    %v6711 = vunpack.c.l.b16 %v6344
    %v6712 = vunpack.c.l.b16 %v6345
    %v6713 = vunpack.c.l.b16 %v6346
    %v6714 = vunpack.c.l.b16 %v6347
    %v6715 = vunpack.c.l.b16 %v6348
    %v6716 = vunpack.c.l.b16 %v6349
    %v6717 = vunpack.c.l.b16 %v6350
    %v6718 = vunpack.c.l.b16 %v6351
    %v6719 = vunpack.c.l.b16 %v6352
    %v6720 = vunpack.c.l.b16 %v6353
    %v6721 = vunpack.c.l.b16 %v6354
    %v6722 = vunpack.c.l.b16 %v6355
    %v6723 = vunpack.c.l.b16 %v6356
    %v6724 = vunpack.c.l.b16 %v6357
    %v6725 = vunpack.c.l.b16 %v6358
    %v6726 = vunpack.c.l.b16 %v6359
    %v6727 = vunpack.c.l.b16 %v6360
    %v6728 = vunpack.c.l.b16 %v6361
    %v6729 = vunpack.c.l.b16 %v6362
    %v6730 = vunpack.c.l.b16 %v6363
    %v6731 = vunpack.c.l.b16 %v6364
    %v6732 = vunpack.c.l.b16 %v6365
    %v6733 = vunpack.c.l.b16 %v6366
    %v6734 = vunpack.c.l.b16 %v6367
    %v6735 = vunpack.c.l.b16 %v6368
    %v6736 = vunpack.c.l.b16 %v6369
    %v6737 = vunpack.c.l.b16 %v6370
    %v6738 = vunpack.c.l.b16 %v6371
    %v6739 = vunpack.c.l.b16 %v6372
    %v6740 = vunpack.c.l.b16 %v6373
    %v6741 = vunpack.c.l.b16 %v6374
    %v6742 = vunpack.c.l.b16 %v6375
    %v6743 = vunpack.c.l.b16 %v6376
    %v6744 = vunpack.c.l.b16 %v6377
    %v6745 = vunpack.c.l.b16 %v6378
    %v6746 = vunpack.c.l.b16 %v6379
    %v6747 = vunpack.c.l.b16 %v6380
    %v6748 = vunpack.c.l.b16 %v6381
    %v6749 = vunpack.c.l.b16 %v6382
    %v6750 = vunpack.c.l.b16 %v6383
    %v6751 = vunpack.c.l.b16 %v6384
    %v6752 = vunpack.c.l.b16 %v6385
    %v6753 = vunpack.c.l.b16 %v6386
    %v6754 = vunpack.c.l.b16 %v6387
    %v6755 = vunpack.c.l.b16 %v6388
    %v6756 = vunpack.c.l.b16 %v6389
    %v6757 = vunpack.c.l.b16 %v6390
    %v6758 = vunpack.c.l.b16 %v6391
    %v6759 = vunpack.c.l.b16 %v6392
    %v6760 = vunpack.c.l.b16 %v6393
    %v6761 = vunpack.c.l.b16 %v6394
    %v6762 = vunpack.c.l.b16 %v6395
    %v6763 = vunpack.c.l.b16 %v6396
    %v6764 = vunpack.c.l.b16 %v6397
    %v6765 = vunpack.c.l.b16 %v6398
    %v6766 = vunpack.c.l.b16 %v6399
    %v6767 = vunpack.c.l.b16 %v6400
    %v6768 = vunpack.c.l.b16 %v6401
    %v6769 = vunpack.c.l.b16 %v6402
    %v6770 = vunpack.c.l.b16 %v6403
    %v6771 = vunpack.c.l.b16 %v6404
    %v6772 = vunpack.c.l.b16 %v6405
    %v6773 = vunpack.c.l.b16 %v6406
    %v6774 = vunpack.c.l.b16 %v6407
    %v6775 = vunpack.c.l.b16 %v6408
    %v6776 = vunpack.c.l.b16 %v6409
    %v6777 = vunpack.c.l.b16 %v6410
    %v6778 = vunpack.c.l.b16 %v6411
    %v6779 = vunpack.c.l.b16 %v6412
    %v6780 = vunpack.c.l.b16 %v6413
    %v6781 = vunpack.c.l.b16 %v6414
    %v6782 = vunpack.c.l.b16 %v6415
    %v6783 = vunpack.c.l.b16 %v6416
    %v6784 = vunpack.c.l.b16 %v6417
    %v6785 = vunpack.c.l.b16 %v6418
    %v6786 = vunpack.c.l.b16 %v6419
    %v6787 = vunpack.c.l.b16 %v6420
    %v6788 = vunpack.c.l.b16 %v6421
    %v6789 = vunpack.c.l.b16 %v6422
    %v6790 = vunpack.c.l.b16 %v6423
    %v6791 = vunpack.c.l.b16 %v6424
    %v6792 = vunpack.c.l.b16 %v6425
    %v6793 = vunpack.c.l.b16 %v6426
    %v6794 = vunpack.c.l.b16 %v6427
    %v6795 = vunpack.c.l.b16 %v6428
    %v6796 = vunpack.c.l.b16 %v6429
    %v6797 = vunpack.c.l.b16 %v6430
    %v6798 = vunpack.c.l.b16 %v6431
    %v6799 = vunpack.c.l.b16 %v6432
    %v6800 = vunpack.c.l.b16 %v6433
    %v6801 = vunpack.c.l.b16 %v6434
    %v6802 = vunpack.c.l.b16 %v6435
    %v6803 = vunpack.c.l.b16 %v6436
    %v6804 = vunpack.c.l.b16 %v6437
    %v6805 = vunpack.c.l.b16 %v6438
    %v6806 = vunpack.c.l.b16 %v6439
    %v6807 = vunpack.c.l.b16 %v6440
    %v6808 = vunpack.c.l.b16 %v6441
    %v6809 = vunpack.c.l.b16 %v6442
    %v6810 = vunpack.c.l.b16 %v6443
    %v6811 = vunpack.c.l.b16 %v6444
    %v6812 = vunpack.c.l.b16 %v6445
    %v6813 = vunpack.c.l.b16 %v6446
    %v6814 = vunpack.c.l.b16 %v6447
    %v6815 = vunpack.c.l.b16 %v6448
    %v6816 = vunpack.c.l.b16 %v6449
    %v6817 = vunpack.c.l.b16 %v6450
    %v6818 = vunpack.c.l.b16 %v6451
    %v6819 = vunpack.c.l.b16 %v6452
    %v6820 = vunpack.c.l.b16 %v6453
    %v6821 = vunpack.c.l.b16 %v6454
    %v6822 = vunpack.c.l.b16 %v6455
    %v6823 = vunpack.c.l.b16 %v6456
    %v6824 = vunpack.c.l.b16 %v6457
    %v6825 = vunpack.c.l.b16 %v6458
    %v6826 = vunpack.c.l.b16 %v6459
    %v6827 = vunpack.c.l.b16 %v6460
    %v6828 = vunpack.c.l.b16 %v6461
    %v6829 = vunpack.c.l.b16 %v6462
    %v6830 = vunpack.c.l.b16 %v6463
    %v6831 = vunpack.c.l.b16 %v6464
    %v6832 = vunpack.c.l.b16 %v6465
    %v6833 = vunpack.c.l.b16 %v6466
    %v6834 = vunpack.c.l.b16 %v6467
    %v6835 = vunpack.c.l.b16 %v6468
    %v6836 = vunpack.c.l.b16 %v6469
    %v6837 = vunpack.c.l.b16 %v6470
    %v6838 = vunpack.c.l.b16 %v6471
    %v6839 = vunpack.c.l.b16 %v6472
    %v6840 = vunpack.c.l.b16 %v6473
    %v6841 = vunpack.c.l.b16 %v6474
    %v6842 = vunpack.c.l.b16 %v6475
    %v6843 = vunpack.c.l.b16 %v6476
    %v6844 = vunpack.c.l.b16 %v6477
    %v6845 = vunpack.c.l.b16 %v6478
    %v6846 = vpack.c.b16 %v6671, %v6670
    %v6847 = vpack.c.b16 %v6673, %v6672
    %v6848 = vpack.c.b16 %v6675, %v6674
    %v6849 = vpack.c.b16 %v6677, %v6676
    %v6850 = vpack.c.b16 %v6679, %v6678
    %v6851 = vpack.c.b16 %v6681, %v6680
    %v6852 = vpack.c.b16 %v6683, %v6682
    %v6853 = vpack.c.b16 %v6685, %v6684
    %v6854 = vpack.c.b16 %v6687, %v6686
    %v6855 = vpack.c.b16 %v6689, %v6688
    %v6856 = vpack.c.b16 %v6691, %v6690
    %v6857 = vpack.c.b16 %v6693, %v6692
    %v6858 = vpack.c.b16 %v6695, %v6694
    %v6859 = vpack.c.b16 %v6697, %v6696
    %v6860 = vpack.c.b16 %v6699, %v6698
    %v6861 = vpack.c.b16 %v6701, %v6700
    %v6862 = vpack.c.b16 %v6703, %v6702
    %v6863 = vpack.c.b16 %v6705, %v6704
    %v6864 = vpack.c.b16 %v6707, %v6706
    %v6865 = vpack.c.b16 %v6709, %v6708
    %v6866 = vpack.c.b16 %v6711, %v6710
    %v6867 = vpack.c.b16 %v6713, %v6712
    %v6868 = vpack.c.b16 %v6715, %v6714
    %v6869 = vpack.c.b16 %v6717, %v6716
    %v6870 = vpack.c.b16 %v6719, %v6718
    %v6871 = vpack.c.b16 %v6721, %v6720
    %v6872 = vpack.c.b16 %v6723, %v6722
    %v6873 = vpack.c.b16 %v6725, %v6724
    %v6874 = vpack.c.b16 %v6727, %v6726
    %v6875 = vpack.c.b16 %v6729, %v6728
    %v6876 = vpack.c.b16 %v6731, %v6730
    %v6877 = vpack.c.b16 %v6733, %v6732
    %v6878 = vpack.c.b16 %v6735, %v6734
    %v6879 = vpack.c.b16 %v6737, %v6736
    %v6880 = vpack.c.b16 %v6739, %v6738
    %v6881 = vpack.c.b16 %v6741, %v6740
    %v6882 = vpack.c.b16 %v6743, %v6742
    %v6883 = vpack.c.b16 %v6745, %v6744
    %v6884 = vpack.c.b16 %v6747, %v6746
    %v6885 = vpack.c.b16 %v6749, %v6748
    %v6886 = vpack.c.b16 %v6751, %v6750
    %v6887 = vpack.c.b16 %v6753, %v6752
    %v6888 = vpack.c.b16 %v6755, %v6754
    %v6889 = vpack.c.b16 %v6757, %v6756
    %v6890 = vpack.c.b16 %v6759, %v6758
    %v6891 = vpack.c.b16 %v6761, %v6760
    %v6892 = vpack.c.b16 %v6763, %v6762
    %v6893 = vpack.c.b16 %v6765, %v6764
    %v6894 = vpack.c.b16 %v6767, %v6766
    %v6895 = vpack.c.b16 %v6769, %v6768
    %v6896 = vpack.c.b16 %v6771, %v6770
    %v6897 = vpack.c.b16 %v6773, %v6772
    %v6898 = vpack.c.b16 %v6775, %v6774
    %v6899 = vpack.c.b16 %v6777, %v6776
    %v6900 = vpack.c.b16 %v6779, %v6778
    %v6901 = vpack.c.b16 %v6781, %v6780
    %v6902 = vpack.c.b16 %v6783, %v6782
    %v6903 = vpack.c.b16 %v6785, %v6784
    %v6904 = vpack.c.b16 %v6787, %v6786
    %v6905 = vpack.c.b16 %v6789, %v6788
    %v6906 = vpack.c.b16 %v6791, %v6790
    %v6907 = vpack.c.b16 %v6793, %v6792
    %v6908 = vpack.c.b16 %v6795, %v6794
    %v6909 = vpack.c.b16 %v6797, %v6796
    %v6910 = vpack.c.b16 %v6799, %v6798
    %v6911 = vpack.c.b16 %v6801, %v6800
    %v6912 = vpack.c.b16 %v6803, %v6802
    %v6913 = vpack.c.b16 %v6805, %v6804
    %v6914 = vpack.c.b16 %v6807, %v6806
    %v6915 = vpack.c.b16 %v6809, %v6808
    %v6916 = vpack.c.b16 %v6811, %v6810
    %v6917 = vpack.c.b16 %v6813, %v6812
    %v6918 = vpack.c.b16 %v6815, %v6814
    %v6919 = vpack.c.b16 %v6817, %v6816
    %v6920 = vpack.c.b16 %v6819, %v6818
    %v6921 = vpack.c.b16 %v6821, %v6820
    %v6922 = vpack.c.b16 %v6823, %v6822
    %v6923 = vpack.c.b16 %v6825, %v6824
    %v6924 = vpack.c.b16 %v6827, %v6826
    %v6925 = vpack.c.b16 %v6829, %v6828
    %v6926 = vpack.c.b16 %v6831, %v6830
    %v6927 = vpack.c.b16 %v6833, %v6832
    %v6928 = vpack.c.b16 %v6835, %v6834
    %v6929 = vpack.c.b16 %v6837, %v6836
    %v6930 = vpack.c.b16 %v6839, %v6838
    %v6931 = vpack.c.b16 %v6841, %v6840
    %v6932 = vpack.c.b16 %v6843, %v6842
    %v6933 = vpack.c.b16 %v6845, %v6844
    %7022 = vmatpush.bf16.msra.mxu0 %v6853
    %7023 = vmatpush.bf16.msra.mxu0 %v6852
    %7024 = vmatpush.bf16.msra.mxu0 %v6851
    %7025 = vmatpush.bf16.msra.mxu0 %v6850
    %7026 = vmatpush.bf16.msra.mxu0 %v6849
    %7027 = vmatpush.bf16.msra.mxu0 %v6848
    %7028 = vmatpush.bf16.msra.mxu0 %v6847
    %7029 = vmatpush.bf16.msra.mxu0 %v6846
    %7030 = vmatmul.bf16.gmra.mxu0 %v6479
    %v7031 = vpop.f32.mrf.mxu0
    %v7032 = vadd.f32 %v6492, %v7031
    %v7033 = vpop.f32.mrf.mxu0
    %7034 = vdwg.mxu0
    %7035 = vmatpush.bf16.msra.mxu0 %v6861
    %7036 = vmatpush.bf16.msra.mxu0 %v6860
    %7037 = vmatpush.bf16.msra.mxu0 %v6859
    %7038 = vmatpush.bf16.msra.mxu0 %v6858
    %7039 = vmatpush.bf16.msra.mxu0 %v6857
    %7040 = vmatpush.bf16.msra.mxu0 %v6856
    %7041 = vmatpush.bf16.msra.mxu0 %v6855
    %7042 = vmatpush.bf16.msra.mxu0 %v6854
    %7043 = vmatmul.bf16.gmra.mxu0 %v6480
    %v7044 = vpop.f32.mrf.mxu0
    %v7045 = vadd.f32 %v7032, %v7044
    %v7046 = vpop.f32.mrf.mxu0
    %7047 = vdwg.mxu0
    %7048 = vmatpush.bf16.msra.mxu0 %v6869
    %7049 = vmatpush.bf16.msra.mxu0 %v6868
    %7050 = vmatpush.bf16.msra.mxu0 %v6867
    %7051 = vmatpush.bf16.msra.mxu0 %v6866
    %7052 = vmatpush.bf16.msra.mxu0 %v6865
    %7053 = vmatpush.bf16.msra.mxu0 %v6864
    %7054 = vmatpush.bf16.msra.mxu0 %v6863
    %7055 = vmatpush.bf16.msra.mxu0 %v6862
    %7056 = vmatmul.bf16.gmra.mxu0 %v6481
    %v7057 = vpop.f32.mrf.mxu0
    %v7058 = vadd.f32 %v7045, %v7057
    %v7059 = vpop.f32.mrf.mxu0
    %7060 = vdwg.mxu0
    %7061 = vmatpush.bf16.msra.mxu0 %v6877
    %7062 = vmatpush.bf16.msra.mxu0 %v6876
    %7063 = vmatpush.bf16.msra.mxu0 %v6875
    %7064 = vmatpush.bf16.msra.mxu0 %v6874
    %7065 = vmatpush.bf16.msra.mxu0 %v6873
    %7066 = vmatpush.bf16.msra.mxu0 %v6872
    %7067 = vmatpush.bf16.msra.mxu0 %v6871
    %7068 = vmatpush.bf16.msra.mxu0 %v6870
    %7069 = vmatmul.bf16.gmra.mxu0 %v6482
    %v7070 = vpop.f32.mrf.mxu0
    %v7071 = vadd.f32 %v7058, %v7070
    %v7072 = vpop.f32.mrf.mxu0
    %7073 = vdwg.mxu0
    %7074 = vmatpush.bf16.msra.mxu0 %v6885
    %7075 = vmatpush.bf16.msra.mxu0 %v6884
    %7076 = vmatpush.bf16.msra.mxu0 %v6883
    %7077 = vmatpush.bf16.msra.mxu0 %v6882
    %7078 = vmatpush.bf16.msra.mxu0 %v6881
    %7079 = vmatpush.bf16.msra.mxu0 %v6880
    %7080 = vmatpush.bf16.msra.mxu0 %v6879
    %7081 = vmatpush.bf16.msra.mxu0 %v6878
    %7082 = vmatmul.bf16.gmra.mxu0 %v6483
    %v7083 = vpop.f32.mrf.mxu0
    %v7084 = vadd.f32 %v7071, %v7083
    %v7085 = vpop.f32.mrf.mxu0
    %7086 = vdwg.mxu0
    %7087 = vmatpush.bf16.msra.mxu0 %v6893
    %7088 = vmatpush.bf16.msra.mxu0 %v6892
    %7089 = vmatpush.bf16.msra.mxu0 %v6891
    %7090 = vmatpush.bf16.msra.mxu0 %v6890
    %7091 = vmatpush.bf16.msra.mxu0 %v6889
    %7092 = vmatpush.bf16.msra.mxu0 %v6888
    %7093 = vmatpush.bf16.msra.mxu0 %v6887
    %7094 = vmatpush.bf16.msra.mxu0 %v6886
    %7095 = vmatmul.bf16.gmra.mxu0 %v6484
    %v7096 = vpop.f32.mrf.mxu0
    %v7097 = vadd.f32 %v7084, %v7096
    %v7098 = vpop.f32.mrf.mxu0
    %7099 = vdwg.mxu0
    %7100 = vmatpush.bf16.msra.mxu0 %v6901
    %7101 = vmatpush.bf16.msra.mxu0 %v6900
    %7102 = vmatpush.bf16.msra.mxu0 %v6899
    %7103 = vmatpush.bf16.msra.mxu0 %v6898
    %7104 = vmatpush.bf16.msra.mxu0 %v6897
    %7105 = vmatpush.bf16.msra.mxu0 %v6896
    %7106 = vmatpush.bf16.msra.mxu0 %v6895
    %7107 = vmatpush.bf16.msra.mxu0 %v6894
    %7108 = vmatmul.bf16.gmra.mxu0 %v6485
    %v7109 = vpop.f32.mrf.mxu0
    %v7110 = vadd.f32 %v7097, %v7109
    %v7111 = vpop.f32.mrf.mxu0
    %7112 = vdwg.mxu0
    %7113 = vmatpush.bf16.msra.mxu0 %v6909
    %7114 = vmatpush.bf16.msra.mxu0 %v6908
    %7115 = vmatpush.bf16.msra.mxu0 %v6907
    %7116 = vmatpush.bf16.msra.mxu0 %v6906
    %7117 = vmatpush.bf16.msra.mxu0 %v6905
    %7118 = vmatpush.bf16.msra.mxu0 %v6904
    %7119 = vmatpush.bf16.msra.mxu0 %v6903
    %7120 = vmatpush.bf16.msra.mxu0 %v6902
    %7121 = vmatmul.bf16.gmra.mxu0 %v6486
    %v7122 = vpop.f32.mrf.mxu0
    %v7123 = vadd.f32 %v7110, %v7122
    %v7124 = vpop.f32.mrf.mxu0
    %7125 = vdwg.mxu0
    %7126 = vmatpush.bf16.msra.mxu0 %v6917
    %7127 = vmatpush.bf16.msra.mxu0 %v6916
    %7128 = vmatpush.bf16.msra.mxu0 %v6915
    %7129 = vmatpush.bf16.msra.mxu0 %v6914
    %7130 = vmatpush.bf16.msra.mxu0 %v6913
    %7131 = vmatpush.bf16.msra.mxu0 %v6912
    %7132 = vmatpush.bf16.msra.mxu0 %v6911
    %7133 = vmatpush.bf16.msra.mxu0 %v6910
    %7134 = vmatmul.bf16.gmra.mxu0 %v6487
    %v7135 = vpop.f32.mrf.mxu0
    %v7136 = vadd.f32 %v7123, %v7135
    %v7137 = vpop.f32.mrf.mxu0
    %7138 = vdwg.mxu0
    %7139 = vmatpush.bf16.msra.mxu0 %v6925
    %7140 = vmatpush.bf16.msra.mxu0 %v6924
    %7141 = vmatpush.bf16.msra.mxu0 %v6923
    %7142 = vmatpush.bf16.msra.mxu0 %v6922
    %7143 = vmatpush.bf16.msra.mxu0 %v6921
    %7144 = vmatpush.bf16.msra.mxu0 %v6920
    %7145 = vmatpush.bf16.msra.mxu0 %v6919
    %7146 = vmatpush.bf16.msra.mxu0 %v6918
    %7147 = vmatmul.bf16.gmra.mxu0 %v6488
    %v7148 = vpop.f32.mrf.mxu0
    %v7149 = vadd.f32 %v7136, %v7148
    %v7150 = vpop.f32.mrf.mxu0
    %7151 = vdwg.mxu0
    %7152 = vmatpush.bf16.msra.mxu0 %v6933
    %7153 = vmatpush.bf16.msra.mxu0 %v6932
    %7154 = vmatpush.bf16.msra.mxu0 %v6931
    %7155 = vmatpush.bf16.msra.mxu0 %v6930
    %7156 = vmatpush.bf16.msra.mxu0 %v6929
    %7157 = vmatpush.bf16.msra.mxu0 %v6928
    %7158 = vmatpush.bf16.msra.mxu0 %v6927
    %7159 = vmatpush.bf16.msra.mxu0 %v6926
    %7160 = vmatmul.bf16.gmra.mxu0 %v6489
    %v7161 = vpop.f32.mrf.mxu0
    %v7162 = vadd.f32 %v7149, %v7161
    %v7163 = vpop.f32.mrf.mxu0
    %7164 = vdwg.mxu0
    %v7165 = vmax.f32 %v7162, 0.0
    %v7166 = vld [vmem:[#allocation18] sm:$0xff]
    %v7167 = vld [vmem:[#allocation18 + $0x8] sm:$0xff]
    %v7168 = vld [vmem:[#allocation18 + $0x10] sm:$0xff]
    %v7169 = vld [vmem:[#allocation18 + $0x18] sm:$0xff]
    %v7170 = vld [vmem:[#allocation18 + $0x20] sm:$0xff]
    %v7171 = vld [vmem:[#allocation18 + $0x28] sm:$0xff]
    %v7172 = vld [vmem:[#allocation18 + $0x30] sm:$0xff]
    %v7173 = vld [vmem:[#allocation18 + $0x38] sm:$0xff]
    %v7174 = vld [vmem:[#allocation18 + $0x40] sm:$0xff]
    %v7175 = vld [vmem:[#allocation18 + $0x48] sm:$0xff]
    %v7176 = vld [vmem:[#allocation18 + $0x50] sm:$0xff]
    %v7177 = vld [vmem:[#allocation18 + $0x58] sm:$0xff]
    %v7178 = vld [vmem:[#allocation18 + $0x60] sm:$0xff]
    %v7179 = vld [vmem:[#allocation18 + $0x68] sm:$0xff]
    %v7180 = vld [vmem:[#allocation18 + $0x70] sm:$0xff]
    %v7181 = vld [vmem:[#allocation18 + $0x78] sm:$0xff]
    %v7182 = vpack.c.bf16 %v7165, %v7165
    %v7183 = vld [vmem:[%s1] sm:$0xff]
    %v7184 = vld [vmem:[#allocation19] sm:$0xff]
    %v7185 = vld [vmem:[#allocation19 + $0x8] sm:$0xff]
    %v7186 = vld [vmem:[#allocation19 + $0x10] sm:$0xff]
    %v7187 = vld [vmem:[#allocation19 + $0x18] sm:$0xff]
    %v7188 = vld [vmem:[#allocation19 + $0x20] sm:$0xff]
    %v7189 = vld [vmem:[#allocation19 + $0x28] sm:$0xff]
    %v7190 = vld [vmem:[#allocation19 + $0x30] sm:$0xff]
    %v7191 = vld [vmem:[#allocation19 + $0x38] sm:$0xff]
    %v7192 = vld [vmem:[#allocation19 + $0x40] sm:$0xff]
    %v7193 = vld [vmem:[#allocation19 + $0x48] sm:$0xff]
    %v7194 = vld [vmem:[#allocation19 + $0x50] sm:$0xff]
    %v7195 = vld [vmem:[#allocation19 + $0x58] sm:$0xff]
    %v7196 = vld [vmem:[#allocation19 + $0x60] sm:$0xff]
    %v7197 = vld [vmem:[#allocation19 + $0x68] sm:$0xff]
    %v7198 = vld [vmem:[#allocation19 + $0x70] sm:$0xff]
    %v7199 = vld [vmem:[#allocation19 + $0x78] sm:$0xff]
    %v7200 = vpack.c.bf16 %v7183, %v7183
    %v7217 = vunpack.c.l.b16 %v7184
    %v7218 = vunpack.c.h.b16 %v7184
    %v7219 = vunpack.c.l.b16 %v7185
    %v7220 = vunpack.c.h.b16 %v7185
    %v7221 = vunpack.c.l.b16 %v7186
    %v7222 = vunpack.c.h.b16 %v7186
    %v7223 = vunpack.c.l.b16 %v7187
    %v7224 = vunpack.c.h.b16 %v7187
    %v7225 = vunpack.c.l.b16 %v7188
    %v7226 = vunpack.c.h.b16 %v7188
    %v7227 = vunpack.c.l.b16 %v7189
    %v7228 = vunpack.c.h.b16 %v7189
    %v7229 = vunpack.c.l.b16 %v7190
    %v7230 = vunpack.c.h.b16 %v7190
    %v7231 = vunpack.c.l.b16 %v7191
    %v7232 = vunpack.c.h.b16 %v7191
    %v7233 = vunpack.c.l.b16 %v7192
    %v7234 = vunpack.c.h.b16 %v7192
    %v7235 = vunpack.c.l.b16 %v7193
    %v7236 = vunpack.c.h.b16 %v7193
    %v7237 = vunpack.c.l.b16 %v7194
    %v7238 = vunpack.c.h.b16 %v7194
    %v7239 = vunpack.c.l.b16 %v7195
    %v7240 = vunpack.c.h.b16 %v7195
    %v7241 = vunpack.c.l.b16 %v7196
    %v7242 = vunpack.c.h.b16 %v7196
    %v7243 = vunpack.c.l.b16 %v7197
    %v7244 = vunpack.c.h.b16 %v7197
    %v7245 = vunpack.c.l.b16 %v7198
    %v7246 = vunpack.c.h.b16 %v7198
    %v7247 = vunpack.c.l.b16 %v7199
    %v7248 = vunpack.c.h.b16 %v7199
    %v7249 = vpack.c.b16 %v7219, %v7217
    %v7250 = vpack.c.b16 %v7220, %v7218
    %v7251 = vpack.c.b16 %v7223, %v7221
    %v7252 = vpack.c.b16 %v7224, %v7222
    %v7253 = vpack.c.b16 %v7227, %v7225
    %v7254 = vpack.c.b16 %v7228, %v7226
    %v7255 = vpack.c.b16 %v7231, %v7229
    %v7256 = vpack.c.b16 %v7232, %v7230
    %v7257 = vpack.c.b16 %v7235, %v7233
    %v7258 = vpack.c.b16 %v7236, %v7234
    %v7259 = vpack.c.b16 %v7239, %v7237
    %v7260 = vpack.c.b16 %v7240, %v7238
    %v7261 = vpack.c.b16 %v7243, %v7241
    %v7262 = vpack.c.b16 %v7244, %v7242
    %v7263 = vpack.c.b16 %v7247, %v7245
    %v7264 = vpack.c.b16 %v7248, %v7246
    %7281 = vmatpush.bf16.msra.mxu0 %v7263
    %7282 = vmatpush.bf16.msra.mxu0 %v7261
    %7283 = vmatpush.bf16.msra.mxu0 %v7259
    %7284 = vmatpush.bf16.msra.mxu0 %v7257
    %7285 = vmatpush.bf16.msra.mxu0 %v7255
    %7286 = vmatpush.bf16.msra.mxu0 %v7253
    %7287 = vmatpush.bf16.msra.mxu0 %v7251
    %7288 = vmatpush.bf16.msra.mxu0 %v7249
    %7289 = vmatmul.bf16.gmra.mxu0 %v7200
    %v7290 = vpop.f32.mrf.mxu0
    %v7291 = vadd.f32 0.0, %v7290
    %v7292 = vpop.f32.mrf.mxu0
    %7293 = vdwg.mxu0
    %7294 = vmatpush.bf16.msra.mxu0 %v7264
    %7295 = vmatpush.bf16.msra.mxu0 %v7262
    %7296 = vmatpush.bf16.msra.mxu0 %v7260
    %7297 = vmatpush.bf16.msra.mxu0 %v7258
    %7298 = vmatpush.bf16.msra.mxu0 %v7256
    %7299 = vmatpush.bf16.msra.mxu0 %v7254
    %7300 = vmatpush.bf16.msra.mxu0 %v7252
    %7301 = vmatpush.bf16.msra.mxu0 %v7250
    %7302 = vmatmul.bf16.gmra.mxu0 %v7200
    %v7303 = vpop.f32.mrf.mxu0
    %v7304 = vadd.f32 0.0, %v7303
    %v7305 = vpop.f32.mrf.mxu0
    %7306 = vdwg.mxu0
    %v7323 = vunpack.c.l.b16 %v7166
    %v7324 = vunpack.c.h.b16 %v7166
    %v7325 = vunpack.c.l.b16 %v7167
    %v7326 = vunpack.c.h.b16 %v7167
    %v7327 = vunpack.c.l.b16 %v7168
    %v7328 = vunpack.c.h.b16 %v7168
    %v7329 = vunpack.c.l.b16 %v7169
    %v7330 = vunpack.c.h.b16 %v7169
    %v7331 = vunpack.c.l.b16 %v7170
    %v7332 = vunpack.c.h.b16 %v7170
    %v7333 = vunpack.c.l.b16 %v7171
    %v7334 = vunpack.c.h.b16 %v7171
    %v7335 = vunpack.c.l.b16 %v7172
    %v7336 = vunpack.c.h.b16 %v7172
    %v7337 = vunpack.c.l.b16 %v7173
    %v7338 = vunpack.c.h.b16 %v7173
    %v7339 = vunpack.c.l.b16 %v7174
    %v7340 = vunpack.c.h.b16 %v7174
    %v7341 = vunpack.c.l.b16 %v7175
    %v7342 = vunpack.c.h.b16 %v7175
    %v7343 = vunpack.c.l.b16 %v7176
    %v7344 = vunpack.c.h.b16 %v7176
    %v7345 = vunpack.c.l.b16 %v7177
    %v7346 = vunpack.c.h.b16 %v7177
    %v7347 = vunpack.c.l.b16 %v7178
    %v7348 = vunpack.c.h.b16 %v7178
    %v7349 = vunpack.c.l.b16 %v7179
    %v7350 = vunpack.c.h.b16 %v7179
    %v7351 = vunpack.c.l.b16 %v7180
    %v7352 = vunpack.c.h.b16 %v7180
    %v7353 = vunpack.c.l.b16 %v7181
    %v7354 = vunpack.c.h.b16 %v7181
    %v7355 = vpack.c.b16 %v7325, %v7323
    %v7356 = vpack.c.b16 %v7326, %v7324
    %v7357 = vpack.c.b16 %v7329, %v7327
    %v7358 = vpack.c.b16 %v7330, %v7328
    %v7359 = vpack.c.b16 %v7333, %v7331
    %v7360 = vpack.c.b16 %v7334, %v7332
    %v7361 = vpack.c.b16 %v7337, %v7335
    %v7362 = vpack.c.b16 %v7338, %v7336
    %v7363 = vpack.c.b16 %v7341, %v7339
    %v7364 = vpack.c.b16 %v7342, %v7340
    %v7365 = vpack.c.b16 %v7345, %v7343
    %v7366 = vpack.c.b16 %v7346, %v7344
    %v7367 = vpack.c.b16 %v7349, %v7347
    %v7368 = vpack.c.b16 %v7350, %v7348
    %v7369 = vpack.c.b16 %v7353, %v7351
    %v7370 = vpack.c.b16 %v7354, %v7352
    %7387 = vmatpush.bf16.msra.mxu0 %v7369
    %7388 = vmatpush.bf16.msra.mxu0 %v7367
    %7389 = vmatpush.bf16.msra.mxu0 %v7365
    %7390 = vmatpush.bf16.msra.mxu0 %v7363
    %7391 = vmatpush.bf16.msra.mxu0 %v7361
    %7392 = vmatpush.bf16.msra.mxu0 %v7359
    %7393 = vmatpush.bf16.msra.mxu0 %v7357
    %7394 = vmatpush.bf16.msra.mxu0 %v7355
    %7395 = vmatmul.bf16.gmra.mxu0 %v7182
    %v7396 = vpop.f32.mrf.mxu0
    %v7397 = vadd.f32 %v7291, %v7396
    %v7398 = vpop.f32.mrf.mxu0
    %7399 = vdwg.mxu0
    %7400 = vmatpush.bf16.msra.mxu0 %v7370
    %7401 = vmatpush.bf16.msra.mxu0 %v7368
    %7402 = vmatpush.bf16.msra.mxu0 %v7366
    %7403 = vmatpush.bf16.msra.mxu0 %v7364
    %7404 = vmatpush.bf16.msra.mxu0 %v7362
    %7405 = vmatpush.bf16.msra.mxu0 %v7360
    %7406 = vmatpush.bf16.msra.mxu0 %v7358
    %7407 = vmatpush.bf16.msra.mxu0 %v7356
    %7408 = vmatmul.bf16.gmra.mxu0 %v7182
    %v7409 = vpop.f32.mrf.mxu0
    %v7410 = vadd.f32 %v7304, %v7409
    %v7411 = vpop.f32.mrf.mxu0
    %7412 = vdwg.mxu0
    %v7413 = vld [vmem:[#allocation21] sm:$0x3]
    %v7415 = vperm.slane %v7413, 0
    %v7416 = vperm.slane %v7413, 1
    %v7419 = vadd.f32 %v7397, %v7415
    %v7420 = vadd.f32 %v7410, %v7416
    %v7421 = vmax.f32 %v7419, 0.0
    %v7422 = vmax.f32 %v7420, 0.0
    %v7423 = vld [vmem:[#allocation22] sm:$0xf]
    %v7424 = vld [vmem:[#allocation22 + $0x4] sm:$0xf]
    %v7425 = vld [vmem:[#allocation22 + $0x8] sm:$0xf]
    %v7426 = vld [vmem:[#allocation22 + $0xc] sm:$0xf]
    %v7427 = vld [vmem:[#allocation22 + $0x10] sm:$0xf]
    %v7428 = vld [vmem:[#allocation22 + $0x14] sm:$0xf]
    %v7429 = vld [vmem:[#allocation22 + $0x18] sm:$0xf]
    %v7430 = vld [vmem:[#allocation22 + $0x1c] sm:$0xf]
    %v7431 = vld [vmem:[#allocation22 + $0x20] sm:$0xf]
    %v7432 = vld [vmem:[#allocation22 + $0x24] sm:$0xf]
    %v7433 = vld [vmem:[#allocation22 + $0x28] sm:$0xf]
    %v7434 = vld [vmem:[#allocation22 + $0x2c] sm:$0xf]
    %v7435 = vld [vmem:[#allocation22 + $0x30] sm:$0xf]
    %v7436 = vld [vmem:[#allocation22 + $0x34] sm:$0xf]
    %v7437 = vld [vmem:[#allocation22 + $0x38] sm:$0xf]
    %v7438 = vld [vmem:[#allocation22 + $0x3c] sm:$0xf]
    %v7439 = vld [vmem:[#allocation22 + $0x40] sm:$0xf]
    %v7440 = vld [vmem:[#allocation22 + $0x44] sm:$0xf]
    %v7441 = vld [vmem:[#allocation22 + $0x48] sm:$0xf]
    %v7442 = vld [vmem:[#allocation22 + $0x4c] sm:$0xf]
    %v7443 = vld [vmem:[#allocation22 + $0x50] sm:$0xf]
    %v7444 = vld [vmem:[#allocation22 + $0x54] sm:$0xf]
    %v7445 = vld [vmem:[#allocation22 + $0x58] sm:$0xf]
    %v7446 = vld [vmem:[#allocation22 + $0x5c] sm:$0xf]
    %v7447 = vld [vmem:[#allocation22 + $0x60] sm:$0xf]
    %v7448 = vld [vmem:[#allocation22 + $0x64] sm:$0xf]
    %v7449 = vld [vmem:[#allocation22 + $0x68] sm:$0xf]
    %v7450 = vld [vmem:[#allocation22 + $0x6c] sm:$0xf]
    %v7451 = vld [vmem:[#allocation22 + $0x70] sm:$0xf]
    %v7452 = vld [vmem:[#allocation22 + $0x74] sm:$0xf]
    %v7453 = vld [vmem:[#allocation22 + $0x78] sm:$0xf]
    %v7454 = vld [vmem:[#allocation22 + $0x7c] sm:$0xf]
    %v7455 = vpack.c.bf16 %v7421, %v7421
    %v7456 = vpack.c.bf16 %v7422, %v7422
    %v7457 = vld [vmem:[#allocation24] sm:$0x1]
    %v7459 = vperm.slane %v7457, 0
    %v7493 = vunpack.c.l.b16 %v7423
    %v7494 = vunpack.c.l.b16 %v7424
    %v7495 = vunpack.c.l.b16 %v7425
    %v7496 = vunpack.c.l.b16 %v7426
    %v7497 = vunpack.c.l.b16 %v7427
    %v7498 = vunpack.c.l.b16 %v7428
    %v7499 = vunpack.c.l.b16 %v7429
    %v7500 = vunpack.c.l.b16 %v7430
    %v7501 = vunpack.c.l.b16 %v7431
    %v7502 = vunpack.c.l.b16 %v7432
    %v7503 = vunpack.c.l.b16 %v7433
    %v7504 = vunpack.c.l.b16 %v7434
    %v7505 = vunpack.c.l.b16 %v7435
    %v7506 = vunpack.c.l.b16 %v7436
    %v7507 = vunpack.c.l.b16 %v7437
    %v7508 = vunpack.c.l.b16 %v7438
    %v7509 = vunpack.c.l.b16 %v7439
    %v7510 = vunpack.c.l.b16 %v7440
    %v7511 = vunpack.c.l.b16 %v7441
    %v7512 = vunpack.c.l.b16 %v7442
    %v7513 = vunpack.c.l.b16 %v7443
    %v7514 = vunpack.c.l.b16 %v7444
    %v7515 = vunpack.c.l.b16 %v7445
    %v7516 = vunpack.c.l.b16 %v7446
    %v7517 = vunpack.c.l.b16 %v7447
    %v7518 = vunpack.c.l.b16 %v7448
    %v7519 = vunpack.c.l.b16 %v7449
    %v7520 = vunpack.c.l.b16 %v7450
    %v7521 = vunpack.c.l.b16 %v7451
    %v7522 = vunpack.c.l.b16 %v7452
    %v7523 = vunpack.c.l.b16 %v7453
    %v7524 = vunpack.c.l.b16 %v7454
    %v7525 = vpack.c.b16 %v7494, %v7493
    %v7526 = vpack.c.b16 %v7496, %v7495
    %v7527 = vpack.c.b16 %v7498, %v7497
    %v7528 = vpack.c.b16 %v7500, %v7499
    %v7529 = vpack.c.b16 %v7502, %v7501
    %v7530 = vpack.c.b16 %v7504, %v7503
    %v7531 = vpack.c.b16 %v7506, %v7505
    %v7532 = vpack.c.b16 %v7508, %v7507
    %v7533 = vpack.c.b16 %v7510, %v7509
    %v7534 = vpack.c.b16 %v7512, %v7511
    %v7535 = vpack.c.b16 %v7514, %v7513
    %v7536 = vpack.c.b16 %v7516, %v7515
    %v7537 = vpack.c.b16 %v7518, %v7517
    %v7538 = vpack.c.b16 %v7520, %v7519
    %v7539 = vpack.c.b16 %v7522, %v7521
    %v7540 = vpack.c.b16 %v7524, %v7523
    %7557 = vmatpush.bf16.msra.mxu0 %v7532
    %7558 = vmatpush.bf16.msra.mxu0 %v7531
    %7559 = vmatpush.bf16.msra.mxu0 %v7530
    %7560 = vmatpush.bf16.msra.mxu0 %v7529
    %7561 = vmatpush.bf16.msra.mxu0 %v7528
    %7562 = vmatpush.bf16.msra.mxu0 %v7527
    %7563 = vmatpush.bf16.msra.mxu0 %v7526
    %7564 = vmatpush.bf16.msra.mxu0 %v7525
    %7565 = vmatmul.bf16.gmra.mxu0 %v7455
    %v7566 = vpop.f32.mrf.mxu0
    %v7567 = vadd.f32 %v7459, %v7566
    %v7568 = vpop.f32.mrf.mxu0
    %7569 = vdwg.mxu0
    %7570 = vmatpush.bf16.msra.mxu0 %v7540
    %7571 = vmatpush.bf16.msra.mxu0 %v7539
    %7572 = vmatpush.bf16.msra.mxu0 %v7538
    %7573 = vmatpush.bf16.msra.mxu0 %v7537
    %7574 = vmatpush.bf16.msra.mxu0 %v7536
    %7575 = vmatpush.bf16.msra.mxu0 %v7535
    %7576 = vmatpush.bf16.msra.mxu0 %v7534
    %7577 = vmatpush.bf16.msra.mxu0 %v7533
    %7578 = vmatmul.bf16.gmra.mxu0 %v7456
    %v7579 = vpop.f32.mrf.mxu0
    %v7580 = vadd.f32 %v7567, %v7579
    %v7581 = vpop.f32.mrf.mxu0
    %7582 = vdwg.mxu0
    %v7583 = vmax.f32 %v7580, 0.0
    %v7584 = vld [vmem:[#allocation25] sm:$0xff]
    %v7585 = vld [vmem:[#allocation25 + $0x8] sm:$0xff]
    %v7586 = vld [vmem:[#allocation25 + $0x10] sm:$0xff]
    %v7587 = vld [vmem:[#allocation25 + $0x18] sm:$0xff]
    %v7588 = vld [vmem:[#allocation25 + $0x20] sm:$0xff]
    %v7589 = vld [vmem:[#allocation25 + $0x28] sm:$0xff]
    %v7590 = vld [vmem:[#allocation25 + $0x30] sm:$0xff]
    %v7591 = vld [vmem:[#allocation25 + $0x38] sm:$0xff]
    %v7592 = vld [vmem:[#allocation25 + $0x40] sm:$0xff]
    %v7593 = vld [vmem:[#allocation25 + $0x48] sm:$0xff]
    %v7594 = vld [vmem:[#allocation25 + $0x50] sm:$0xff]
    %v7595 = vld [vmem:[#allocation25 + $0x58] sm:$0xff]
    %v7596 = vld [vmem:[#allocation25 + $0x60] sm:$0xff]
    %v7597 = vld [vmem:[#allocation25 + $0x68] sm:$0xff]
    %v7598 = vld [vmem:[#allocation25 + $0x70] sm:$0xff]
    %v7599 = vld [vmem:[#allocation25 + $0x78] sm:$0xff]
    %v7600 = vpack.c.bf16 %v7583, %v7583
    %v7601 = vld [vmem:[#allocation27] sm:$0x3]
    %v7603 = vperm.slane %v7601, 0
    %v7604 = vperm.slane %v7601, 1
    %v7623 = vunpack.c.l.b16 %v7584
    %v7624 = vunpack.c.h.b16 %v7584
    %v7625 = vunpack.c.l.b16 %v7585
    %v7626 = vunpack.c.h.b16 %v7585
    %v7627 = vunpack.c.l.b16 %v7586
    %v7628 = vunpack.c.h.b16 %v7586
    %v7629 = vunpack.c.l.b16 %v7587
    %v7630 = vunpack.c.h.b16 %v7587
    %v7631 = vunpack.c.l.b16 %v7588
    %v7632 = vunpack.c.h.b16 %v7588
    %v7633 = vunpack.c.l.b16 %v7589
    %v7634 = vunpack.c.h.b16 %v7589
    %v7635 = vunpack.c.l.b16 %v7590
    %v7636 = vunpack.c.h.b16 %v7590
    %v7637 = vunpack.c.l.b16 %v7591
    %v7638 = vunpack.c.h.b16 %v7591
    %v7639 = vunpack.c.l.b16 %v7592
    %v7640 = vunpack.c.h.b16 %v7592
    %v7641 = vunpack.c.l.b16 %v7593
    %v7642 = vunpack.c.h.b16 %v7593
    %v7643 = vunpack.c.l.b16 %v7594
    %v7644 = vunpack.c.h.b16 %v7594
    %v7645 = vunpack.c.l.b16 %v7595
    %v7646 = vunpack.c.h.b16 %v7595
    %v7647 = vunpack.c.l.b16 %v7596
    %v7648 = vunpack.c.h.b16 %v7596
    %v7649 = vunpack.c.l.b16 %v7597
    %v7650 = vunpack.c.h.b16 %v7597
    %v7651 = vunpack.c.l.b16 %v7598
    %v7652 = vunpack.c.h.b16 %v7598
    %v7653 = vunpack.c.l.b16 %v7599
    %v7654 = vunpack.c.h.b16 %v7599
    %v7655 = vpack.c.b16 %v7625, %v7623
    %v7656 = vpack.c.b16 %v7626, %v7624
    %v7657 = vpack.c.b16 %v7629, %v7627
    %v7658 = vpack.c.b16 %v7630, %v7628
    %v7659 = vpack.c.b16 %v7633, %v7631
    %v7660 = vpack.c.b16 %v7634, %v7632
    %v7661 = vpack.c.b16 %v7637, %v7635
    %v7662 = vpack.c.b16 %v7638, %v7636
    %v7663 = vpack.c.b16 %v7641, %v7639
    %v7664 = vpack.c.b16 %v7642, %v7640
    %v7665 = vpack.c.b16 %v7645, %v7643
    %v7666 = vpack.c.b16 %v7646, %v7644
    %v7667 = vpack.c.b16 %v7649, %v7647
    %v7668 = vpack.c.b16 %v7650, %v7648
    %v7669 = vpack.c.b16 %v7653, %v7651
    %v7670 = vpack.c.b16 %v7654, %v7652
    %7687 = vmatpush.bf16.msra.mxu0 %v7669
    %7688 = vmatpush.bf16.msra.mxu0 %v7667
    %7689 = vmatpush.bf16.msra.mxu0 %v7665
    %7690 = vmatpush.bf16.msra.mxu0 %v7663
    %7691 = vmatpush.bf16.msra.mxu0 %v7661
    %7692 = vmatpush.bf16.msra.mxu0 %v7659
    %7693 = vmatpush.bf16.msra.mxu0 %v7657
    %7694 = vmatpush.bf16.msra.mxu0 %v7655
    %7695 = vmatmul.bf16.gmra.mxu0 %v7600
    %v7696 = vpop.f32.mrf.mxu0
    %v7697 = vadd.f32 %v7603, %v7696
    %v7698 = vpop.f32.mrf.mxu0
    %7699 = vdwg.mxu0
    %7700 = vmatpush.bf16.msra.mxu0 %v7670
    %7701 = vmatpush.bf16.msra.mxu0 %v7668
    %7702 = vmatpush.bf16.msra.mxu0 %v7666
    %7703 = vmatpush.bf16.msra.mxu0 %v7664
    %7704 = vmatpush.bf16.msra.mxu0 %v7662
    %7705 = vmatpush.bf16.msra.mxu0 %v7660
    %7706 = vmatpush.bf16.msra.mxu0 %v7658
    %7707 = vmatpush.bf16.msra.mxu0 %v7656
    %7708 = vmatmul.bf16.gmra.mxu0 %v7600
    %v7709 = vpop.f32.mrf.mxu0
    %v7710 = vadd.f32 %v7604, %v7709
    %v7711 = vpop.f32.mrf.mxu0
    %7712 = vdwg.mxu0
    %v7713 = vld [vmem:[%s2] sm:$0xff]
    %v7714 = vld [vmem:[%s2 + $0x8] sm:$0xff]
    %v7715 = vadd.f32 %v7697, %v7713
    %v7716 = vadd.f32 %v7710, %v7714
    %v7717 = vmax.f32 %v7715, %v7716
    %7718 = vmax.xlane.f32.xlu0 %v7717
    %v7719 = vpop.xlane.xlu0 %7718
    %v7720 = vsub.f32 %v7715, %v7719
    %v7721 = vsub.f32 %v7716, %v7719
    %v7722 = vmul.f32 %v7720, 1.442695
    %v7723 = vpow.pop %v7722
    %v7724 = vmul.f32 %v7721, 1.442695
    %v7725 = vpow.pop %v7724
    %v7726 = vadd.f32 %v7723, %v7725
    %7727 = vadd.xlane.f32.xlu0 %v7726
    %v7728 = vpop.xlane.xlu0 %7727
    %v7729 = vrcp.pop %v7728
    %v7730 = vmul.f32 %v7728, %v7729
    %v7731 = vsub.f32 1.0, %v7730
    %v7732 = vmul.f32 %v7729, %v7731
    %v7733 = vadd.f32 %v7729, %v7732
    %vm7734 = vweird.f32 %v7728
    %vm7735 = vweird.f32 %v7729
    %vm7736 = vmor %vm7734, %vm7735
    %v7737 = vsel %vm7736, %v7729, %v7733
    %v7738 = vand.u32 2147483647, %v7728
    %vm7739 = vcmp.eq.f32.partialorder %v7738, 8.507059e+37
    %v7740 = vand.u32 %v7728, 2147483648
    %v7741 = vor.u32 1.1754944e-38, %v7740
    %v7742 = vsel %vm7739, %v7741, %v7737
    %v7743 = vmul.f32 %v7723, %v7742
    %v7744 = vmul.f32 %v7725, %v7742
    %7745 = vst [vmem:[%s22] sm:$0xff] %v7743
    %7746 = vst [vmem:[%s22 + $0x8] sm:$0xff] %v7744
    %v7747 = vld [vmem:[#allocation28] sm:$0xf]
    %v7748 = vld [vmem:[#allocation28 + $0x4] sm:$0xf]
    %v7749 = vld [vmem:[#allocation28 + $0x8] sm:$0xf]
    %v7750 = vld [vmem:[#allocation28 + $0xc] sm:$0xf]
    %v7751 = vld [vmem:[#allocation28 + $0x10] sm:$0xf]
    %v7752 = vld [vmem:[#allocation28 + $0x14] sm:$0xf]
    %v7753 = vld [vmem:[#allocation28 + $0x18] sm:$0xf]
    %v7754 = vld [vmem:[#allocation28 + $0x1c] sm:$0xf]
    %v7755 = vld [vmem:[#allocation28 + $0x20] sm:$0xf]
    %v7756 = vld [vmem:[#allocation28 + $0x24] sm:$0xf]
    %v7757 = vld [vmem:[#allocation28 + $0x28] sm:$0xf]
    %v7758 = vld [vmem:[#allocation28 + $0x2c] sm:$0xf]
    %v7759 = vld [vmem:[#allocation28 + $0x30] sm:$0xf]
    %v7760 = vld [vmem:[#allocation28 + $0x34] sm:$0xf]
    %v7761 = vld [vmem:[#allocation28 + $0x38] sm:$0xf]
    %v7762 = vld [vmem:[#allocation28 + $0x3c] sm:$0xf]
    %v7763 = vld [vmem:[#allocation30] sm:$0x1]
    %v7765 = vperm.slane %v7763, 0
    %v7783 = vunpack.c.l.b16 %v7747
    %v7784 = vunpack.c.l.b16 %v7748
    %v7785 = vunpack.c.l.b16 %v7749
    %v7786 = vunpack.c.l.b16 %v7750
    %v7787 = vunpack.c.l.b16 %v7751
    %v7788 = vunpack.c.l.b16 %v7752
    %v7789 = vunpack.c.l.b16 %v7753
    %v7790 = vunpack.c.l.b16 %v7754
    %v7791 = vunpack.c.l.b16 %v7755
    %v7792 = vunpack.c.l.b16 %v7756
    %v7793 = vunpack.c.l.b16 %v7757
    %v7794 = vunpack.c.l.b16 %v7758
    %v7795 = vunpack.c.l.b16 %v7759
    %v7796 = vunpack.c.l.b16 %v7760
    %v7797 = vunpack.c.l.b16 %v7761
    %v7798 = vunpack.c.l.b16 %v7762
    %v7799 = vpack.c.b16 %v7784, %v7783
    %v7800 = vpack.c.b16 %v7786, %v7785
    %v7801 = vpack.c.b16 %v7788, %v7787
    %v7802 = vpack.c.b16 %v7790, %v7789
    %v7803 = vpack.c.b16 %v7792, %v7791
    %v7804 = vpack.c.b16 %v7794, %v7793
    %v7805 = vpack.c.b16 %v7796, %v7795
    %v7806 = vpack.c.b16 %v7798, %v7797
    %7815 = vmatpush.bf16.msra.mxu0 %v7806
    %7816 = vmatpush.bf16.msra.mxu0 %v7805
    %7817 = vmatpush.bf16.msra.mxu0 %v7804
    %7818 = vmatpush.bf16.msra.mxu0 %v7803
    %7819 = vmatpush.bf16.msra.mxu0 %v7802
    %7820 = vmatpush.bf16.msra.mxu0 %v7801
    %7821 = vmatpush.bf16.msra.mxu0 %v7800
    %7822 = vmatpush.bf16.msra.mxu0 %v7799
    %7823 = vmatmul.bf16.gmra.mxu0 %v7600
    %v7824 = vpop.f32.mrf.mxu0
    %v7825 = vadd.f32 %v7765, %v7824
    %v7826 = vpop.f32.mrf.mxu0
    %7827 = vdwg.mxu0
    %v7828 = vtanh.pop %v7825
    %7829 = vst [vmem:[%s23] sm:$0xff] %v7828
    // Predicated region
    $region166: #{abalone_forward.1} parent=1 // pred_check
      _
    $region167: #{abalone_forward.1} parent=1 // pred_check_branch
      %7831 = sbr.rel (0) target = $region169
    $region168: #{abalone_forward.1} parent=1 // pred_region
      _
    $region169: #{abalone_forward.1} parent=1 // pred_fallthru
      _
    // Predicated region
    $region170: #{abalone_forward.1} parent=1 // pred_check
      _
    $region171: #{abalone_forward.1} parent=1 // pred_check_branch
      %7833 = sbr.rel (0) target = $region173
    $region172: #{abalone_forward.1} parent=1 // pred_region
      _
    $region173: #{abalone_forward.1} parent=1 // pred_fallthru
      _
    // Predicated region
    $region174: #{abalone_forward.1} parent=1 // pred_check
      _
    $region175: #{abalone_forward.1} parent=1 // pred_check_branch
      %7835 = sbr.rel (0) target = $region177
    $region176: #{abalone_forward.1} parent=1 // pred_region
      _
    $region177: #{abalone_forward.1} parent=1 // pred_fallthru
      _
    // Predicated region
    $region178: #{abalone_forward.1} parent=1 // pred_check
      _
    $region179: #{abalone_forward.1} parent=1 // pred_check_branch
      %7837 = sbr.rel (0) target = $region181
    $region180: #{abalone_forward.1} parent=1 // pred_region
      _
    $region181: #{abalone_forward.1} parent=1 // pred_fallthru
      _
    %7838 = vsyncpa [#allocation3], 1
    %7839 = vsyncpa [#allocation5], 1
    %7840 = vsyncpa [#allocation8], 1
    %7841 = vsyncpa [#allocation11], 1
    %7842 = vsyncpa [#allocation14], 1
    %7843 = vsyncpa [#allocation17], 1
    %7844 = vsyncpa [#allocation20], 1
    %7845 = vsyncpa [#allocation23], 1
    %7846 = vsyncpa [#allocation26], 1
    %7847 = vsyncpa [#allocation29], 1

</llo_original>
